<compile_context>
chip_gen: v6e
topology: v6e:2x2x1
jax: 0.10.0
libtpu: 0.0.40
codegen_flags: <defaults>
</compile_context>

<pallas_src>
import functools

import jax
import jax.numpy as jnp
from jax.experimental import pallas as pl
from jax.experimental.pallas import tpu as pltpu

NEG_SLOPE = 0.01                  # nn.LeakyReLU default negative_slope
EPS = 1e-5                        # nn.BatchNorm default eps
VMEM_LIMIT = 32 * 1024 * 1024     # explicit scoped-VMEM budget (v5e..v7x portable)


def _round_up(a, b):
    return (a + b - 1) // b * b


def _pick_tile(m):
    """Row tile over the pooled-pixel axis: multiple of 128, capped at 2048,
    >=2 grid steps whenever the layer is big enough (v7x has 2 TensorCores)."""
    if m <= 128:
        return m
    tm = min(2048, m // 2)
    return max(128, (tm // 128) * 128)


# ---------------------------------------------------------------------------
# Pallas kernels
# ---------------------------------------------------------------------------
def _conv_bn_lrelu_pool_kernel(p0_ref, p1_ref, p2_ref, p3_ref,
                               w_ref, b_ref, o_ref):
    """Fused Conv2d(+bias) + BatchNorm2d(eval) + LeakyReLU + MaxPool2d(2,2).

    p*_ref : (K, tm)    bf16  im2col patches, one slab per 2x2 pool tap
    w_ref  : (Cout, K)  bf16  conv weight with BN scale pre-folded per out-chan
    b_ref  : (Cout, 1)  f32   folded conv-bias + BN bias (per out-chan)
    o_ref  : (Cout, tm) bf16  pooled activation (lane-dense minor dim = tm)

    Per-channel BN scale is folded into w, so the tap-max can be taken on the
    raw accumulators; bias is added once after the max (same per channel for
    all taps), and LeakyReLU is applied once (monotone => commutes with max).
    """
    w = w_ref[...]
    m = jnp.dot(w, p0_ref[...], preferred_element_type=jnp.float32)
    for p_ref in (p1_ref, p2_ref, p3_ref):
        m = jnp.maximum(m, jnp.dot(w, p_ref[...],
                                   preferred_element_type=jnp.float32))
    z = m + b_ref[...]
    o_ref[...] = jnp.where(z >= 0.0, z, NEG_SLOPE * z).astype(o_ref.dtype)


def _mlp_kernel(x_ref, w1_ref, s1_ref, b1_ref, w2_ref, b2_ref, o_ref):
    """Linear -> Dropout(identity, eval) -> BatchNorm1d(eval) -> LeakyReLU
       -> Linear -> Softmax(dim=1), fully fused (all operands tiny, one call)."""
    h = jnp.dot(x_ref[...], w1_ref[...], preferred_element_type=jnp.float32)
    h = h * s1_ref[...] + b1_ref[...]
    h = jnp.where(h >= 0.0, h, NEG_SLOPE * h)
    y = jnp.dot(h, w2_ref[...].astype(jnp.float32),
                preferred_element_type=jnp.float32) + b2_ref[...]
    y = y - jnp.max(y, axis=-1, keepdims=True)
    e = jnp.exp(y)
    o_ref[...] = e / jnp.sum(e, axis=-1, keepdims=True)


# ---------------------------------------------------------------------------
# Glue: pool-tap im2col, conv block, MLP, parameters
# ---------------------------------------------------------------------------
def _im2col_pool_taps(x, k, m_padded):
    """Build four bf16 patch slabs, one per 2x2 pool tap.

    x : (Cin, N, H, W) channel-major activation (H, W even), stride-1 'same' conv.
    Returns [P_t] with P_t[(dy*k+dx)*Cin+ci, n*(H//2)*(W//2)+i*(W//2)+j]
            = x_pad[ci, n, 2i+ph+dy, 2j+pw+dx],  t = 2*ph+pw.
    """
    c, n, h, w = x.shape
    pad = k // 2
    xp = jnp.pad(x, ((0, 0), (0, 0), (pad, pad), (pad, pad)))
    hh, wh = h // 2, w // 2
    m = n * hh * wh
    taps = []
    for ph in range(2):
        for pw in range(2):
            feats = [
                xp[:, :, ph + dy:ph + dy + h:2, pw + dx:pw + dx + w:2]
                .reshape(c, m)
                for dy in range(k) for dx in range(k)
            ]
            t = jnp.stack(feats, axis=0).reshape(k * k * c, m)
            if m_padded > m:
                t = jnp.pad(t, ((0, 0), (0, m_padded - m)))
            taps.append(t)
    return taps


def conv_block(x, p):
    """Conv2d('same') + BN + LeakyReLU + MaxPool2d(2) + Dropout(eval=identity),
    as a single pallas_call.   x: (Cin, N, H, W) bf16 -> (Cout, N, H/2, W/2) bf16."""
    _, n, h, w = x.shape
    k = p["k"]
    cout, kk = p["wT"].shape
    hh, wh = h // 2, w // 2
    m = n * hh * wh
    tm = _pick_tile(m)
    mp = _round_up(m, tm)
    p0, p1, p2, p3 = _im2col_pool_taps(x, k, mp)
    patch_spec = pl.BlockSpec((kk, tm), lambda i: (0, i))
    out = pl.pallas_call(
        _conv_bn_lrelu_pool_kernel,
        out_shape=jax.ShapeDtypeStruct((cout, mp), jnp.bfloat16),
        grid_spec=pltpu.PrefetchScalarGridSpec(
            num_scalar_prefetch=0,
            grid=(mp // tm,),
            in_specs=[
                patch_spec, patch_spec, patch_spec, patch_spec,
                pl.BlockSpec((cout, kk), lambda i: (0, 0)),
                pl.BlockSpec((cout, 1), lambda i: (0, 0)),
            ],
            out_specs=pl.BlockSpec((cout, tm), lambda i: (0, i)),
        ),
        compiler_params=pltpu.CompilerParams(
            dimension_semantics=("parallel",),
            vmem_limit_bytes=VMEM_LIMIT,
        ),
    )(p0, p1, p2, p3, p["wT"], p["bias"])
    if mp > m:
        out = out[:, :m]
    return out.reshape(cout, n, hh, wh)


def mlp_forward(x, m):
    """Fused MLP head; all operands are tiny (feat = 16*ms*16, hid = 2*ms)."""
    n = x.shape[0]
    return pl.pallas_call(
        _mlp_kernel,
        out_shape=jax.ShapeDtypeStruct((n, 2), jnp.float32),
        in_specs=[pl.BlockSpec(memory_space=pltpu.MemorySpace.VMEM)] * 6,
        out_specs=pl.BlockSpec(memory_space=pltpu.MemorySpace.VMEM),
        compiler_params=pltpu.CompilerParams(vmem_limit_bytes=VMEM_LIMIT),
    )(x, m["w1"], m["scale1"], m["bias1"], m["w2"], m["b2"])


def _fold_bn(conv_bias, gamma, beta, mean, var):
    s = gamma / jnp.sqrt(var + EPS)
    return s, (conv_bias - mean) * s + beta


def init_params(key, model_scale):
    """Deterministic synthetic parameters matching the module's shapes.
    (A real torch conv weight (Cout,Cin,kh,kw) maps to the (Cout, kh*kw*Cin)
     layout used here via transpose(0,2,3,1).reshape; the BN scale is then
     folded in per output channel before the bf16 cast.)"""
    ms = model_scale
    conv_cfg = [(3, ms, 5), (ms, 2 * ms, 3), (2 * ms, 4 * ms, 3),
                (4 * ms, 8 * ms, 3), (8 * ms, 16 * ms, 3)]
    params = {"convs": []}
    for cin, cout, k in conv_cfg:
        key, kw, kb, kg, kbe, km, kv = jax.random.split(key, 7)
        w = jax.random.normal(kw, (k, k, cin, cout), jnp.float32) * 0.05
        b = jax.random.normal(kb, (cout,), jnp.float32) * 0.05
        gamma = 1.0 + 0.1 * jax.random.normal(kg, (cout,), jnp.float32)
        beta = 0.1 * jax.random.normal(kbe, (cout,), jnp.float32)
        mean = 0.1 * jax.random.normal(km, (cout,), jnp.float32)
        var = 1.0 + 0.1 * jnp.abs(jax.random.normal(kv, (cout,), jnp.float32))
        scale, bias = _fold_bn(b, gamma, beta, mean, var)
        w_km = w.reshape(k * k * cin, cout)              # rows ordered (dy, dx, ci)
        w_t = jnp.transpose(w_km * scale[None, :]).astype(jnp.bfloat16)
        params["convs"].append({"k": k, "wT": w_t,
                                "bias": bias.reshape(cout, 1)})

    feat = 16 * ms * 4 * 4
    hid = 2 * ms
    key, kw1, kb1, kg1, kbe1, km1, kv1, kw2, kb2 = jax.random.split(key, 9)
    w1 = jax.random.normal(kw1, (feat, hid), jnp.float32) * 0.05
    b1 = jax.random.normal(kb1, (hid,), jnp.float32) * 0.05
    gamma1 = 1.0 + 0.1 * jax.random.normal(kg1, (hid,), jnp.float32)
    beta1 = 0.1 * jax.random.normal(kbe1, (hid,), jnp.float32)
    mean1 = 0.1 * jax.random.normal(km1, (hid,), jnp.float32)
    var1 = 1.0 + 0.1 * jnp.abs(jax.random.normal(kv1, (hid,), jnp.float32))
    s1, bb1 = _fold_bn(b1, gamma1, beta1, mean1, var1)
    w2 = jax.random.normal(kw2, (hid, 2), jnp.float32) * 0.05
    b2 = jax.random.normal(kb2, (2,), jnp.float32) * 0.05
    params["mlp"] = {"w1": w1.astype(jnp.bfloat16),
                     "scale1": s1.reshape(1, hid),
                     "bias1": bb1.reshape(1, hid),
                     "w2": w2.astype(jnp.bfloat16),
                     "b2": b2.reshape(1, 2)}
    return params


def classifier_forward(x_nchw, params):
    # NCHW input -> channel-major (C, N, H, W) bf16 (the layout the conv
    # kernels produce/consume); one small XLA transpose+cast at entry.
    x = jnp.transpose(x_nchw, (1, 0, 2, 3)).astype(jnp.bfloat16)
    for p in params["convs"]:
        x = conv_block(x, p)
    # PyTorch's x.view(N, -1) on an NCHW tensor flattens per-sample in
    # (C, H, W) order: transpose the tiny (C, N, 4, 4) tail accordingly.
    c, n, hh, wh = x.shape
    x = jnp.transpose(x, (1, 0, 2, 3)).reshape(n, c * hh * wh)
    return mlp_forward(x, params["mlp"])
    # TODO(synk): torchvision preprocessing transforms and pretrained .pkl
    # weight loading live outside forward() and are not reproduced here.


if __name__ == "__main__":
    key = jax.random.PRNGKey(0)
    kp, kx = jax.random.split(key)
    model_scale = 4          # module default is 16; small synthetic scale for test
    batch = 2
    params = init_params(kp, model_scale)
    # 128x128 input is required by the module (Linear in_features = 16*ms*4*4).
    x = jax.random.normal(kx, (batch, 3, 128, 128), jnp.float32)

    fwd = jax.jit(functools.partial(classifier_forward, params=params))
    out = jax.block_until_ready(fwd(x))

    assert out.shape == (batch, 2), out.shape
    assert bool(jnp.all(jnp.isfinite(out)))
    assert bool(jnp.allclose(jnp.sum(out, axis=1), 1.0, atol=1e-5))
    print("KERNEL_OK")
</pallas_src>

<mosaic_0001>
module attributes {stable_mosaic.version = 11 : i64} {
  func.func @_conv_bn_lrelu_pool_kernel(%arg0: i32, %arg1: memref<75x2048xbf16, #tpu.memory_space<vmem>>, %arg2: memref<75x2048xbf16, #tpu.memory_space<vmem>>, %arg3: memref<75x2048xbf16, #tpu.memory_space<vmem>>, %arg4: memref<75x2048xbf16, #tpu.memory_space<vmem>>, %arg5: memref<4x75xbf16, #tpu.memory_space<vmem>>, %arg6: memref<4x1xf32, #tpu.memory_space<vmem>>, %arg7: memref<4x2048xbf16, #tpu.memory_space<vmem>>) attributes {dimension_semantics = [#tpu.dimension_semantics<parallel>], iteration_bounds = array<i64: 4>, scalar_prefetch = 0 : i64, scratch_operands = 0 : i64, tpu.core_type = #tpu.core_type<tc>, window_params = [{transform_indices = @transform_0, window_bounds = array<i64: 75, 2048>}, {transform_indices = @transform_1, window_bounds = array<i64: 75, 2048>}, {transform_indices = @transform_2, window_bounds = array<i64: 75, 2048>}, {transform_indices = @transform_3, window_bounds = array<i64: 75, 2048>}, {pipeline_mode = #tpu.pipeline_mode<synchronous>, transform_indices = @transform_4, window_bounds = array<i64: 4, 75>}, {pipeline_mode = #tpu.pipeline_mode<synchronous>, transform_indices = @transform_5, window_bounds = array<i64: 4, 1>}, {transform_indices = @transform_6, window_bounds = array<i64: 4, 2048>}]} {
    %c0 = arith.constant 0 : index
    %c0_0 = arith.constant 0 : index
    %0 = vector.load %arg5[%c0, %c0_0] : memref<4x75xbf16, #tpu.memory_space<vmem>>, vector<4x75xbf16>
    %c0_1 = arith.constant 0 : index
    %c0_2 = arith.constant 0 : index
    %1 = vector.load %arg1[%c0_1, %c0_2] : memref<75x2048xbf16, #tpu.memory_space<vmem>>, vector<75x2048xbf16>
    %cst = arith.constant dense<0.000000e+00> : vector<4x2048xf32>
    %2 = tpu.matmul %0, %1, %cst {dimension_numbers = #tpu.dot_dimension_numbers<[1], [0], [0], [1], [0, 0, 1, 1], [], []>} : vector<4x75xbf16>, vector<75x2048xbf16>, vector<4x2048xf32> -> vector<4x2048xf32>
    %c0_3 = arith.constant 0 : index
    %c0_4 = arith.constant 0 : index
    %3 = vector.load %arg2[%c0_3, %c0_4] : memref<75x2048xbf16, #tpu.memory_space<vmem>>, vector<75x2048xbf16>
    %cst_5 = arith.constant dense<0.000000e+00> : vector<4x2048xf32>
    %4 = tpu.matmul %0, %3, %cst_5 {dimension_numbers = #tpu.dot_dimension_numbers<[1], [0], [0], [1], [0, 0, 1, 1], [], []>} : vector<4x75xbf16>, vector<75x2048xbf16>, vector<4x2048xf32> -> vector<4x2048xf32>
    %5 = arith.maximumf %2, %4 : vector<4x2048xf32>
    %c0_6 = arith.constant 0 : index
    %c0_7 = arith.constant 0 : index
    %6 = vector.load %arg3[%c0_6, %c0_7] : memref<75x2048xbf16, #tpu.memory_space<vmem>>, vector<75x2048xbf16>
    %cst_8 = arith.constant dense<0.000000e+00> : vector<4x2048xf32>
    %7 = tpu.matmul %0, %6, %cst_8 {dimension_numbers = #tpu.dot_dimension_numbers<[1], [0], [0], [1], [0, 0, 1, 1], [], []>} : vector<4x75xbf16>, vector<75x2048xbf16>, vector<4x2048xf32> -> vector<4x2048xf32>
    %8 = arith.maximumf %5, %7 : vector<4x2048xf32>
    %c0_9 = arith.constant 0 : index
    %c0_10 = arith.constant 0 : index
    %9 = vector.load %arg4[%c0_9, %c0_10] : memref<75x2048xbf16, #tpu.memory_space<vmem>>, vector<75x2048xbf16>
    %cst_11 = arith.constant dense<0.000000e+00> : vector<4x2048xf32>
    %10 = tpu.matmul %0, %9, %cst_11 {dimension_numbers = #tpu.dot_dimension_numbers<[1], [0], [0], [1], [0, 0, 1, 1], [], []>} : vector<4x75xbf16>, vector<75x2048xbf16>, vector<4x2048xf32> -> vector<4x2048xf32>
    %11 = arith.maximumf %8, %10 : vector<4x2048xf32>
    %c0_12 = arith.constant 0 : index
    %c0_13 = arith.constant 0 : index
    %12 = vector.load %arg6[%c0_12, %c0_13] : memref<4x1xf32, #tpu.memory_space<vmem>>, vector<4x1xf32>
    %13 = vector.broadcast %12 : vector<4x1xf32> to vector<4x2048xf32>
    %14 = arith.addf %11, %13 : vector<4x2048xf32>
    %cst_14 = arith.constant 0.000000e+00 : f32
    %15 = vector.broadcast %cst_14 : f32 to vector<4x2048xf32>
    %16 = arith.cmpf oge, %14, %15 : vector<4x2048xf32>
    %cst_15 = arith.constant 0.00999999977 : f32
    %17 = vector.broadcast %cst_15 : f32 to vector<4x2048xf32>
    %18 = arith.mulf %17, %14 : vector<4x2048xf32>
    %19 = arith.select %16, %14, %18 : vector<4x2048xi1>, vector<4x2048xf32>
    %20 = arith.truncf %19 : vector<4x2048xf32> to vector<4x2048xbf16>
    %c0_16 = arith.constant 0 : index
    %c0_17 = arith.constant 0 : index
    %21 = vector.load %arg7[%c0_16, %c0_17] : memref<4x2048xbf16, #tpu.memory_space<vmem>>, vector<4x2048xbf16>
    tpu.vector_store %arg7[%c0_16, %c0_17], %20 {strides = array<i32>} : memref<4x2048xbf16, #tpu.memory_space<vmem>>, vector<4x2048xbf16>,
    return
  }
  func.func @transform_0(%arg0: i32) -> (i32, i32) {
    %c0_i32 = arith.constant 0 : i32
    %c0_i32_0 = arith.constant 0 : i32
    return %c0_i32, %arg0 : i32, i32
  }
  func.func @transform_1(%arg0: i32) -> (i32, i32) {
    %c0_i32 = arith.constant 0 : i32
    %c0_i32_0 = arith.constant 0 : i32
    return %c0_i32, %arg0 : i32, i32
  }
  func.func @transform_2(%arg0: i32) -> (i32, i32) {
    %c0_i32 = arith.constant 0 : i32
    %c0_i32_0 = arith.constant 0 : i32
    return %c0_i32, %arg0 : i32, i32
  }
  func.func @transform_3(%arg0: i32) -> (i32, i32) {
    %c0_i32 = arith.constant 0 : i32
    %c0_i32_0 = arith.constant 0 : i32
    return %c0_i32, %arg0 : i32, i32
  }
  func.func @transform_4(%arg0: i32) -> (i32, i32) {
    %c0_i32 = arith.constant 0 : i32
    %c0_i32_0 = arith.constant 0 : i32
    %c0_i32_1 = arith.constant 0 : i32
    return %c0_i32, %c0_i32_0 : i32, i32
  }
  func.func @transform_5(%arg0: i32) -> (i32, i32) {
    %c0_i32 = arith.constant 0 : i32
    %c0_i32_0 = arith.constant 0 : i32
    %c0_i32_1 = arith.constant 0 : i32
    return %c0_i32, %c0_i32_0 : i32, i32
  }
  func.func @transform_6(%arg0: i32) -> (i32, i32) {
    %c0_i32 = arith.constant 0 : i32
    %c0_i32_0 = arith.constant 0 : i32
    return %c0_i32, %arg0 : i32, i32
  }
}

module attributes {stable_mosaic.version = 11 : i64} {
  func.func @_conv_bn_lrelu_pool_kernel(%arg0: i32, %arg1: memref<36x1024xbf16, #tpu.memory_space<vmem>>, %arg2: memref<36x1024xbf16, #tpu.memory_space<vmem>>, %arg3: memref<36x1024xbf16, #tpu.memory_space<vmem>>, %arg4: memref<36x1024xbf16, #tpu.memory_space<vmem>>, %arg5: memref<8x36xbf16, #tpu.memory_space<vmem>>, %arg6: memref<8x1xf32, #tpu.memory_space<vmem>>, %arg7: memref<8x1024xbf16, #tpu.memory_space<vmem>>) attributes {dimension_semantics = [#tpu.dimension_semantics<parallel>], iteration_bounds = array<i64: 2>, scalar_prefetch = 0 : i64, scratch_operands = 0 : i64, tpu.core_type = #tpu.core_type<tc>, window_params = [{transform_indices = @transform_0, window_bounds = array<i64: 36, 1024>}, {transform_indices = @transform_1, window_bounds = array<i64: 36, 1024>}, {transform_indices = @transform_2, window_bounds = array<i64: 36, 1024>}, {transform_indices = @transform_3, window_bounds = array<i64: 36, 1024>}, {pipeline_mode = #tpu.pipeline_mode<synchronous>, transform_indices = @transform_4, window_bounds = array<i64: 8, 36>}, {pipeline_mode = #tpu.pipeline_mode<synchronous>, transform_indices = @transform_5, window_bounds = array<i64: 8, 1>}, {transform_indices = @transform_6, window_bounds = array<i64: 8, 1024>}]} {
    %c0 = arith.constant 0 : index
    %c0_0 = arith.constant 0 : index
    %0 = vector.load %arg5[%c0, %c0_0] : memref<8x36xbf16, #tpu.memory_space<vmem>>, vector<8x36xbf16>
    %c0_1 = arith.constant 0 : index
    %c0_2 = arith.constant 0 : index
    %1 = vector.load %arg1[%c0_1, %c0_2] : memref<36x1024xbf16, #tpu.memory_space<vmem>>, vector<36x1024xbf16>
    %cst = arith.constant dense<0.000000e+00> : vector<8x1024xf32>
    %2 = tpu.matmul %0, %1, %cst {dimension_numbers = #tpu.dot_dimension_numbers<[1], [0], [0], [1], [0, 0, 1, 1], [], []>} : vector<8x36xbf16>, vector<36x1024xbf16>, vector<8x1024xf32> -> vector<8x1024xf32>
    %c0_3 = arith.constant 0 : index
    %c0_4 = arith.constant 0 : index
    %3 = vector.load %arg2[%c0_3, %c0_4] : memref<36x1024xbf16, #tpu.memory_space<vmem>>, vector<36x1024xbf16>
    %cst_5 = arith.constant dense<0.000000e+00> : vector<8x1024xf32>
    %4 = tpu.matmul %0, %3, %cst_5 {dimension_numbers = #tpu.dot_dimension_numbers<[1], [0], [0], [1], [0, 0, 1, 1], [], []>} : vector<8x36xbf16>, vector<36x1024xbf16>, vector<8x1024xf32> -> vector<8x1024xf32>
    %5 = arith.maximumf %2, %4 : vector<8x1024xf32>
    %c0_6 = arith.constant 0 : index
    %c0_7 = arith.constant 0 : index
    %6 = vector.load %arg3[%c0_6, %c0_7] : memref<36x1024xbf16, #tpu.memory_space<vmem>>, vector<36x1024xbf16>
    %cst_8 = arith.constant dense<0.000000e+00> : vector<8x1024xf32>
    %7 = tpu.matmul %0, %6, %cst_8 {dimension_numbers = #tpu.dot_dimension_numbers<[1], [0], [0], [1], [0, 0, 1, 1], [], []>} : vector<8x36xbf16>, vector<36x1024xbf16>, vector<8x1024xf32> -> vector<8x1024xf32>
    %8 = arith.maximumf %5, %7 : vector<8x1024xf32>
    %c0_9 = arith.constant 0 : index
    %c0_10 = arith.constant 0 : index
    %9 = vector.load %arg4[%c0_9, %c0_10] : memref<36x1024xbf16, #tpu.memory_space<vmem>>, vector<36x1024xbf16>
    %cst_11 = arith.constant dense<0.000000e+00> : vector<8x1024xf32>
    %10 = tpu.matmul %0, %9, %cst_11 {dimension_numbers = #tpu.dot_dimension_numbers<[1], [0], [0], [1], [0, 0, 1, 1], [], []>} : vector<8x36xbf16>, vector<36x1024xbf16>, vector<8x1024xf32> -> vector<8x1024xf32>
    %11 = arith.maximumf %8, %10 : vector<8x1024xf32>
    %c0_12 = arith.constant 0 : index
    %c0_13 = arith.constant 0 : index
    %12 = vector.load %arg6[%c0_12, %c0_13] : memref<8x1xf32, #tpu.memory_space<vmem>>, vector<8x1xf32>
    %13 = vector.broadcast %12 : vector<8x1xf32> to vector<8x1024xf32>
    %14 = arith.addf %11, %13 : vector<8x1024xf32>
    %cst_14 = arith.constant 0.000000e+00 : f32
    %15 = vector.broadcast %cst_14 : f32 to vector<8x1024xf32>
    %16 = arith.cmpf oge, %14, %15 : vector<8x1024xf32>
    %cst_15 = arith.constant 0.00999999977 : f32
    %17 = vector.broadcast %cst_15 : f32 to vector<8x1024xf32>
    %18 = arith.mulf %17, %14 : vector<8x1024xf32>
    %19 = arith.select %16, %14, %18 : vector<8x1024xi1>, vector<8x1024xf32>
    %20 = arith.truncf %19 : vector<8x1024xf32> to vector<8x1024xbf16>
    %c0_16 = arith.constant 0 : index
    %c0_17 = arith.constant 0 : index
    %21 = vector.load %arg7[%c0_16, %c0_17] : memref<8x1024xbf16, #tpu.memory_space<vmem>>, vector<8x1024xbf16>
    tpu.vector_store %arg7[%c0_16, %c0_17], %20 {strides = array<i32>} : memref<8x1024xbf16, #tpu.memory_space<vmem>>, vector<8x1024xbf16>,
    return
  }
  func.func @transform_0(%arg0: i32) -> (i32, i32) {
    %c0_i32 = arith.constant 0 : i32
    %c0_i32_0 = arith.constant 0 : i32
    return %c0_i32, %arg0 : i32, i32
  }
  func.func @transform_1(%arg0: i32) -> (i32, i32) {
    %c0_i32 = arith.constant 0 : i32
    %c0_i32_0 = arith.constant 0 : i32
    return %c0_i32, %arg0 : i32, i32
  }
  func.func @transform_2(%arg0: i32) -> (i32, i32) {
    %c0_i32 = arith.constant 0 : i32
    %c0_i32_0 = arith.constant 0 : i32
    return %c0_i32, %arg0 : i32, i32
  }
  func.func @transform_3(%arg0: i32) -> (i32, i32) {
    %c0_i32 = arith.constant 0 : i32
    %c0_i32_0 = arith.constant 0 : i32
    return %c0_i32, %arg0 : i32, i32
  }
  func.func @transform_4(%arg0: i32) -> (i32, i32) {
    %c0_i32 = arith.constant 0 : i32
    %c0_i32_0 = arith.constant 0 : i32
    %c0_i32_1 = arith.constant 0 : i32
    return %c0_i32, %c0_i32_0 : i32, i32
  }
  func.func @transform_5(%arg0: i32) -> (i32, i32) {
    %c0_i32 = arith.constant 0 : i32
    %c0_i32_0 = arith.constant 0 : i32
    %c0_i32_1 = arith.constant 0 : i32
    return %c0_i32, %c0_i32_0 : i32, i32
  }
  func.func @transform_6(%arg0: i32) -> (i32, i32) {
    %c0_i32 = arith.constant 0 : i32
    %c0_i32_0 = arith.constant 0 : i32
    return %c0_i32, %arg0 : i32, i32
  }
}

module attributes {stable_mosaic.version = 11 : i64} {
  func.func @_conv_bn_lrelu_pool_kernel(%arg0: i32, %arg1: memref<72x256xbf16, #tpu.memory_space<vmem>>, %arg2: memref<72x256xbf16, #tpu.memory_space<vmem>>, %arg3: memref<72x256xbf16, #tpu.memory_space<vmem>>, %arg4: memref<72x256xbf16, #tpu.memory_space<vmem>>, %arg5: memref<16x72xbf16, #tpu.memory_space<vmem>>, %arg6: memref<16x1xf32, #tpu.memory_space<vmem>>, %arg7: memref<16x256xbf16, #tpu.memory_space<vmem>>) attributes {dimension_semantics = [#tpu.dimension_semantics<parallel>], iteration_bounds = array<i64: 2>, scalar_prefetch = 0 : i64, scratch_operands = 0 : i64, tpu.core_type = #tpu.core_type<tc>, window_params = [{transform_indices = @transform_0, window_bounds = array<i64: 72, 256>}, {transform_indices = @transform_1, window_bounds = array<i64: 72, 256>}, {transform_indices = @transform_2, window_bounds = array<i64: 72, 256>}, {transform_indices = @transform_3, window_bounds = array<i64: 72, 256>}, {pipeline_mode = #tpu.pipeline_mode<synchronous>, transform_indices = @transform_4, window_bounds = array<i64: 16, 72>}, {pipeline_mode = #tpu.pipeline_mode<synchronous>, transform_indices = @transform_5, window_bounds = array<i64: 16, 1>}, {transform_indices = @transform_6, window_bounds = array<i64: 16, 256>}]} {
    %c0 = arith.constant 0 : index
    %c0_0 = arith.constant 0 : index
    %0 = vector.load %arg5[%c0, %c0_0] : memref<16x72xbf16, #tpu.memory_space<vmem>>, vector<16x72xbf16>
    %c0_1 = arith.constant 0 : index
    %c0_2 = arith.constant 0 : index
    %1 = vector.load %arg1[%c0_1, %c0_2] : memref<72x256xbf16, #tpu.memory_space<vmem>>, vector<72x256xbf16>
    %cst = arith.constant dense<0.000000e+00> : vector<16x256xf32>
    %2 = tpu.matmul %0, %1, %cst {dimension_numbers = #tpu.dot_dimension_numbers<[1], [0], [0], [1], [0, 0, 1, 1], [], []>} : vector<16x72xbf16>, vector<72x256xbf16>, vector<16x256xf32> -> vector<16x256xf32>
    %c0_3 = arith.constant 0 : index
    %c0_4 = arith.constant 0 : index
    %3 = vector.load %arg2[%c0_3, %c0_4] : memref<72x256xbf16, #tpu.memory_space<vmem>>, vector<72x256xbf16>
    %cst_5 = arith.constant dense<0.000000e+00> : vector<16x256xf32>
    %4 = tpu.matmul %0, %3, %cst_5 {dimension_numbers = #tpu.dot_dimension_numbers<[1], [0], [0], [1], [0, 0, 1, 1], [], []>} : vector<16x72xbf16>, vector<72x256xbf16>, vector<16x256xf32> -> vector<16x256xf32>
    %5 = arith.maximumf %2, %4 : vector<16x256xf32>
    %c0_6 = arith.constant 0 : index
    %c0_7 = arith.constant 0 : index
    %6 = vector.load %arg3[%c0_6, %c0_7] : memref<72x256xbf16, #tpu.memory_space<vmem>>, vector<72x256xbf16>
    %cst_8 = arith.constant dense<0.000000e+00> : vector<16x256xf32>
    %7 = tpu.matmul %0, %6, %cst_8 {dimension_numbers = #tpu.dot_dimension_numbers<[1], [0], [0], [1], [0, 0, 1, 1], [], []>} : vector<16x72xbf16>, vector<72x256xbf16>, vector<16x256xf32> -> vector<16x256xf32>
    %8 = arith.maximumf %5, %7 : vector<16x256xf32>
    %c0_9 = arith.constant 0 : index
    %c0_10 = arith.constant 0 : index
    %9 = vector.load %arg4[%c0_9, %c0_10] : memref<72x256xbf16, #tpu.memory_space<vmem>>, vector<72x256xbf16>
    %cst_11 = arith.constant dense<0.000000e+00> : vector<16x256xf32>
    %10 = tpu.matmul %0, %9, %cst_11 {dimension_numbers = #tpu.dot_dimension_numbers<[1], [0], [0], [1], [0, 0, 1, 1], [], []>} : vector<16x72xbf16>, vector<72x256xbf16>, vector<16x256xf32> -> vector<16x256xf32>
    %11 = arith.maximumf %8, %10 : vector<16x256xf32>
    %c0_12 = arith.constant 0 : index
    %c0_13 = arith.constant 0 : index
    %12 = vector.load %arg6[%c0_12, %c0_13] : memref<16x1xf32, #tpu.memory_space<vmem>>, vector<16x1xf32>
    %13 = vector.broadcast %12 : vector<16x1xf32> to vector<16x256xf32>
    %14 = arith.addf %11, %13 : vector<16x256xf32>
    %cst_14 = arith.constant 0.000000e+00 : f32
    %15 = vector.broadcast %cst_14 : f32 to vector<16x256xf32>
    %16 = arith.cmpf oge, %14, %15 : vector<16x256xf32>
    %cst_15 = arith.constant 0.00999999977 : f32
    %17 = vector.broadcast %cst_15 : f32 to vector<16x256xf32>
    %18 = arith.mulf %17, %14 : vector<16x256xf32>
    %19 = arith.select %16, %14, %18 : vector<16x256xi1>, vector<16x256xf32>
    %20 = arith.truncf %19 : vector<16x256xf32> to vector<16x256xbf16>
    %c0_16 = arith.constant 0 : index
    %c0_17 = arith.constant 0 : index
    %21 = vector.load %arg7[%c0_16, %c0_17] : memref<16x256xbf16, #tpu.memory_space<vmem>>, vector<16x256xbf16>
    tpu.vector_store %arg7[%c0_16, %c0_17], %20 {strides = array<i32>} : memref<16x256xbf16, #tpu.memory_space<vmem>>, vector<16x256xbf16>,
    return
  }
  func.func @transform_0(%arg0: i32) -> (i32, i32) {
    %c0_i32 = arith.constant 0 : i32
    %c0_i32_0 = arith.constant 0 : i32
    return %c0_i32, %arg0 : i32, i32
  }
  func.func @transform_1(%arg0: i32) -> (i32, i32) {
    %c0_i32 = arith.constant 0 : i32
    %c0_i32_0 = arith.constant 0 : i32
    return %c0_i32, %arg0 : i32, i32
  }
  func.func @transform_2(%arg0: i32) -> (i32, i32) {
    %c0_i32 = arith.constant 0 : i32
    %c0_i32_0 = arith.constant 0 : i32
    return %c0_i32, %arg0 : i32, i32
  }
  func.func @transform_3(%arg0: i32) -> (i32, i32) {
    %c0_i32 = arith.constant 0 : i32
    %c0_i32_0 = arith.constant 0 : i32
    return %c0_i32, %arg0 : i32, i32
  }
  func.func @transform_4(%arg0: i32) -> (i32, i32) {
    %c0_i32 = arith.constant 0 : i32
    %c0_i32_0 = arith.constant 0 : i32
    %c0_i32_1 = arith.constant 0 : i32
    return %c0_i32, %c0_i32_0 : i32, i32
  }
  func.func @transform_5(%arg0: i32) -> (i32, i32) {
    %c0_i32 = arith.constant 0 : i32
    %c0_i32_0 = arith.constant 0 : i32
    %c0_i32_1 = arith.constant 0 : i32
    return %c0_i32, %c0_i32_0 : i32, i32
  }
  func.func @transform_6(%arg0: i32) -> (i32, i32) {
    %c0_i32 = arith.constant 0 : i32
    %c0_i32_0 = arith.constant 0 : i32
    return %c0_i32, %arg0 : i32, i32
  }
}

module attributes {stable_mosaic.version = 11 : i64} {
  func.func @_conv_bn_lrelu_pool_kernel(%arg0: i32, %arg1: memref<144x128xbf16, #tpu.memory_space<vmem>>, %arg2: memref<144x128xbf16, #tpu.memory_space<vmem>>, %arg3: memref<144x128xbf16, #tpu.memory_space<vmem>>, %arg4: memref<144x128xbf16, #tpu.memory_space<vmem>>, %arg5: memref<32x144xbf16, #tpu.memory_space<vmem>>, %arg6: memref<32x1xf32, #tpu.memory_space<vmem>>, %arg7: memref<32x128xbf16, #tpu.memory_space<vmem>>) attributes {dimension_semantics = [#tpu.dimension_semantics<parallel>], iteration_bounds = array<i64: 1>, scalar_prefetch = 0 : i64, scratch_operands = 0 : i64, tpu.core_type = #tpu.core_type<tc>, window_params = [{transform_indices = @transform_0, window_bounds = array<i64: 144, 128>}, {transform_indices = @transform_1, window_bounds = array<i64: 144, 128>}, {transform_indices = @transform_2, window_bounds = array<i64: 144, 128>}, {transform_indices = @transform_3, window_bounds = array<i64: 144, 128>}, {pipeline_mode = #tpu.pipeline_mode<synchronous>, transform_indices = @transform_4, window_bounds = array<i64: 32, 144>}, {pipeline_mode = #tpu.pipeline_mode<synchronous>, transform_indices = @transform_5, window_bounds = array<i64: 32, 1>}, {transform_indices = @transform_6, window_bounds = array<i64: 32, 128>}]} {
    %c0 = arith.constant 0 : index
    %c0_0 = arith.constant 0 : index
    %0 = vector.load %arg5[%c0, %c0_0] : memref<32x144xbf16, #tpu.memory_space<vmem>>, vector<32x144xbf16>
    %c0_1 = arith.constant 0 : index
    %c0_2 = arith.constant 0 : index
    %1 = vector.load %arg1[%c0_1, %c0_2] : memref<144x128xbf16, #tpu.memory_space<vmem>>, vector<144x128xbf16>
    %cst = arith.constant dense<0.000000e+00> : vector<32x128xf32>
    %2 = tpu.matmul %0, %1, %cst {dimension_numbers = #tpu.dot_dimension_numbers<[1], [0], [0], [1], [0, 0, 1, 1], [], []>} : vector<32x144xbf16>, vector<144x128xbf16>, vector<32x128xf32> -> vector<32x128xf32>
    %c0_3 = arith.constant 0 : index
    %c0_4 = arith.constant 0 : index
    %3 = vector.load %arg2[%c0_3, %c0_4] : memref<144x128xbf16, #tpu.memory_space<vmem>>, vector<144x128xbf16>
    %cst_5 = arith.constant dense<0.000000e+00> : vector<32x128xf32>
    %4 = tpu.matmul %0, %3, %cst_5 {dimension_numbers = #tpu.dot_dimension_numbers<[1], [0], [0], [1], [0, 0, 1, 1], [], []>} : vector<32x144xbf16>, vector<144x128xbf16>, vector<32x128xf32> -> vector<32x128xf32>
    %5 = arith.maximumf %2, %4 : vector<32x128xf32>
    %c0_6 = arith.constant 0 : index
    %c0_7 = arith.constant 0 : index
    %6 = vector.load %arg3[%c0_6, %c0_7] : memref<144x128xbf16, #tpu.memory_space<vmem>>, vector<144x128xbf16>
    %cst_8 = arith.constant dense<0.000000e+00> : vector<32x128xf32>
    %7 = tpu.matmul %0, %6, %cst_8 {dimension_numbers = #tpu.dot_dimension_numbers<[1], [0], [0], [1], [0, 0, 1, 1], [], []>} : vector<32x144xbf16>, vector<144x128xbf16>, vector<32x128xf32> -> vector<32x128xf32>
    %8 = arith.maximumf %5, %7 : vector<32x128xf32>
    %c0_9 = arith.constant 0 : index
    %c0_10 = arith.constant 0 : index
    %9 = vector.load %arg4[%c0_9, %c0_10] : memref<144x128xbf16, #tpu.memory_space<vmem>>, vector<144x128xbf16>
    %cst_11 = arith.constant dense<0.000000e+00> : vector<32x128xf32>
    %10 = tpu.matmul %0, %9, %cst_11 {dimension_numbers = #tpu.dot_dimension_numbers<[1], [0], [0], [1], [0, 0, 1, 1], [], []>} : vector<32x144xbf16>, vector<144x128xbf16>, vector<32x128xf32> -> vector<32x128xf32>
    %11 = arith.maximumf %8, %10 : vector<32x128xf32>
    %c0_12 = arith.constant 0 : index
    %c0_13 = arith.constant 0 : index
    %12 = vector.load %arg6[%c0_12, %c0_13] : memref<32x1xf32, #tpu.memory_space<vmem>>, vector<32x1xf32>
    %13 = vector.broadcast %12 : vector<32x1xf32> to vector<32x128xf32>
    %14 = arith.addf %11, %13 : vector<32x128xf32>
    %cst_14 = arith.constant 0.000000e+00 : f32
    %15 = vector.broadcast %cst_14 : f32 to vector<32x128xf32>
    %16 = arith.cmpf oge, %14, %15 : vector<32x128xf32>
    %cst_15 = arith.constant 0.00999999977 : f32
    %17 = vector.broadcast %cst_15 : f32 to vector<32x128xf32>
    %18 = arith.mulf %17, %14 : vector<32x128xf32>
    %19 = arith.select %16, %14, %18 : vector<32x128xi1>, vector<32x128xf32>
    %20 = arith.truncf %19 : vector<32x128xf32> to vector<32x128xbf16>
    %c0_16 = arith.constant 0 : index
    %c0_17 = arith.constant 0 : index
    %21 = vector.load %arg7[%c0_16, %c0_17] : memref<32x128xbf16, #tpu.memory_space<vmem>>, vector<32x128xbf16>
    tpu.vector_store %arg7[%c0_16, %c0_17], %20 {strides = array<i32>} : memref<32x128xbf16, #tpu.memory_space<vmem>>, vector<32x128xbf16>,
    return
  }
  func.func @transform_0(%arg0: i32) -> (i32, i32) {
    %c0_i32 = arith.constant 0 : i32
    %c0_i32_0 = arith.constant 0 : i32
    return %c0_i32, %arg0 : i32, i32
  }
  func.func @transform_1(%arg0: i32) -> (i32, i32) {
    %c0_i32 = arith.constant 0 : i32
    %c0_i32_0 = arith.constant 0 : i32
    return %c0_i32, %arg0 : i32, i32
  }
  func.func @transform_2(%arg0: i32) -> (i32, i32) {
    %c0_i32 = arith.constant 0 : i32
    %c0_i32_0 = arith.constant 0 : i32
    return %c0_i32, %arg0 : i32, i32
  }
  func.func @transform_3(%arg0: i32) -> (i32, i32) {
    %c0_i32 = arith.constant 0 : i32
    %c0_i32_0 = arith.constant 0 : i32
    return %c0_i32, %arg0 : i32, i32
  }
  func.func @transform_4(%arg0: i32) -> (i32, i32) {
    %c0_i32 = arith.constant 0 : i32
    %c0_i32_0 = arith.constant 0 : i32
    %c0_i32_1 = arith.constant 0 : i32
    return %c0_i32, %c0_i32_0 : i32, i32
  }
  func.func @transform_5(%arg0: i32) -> (i32, i32) {
    %c0_i32 = arith.constant 0 : i32
    %c0_i32_0 = arith.constant 0 : i32
    %c0_i32_1 = arith.constant 0 : i32
    return %c0_i32, %c0_i32_0 : i32, i32
  }
  func.func @transform_6(%arg0: i32) -> (i32, i32) {
    %c0_i32 = arith.constant 0 : i32
    %c0_i32_0 = arith.constant 0 : i32
    return %c0_i32, %arg0 : i32, i32
  }
}

module attributes {stable_mosaic.version = 11 : i64} {
  func.func @_mlp_kernel(%arg0: memref<2x1024xbf16, #tpu.memory_space<vmem>>, %arg1: memref<1024x8xbf16, #tpu.memory_space<vmem>>, %arg2: memref<1x8xf32, #tpu.memory_space<vmem>>, %arg3: memref<1x8xf32, #tpu.memory_space<vmem>>, %arg4: memref<8x2xbf16, #tpu.memory_space<vmem>>, %arg5: memref<1x2xf32, #tpu.memory_space<vmem>>, %arg6: memref<2x2xf32, #tpu.memory_space<vmem>>) attributes {dimension_semantics = [], scalar_prefetch = 0 : i64, scratch_operands = 0 : i64, tpu.core_type = #tpu.core_type<tc>} {
    %c0 = arith.constant 0 : index
    %c0_0 = arith.constant 0 : index
    %0 = vector.load %arg0[%c0, %c0_0] : memref<2x1024xbf16, #tpu.memory_space<vmem>>, vector<2x1024xbf16>
    %c0_1 = arith.constant 0 : index
    %c0_2 = arith.constant 0 : index
    %1 = vector.load %arg1[%c0_1, %c0_2] : memref<1024x8xbf16, #tpu.memory_space<vmem>>, vector<1024x8xbf16>
    %cst = arith.constant dense<0.000000e+00> : vector<2x8xf32>
    %2 = tpu.matmul %0, %1, %cst {dimension_numbers = #tpu.dot_dimension_numbers<[1], [0], [0], [1], [0, 0, 1, 1], [], []>} : vector<2x1024xbf16>, vector<1024x8xbf16>, vector<2x8xf32> -> vector<2x8xf32>
    %c0_3 = arith.constant 0 : index
    %c0_4 = arith.constant 0 : index
    %3 = vector.load %arg2[%c0_3, %c0_4] : memref<1x8xf32, #tpu.memory_space<vmem>>, vector<1x8xf32>
    %4 = vector.broadcast %3 : vector<1x8xf32> to vector<2x8xf32>
    %5 = arith.mulf %2, %4 : vector<2x8xf32>
    %c0_5 = arith.constant 0 : index
    %c0_6 = arith.constant 0 : index
    %6 = vector.load %arg3[%c0_5, %c0_6] : memref<1x8xf32, #tpu.memory_space<vmem>>, vector<1x8xf32>
    %7 = vector.broadcast %6 : vector<1x8xf32> to vector<2x8xf32>
    %8 = arith.addf %5, %7 : vector<2x8xf32>
    %cst_7 = arith.constant 0.000000e+00 : f32
    %9 = vector.broadcast %cst_7 : f32 to vector<2x8xf32>
    %10 = arith.cmpf oge, %8, %9 : vector<2x8xf32>
    %cst_8 = arith.constant 0.00999999977 : f32
    %11 = vector.broadcast %cst_8 : f32 to vector<2x8xf32>
    %12 = arith.mulf %11, %8 : vector<2x8xf32>
    %13 = arith.select %10, %8, %12 : vector<2x8xi1>, vector<2x8xf32>
    %c0_9 = arith.constant 0 : index
    %c0_10 = arith.constant 0 : index
    %14 = vector.load %arg4[%c0_9, %c0_10] : memref<8x2xbf16, #tpu.memory_space<vmem>>, vector<8x2xbf16>
    %15 = arith.extf %14 : vector<8x2xbf16> to vector<8x2xf32>
    %cst_11 = arith.constant dense<0.000000e+00> : vector<2x2xf32>
    %16 = tpu.matmul %13, %15, %cst_11 {dimension_numbers = #tpu.dot_dimension_numbers<[1], [0], [0], [1], [0, 0, 1, 1], [], []>} : vector<2x8xf32>, vector<8x2xf32>, vector<2x2xf32> -> vector<2x2xf32>
    %c0_12 = arith.constant 0 : index
    %c0_13 = arith.constant 0 : index
    %17 = vector.load %arg5[%c0_12, %c0_13] : memref<1x2xf32, #tpu.memory_space<vmem>>, vector<1x2xf32>
    %18 = vector.broadcast %17 : vector<1x2xf32> to vector<2x2xf32>
    %19 = arith.addf %16, %18 : vector<2x2xf32>
    %cst_14 = arith.constant dense<0xFF800000> : vector<2xf32>
    %20 = vector.multi_reduction <maximumf>, %19, %cst_14 [1] : vector<2x2xf32> to vector<2xf32>
    %21 = vector.shape_cast %20 : vector<2xf32> to vector<2x1xf32>
    %22 = vector.broadcast %21 : vector<2x1xf32> to vector<2x2xf32>
    %23 = arith.subf %19, %22 : vector<2x2xf32>
    %24 = math.exp %23 : vector<2x2xf32>
    %cst_15 = arith.constant dense<0.000000e+00> : vector<2xf32>
    %25 = vector.multi_reduction <add>, %24, %cst_15 [1] : vector<2x2xf32> to vector<2xf32>
    %26 = vector.shape_cast %25 : vector<2xf32> to vector<2x1xf32>
    %27 = vector.broadcast %26 : vector<2x1xf32> to vector<2x2xf32>
    %28 = arith.divf %24, %27 : vector<2x2xf32>
    %c0_16 = arith.constant 0 : index
    %c0_17 = arith.constant 0 : index
    %29 = vector.load %arg6[%c0_16, %c0_17] : memref<2x2xf32, #tpu.memory_space<vmem>>, vector<2x2xf32>
    tpu.vector_store %arg6[%c0_16, %c0_17], %28 {strides = array<i32>} : memref<2x2xf32, #tpu.memory_space<vmem>>, vector<2x2xf32>,
    return
  }
}

module attributes {stable_mosaic.version = 11 : i64} {
  func.func @_conv_bn_lrelu_pool_kernel(%arg0: i32, %arg1: memref<288x32xbf16, #tpu.memory_space<vmem>>, %arg2: memref<288x32xbf16, #tpu.memory_space<vmem>>, %arg3: memref<288x32xbf16, #tpu.memory_space<vmem>>, %arg4: memref<288x32xbf16, #tpu.memory_space<vmem>>, %arg5: memref<64x288xbf16, #tpu.memory_space<vmem>>, %arg6: memref<64x1xf32, #tpu.memory_space<vmem>>, %arg7: memref<64x32xbf16, #tpu.memory_space<vmem>>) attributes {dimension_semantics = [#tpu.dimension_semantics<parallel>], iteration_bounds = array<i64: 1>, scalar_prefetch = 0 : i64, scratch_operands = 0 : i64, tpu.core_type = #tpu.core_type<tc>, window_params = [{transform_indices = @transform_0, window_bounds = array<i64: 288, 32>}, {transform_indices = @transform_1, window_bounds = array<i64: 288, 32>}, {transform_indices = @transform_2, window_bounds = array<i64: 288, 32>}, {transform_indices = @transform_3, window_bounds = array<i64: 288, 32>}, {pipeline_mode = #tpu.pipeline_mode<synchronous>, transform_indices = @transform_4, window_bounds = array<i64: 64, 288>}, {pipeline_mode = #tpu.pipeline_mode<synchronous>, transform_indices = @transform_5, window_bounds = array<i64: 64, 1>}, {transform_indices = @transform_6, window_bounds = array<i64: 64, 32>}]} {
    %c0 = arith.constant 0 : index
    %c0_0 = arith.constant 0 : index
    %0 = vector.load %arg5[%c0, %c0_0] : memref<64x288xbf16, #tpu.memory_space<vmem>>, vector<64x288xbf16>
    %c0_1 = arith.constant 0 : index
    %c0_2 = arith.constant 0 : index
    %1 = vector.load %arg1[%c0_1, %c0_2] : memref<288x32xbf16, #tpu.memory_space<vmem>>, vector<288x32xbf16>
    %cst = arith.constant dense<0.000000e+00> : vector<64x32xf32>
    %2 = tpu.matmul %0, %1, %cst {dimension_numbers = #tpu.dot_dimension_numbers<[1], [0], [0], [1], [0, 0, 1, 1], [], []>} : vector<64x288xbf16>, vector<288x32xbf16>, vector<64x32xf32> -> vector<64x32xf32>
    %c0_3 = arith.constant 0 : index
    %c0_4 = arith.constant 0 : index
    %3 = vector.load %arg2[%c0_3, %c0_4] : memref<288x32xbf16, #tpu.memory_space<vmem>>, vector<288x32xbf16>
    %cst_5 = arith.constant dense<0.000000e+00> : vector<64x32xf32>
    %4 = tpu.matmul %0, %3, %cst_5 {dimension_numbers = #tpu.dot_dimension_numbers<[1], [0], [0], [1], [0, 0, 1, 1], [], []>} : vector<64x288xbf16>, vector<288x32xbf16>, vector<64x32xf32> -> vector<64x32xf32>
    %5 = arith.maximumf %2, %4 : vector<64x32xf32>
    %c0_6 = arith.constant 0 : index
    %c0_7 = arith.constant 0 : index
    %6 = vector.load %arg3[%c0_6, %c0_7] : memref<288x32xbf16, #tpu.memory_space<vmem>>, vector<288x32xbf16>
    %cst_8 = arith.constant dense<0.000000e+00> : vector<64x32xf32>
    %7 = tpu.matmul %0, %6, %cst_8 {dimension_numbers = #tpu.dot_dimension_numbers<[1], [0], [0], [1], [0, 0, 1, 1], [], []>} : vector<64x288xbf16>, vector<288x32xbf16>, vector<64x32xf32> -> vector<64x32xf32>
    %8 = arith.maximumf %5, %7 : vector<64x32xf32>
    %c0_9 = arith.constant 0 : index
    %c0_10 = arith.constant 0 : index
    %9 = vector.load %arg4[%c0_9, %c0_10] : memref<288x32xbf16, #tpu.memory_space<vmem>>, vector<288x32xbf16>
    %cst_11 = arith.constant dense<0.000000e+00> : vector<64x32xf32>
    %10 = tpu.matmul %0, %9, %cst_11 {dimension_numbers = #tpu.dot_dimension_numbers<[1], [0], [0], [1], [0, 0, 1, 1], [], []>} : vector<64x288xbf16>, vector<288x32xbf16>, vector<64x32xf32> -> vector<64x32xf32>
    %11 = arith.maximumf %8, %10 : vector<64x32xf32>
    %c0_12 = arith.constant 0 : index
    %c0_13 = arith.constant 0 : index
    %12 = vector.load %arg6[%c0_12, %c0_13] : memref<64x1xf32, #tpu.memory_space<vmem>>, vector<64x1xf32>
    %13 = vector.broadcast %12 : vector<64x1xf32> to vector<64x32xf32>
    %14 = arith.addf %11, %13 : vector<64x32xf32>
    %cst_14 = arith.constant 0.000000e+00 : f32
    %15 = vector.broadcast %cst_14 : f32 to vector<64x32xf32>
    %16 = arith.cmpf oge, %14, %15 : vector<64x32xf32>
    %cst_15 = arith.constant 0.00999999977 : f32
    %17 = vector.broadcast %cst_15 : f32 to vector<64x32xf32>
    %18 = arith.mulf %17, %14 : vector<64x32xf32>
    %19 = arith.select %16, %14, %18 : vector<64x32xi1>, vector<64x32xf32>
    %20 = arith.truncf %19 : vector<64x32xf32> to vector<64x32xbf16>
    %c0_16 = arith.constant 0 : index
    %c0_17 = arith.constant 0 : index
    %21 = vector.load %arg7[%c0_16, %c0_17] : memref<64x32xbf16, #tpu.memory_space<vmem>>, vector<64x32xbf16>
    tpu.vector_store %arg7[%c0_16, %c0_17], %20 {strides = array<i32>} : memref<64x32xbf16, #tpu.memory_space<vmem>>, vector<64x32xbf16>,
    return
  }
  func.func @transform_0(%arg0: i32) -> (i32, i32) {
    %c0_i32 = arith.constant 0 : i32
    %c0_i32_0 = arith.constant 0 : i32
    return %c0_i32, %arg0 : i32, i32
  }
  func.func @transform_1(%arg0: i32) -> (i32, i32) {
    %c0_i32 = arith.constant 0 : i32
    %c0_i32_0 = arith.constant 0 : i32
    return %c0_i32, %arg0 : i32, i32
  }
  func.func @transform_2(%arg0: i32) -> (i32, i32) {
    %c0_i32 = arith.constant 0 : i32
    %c0_i32_0 = arith.constant 0 : i32
    return %c0_i32, %arg0 : i32, i32
  }
  func.func @transform_3(%arg0: i32) -> (i32, i32) {
    %c0_i32 = arith.constant 0 : i32
    %c0_i32_0 = arith.constant 0 : i32
    return %c0_i32, %arg0 : i32, i32
  }
  func.func @transform_4(%arg0: i32) -> (i32, i32) {
    %c0_i32 = arith.constant 0 : i32
    %c0_i32_0 = arith.constant 0 : i32
    %c0_i32_1 = arith.constant 0 : i32
    return %c0_i32, %c0_i32_0 : i32, i32
  }
  func.func @transform_5(%arg0: i32) -> (i32, i32) {
    %c0_i32 = arith.constant 0 : i32
    %c0_i32_0 = arith.constant 0 : i32
    %c0_i32_1 = arith.constant 0 : i32
    return %c0_i32, %c0_i32_0 : i32, i32
  }
  func.func @transform_6(%arg0: i32) -> (i32, i32) {
    %c0_i32 = arith.constant 0 : i32
    %c0_i32_0 = arith.constant 0 : i32
    return %c0_i32, %arg0 : i32, i32
  }
}

</mosaic_0001>

<llo_original>
// kernel: classifier_forward.6
$region0: #{classifier_forward.6}
  #allocation0 [shape = 'u32[]', space=smem, size = 0x4, offset = 0x4, fixed_abs, tag = 'smem constant byte address 0x4 - core index']
  #allocation1 [shape = 'u32[144,128]{1,0:T(1,128)}', space=vmem, size = 0x12000, scoped, tag = 'internal scratch']
  %s0 = inlined_call_operand.vmem [shape: bf16[75,8192], index: 0, kind: input, shape index: {}]
  %s1 = inlined_call_operand.vmem [shape: bf16[75,8192], index: 1, kind: input, shape index: {}]
  %s2 = inlined_call_operand.vmem [shape: bf16[75,8192], index: 2, kind: input, shape index: {}]
  %s3 = inlined_call_operand.vmem [shape: bf16[75,8192], index: 3, kind: input, shape index: {}]
  %s4 = inlined_call_operand.vmem [shape: bf16[4,75], index: 4, kind: input, shape index: {}]
  %s5 = inlined_call_operand.vmem [shape: f32[4,1], index: 5, kind: input, shape index: {}]
  %s6 = inlined_call_operand.vmem [shape: bf16[4,8192], index: 6, kind: output, shape index: {}]
  %s7 = sld [smem:[#allocation0]]
  $region149: #{classifier_forward.6} parent=0
    _
  %s9 = ssub.s32 1, %s7
  %s10 = scalar_select 0, %s9, %s7
  $region1: #{classifier_forward.6} parent=0
    #allocation2 [shape = 'u8[655360]{0}', space=vmem, size = 0xa0000, scoped, tag = 'input window, operand 0']
    #allocation3 [shape = 'u8[655360]{0}', space=vmem, size = 0xa0000, scoped, tag = 'input window, operand 1']
    #allocation4 [shape = 'u8[655360]{0}', space=vmem, size = 0xa0000, scoped, tag = 'input window, operand 2']
    #allocation5 [shape = 'u8[655360]{0}', space=vmem, size = 0xa0000, scoped, tag = 'input window, operand 3']
    loop: start=0, step=1, limit=6
    $region2: #{classifier_forward.6} parent=1 // loop_pre_header
      _
    $region3: #{classifier_forward.6} parent=1 // loop_header
      %s12 = sphi 0, %s16
      %p13 = scmp.ge.s32.totalorder %s12, 6
      %s22 = sphi 0, %s24
      %s25 = sphi 0, %s22
      %s26 = sphi 0, %s25
      %s42 = sphi 0, %s26
      %s48 = sphi 0, %s50
      %s51 = sphi 0, %s48
      %s52 = sphi 0, %s51
      %s68 = sphi 0, %s52
      %s74 = sphi 0, %s76
      %s77 = sphi 0, %s74
      %s78 = sphi 0, %s77
      %s94 = sphi 0, %s78
      %s100 = sphi 0, %s102
      %s103 = sphi 0, %s100
      %s104 = sphi 0, %s103
      %s120 = sphi 0, %s104
      %s124 = sphi 0, %s124
      %s126 = sphi 0, %s124
      %s127 = sphi 0, %s126
      %s141 = sphi 0, %s127
      %s145 = sphi 0, %s145
      %s147 = sphi 0, %s145
      %s148 = sphi 0, %s147
      %s162 = sphi 0, %s148
      %s168 = sphi 0, %s170
      %s171 = sphi 0, %s168
      %s172 = sphi 0, %s171
      %s188 = sphi 0, %s172
    $region4: #{classifier_forward.6} parent=1 // loop_header_branch
      %15 = sbr.rel (%p13) target = $region8
    $region5: #{classifier_forward.6} parent=1 // loop_body
      %s17 = ssub.s32 %s12, 1
      %s18 = ssub.s32 %s12, 2
      %s19 = sadd.s32 %s12, 1
      %s20 = ssub.s32 %s12, %s19
      %p21 = scmp.eq.s32.totalorder %s20, 0
      %s23 = sadd.s32 %s22, 1
      %s24 = scalar_select %p21, %s22, %s23
      %p27 = pneg %p21
      %p28 = scmp.eq.s32.totalorder %s12, 3
      %p29 = por %p27, %p28
      %p30 = scmp.ne.s32.totalorder %s22, %s25
      %p31 = scmp.eq.s32.totalorder %s12, 0
      %p32 = por %p30, %p31
      %p33 = scmp.ne.s32.totalorder %s22, %s25
      %p34 = scmp.eq.s32.totalorder %s17, 3
      %p35 = por %p33, %p34
      %p36 = scmp.ne.s32.totalorder %s25, %s26
      %p37 = scmp.eq.s32.totalorder %s17, 0
      %p38 = por %p36, %p37
      %p39 = scmp.ne.s32.totalorder %s25, %s26
      %p40 = scmp.eq.s32.totalorder %s18, 3
      %p41 = por %p39, %p40
      %p43 = scmp.ne.s32.totalorder %s26, %s42
      %p44 = scmp.eq.s32.totalorder %s18, 0
      %p45 = por %p43, %p44
      %s46 = ssub.s32 %s12, %s19
      %p47 = scmp.eq.s32.totalorder %s46, 0
      %s49 = sadd.s32 %s48, 1
      %s50 = scalar_select %p47, %s48, %s49
      %p53 = pneg %p47
      %p54 = scmp.eq.s32.totalorder %s12, 3
      %p55 = por %p53, %p54
      %p56 = scmp.ne.s32.totalorder %s48, %s51
      %p57 = scmp.eq.s32.totalorder %s12, 0
      %p58 = por %p56, %p57
      %p59 = scmp.ne.s32.totalorder %s48, %s51
      %p60 = scmp.eq.s32.totalorder %s17, 3
      %p61 = por %p59, %p60
      %p62 = scmp.ne.s32.totalorder %s51, %s52
      %p63 = scmp.eq.s32.totalorder %s17, 0
      %p64 = por %p62, %p63
      %p65 = scmp.ne.s32.totalorder %s51, %s52
      %p66 = scmp.eq.s32.totalorder %s18, 3
      %p67 = por %p65, %p66
      %p69 = scmp.ne.s32.totalorder %s52, %s68
      %p70 = scmp.eq.s32.totalorder %s18, 0
      %p71 = por %p69, %p70
      %s72 = ssub.s32 %s12, %s19
      %p73 = scmp.eq.s32.totalorder %s72, 0
      %s75 = sadd.s32 %s74, 1
      %s76 = scalar_select %p73, %s74, %s75
      %p79 = pneg %p73
      %p80 = scmp.eq.s32.totalorder %s12, 3
      %p81 = por %p79, %p80
      %p82 = scmp.ne.s32.totalorder %s74, %s77
      %p83 = scmp.eq.s32.totalorder %s12, 0
      %p84 = por %p82, %p83
      %p85 = scmp.ne.s32.totalorder %s74, %s77
      %p86 = scmp.eq.s32.totalorder %s17, 3
      %p87 = por %p85, %p86
      %p88 = scmp.ne.s32.totalorder %s77, %s78
      %p89 = scmp.eq.s32.totalorder %s17, 0
      %p90 = por %p88, %p89
      %p91 = scmp.ne.s32.totalorder %s77, %s78
      %p92 = scmp.eq.s32.totalorder %s18, 3
      %p93 = por %p91, %p92
      %p95 = scmp.ne.s32.totalorder %s78, %s94
      %p96 = scmp.eq.s32.totalorder %s18, 0
      %p97 = por %p95, %p96
      %s98 = ssub.s32 %s12, %s19
      %p99 = scmp.eq.s32.totalorder %s98, 0
      %s101 = sadd.s32 %s100, 1
      %s102 = scalar_select %p99, %s100, %s101
      %p105 = pneg %p99
      %p106 = scmp.eq.s32.totalorder %s12, 3
      %p107 = por %p105, %p106
      %p108 = scmp.ne.s32.totalorder %s100, %s103
      %p109 = scmp.eq.s32.totalorder %s12, 0
      %p110 = por %p108, %p109
      %p111 = scmp.ne.s32.totalorder %s100, %s103
      %p112 = scmp.eq.s32.totalorder %s17, 3
      %p113 = por %p111, %p112
      %p114 = scmp.ne.s32.totalorder %s103, %s104
      %p115 = scmp.eq.s32.totalorder %s17, 0
      %p116 = por %p114, %p115
      %p117 = scmp.ne.s32.totalorder %s103, %s104
      %p118 = scmp.eq.s32.totalorder %s18, 3
      %p119 = por %p117, %p118
      %p121 = scmp.ne.s32.totalorder %s104, %s120
      %p122 = scmp.eq.s32.totalorder %s18, 0
      %p123 = por %p121, %p122
      %s125 = sadd.s32 %s124, 1
      %p128 = scmp.eq.s32.totalorder %s12, 3
      %p129 = scmp.ne.s32.totalorder %s124, %s126
      %p130 = scmp.eq.s32.totalorder %s12, 0
      %p131 = por %p129, %p130
      %p132 = scmp.ne.s32.totalorder %s124, %s126
      %p133 = scmp.eq.s32.totalorder %s17, 3
      %p134 = por %p132, %p133
      %p135 = scmp.ne.s32.totalorder %s126, %s127
      %p136 = scmp.eq.s32.totalorder %s17, 0
      %p137 = por %p135, %p136
      %p138 = scmp.ne.s32.totalorder %s126, %s127
      %p139 = scmp.eq.s32.totalorder %s18, 3
      %p140 = por %p138, %p139
      %p142 = scmp.ne.s32.totalorder %s127, %s141
      %p143 = scmp.eq.s32.totalorder %s18, 0
      %p144 = por %p142, %p143
      %s146 = sadd.s32 %s145, 1
      %p149 = scmp.eq.s32.totalorder %s12, 3
      %p150 = scmp.ne.s32.totalorder %s145, %s147
      %p151 = scmp.eq.s32.totalorder %s12, 0
      %p152 = por %p150, %p151
      %p153 = scmp.ne.s32.totalorder %s145, %s147
      %p154 = scmp.eq.s32.totalorder %s17, 3
      %p155 = por %p153, %p154
      %p156 = scmp.ne.s32.totalorder %s147, %s148
      %p157 = scmp.eq.s32.totalorder %s17, 0
      %p158 = por %p156, %p157
      %p159 = scmp.ne.s32.totalorder %s147, %s148
      %p160 = scmp.eq.s32.totalorder %s18, 3
      %p161 = por %p159, %p160
      %p163 = scmp.ne.s32.totalorder %s148, %s162
      %p164 = scmp.eq.s32.totalorder %s18, 0
      %p165 = por %p163, %p164
      %s166 = ssub.s32 %s12, %s19
      %p167 = scmp.eq.s32.totalorder %s166, 0
      %s169 = sadd.s32 %s168, 1
      %s170 = scalar_select %p167, %s168, %s169
      %p173 = pneg %p167
      %p174 = scmp.eq.s32.totalorder %s12, 3
      %p175 = por %p173, %p174
      %p176 = scmp.ne.s32.totalorder %s168, %s171
      %p177 = scmp.eq.s32.totalorder %s12, 0
      %p178 = por %p176, %p177
      %p179 = scmp.ne.s32.totalorder %s168, %s171
      %p180 = scmp.eq.s32.totalorder %s17, 3
      %p181 = por %p179, %p180
      %p182 = scmp.ne.s32.totalorder %s171, %s172
      %p183 = scmp.eq.s32.totalorder %s17, 0
      %p184 = por %p182, %p183
      %p185 = scmp.ne.s32.totalorder %s171, %s172
      %p186 = scmp.eq.s32.totalorder %s18, 3
      %p187 = por %p185, %p186
      %p189 = scmp.ne.s32.totalorder %s172, %s188
      %p190 = scmp.eq.s32.totalorder %s18, 0
      %p191 = por %p189, %p190
      %p192 = scmp.le.s32.totalorder 1, %s12
      %p193 = scmp.lt.s32.totalorder %s12, 5
      %p194 = pnand %p192, %p193
      %p195 = pneg %p194
      // Predicated region
      $region9: #{classifier_forward.6} parent=5 // pred_check
        _
      $region10: #{classifier_forward.6} parent=5 // pred_check_branch
        %197 = sbr.rel (%p194) target = $region12
      $region11: #{classifier_forward.6} parent=5 // pred_region
        %s198 = ssub.s32 %s12, 1
        // Predicated region
        $region13: #{classifier_forward.6} parent=11 // pred_check
          %p199 = pneg %p137
        $region14: #{classifier_forward.6} parent=11 // pred_check_branch
          %201 = sbr.rel (%p199) target = $region16
        $region15: #{classifier_forward.6} parent=11 // pred_region
          _
        $region16: #{classifier_forward.6} parent=11 // pred_fallthru
          _
        // Predicated region
        $region17: #{classifier_forward.6} parent=11 // pred_check
          %p202 = pneg %p158
        $region18: #{classifier_forward.6} parent=11 // pred_check_branch
          %204 = sbr.rel (%p202) target = $region20
        $region19: #{classifier_forward.6} parent=11 // pred_region
          _
        $region20: #{classifier_forward.6} parent=11 // pred_fallthru
          _
      $region12: #{classifier_forward.6} parent=5 // pred_fallthru
        _
      %p205 = scmp.lt.s32.totalorder %s12, 4
      // Predicated region
      $region21: #{classifier_forward.6} parent=5 // pred_check
        %p206 = pneg %p205
      $region22: #{classifier_forward.6} parent=5 // pred_check_branch
        %208 = sbr.rel (%p206) target = $region24
      $region23: #{classifier_forward.6} parent=5 // pred_region
        // Predicated region
        $region25: #{classifier_forward.6} parent=23 // pred_check
          %p209 = pneg %p32
        $region26: #{classifier_forward.6} parent=23 // pred_check_branch
          %211 = sbr.rel (%p209) target = $region28
        $region27: #{classifier_forward.6} parent=23 // pred_region
          %s212 = sand.u32 %s22, 1
          %s213 = sand.u32 %s22, 1
          %s214 = smul.addr %s213, 640
          %s215 = scalar_lea.vmem [#allocation2], %s214
          %s216 = smul.u32 16, %s12
          %s217 = smul.addr %s216, 4
          %s218 = scalar_lea.vmem %s0, %s217
          // Predicated region
          $region29: #{classifier_forward.6} parent=27 // pred_check
            _
          $region30: #{classifier_forward.6} parent=27 // pred_check_branch
            %220 = sbr.rel (0) target = $region32
          $region31: #{classifier_forward.6} parent=27 // pred_region
            // Predicated region
            $region33: #{classifier_forward.6} parent=31 // pred_check
              _
            $region34: #{classifier_forward.6} parent=31 // pred_check_branch
              %222 = sbr.rel (0) target = $region36
            $region35: #{classifier_forward.6} parent=31 // pred_region
              loop: start=0, step=1, limit=1
              $region37: #{classifier_forward.6} parent=35 // loop_pre_header
                _
              $region38: #{classifier_forward.6} parent=35 // loop_header
                %s224 = sphi 0, %s228
                %p225 = scmp.ge.s32.totalorder %s224, 1
                %s229 = sphi %s218, %s218
                %s230 = sphi %s215, %s215
              $region39: #{classifier_forward.6} parent=35 // loop_header_branch
                %227 = sbr.rel (%p225) target = $region43
              $region40: #{classifier_forward.6} parent=35 // loop_body
                %v231 = vld [vmem:[%s229] sm:$0xff]
                %232 = vst [vmem:[%s230] sm:$0xff] %v231
                %v233 = vld [vmem:[%s229 + $0x8] sm:$0xff]
                %234 = vst [vmem:[%s230 + $0x8] sm:$0xff] %v233
                %v235 = vld [vmem:[%s229 + $0x10] sm:$0xff]
                %236 = vst [vmem:[%s230 + $0x10] sm:$0xff] %v235
                %v237 = vld [vmem:[%s229 + $0x18] sm:$0xff]
                %238 = vst [vmem:[%s230 + $0x18] sm:$0xff] %v237
                %v239 = vld [vmem:[%s229 + $0x20] sm:$0xff]
                %240 = vst [vmem:[%s230 + $0x20] sm:$0xff] %v239
                %v241 = vld [vmem:[%s229 + $0x28] sm:$0xff]
                %242 = vst [vmem:[%s230 + $0x28] sm:$0xff] %v241
                %v243 = vld [vmem:[%s229 + $0x30] sm:$0xff]
                %244 = vst [vmem:[%s230 + $0x30] sm:$0xff] %v243
                %v245 = vld [vmem:[%s229 + $0x38] sm:$0xff]
                %246 = vst [vmem:[%s230 + $0x38] sm:$0xff] %v245
                %v247 = vld [vmem:[%s229 + $0x100] sm:$0xff]
                %248 = vst [vmem:[%s230 + $0x40] sm:$0xff] %v247
                %v249 = vld [vmem:[%s229 + $0x108] sm:$0xff]
                %250 = vst [vmem:[%s230 + $0x48] sm:$0xff] %v249
                %v251 = vld [vmem:[%s229 + $0x110] sm:$0xff]
                %252 = vst [vmem:[%s230 + $0x50] sm:$0xff] %v251
                %v253 = vld [vmem:[%s229 + $0x118] sm:$0xff]
                %254 = vst [vmem:[%s230 + $0x58] sm:$0xff] %v253
                %v255 = vld [vmem:[%s229 + $0x120] sm:$0xff]
                %256 = vst [vmem:[%s230 + $0x60] sm:$0xff] %v255
                %v257 = vld [vmem:[%s229 + $0x128] sm:$0xff]
                %258 = vst [vmem:[%s230 + $0x68] sm:$0xff] %v257
                %v259 = vld [vmem:[%s229 + $0x130] sm:$0xff]
                %260 = vst [vmem:[%s230 + $0x70] sm:$0xff] %v259
                %v261 = vld [vmem:[%s229 + $0x138] sm:$0xff]
                %262 = vst [vmem:[%s230 + $0x78] sm:$0xff] %v261
                %v263 = vld [vmem:[%s229 + $0x200] sm:$0xff]
                %264 = vst [vmem:[%s230 + $0x80] sm:$0xff] %v263
                %v265 = vld [vmem:[%s229 + $0x208] sm:$0xff]
                %266 = vst [vmem:[%s230 + $0x88] sm:$0xff] %v265
                %v267 = vld [vmem:[%s229 + $0x210] sm:$0xff]
                %268 = vst [vmem:[%s230 + $0x90] sm:$0xff] %v267
                %v269 = vld [vmem:[%s229 + $0x218] sm:$0xff]
                %270 = vst [vmem:[%s230 + $0x98] sm:$0xff] %v269
                %v271 = vld [vmem:[%s229 + $0x220] sm:$0xff]
                %272 = vst [vmem:[%s230 + $0xa0] sm:$0xff] %v271
                %v273 = vld [vmem:[%s229 + $0x228] sm:$0xff]
                %274 = vst [vmem:[%s230 + $0xa8] sm:$0xff] %v273
                %v275 = vld [vmem:[%s229 + $0x230] sm:$0xff]
                %276 = vst [vmem:[%s230 + $0xb0] sm:$0xff] %v275
                %v277 = vld [vmem:[%s229 + $0x238] sm:$0xff]
                %278 = vst [vmem:[%s230 + $0xb8] sm:$0xff] %v277
                %v279 = vld [vmem:[%s229 + $0x300] sm:$0xff]
                %280 = vst [vmem:[%s230 + $0xc0] sm:$0xff] %v279
                %v281 = vld [vmem:[%s229 + $0x308] sm:$0xff]
                %282 = vst [vmem:[%s230 + $0xc8] sm:$0xff] %v281
                %v283 = vld [vmem:[%s229 + $0x310] sm:$0xff]
                %284 = vst [vmem:[%s230 + $0xd0] sm:$0xff] %v283
                %v285 = vld [vmem:[%s229 + $0x318] sm:$0xff]
                %286 = vst [vmem:[%s230 + $0xd8] sm:$0xff] %v285
                %v287 = vld [vmem:[%s229 + $0x320] sm:$0xff]
                %288 = vst [vmem:[%s230 + $0xe0] sm:$0xff] %v287
                %v289 = vld [vmem:[%s229 + $0x328] sm:$0xff]
                %290 = vst [vmem:[%s230 + $0xe8] sm:$0xff] %v289
                %v291 = vld [vmem:[%s229 + $0x330] sm:$0xff]
                %292 = vst [vmem:[%s230 + $0xf0] sm:$0xff] %v291
                %v293 = vld [vmem:[%s229 + $0x338] sm:$0xff]
                %294 = vst [vmem:[%s230 + $0xf8] sm:$0xff] %v293
                %v295 = vld [vmem:[%s229 + $0x400] sm:$0xff]
                %296 = vst [vmem:[%s230 + $0x100] sm:$0xff] %v295
                %v297 = vld [vmem:[%s229 + $0x408] sm:$0xff]
                %298 = vst [vmem:[%s230 + $0x108] sm:$0xff] %v297
                %v299 = vld [vmem:[%s229 + $0x410] sm:$0xff]
                %300 = vst [vmem:[%s230 + $0x110] sm:$0xff] %v299
                %v301 = vld [vmem:[%s229 + $0x418] sm:$0xff]
                %302 = vst [vmem:[%s230 + $0x118] sm:$0xff] %v301
                %v303 = vld [vmem:[%s229 + $0x420] sm:$0xff]
                %304 = vst [vmem:[%s230 + $0x120] sm:$0xff] %v303
                %v305 = vld [vmem:[%s229 + $0x428] sm:$0xff]
                %306 = vst [vmem:[%s230 + $0x128] sm:$0xff] %v305
                %v307 = vld [vmem:[%s229 + $0x430] sm:$0xff]
                %308 = vst [vmem:[%s230 + $0x130] sm:$0xff] %v307
                %v309 = vld [vmem:[%s229 + $0x438] sm:$0xff]
                %310 = vst [vmem:[%s230 + $0x138] sm:$0xff] %v309
                %v311 = vld [vmem:[%s229 + $0x500] sm:$0xff]
                %312 = vst [vmem:[%s230 + $0x140] sm:$0xff] %v311
                %v313 = vld [vmem:[%s229 + $0x508] sm:$0xff]
                %314 = vst [vmem:[%s230 + $0x148] sm:$0xff] %v313
                %v315 = vld [vmem:[%s229 + $0x510] sm:$0xff]
                %316 = vst [vmem:[%s230 + $0x150] sm:$0xff] %v315
                %v317 = vld [vmem:[%s229 + $0x518] sm:$0xff]
                %318 = vst [vmem:[%s230 + $0x158] sm:$0xff] %v317
                %v319 = vld [vmem:[%s229 + $0x520] sm:$0xff]
                %320 = vst [vmem:[%s230 + $0x160] sm:$0xff] %v319
                %v321 = vld [vmem:[%s229 + $0x528] sm:$0xff]
                %322 = vst [vmem:[%s230 + $0x168] sm:$0xff] %v321
                %v323 = vld [vmem:[%s229 + $0x530] sm:$0xff]
                %324 = vst [vmem:[%s230 + $0x170] sm:$0xff] %v323
                %v325 = vld [vmem:[%s229 + $0x538] sm:$0xff]
                %326 = vst [vmem:[%s230 + $0x178] sm:$0xff] %v325
                %v327 = vld [vmem:[%s229 + $0x600] sm:$0xff]
                %328 = vst [vmem:[%s230 + $0x180] sm:$0xff] %v327
                %v329 = vld [vmem:[%s229 + $0x608] sm:$0xff]
                %330 = vst [vmem:[%s230 + $0x188] sm:$0xff] %v329
                %v331 = vld [vmem:[%s229 + $0x610] sm:$0xff]
                %332 = vst [vmem:[%s230 + $0x190] sm:$0xff] %v331
                %v333 = vld [vmem:[%s229 + $0x618] sm:$0xff]
                %334 = vst [vmem:[%s230 + $0x198] sm:$0xff] %v333
                %v335 = vld [vmem:[%s229 + $0x620] sm:$0xff]
                %336 = vst [vmem:[%s230 + $0x1a0] sm:$0xff] %v335
                %v337 = vld [vmem:[%s229 + $0x628] sm:$0xff]
                %338 = vst [vmem:[%s230 + $0x1a8] sm:$0xff] %v337
                %v339 = vld [vmem:[%s229 + $0x630] sm:$0xff]
                %340 = vst [vmem:[%s230 + $0x1b0] sm:$0xff] %v339
                %v341 = vld [vmem:[%s229 + $0x638] sm:$0xff]
                %342 = vst [vmem:[%s230 + $0x1b8] sm:$0xff] %v341
                %v343 = vld [vmem:[%s229 + $0x700] sm:$0xff]
                %344 = vst [vmem:[%s230 + $0x1c0] sm:$0xff] %v343
                %v345 = vld [vmem:[%s229 + $0x708] sm:$0xff]
                %346 = vst [vmem:[%s230 + $0x1c8] sm:$0xff] %v345
                %v347 = vld [vmem:[%s229 + $0x710] sm:$0xff]
                %348 = vst [vmem:[%s230 + $0x1d0] sm:$0xff] %v347
                %v349 = vld [vmem:[%s229 + $0x718] sm:$0xff]
                %350 = vst [vmem:[%s230 + $0x1d8] sm:$0xff] %v349
                %v351 = vld [vmem:[%s229 + $0x720] sm:$0xff]
                %352 = vst [vmem:[%s230 + $0x1e0] sm:$0xff] %v351
                %v353 = vld [vmem:[%s229 + $0x728] sm:$0xff]
                %354 = vst [vmem:[%s230 + $0x1e8] sm:$0xff] %v353
                %v355 = vld [vmem:[%s229 + $0x730] sm:$0xff]
                %356 = vst [vmem:[%s230 + $0x1f0] sm:$0xff] %v355
                %v357 = vld [vmem:[%s229 + $0x738] sm:$0xff]
                %358 = vst [vmem:[%s230 + $0x1f8] sm:$0xff] %v357
                %v359 = vld [vmem:[%s229 + $0x800] sm:$0xff]
                %360 = vst [vmem:[%s230 + $0x200] sm:$0xff] %v359
                %v361 = vld [vmem:[%s229 + $0x808] sm:$0xff]
                %362 = vst [vmem:[%s230 + $0x208] sm:$0xff] %v361
                %v363 = vld [vmem:[%s229 + $0x810] sm:$0xff]
                %364 = vst [vmem:[%s230 + $0x210] sm:$0xff] %v363
                %v365 = vld [vmem:[%s229 + $0x818] sm:$0xff]
                %366 = vst [vmem:[%s230 + $0x218] sm:$0xff] %v365
                %v367 = vld [vmem:[%s229 + $0x820] sm:$0xff]
                %368 = vst [vmem:[%s230 + $0x220] sm:$0xff] %v367
                %v369 = vld [vmem:[%s229 + $0x828] sm:$0xff]
                %370 = vst [vmem:[%s230 + $0x228] sm:$0xff] %v369
                %v371 = vld [vmem:[%s229 + $0x830] sm:$0xff]
                %372 = vst [vmem:[%s230 + $0x230] sm:$0xff] %v371
                %v373 = vld [vmem:[%s229 + $0x838] sm:$0xff]
                %374 = vst [vmem:[%s230 + $0x238] sm:$0xff] %v373
                %v375 = vld [vmem:[%s229 + $0x900] sm:$0xff]
                %376 = vst [vmem:[%s230 + $0x240] sm:$0xff] %v375
                %v377 = vld [vmem:[%s229 + $0x908] sm:$0xff]
                %378 = vst [vmem:[%s230 + $0x248] sm:$0xff] %v377
                %v379 = vld [vmem:[%s229 + $0x910] sm:$0xff]
                %380 = vst [vmem:[%s230 + $0x250] sm:$0xff] %v379
                %v381 = vld [vmem:[%s229 + $0x918] sm:$0xff]
                %382 = vst [vmem:[%s230 + $0x258] sm:$0xff] %v381
                %v383 = vld [vmem:[%s229 + $0x920] sm:$0xff]
                %384 = vst [vmem:[%s230 + $0x260] sm:$0xff] %v383
                %v385 = vld [vmem:[%s229 + $0x928] sm:$0xff]
                %386 = vst [vmem:[%s230 + $0x268] sm:$0xff] %v385
                %v387 = vld [vmem:[%s229 + $0x930] sm:$0xff]
                %388 = vst [vmem:[%s230 + $0x270] sm:$0xff] %v387
                %v389 = vld [vmem:[%s229 + $0x938] sm:$0xff]
                %390 = vst [vmem:[%s230 + $0x278] sm:$0xff] %v389
              $region41: #{classifier_forward.6} parent=35 // loop_footer
                %s228 = sadd.s32 1, %s224
              $region42: #{classifier_forward.6} parent=35 // loop_footer_branch
                %223 = sbr.rel target = $region38
              $region43: #{classifier_forward.6} parent=35 // loop_exit
                _
            $region36: #{classifier_forward.6} parent=31 // pred_fallthru
              _
            // Predicated region
            $region44: #{classifier_forward.6} parent=31 // pred_check
              _
            $region45: #{classifier_forward.6} parent=31 // pred_check_branch
              %392 = sbr.rel target = $region47
            $region46: #{classifier_forward.6} parent=31 // pred_region
              _
            $region47: #{classifier_forward.6} parent=31 // pred_fallthru
              _
          $region32: #{classifier_forward.6} parent=27 // pred_fallthru
            _
          %393 = vnop
        $region28: #{classifier_forward.6} parent=23 // pred_fallthru
          _
        // Predicated region
        $region48: #{classifier_forward.6} parent=23 // pred_check
          %p394 = pneg %p58
        $region49: #{classifier_forward.6} parent=23 // pred_check_branch
          %396 = sbr.rel (%p394) target = $region51
        $region50: #{classifier_forward.6} parent=23 // pred_region
          %s397 = sand.u32 %s48, 1
          %s398 = sand.u32 %s48, 1
          %s399 = smul.addr %s398, 640
          %s400 = scalar_lea.vmem [#allocation3], %s399
          %s401 = smul.u32 16, %s12
          %s402 = smul.addr %s401, 4
          %s403 = scalar_lea.vmem %s1, %s402
          // Predicated region
          $region52: #{classifier_forward.6} parent=50 // pred_check
            _
          $region53: #{classifier_forward.6} parent=50 // pred_check_branch
            %405 = sbr.rel (0) target = $region55
          $region54: #{classifier_forward.6} parent=50 // pred_region
            // Predicated region
            $region56: #{classifier_forward.6} parent=54 // pred_check
              _
            $region57: #{classifier_forward.6} parent=54 // pred_check_branch
              %407 = sbr.rel (0) target = $region59
            $region58: #{classifier_forward.6} parent=54 // pred_region
              loop: start=0, step=1, limit=1
              $region60: #{classifier_forward.6} parent=58 // loop_pre_header
                _
              $region61: #{classifier_forward.6} parent=58 // loop_header
                %s409 = sphi 0, %s413
                %p410 = scmp.ge.s32.totalorder %s409, 1
                %s414 = sphi %s403, %s403
                %s415 = sphi %s400, %s400
              $region62: #{classifier_forward.6} parent=58 // loop_header_branch
                %412 = sbr.rel (%p410) target = $region66
              $region63: #{classifier_forward.6} parent=58 // loop_body
                %v416 = vld [vmem:[%s414] sm:$0xff]
                %417 = vst [vmem:[%s415] sm:$0xff] %v416
                %v418 = vld [vmem:[%s414 + $0x8] sm:$0xff]
                %419 = vst [vmem:[%s415 + $0x8] sm:$0xff] %v418
                %v420 = vld [vmem:[%s414 + $0x10] sm:$0xff]
                %421 = vst [vmem:[%s415 + $0x10] sm:$0xff] %v420
                %v422 = vld [vmem:[%s414 + $0x18] sm:$0xff]
                %423 = vst [vmem:[%s415 + $0x18] sm:$0xff] %v422
                %v424 = vld [vmem:[%s414 + $0x20] sm:$0xff]
                %425 = vst [vmem:[%s415 + $0x20] sm:$0xff] %v424
                %v426 = vld [vmem:[%s414 + $0x28] sm:$0xff]
                %427 = vst [vmem:[%s415 + $0x28] sm:$0xff] %v426
                %v428 = vld [vmem:[%s414 + $0x30] sm:$0xff]
                %429 = vst [vmem:[%s415 + $0x30] sm:$0xff] %v428
                %v430 = vld [vmem:[%s414 + $0x38] sm:$0xff]
                %431 = vst [vmem:[%s415 + $0x38] sm:$0xff] %v430
                %v432 = vld [vmem:[%s414 + $0x100] sm:$0xff]
                %433 = vst [vmem:[%s415 + $0x40] sm:$0xff] %v432
                %v434 = vld [vmem:[%s414 + $0x108] sm:$0xff]
                %435 = vst [vmem:[%s415 + $0x48] sm:$0xff] %v434
                %v436 = vld [vmem:[%s414 + $0x110] sm:$0xff]
                %437 = vst [vmem:[%s415 + $0x50] sm:$0xff] %v436
                %v438 = vld [vmem:[%s414 + $0x118] sm:$0xff]
                %439 = vst [vmem:[%s415 + $0x58] sm:$0xff] %v438
                %v440 = vld [vmem:[%s414 + $0x120] sm:$0xff]
                %441 = vst [vmem:[%s415 + $0x60] sm:$0xff] %v440
                %v442 = vld [vmem:[%s414 + $0x128] sm:$0xff]
                %443 = vst [vmem:[%s415 + $0x68] sm:$0xff] %v442
                %v444 = vld [vmem:[%s414 + $0x130] sm:$0xff]
                %445 = vst [vmem:[%s415 + $0x70] sm:$0xff] %v444
                %v446 = vld [vmem:[%s414 + $0x138] sm:$0xff]
                %447 = vst [vmem:[%s415 + $0x78] sm:$0xff] %v446
                %v448 = vld [vmem:[%s414 + $0x200] sm:$0xff]
                %449 = vst [vmem:[%s415 + $0x80] sm:$0xff] %v448
                %v450 = vld [vmem:[%s414 + $0x208] sm:$0xff]
                %451 = vst [vmem:[%s415 + $0x88] sm:$0xff] %v450
                %v452 = vld [vmem:[%s414 + $0x210] sm:$0xff]
                %453 = vst [vmem:[%s415 + $0x90] sm:$0xff] %v452
                %v454 = vld [vmem:[%s414 + $0x218] sm:$0xff]
                %455 = vst [vmem:[%s415 + $0x98] sm:$0xff] %v454
                %v456 = vld [vmem:[%s414 + $0x220] sm:$0xff]
                %457 = vst [vmem:[%s415 + $0xa0] sm:$0xff] %v456
                %v458 = vld [vmem:[%s414 + $0x228] sm:$0xff]
                %459 = vst [vmem:[%s415 + $0xa8] sm:$0xff] %v458
                %v460 = vld [vmem:[%s414 + $0x230] sm:$0xff]
                %461 = vst [vmem:[%s415 + $0xb0] sm:$0xff] %v460
                %v462 = vld [vmem:[%s414 + $0x238] sm:$0xff]
                %463 = vst [vmem:[%s415 + $0xb8] sm:$0xff] %v462
                %v464 = vld [vmem:[%s414 + $0x300] sm:$0xff]
                %465 = vst [vmem:[%s415 + $0xc0] sm:$0xff] %v464
                %v466 = vld [vmem:[%s414 + $0x308] sm:$0xff]
                %467 = vst [vmem:[%s415 + $0xc8] sm:$0xff] %v466
                %v468 = vld [vmem:[%s414 + $0x310] sm:$0xff]
                %469 = vst [vmem:[%s415 + $0xd0] sm:$0xff] %v468
                %v470 = vld [vmem:[%s414 + $0x318] sm:$0xff]
                %471 = vst [vmem:[%s415 + $0xd8] sm:$0xff] %v470
                %v472 = vld [vmem:[%s414 + $0x320] sm:$0xff]
                %473 = vst [vmem:[%s415 + $0xe0] sm:$0xff] %v472
                %v474 = vld [vmem:[%s414 + $0x328] sm:$0xff]
                %475 = vst [vmem:[%s415 + $0xe8] sm:$0xff] %v474
                %v476 = vld [vmem:[%s414 + $0x330] sm:$0xff]
                %477 = vst [vmem:[%s415 + $0xf0] sm:$0xff] %v476
                %v478 = vld [vmem:[%s414 + $0x338] sm:$0xff]
                %479 = vst [vmem:[%s415 + $0xf8] sm:$0xff] %v478
                %v480 = vld [vmem:[%s414 + $0x400] sm:$0xff]
                %481 = vst [vmem:[%s415 + $0x100] sm:$0xff] %v480
                %v482 = vld [vmem:[%s414 + $0x408] sm:$0xff]
                %483 = vst [vmem:[%s415 + $0x108] sm:$0xff] %v482
                %v484 = vld [vmem:[%s414 + $0x410] sm:$0xff]
                %485 = vst [vmem:[%s415 + $0x110] sm:$0xff] %v484
                %v486 = vld [vmem:[%s414 + $0x418] sm:$0xff]
                %487 = vst [vmem:[%s415 + $0x118] sm:$0xff] %v486
                %v488 = vld [vmem:[%s414 + $0x420] sm:$0xff]
                %489 = vst [vmem:[%s415 + $0x120] sm:$0xff] %v488
                %v490 = vld [vmem:[%s414 + $0x428] sm:$0xff]
                %491 = vst [vmem:[%s415 + $0x128] sm:$0xff] %v490
                %v492 = vld [vmem:[%s414 + $0x430] sm:$0xff]
                %493 = vst [vmem:[%s415 + $0x130] sm:$0xff] %v492
                %v494 = vld [vmem:[%s414 + $0x438] sm:$0xff]
                %495 = vst [vmem:[%s415 + $0x138] sm:$0xff] %v494
                %v496 = vld [vmem:[%s414 + $0x500] sm:$0xff]
                %497 = vst [vmem:[%s415 + $0x140] sm:$0xff] %v496
                %v498 = vld [vmem:[%s414 + $0x508] sm:$0xff]
                %499 = vst [vmem:[%s415 + $0x148] sm:$0xff] %v498
                %v500 = vld [vmem:[%s414 + $0x510] sm:$0xff]
                %501 = vst [vmem:[%s415 + $0x150] sm:$0xff] %v500
                %v502 = vld [vmem:[%s414 + $0x518] sm:$0xff]
                %503 = vst [vmem:[%s415 + $0x158] sm:$0xff] %v502
                %v504 = vld [vmem:[%s414 + $0x520] sm:$0xff]
                %505 = vst [vmem:[%s415 + $0x160] sm:$0xff] %v504
                %v506 = vld [vmem:[%s414 + $0x528] sm:$0xff]
                %507 = vst [vmem:[%s415 + $0x168] sm:$0xff] %v506
                %v508 = vld [vmem:[%s414 + $0x530] sm:$0xff]
                %509 = vst [vmem:[%s415 + $0x170] sm:$0xff] %v508
                %v510 = vld [vmem:[%s414 + $0x538] sm:$0xff]
                %511 = vst [vmem:[%s415 + $0x178] sm:$0xff] %v510
                %v512 = vld [vmem:[%s414 + $0x600] sm:$0xff]
                %513 = vst [vmem:[%s415 + $0x180] sm:$0xff] %v512
                %v514 = vld [vmem:[%s414 + $0x608] sm:$0xff]
                %515 = vst [vmem:[%s415 + $0x188] sm:$0xff] %v514
                %v516 = vld [vmem:[%s414 + $0x610] sm:$0xff]
                %517 = vst [vmem:[%s415 + $0x190] sm:$0xff] %v516
                %v518 = vld [vmem:[%s414 + $0x618] sm:$0xff]
                %519 = vst [vmem:[%s415 + $0x198] sm:$0xff] %v518
                %v520 = vld [vmem:[%s414 + $0x620] sm:$0xff]
                %521 = vst [vmem:[%s415 + $0x1a0] sm:$0xff] %v520
                %v522 = vld [vmem:[%s414 + $0x628] sm:$0xff]
                %523 = vst [vmem:[%s415 + $0x1a8] sm:$0xff] %v522
                %v524 = vld [vmem:[%s414 + $0x630] sm:$0xff]
                %525 = vst [vmem:[%s415 + $0x1b0] sm:$0xff] %v524
                %v526 = vld [vmem:[%s414 + $0x638] sm:$0xff]
                %527 = vst [vmem:[%s415 + $0x1b8] sm:$0xff] %v526
                %v528 = vld [vmem:[%s414 + $0x700] sm:$0xff]
                %529 = vst [vmem:[%s415 + $0x1c0] sm:$0xff] %v528
                %v530 = vld [vmem:[%s414 + $0x708] sm:$0xff]
                %531 = vst [vmem:[%s415 + $0x1c8] sm:$0xff] %v530
                %v532 = vld [vmem:[%s414 + $0x710] sm:$0xff]
                %533 = vst [vmem:[%s415 + $0x1d0] sm:$0xff] %v532
                %v534 = vld [vmem:[%s414 + $0x718] sm:$0xff]
                %535 = vst [vmem:[%s415 + $0x1d8] sm:$0xff] %v534
                %v536 = vld [vmem:[%s414 + $0x720] sm:$0xff]
                %537 = vst [vmem:[%s415 + $0x1e0] sm:$0xff] %v536
                %v538 = vld [vmem:[%s414 + $0x728] sm:$0xff]
                %539 = vst [vmem:[%s415 + $0x1e8] sm:$0xff] %v538
                %v540 = vld [vmem:[%s414 + $0x730] sm:$0xff]
                %541 = vst [vmem:[%s415 + $0x1f0] sm:$0xff] %v540
                %v542 = vld [vmem:[%s414 + $0x738] sm:$0xff]
                %543 = vst [vmem:[%s415 + $0x1f8] sm:$0xff] %v542
                %v544 = vld [vmem:[%s414 + $0x800] sm:$0xff]
                %545 = vst [vmem:[%s415 + $0x200] sm:$0xff] %v544
                %v546 = vld [vmem:[%s414 + $0x808] sm:$0xff]
                %547 = vst [vmem:[%s415 + $0x208] sm:$0xff] %v546
                %v548 = vld [vmem:[%s414 + $0x810] sm:$0xff]
                %549 = vst [vmem:[%s415 + $0x210] sm:$0xff] %v548
                %v550 = vld [vmem:[%s414 + $0x818] sm:$0xff]
                %551 = vst [vmem:[%s415 + $0x218] sm:$0xff] %v550
                %v552 = vld [vmem:[%s414 + $0x820] sm:$0xff]
                %553 = vst [vmem:[%s415 + $0x220] sm:$0xff] %v552
                %v554 = vld [vmem:[%s414 + $0x828] sm:$0xff]
                %555 = vst [vmem:[%s415 + $0x228] sm:$0xff] %v554
                %v556 = vld [vmem:[%s414 + $0x830] sm:$0xff]
                %557 = vst [vmem:[%s415 + $0x230] sm:$0xff] %v556
                %v558 = vld [vmem:[%s414 + $0x838] sm:$0xff]
                %559 = vst [vmem:[%s415 + $0x238] sm:$0xff] %v558
                %v560 = vld [vmem:[%s414 + $0x900] sm:$0xff]
                %561 = vst [vmem:[%s415 + $0x240] sm:$0xff] %v560
                %v562 = vld [vmem:[%s414 + $0x908] sm:$0xff]
                %563 = vst [vmem:[%s415 + $0x248] sm:$0xff] %v562
                %v564 = vld [vmem:[%s414 + $0x910] sm:$0xff]
                %565 = vst [vmem:[%s415 + $0x250] sm:$0xff] %v564
                %v566 = vld [vmem:[%s414 + $0x918] sm:$0xff]
                %567 = vst [vmem:[%s415 + $0x258] sm:$0xff] %v566
                %v568 = vld [vmem:[%s414 + $0x920] sm:$0xff]
                %569 = vst [vmem:[%s415 + $0x260] sm:$0xff] %v568
                %v570 = vld [vmem:[%s414 + $0x928] sm:$0xff]
                %571 = vst [vmem:[%s415 + $0x268] sm:$0xff] %v570
                %v572 = vld [vmem:[%s414 + $0x930] sm:$0xff]
                %573 = vst [vmem:[%s415 + $0x270] sm:$0xff] %v572
                %v574 = vld [vmem:[%s414 + $0x938] sm:$0xff]
                %575 = vst [vmem:[%s415 + $0x278] sm:$0xff] %v574
              $region64: #{classifier_forward.6} parent=58 // loop_footer
                %s413 = sadd.s32 1, %s409
              $region65: #{classifier_forward.6} parent=58 // loop_footer_branch
                %408 = sbr.rel target = $region61
              $region66: #{classifier_forward.6} parent=58 // loop_exit
                _
            $region59: #{classifier_forward.6} parent=54 // pred_fallthru
              _
            // Predicated region
            $region67: #{classifier_forward.6} parent=54 // pred_check
              _
            $region68: #{classifier_forward.6} parent=54 // pred_check_branch
              %577 = sbr.rel target = $region70
            $region69: #{classifier_forward.6} parent=54 // pred_region
              _
            $region70: #{classifier_forward.6} parent=54 // pred_fallthru
              _
          $region55: #{classifier_forward.6} parent=50 // pred_fallthru
            _
          %578 = vnop
        $region51: #{classifier_forward.6} parent=23 // pred_fallthru
          _
        // Predicated region
        $region71: #{classifier_forward.6} parent=23 // pred_check
          %p579 = pneg %p84
        $region72: #{classifier_forward.6} parent=23 // pred_check_branch
          %581 = sbr.rel (%p579) target = $region74
        $region73: #{classifier_forward.6} parent=23 // pred_region
          %s582 = sand.u32 %s74, 1
          %s583 = sand.u32 %s74, 1
          %s584 = smul.addr %s583, 640
          %s585 = scalar_lea.vmem [#allocation4], %s584
          %s586 = smul.u32 16, %s12
          %s587 = smul.addr %s586, 4
          %s588 = scalar_lea.vmem %s2, %s587
          // Predicated region
          $region75: #{classifier_forward.6} parent=73 // pred_check
            _
          $region76: #{classifier_forward.6} parent=73 // pred_check_branch
            %590 = sbr.rel (0) target = $region78
          $region77: #{classifier_forward.6} parent=73 // pred_region
            // Predicated region
            $region79: #{classifier_forward.6} parent=77 // pred_check
              _
            $region80: #{classifier_forward.6} parent=77 // pred_check_branch
              %592 = sbr.rel (0) target = $region82
            $region81: #{classifier_forward.6} parent=77 // pred_region
              loop: start=0, step=1, limit=1
              $region83: #{classifier_forward.6} parent=81 // loop_pre_header
                _
              $region84: #{classifier_forward.6} parent=81 // loop_header
                %s594 = sphi 0, %s598
                %p595 = scmp.ge.s32.totalorder %s594, 1
                %s599 = sphi %s588, %s588
                %s600 = sphi %s585, %s585
              $region85: #{classifier_forward.6} parent=81 // loop_header_branch
                %597 = sbr.rel (%p595) target = $region89
              $region86: #{classifier_forward.6} parent=81 // loop_body
                %v601 = vld [vmem:[%s599] sm:$0xff]
                %602 = vst [vmem:[%s600] sm:$0xff] %v601
                %v603 = vld [vmem:[%s599 + $0x8] sm:$0xff]
                %604 = vst [vmem:[%s600 + $0x8] sm:$0xff] %v603
                %v605 = vld [vmem:[%s599 + $0x10] sm:$0xff]
                %606 = vst [vmem:[%s600 + $0x10] sm:$0xff] %v605
                %v607 = vld [vmem:[%s599 + $0x18] sm:$0xff]
                %608 = vst [vmem:[%s600 + $0x18] sm:$0xff] %v607
                %v609 = vld [vmem:[%s599 + $0x20] sm:$0xff]
                %610 = vst [vmem:[%s600 + $0x20] sm:$0xff] %v609
                %v611 = vld [vmem:[%s599 + $0x28] sm:$0xff]
                %612 = vst [vmem:[%s600 + $0x28] sm:$0xff] %v611
                %v613 = vld [vmem:[%s599 + $0x30] sm:$0xff]
                %614 = vst [vmem:[%s600 + $0x30] sm:$0xff] %v613
                %v615 = vld [vmem:[%s599 + $0x38] sm:$0xff]
                %616 = vst [vmem:[%s600 + $0x38] sm:$0xff] %v615
                %v617 = vld [vmem:[%s599 + $0x100] sm:$0xff]
                %618 = vst [vmem:[%s600 + $0x40] sm:$0xff] %v617
                %v619 = vld [vmem:[%s599 + $0x108] sm:$0xff]
                %620 = vst [vmem:[%s600 + $0x48] sm:$0xff] %v619
                %v621 = vld [vmem:[%s599 + $0x110] sm:$0xff]
                %622 = vst [vmem:[%s600 + $0x50] sm:$0xff] %v621
                %v623 = vld [vmem:[%s599 + $0x118] sm:$0xff]
                %624 = vst [vmem:[%s600 + $0x58] sm:$0xff] %v623
                %v625 = vld [vmem:[%s599 + $0x120] sm:$0xff]
                %626 = vst [vmem:[%s600 + $0x60] sm:$0xff] %v625
                %v627 = vld [vmem:[%s599 + $0x128] sm:$0xff]
                %628 = vst [vmem:[%s600 + $0x68] sm:$0xff] %v627
                %v629 = vld [vmem:[%s599 + $0x130] sm:$0xff]
                %630 = vst [vmem:[%s600 + $0x70] sm:$0xff] %v629
                %v631 = vld [vmem:[%s599 + $0x138] sm:$0xff]
                %632 = vst [vmem:[%s600 + $0x78] sm:$0xff] %v631
                %v633 = vld [vmem:[%s599 + $0x200] sm:$0xff]
                %634 = vst [vmem:[%s600 + $0x80] sm:$0xff] %v633
                %v635 = vld [vmem:[%s599 + $0x208] sm:$0xff]
                %636 = vst [vmem:[%s600 + $0x88] sm:$0xff] %v635
                %v637 = vld [vmem:[%s599 + $0x210] sm:$0xff]
                %638 = vst [vmem:[%s600 + $0x90] sm:$0xff] %v637
                %v639 = vld [vmem:[%s599 + $0x218] sm:$0xff]
                %640 = vst [vmem:[%s600 + $0x98] sm:$0xff] %v639
                %v641 = vld [vmem:[%s599 + $0x220] sm:$0xff]
                %642 = vst [vmem:[%s600 + $0xa0] sm:$0xff] %v641
                %v643 = vld [vmem:[%s599 + $0x228] sm:$0xff]
                %644 = vst [vmem:[%s600 + $0xa8] sm:$0xff] %v643
                %v645 = vld [vmem:[%s599 + $0x230] sm:$0xff]
                %646 = vst [vmem:[%s600 + $0xb0] sm:$0xff] %v645
                %v647 = vld [vmem:[%s599 + $0x238] sm:$0xff]
                %648 = vst [vmem:[%s600 + $0xb8] sm:$0xff] %v647
                %v649 = vld [vmem:[%s599 + $0x300] sm:$0xff]
                %650 = vst [vmem:[%s600 + $0xc0] sm:$0xff] %v649
                %v651 = vld [vmem:[%s599 + $0x308] sm:$0xff]
                %652 = vst [vmem:[%s600 + $0xc8] sm:$0xff] %v651
                %v653 = vld [vmem:[%s599 + $0x310] sm:$0xff]
                %654 = vst [vmem:[%s600 + $0xd0] sm:$0xff] %v653
                %v655 = vld [vmem:[%s599 + $0x318] sm:$0xff]
                %656 = vst [vmem:[%s600 + $0xd8] sm:$0xff] %v655
                %v657 = vld [vmem:[%s599 + $0x320] sm:$0xff]
                %658 = vst [vmem:[%s600 + $0xe0] sm:$0xff] %v657
                %v659 = vld [vmem:[%s599 + $0x328] sm:$0xff]
                %660 = vst [vmem:[%s600 + $0xe8] sm:$0xff] %v659
                %v661 = vld [vmem:[%s599 + $0x330] sm:$0xff]
                %662 = vst [vmem:[%s600 + $0xf0] sm:$0xff] %v661
                %v663 = vld [vmem:[%s599 + $0x338] sm:$0xff]
                %664 = vst [vmem:[%s600 + $0xf8] sm:$0xff] %v663
                %v665 = vld [vmem:[%s599 + $0x400] sm:$0xff]
                %666 = vst [vmem:[%s600 + $0x100] sm:$0xff] %v665
                %v667 = vld [vmem:[%s599 + $0x408] sm:$0xff]
                %668 = vst [vmem:[%s600 + $0x108] sm:$0xff] %v667
                %v669 = vld [vmem:[%s599 + $0x410] sm:$0xff]
                %670 = vst [vmem:[%s600 + $0x110] sm:$0xff] %v669
                %v671 = vld [vmem:[%s599 + $0x418] sm:$0xff]
                %672 = vst [vmem:[%s600 + $0x118] sm:$0xff] %v671
                %v673 = vld [vmem:[%s599 + $0x420] sm:$0xff]
                %674 = vst [vmem:[%s600 + $0x120] sm:$0xff] %v673
                %v675 = vld [vmem:[%s599 + $0x428] sm:$0xff]
                %676 = vst [vmem:[%s600 + $0x128] sm:$0xff] %v675
                %v677 = vld [vmem:[%s599 + $0x430] sm:$0xff]
                %678 = vst [vmem:[%s600 + $0x130] sm:$0xff] %v677
                %v679 = vld [vmem:[%s599 + $0x438] sm:$0xff]
                %680 = vst [vmem:[%s600 + $0x138] sm:$0xff] %v679
                %v681 = vld [vmem:[%s599 + $0x500] sm:$0xff]
                %682 = vst [vmem:[%s600 + $0x140] sm:$0xff] %v681
                %v683 = vld [vmem:[%s599 + $0x508] sm:$0xff]
                %684 = vst [vmem:[%s600 + $0x148] sm:$0xff] %v683
                %v685 = vld [vmem:[%s599 + $0x510] sm:$0xff]
                %686 = vst [vmem:[%s600 + $0x150] sm:$0xff] %v685
                %v687 = vld [vmem:[%s599 + $0x518] sm:$0xff]
                %688 = vst [vmem:[%s600 + $0x158] sm:$0xff] %v687
                %v689 = vld [vmem:[%s599 + $0x520] sm:$0xff]
                %690 = vst [vmem:[%s600 + $0x160] sm:$0xff] %v689
                %v691 = vld [vmem:[%s599 + $0x528] sm:$0xff]
                %692 = vst [vmem:[%s600 + $0x168] sm:$0xff] %v691
                %v693 = vld [vmem:[%s599 + $0x530] sm:$0xff]
                %694 = vst [vmem:[%s600 + $0x170] sm:$0xff] %v693
                %v695 = vld [vmem:[%s599 + $0x538] sm:$0xff]
                %696 = vst [vmem:[%s600 + $0x178] sm:$0xff] %v695
                %v697 = vld [vmem:[%s599 + $0x600] sm:$0xff]
                %698 = vst [vmem:[%s600 + $0x180] sm:$0xff] %v697
                %v699 = vld [vmem:[%s599 + $0x608] sm:$0xff]
                %700 = vst [vmem:[%s600 + $0x188] sm:$0xff] %v699
                %v701 = vld [vmem:[%s599 + $0x610] sm:$0xff]
                %702 = vst [vmem:[%s600 + $0x190] sm:$0xff] %v701
                %v703 = vld [vmem:[%s599 + $0x618] sm:$0xff]
                %704 = vst [vmem:[%s600 + $0x198] sm:$0xff] %v703
                %v705 = vld [vmem:[%s599 + $0x620] sm:$0xff]
                %706 = vst [vmem:[%s600 + $0x1a0] sm:$0xff] %v705
                %v707 = vld [vmem:[%s599 + $0x628] sm:$0xff]
                %708 = vst [vmem:[%s600 + $0x1a8] sm:$0xff] %v707
                %v709 = vld [vmem:[%s599 + $0x630] sm:$0xff]
                %710 = vst [vmem:[%s600 + $0x1b0] sm:$0xff] %v709
                %v711 = vld [vmem:[%s599 + $0x638] sm:$0xff]
                %712 = vst [vmem:[%s600 + $0x1b8] sm:$0xff] %v711
                %v713 = vld [vmem:[%s599 + $0x700] sm:$0xff]
                %714 = vst [vmem:[%s600 + $0x1c0] sm:$0xff] %v713
                %v715 = vld [vmem:[%s599 + $0x708] sm:$0xff]
                %716 = vst [vmem:[%s600 + $0x1c8] sm:$0xff] %v715
                %v717 = vld [vmem:[%s599 + $0x710] sm:$0xff]
                %718 = vst [vmem:[%s600 + $0x1d0] sm:$0xff] %v717
                %v719 = vld [vmem:[%s599 + $0x718] sm:$0xff]
                %720 = vst [vmem:[%s600 + $0x1d8] sm:$0xff] %v719
                %v721 = vld [vmem:[%s599 + $0x720] sm:$0xff]
                %722 = vst [vmem:[%s600 + $0x1e0] sm:$0xff] %v721
                %v723 = vld [vmem:[%s599 + $0x728] sm:$0xff]
                %724 = vst [vmem:[%s600 + $0x1e8] sm:$0xff] %v723
                %v725 = vld [vmem:[%s599 + $0x730] sm:$0xff]
                %726 = vst [vmem:[%s600 + $0x1f0] sm:$0xff] %v725
                %v727 = vld [vmem:[%s599 + $0x738] sm:$0xff]
                %728 = vst [vmem:[%s600 + $0x1f8] sm:$0xff] %v727
                %v729 = vld [vmem:[%s599 + $0x800] sm:$0xff]
                %730 = vst [vmem:[%s600 + $0x200] sm:$0xff] %v729
                %v731 = vld [vmem:[%s599 + $0x808] sm:$0xff]
                %732 = vst [vmem:[%s600 + $0x208] sm:$0xff] %v731
                %v733 = vld [vmem:[%s599 + $0x810] sm:$0xff]
                %734 = vst [vmem:[%s600 + $0x210] sm:$0xff] %v733
                %v735 = vld [vmem:[%s599 + $0x818] sm:$0xff]
                %736 = vst [vmem:[%s600 + $0x218] sm:$0xff] %v735
                %v737 = vld [vmem:[%s599 + $0x820] sm:$0xff]
                %738 = vst [vmem:[%s600 + $0x220] sm:$0xff] %v737
                %v739 = vld [vmem:[%s599 + $0x828] sm:$0xff]
                %740 = vst [vmem:[%s600 + $0x228] sm:$0xff] %v739
                %v741 = vld [vmem:[%s599 + $0x830] sm:$0xff]
                %742 = vst [vmem:[%s600 + $0x230] sm:$0xff] %v741
                %v743 = vld [vmem:[%s599 + $0x838] sm:$0xff]
                %744 = vst [vmem:[%s600 + $0x238] sm:$0xff] %v743
                %v745 = vld [vmem:[%s599 + $0x900] sm:$0xff]
                %746 = vst [vmem:[%s600 + $0x240] sm:$0xff] %v745
                %v747 = vld [vmem:[%s599 + $0x908] sm:$0xff]
                %748 = vst [vmem:[%s600 + $0x248] sm:$0xff] %v747
                %v749 = vld [vmem:[%s599 + $0x910] sm:$0xff]
                %750 = vst [vmem:[%s600 + $0x250] sm:$0xff] %v749
                %v751 = vld [vmem:[%s599 + $0x918] sm:$0xff]
                %752 = vst [vmem:[%s600 + $0x258] sm:$0xff] %v751
                %v753 = vld [vmem:[%s599 + $0x920] sm:$0xff]
                %754 = vst [vmem:[%s600 + $0x260] sm:$0xff] %v753
                %v755 = vld [vmem:[%s599 + $0x928] sm:$0xff]
                %756 = vst [vmem:[%s600 + $0x268] sm:$0xff] %v755
                %v757 = vld [vmem:[%s599 + $0x930] sm:$0xff]
                %758 = vst [vmem:[%s600 + $0x270] sm:$0xff] %v757
                %v759 = vld [vmem:[%s599 + $0x938] sm:$0xff]
                %760 = vst [vmem:[%s600 + $0x278] sm:$0xff] %v759
              $region87: #{classifier_forward.6} parent=81 // loop_footer
                %s598 = sadd.s32 1, %s594
              $region88: #{classifier_forward.6} parent=81 // loop_footer_branch
                %593 = sbr.rel target = $region84
              $region89: #{classifier_forward.6} parent=81 // loop_exit
                _
            $region82: #{classifier_forward.6} parent=77 // pred_fallthru
              _
            // Predicated region
            $region90: #{classifier_forward.6} parent=77 // pred_check
              _
            $region91: #{classifier_forward.6} parent=77 // pred_check_branch
              %762 = sbr.rel target = $region93
            $region92: #{classifier_forward.6} parent=77 // pred_region
              _
            $region93: #{classifier_forward.6} parent=77 // pred_fallthru
              _
          $region78: #{classifier_forward.6} parent=73 // pred_fallthru
            _
          %763 = vnop
        $region74: #{classifier_forward.6} parent=23 // pred_fallthru
          _
        // Predicated region
        $region94: #{classifier_forward.6} parent=23 // pred_check
          %p764 = pneg %p110
        $region95: #{classifier_forward.6} parent=23 // pred_check_branch
          %766 = sbr.rel (%p764) target = $region97
        $region96: #{classifier_forward.6} parent=23 // pred_region
          %s767 = sand.u32 %s100, 1
          %s768 = sand.u32 %s100, 1
          %s769 = smul.addr %s768, 640
          %s770 = scalar_lea.vmem [#allocation5], %s769
          %s771 = smul.u32 16, %s12
          %s772 = smul.addr %s771, 4
          %s773 = scalar_lea.vmem %s3, %s772
          // Predicated region
          $region98: #{classifier_forward.6} parent=96 // pred_check
            _
          $region99: #{classifier_forward.6} parent=96 // pred_check_branch
            %775 = sbr.rel (0) target = $region101
          $region100: #{classifier_forward.6} parent=96 // pred_region
            // Predicated region
            $region102: #{classifier_forward.6} parent=100 // pred_check
              _
            $region103: #{classifier_forward.6} parent=100 // pred_check_branch
              %777 = sbr.rel (0) target = $region105
            $region104: #{classifier_forward.6} parent=100 // pred_region
              loop: start=0, step=1, limit=1
              $region106: #{classifier_forward.6} parent=104 // loop_pre_header
                _
              $region107: #{classifier_forward.6} parent=104 // loop_header
                %s779 = sphi 0, %s783
                %p780 = scmp.ge.s32.totalorder %s779, 1
                %s784 = sphi %s773, %s773
                %s785 = sphi %s770, %s770
              $region108: #{classifier_forward.6} parent=104 // loop_header_branch
                %782 = sbr.rel (%p780) target = $region112
              $region109: #{classifier_forward.6} parent=104 // loop_body
                %v786 = vld [vmem:[%s784] sm:$0xff]
                %787 = vst [vmem:[%s785] sm:$0xff] %v786
                %v788 = vld [vmem:[%s784 + $0x8] sm:$0xff]
                %789 = vst [vmem:[%s785 + $0x8] sm:$0xff] %v788
                %v790 = vld [vmem:[%s784 + $0x10] sm:$0xff]
                %791 = vst [vmem:[%s785 + $0x10] sm:$0xff] %v790
                %v792 = vld [vmem:[%s784 + $0x18] sm:$0xff]
                %793 = vst [vmem:[%s785 + $0x18] sm:$0xff] %v792
                %v794 = vld [vmem:[%s784 + $0x20] sm:$0xff]
                %795 = vst [vmem:[%s785 + $0x20] sm:$0xff] %v794
                %v796 = vld [vmem:[%s784 + $0x28] sm:$0xff]
                %797 = vst [vmem:[%s785 + $0x28] sm:$0xff] %v796
                %v798 = vld [vmem:[%s784 + $0x30] sm:$0xff]
                %799 = vst [vmem:[%s785 + $0x30] sm:$0xff] %v798
                %v800 = vld [vmem:[%s784 + $0x38] sm:$0xff]
                %801 = vst [vmem:[%s785 + $0x38] sm:$0xff] %v800
                %v802 = vld [vmem:[%s784 + $0x100] sm:$0xff]
                %803 = vst [vmem:[%s785 + $0x40] sm:$0xff] %v802
                %v804 = vld [vmem:[%s784 + $0x108] sm:$0xff]
                %805 = vst [vmem:[%s785 + $0x48] sm:$0xff] %v804
                %v806 = vld [vmem:[%s784 + $0x110] sm:$0xff]
                %807 = vst [vmem:[%s785 + $0x50] sm:$0xff] %v806
                %v808 = vld [vmem:[%s784 + $0x118] sm:$0xff]
                %809 = vst [vmem:[%s785 + $0x58] sm:$0xff] %v808
                %v810 = vld [vmem:[%s784 + $0x120] sm:$0xff]
                %811 = vst [vmem:[%s785 + $0x60] sm:$0xff] %v810
                %v812 = vld [vmem:[%s784 + $0x128] sm:$0xff]
                %813 = vst [vmem:[%s785 + $0x68] sm:$0xff] %v812
                %v814 = vld [vmem:[%s784 + $0x130] sm:$0xff]
                %815 = vst [vmem:[%s785 + $0x70] sm:$0xff] %v814
                %v816 = vld [vmem:[%s784 + $0x138] sm:$0xff]
                %817 = vst [vmem:[%s785 + $0x78] sm:$0xff] %v816
                %v818 = vld [vmem:[%s784 + $0x200] sm:$0xff]
                %819 = vst [vmem:[%s785 + $0x80] sm:$0xff] %v818
                %v820 = vld [vmem:[%s784 + $0x208] sm:$0xff]
                %821 = vst [vmem:[%s785 + $0x88] sm:$0xff] %v820
                %v822 = vld [vmem:[%s784 + $0x210] sm:$0xff]
                %823 = vst [vmem:[%s785 + $0x90] sm:$0xff] %v822
                %v824 = vld [vmem:[%s784 + $0x218] sm:$0xff]
                %825 = vst [vmem:[%s785 + $0x98] sm:$0xff] %v824
                %v826 = vld [vmem:[%s784 + $0x220] sm:$0xff]
                %827 = vst [vmem:[%s785 + $0xa0] sm:$0xff] %v826
                %v828 = vld [vmem:[%s784 + $0x228] sm:$0xff]
                %829 = vst [vmem:[%s785 + $0xa8] sm:$0xff] %v828
                %v830 = vld [vmem:[%s784 + $0x230] sm:$0xff]
                %831 = vst [vmem:[%s785 + $0xb0] sm:$0xff] %v830
                %v832 = vld [vmem:[%s784 + $0x238] sm:$0xff]
                %833 = vst [vmem:[%s785 + $0xb8] sm:$0xff] %v832
                %v834 = vld [vmem:[%s784 + $0x300] sm:$0xff]
                %835 = vst [vmem:[%s785 + $0xc0] sm:$0xff] %v834
                %v836 = vld [vmem:[%s784 + $0x308] sm:$0xff]
                %837 = vst [vmem:[%s785 + $0xc8] sm:$0xff] %v836
                %v838 = vld [vmem:[%s784 + $0x310] sm:$0xff]
                %839 = vst [vmem:[%s785 + $0xd0] sm:$0xff] %v838
                %v840 = vld [vmem:[%s784 + $0x318] sm:$0xff]
                %841 = vst [vmem:[%s785 + $0xd8] sm:$0xff] %v840
                %v842 = vld [vmem:[%s784 + $0x320] sm:$0xff]
                %843 = vst [vmem:[%s785 + $0xe0] sm:$0xff] %v842
                %v844 = vld [vmem:[%s784 + $0x328] sm:$0xff]
                %845 = vst [vmem:[%s785 + $0xe8] sm:$0xff] %v844
                %v846 = vld [vmem:[%s784 + $0x330] sm:$0xff]
                %847 = vst [vmem:[%s785 + $0xf0] sm:$0xff] %v846
                %v848 = vld [vmem:[%s784 + $0x338] sm:$0xff]
                %849 = vst [vmem:[%s785 + $0xf8] sm:$0xff] %v848
                %v850 = vld [vmem:[%s784 + $0x400] sm:$0xff]
                %851 = vst [vmem:[%s785 + $0x100] sm:$0xff] %v850
                %v852 = vld [vmem:[%s784 + $0x408] sm:$0xff]
                %853 = vst [vmem:[%s785 + $0x108] sm:$0xff] %v852
                %v854 = vld [vmem:[%s784 + $0x410] sm:$0xff]
                %855 = vst [vmem:[%s785 + $0x110] sm:$0xff] %v854
                %v856 = vld [vmem:[%s784 + $0x418] sm:$0xff]
                %857 = vst [vmem:[%s785 + $0x118] sm:$0xff] %v856
                %v858 = vld [vmem:[%s784 + $0x420] sm:$0xff]
                %859 = vst [vmem:[%s785 + $0x120] sm:$0xff] %v858
                %v860 = vld [vmem:[%s784 + $0x428] sm:$0xff]
                %861 = vst [vmem:[%s785 + $0x128] sm:$0xff] %v860
                %v862 = vld [vmem:[%s784 + $0x430] sm:$0xff]
                %863 = vst [vmem:[%s785 + $0x130] sm:$0xff] %v862
                %v864 = vld [vmem:[%s784 + $0x438] sm:$0xff]
                %865 = vst [vmem:[%s785 + $0x138] sm:$0xff] %v864
                %v866 = vld [vmem:[%s784 + $0x500] sm:$0xff]
                %867 = vst [vmem:[%s785 + $0x140] sm:$0xff] %v866
                %v868 = vld [vmem:[%s784 + $0x508] sm:$0xff]
                %869 = vst [vmem:[%s785 + $0x148] sm:$0xff] %v868
                %v870 = vld [vmem:[%s784 + $0x510] sm:$0xff]
                %871 = vst [vmem:[%s785 + $0x150] sm:$0xff] %v870
                %v872 = vld [vmem:[%s784 + $0x518] sm:$0xff]
                %873 = vst [vmem:[%s785 + $0x158] sm:$0xff] %v872
                %v874 = vld [vmem:[%s784 + $0x520] sm:$0xff]
                %875 = vst [vmem:[%s785 + $0x160] sm:$0xff] %v874
                %v876 = vld [vmem:[%s784 + $0x528] sm:$0xff]
                %877 = vst [vmem:[%s785 + $0x168] sm:$0xff] %v876
                %v878 = vld [vmem:[%s784 + $0x530] sm:$0xff]
                %879 = vst [vmem:[%s785 + $0x170] sm:$0xff] %v878
                %v880 = vld [vmem:[%s784 + $0x538] sm:$0xff]
                %881 = vst [vmem:[%s785 + $0x178] sm:$0xff] %v880
                %v882 = vld [vmem:[%s784 + $0x600] sm:$0xff]
                %883 = vst [vmem:[%s785 + $0x180] sm:$0xff] %v882
                %v884 = vld [vmem:[%s784 + $0x608] sm:$0xff]
                %885 = vst [vmem:[%s785 + $0x188] sm:$0xff] %v884
                %v886 = vld [vmem:[%s784 + $0x610] sm:$0xff]
                %887 = vst [vmem:[%s785 + $0x190] sm:$0xff] %v886
                %v888 = vld [vmem:[%s784 + $0x618] sm:$0xff]
                %889 = vst [vmem:[%s785 + $0x198] sm:$0xff] %v888
                %v890 = vld [vmem:[%s784 + $0x620] sm:$0xff]
                %891 = vst [vmem:[%s785 + $0x1a0] sm:$0xff] %v890
                %v892 = vld [vmem:[%s784 + $0x628] sm:$0xff]
                %893 = vst [vmem:[%s785 + $0x1a8] sm:$0xff] %v892
                %v894 = vld [vmem:[%s784 + $0x630] sm:$0xff]
                %895 = vst [vmem:[%s785 + $0x1b0] sm:$0xff] %v894
                %v896 = vld [vmem:[%s784 + $0x638] sm:$0xff]
                %897 = vst [vmem:[%s785 + $0x1b8] sm:$0xff] %v896
                %v898 = vld [vmem:[%s784 + $0x700] sm:$0xff]
                %899 = vst [vmem:[%s785 + $0x1c0] sm:$0xff] %v898
                %v900 = vld [vmem:[%s784 + $0x708] sm:$0xff]
                %901 = vst [vmem:[%s785 + $0x1c8] sm:$0xff] %v900
                %v902 = vld [vmem:[%s784 + $0x710] sm:$0xff]
                %903 = vst [vmem:[%s785 + $0x1d0] sm:$0xff] %v902
                %v904 = vld [vmem:[%s784 + $0x718] sm:$0xff]
                %905 = vst [vmem:[%s785 + $0x1d8] sm:$0xff] %v904
                %v906 = vld [vmem:[%s784 + $0x720] sm:$0xff]
                %907 = vst [vmem:[%s785 + $0x1e0] sm:$0xff] %v906
                %v908 = vld [vmem:[%s784 + $0x728] sm:$0xff]
                %909 = vst [vmem:[%s785 + $0x1e8] sm:$0xff] %v908
                %v910 = vld [vmem:[%s784 + $0x730] sm:$0xff]
                %911 = vst [vmem:[%s785 + $0x1f0] sm:$0xff] %v910
                %v912 = vld [vmem:[%s784 + $0x738] sm:$0xff]
                %913 = vst [vmem:[%s785 + $0x1f8] sm:$0xff] %v912
                %v914 = vld [vmem:[%s784 + $0x800] sm:$0xff]
                %915 = vst [vmem:[%s785 + $0x200] sm:$0xff] %v914
                %v916 = vld [vmem:[%s784 + $0x808] sm:$0xff]
                %917 = vst [vmem:[%s785 + $0x208] sm:$0xff] %v916
                %v918 = vld [vmem:[%s784 + $0x810] sm:$0xff]
                %919 = vst [vmem:[%s785 + $0x210] sm:$0xff] %v918
                %v920 = vld [vmem:[%s784 + $0x818] sm:$0xff]
                %921 = vst [vmem:[%s785 + $0x218] sm:$0xff] %v920
                %v922 = vld [vmem:[%s784 + $0x820] sm:$0xff]
                %923 = vst [vmem:[%s785 + $0x220] sm:$0xff] %v922
                %v924 = vld [vmem:[%s784 + $0x828] sm:$0xff]
                %925 = vst [vmem:[%s785 + $0x228] sm:$0xff] %v924
                %v926 = vld [vmem:[%s784 + $0x830] sm:$0xff]
                %927 = vst [vmem:[%s785 + $0x230] sm:$0xff] %v926
                %v928 = vld [vmem:[%s784 + $0x838] sm:$0xff]
                %929 = vst [vmem:[%s785 + $0x238] sm:$0xff] %v928
                %v930 = vld [vmem:[%s784 + $0x900] sm:$0xff]
                %931 = vst [vmem:[%s785 + $0x240] sm:$0xff] %v930
                %v932 = vld [vmem:[%s784 + $0x908] sm:$0xff]
                %933 = vst [vmem:[%s785 + $0x248] sm:$0xff] %v932
                %v934 = vld [vmem:[%s784 + $0x910] sm:$0xff]
                %935 = vst [vmem:[%s785 + $0x250] sm:$0xff] %v934
                %v936 = vld [vmem:[%s784 + $0x918] sm:$0xff]
                %937 = vst [vmem:[%s785 + $0x258] sm:$0xff] %v936
                %v938 = vld [vmem:[%s784 + $0x920] sm:$0xff]
                %939 = vst [vmem:[%s785 + $0x260] sm:$0xff] %v938
                %v940 = vld [vmem:[%s784 + $0x928] sm:$0xff]
                %941 = vst [vmem:[%s785 + $0x268] sm:$0xff] %v940
                %v942 = vld [vmem:[%s784 + $0x930] sm:$0xff]
                %943 = vst [vmem:[%s785 + $0x270] sm:$0xff] %v942
                %v944 = vld [vmem:[%s784 + $0x938] sm:$0xff]
                %945 = vst [vmem:[%s785 + $0x278] sm:$0xff] %v944
              $region110: #{classifier_forward.6} parent=104 // loop_footer
                %s783 = sadd.s32 1, %s779
              $region111: #{classifier_forward.6} parent=104 // loop_footer_branch
                %778 = sbr.rel target = $region107
              $region112: #{classifier_forward.6} parent=104 // loop_exit
                _
            $region105: #{classifier_forward.6} parent=100 // pred_fallthru
              _
            // Predicated region
            $region113: #{classifier_forward.6} parent=100 // pred_check
              _
            $region114: #{classifier_forward.6} parent=100 // pred_check_branch
              %947 = sbr.rel target = $region116
            $region115: #{classifier_forward.6} parent=100 // pred_region
              _
            $region116: #{classifier_forward.6} parent=100 // pred_fallthru
              _
          $region101: #{classifier_forward.6} parent=96 // pred_fallthru
            _
          %948 = vnop
        $region97: #{classifier_forward.6} parent=23 // pred_fallthru
          _
      $region24: #{classifier_forward.6} parent=5 // pred_fallthru
        _
      %p949 = scmp.le.s32.totalorder 1, %s12
      %p950 = scmp.lt.s32.totalorder %s12, 5
      %p951 = pnand %p949, %p950
      %p952 = pneg %p951
      // Predicated region
      $region117: #{classifier_forward.6} parent=5 // pred_check
        _
      $region118: #{classifier_forward.6} parent=5 // pred_check_branch
        %954 = sbr.rel (%p951) target = $region120
      $region119: #{classifier_forward.6} parent=5 // pred_region
        %s955 = ssub.s32 %s12, 1
        %s956 = sand.u32 %s25, 1
        %s957 = sand.u32 %s25, 1
        %s958 = smul.addr %s957, 640
        %s959 = scalar_lea.vmem [#allocation2], %s958
        // Predicated region
        $region121: #{classifier_forward.6} parent=119 // pred_check
          %p960 = pneg %p38
        $region122: #{classifier_forward.6} parent=119 // pred_check_branch
          %962 = sbr.rel (%p960) target = $region124
        $region123: #{classifier_forward.6} parent=119 // pred_region
          _
        $region124: #{classifier_forward.6} parent=119 // pred_fallthru
          _
        %s963 = sand.u32 %s51, 1
        %s964 = sand.u32 %s51, 1
        %s965 = smul.addr %s964, 640
        %s966 = scalar_lea.vmem [#allocation3], %s965
        // Predicated region
        $region125: #{classifier_forward.6} parent=119 // pred_check
          %p967 = pneg %p64
        $region126: #{classifier_forward.6} parent=119 // pred_check_branch
          %969 = sbr.rel (%p967) target = $region128
        $region127: #{classifier_forward.6} parent=119 // pred_region
          _
        $region128: #{classifier_forward.6} parent=119 // pred_fallthru
          _
        %s970 = sand.u32 %s77, 1
        %s971 = sand.u32 %s77, 1
        %s972 = smul.addr %s971, 640
        %s973 = scalar_lea.vmem [#allocation4], %s972
        // Predicated region
        $region129: #{classifier_forward.6} parent=119 // pred_check
          %p974 = pneg %p90
        $region130: #{classifier_forward.6} parent=119 // pred_check_branch
          %976 = sbr.rel (%p974) target = $region132
        $region131: #{classifier_forward.6} parent=119 // pred_region
          _
        $region132: #{classifier_forward.6} parent=119 // pred_fallthru
          _
        %s977 = sand.u32 %s103, 1
        %s978 = sand.u32 %s103, 1
        %s979 = smul.addr %s978, 640
        %s980 = scalar_lea.vmem [#allocation5], %s979
        // Predicated region
        $region133: #{classifier_forward.6} parent=119 // pred_check
          %p981 = pneg %p116
        $region134: #{classifier_forward.6} parent=119 // pred_check_branch
          %983 = sbr.rel (%p981) target = $region136
        $region135: #{classifier_forward.6} parent=119 // pred_region
          _
        $region136: #{classifier_forward.6} parent=119 // pred_fallthru
          _
        %s984 = sand.u32 %s25, 1
        %s985 = sand.u32 %s25, 1
        %s986 = smul.addr %s985, 640
        %s987 = scalar_lea.vmem [#allocation2], %s986
        %p988 = pneg %p38
        %p989 = pneg %p35
        %s990 = sand.u32 %s51, 1
        %s991 = sand.u32 %s51, 1
        %s992 = smul.addr %s991, 640
        %s993 = scalar_lea.vmem [#allocation3], %s992
        %p994 = pneg %p64
        %p995 = pneg %p61
        %s996 = sand.u32 %s77, 1
        %s997 = sand.u32 %s77, 1
        %s998 = smul.addr %s997, 640
        %s999 = scalar_lea.vmem [#allocation4], %s998
        %p1000 = pneg %p90
        %p1001 = pneg %p87
        %s1002 = sand.u32 %s103, 1
        %s1003 = sand.u32 %s103, 1
        %s1004 = smul.addr %s1003, 640
        %s1005 = scalar_lea.vmem [#allocation5], %s1004
        %p1006 = pneg %p116
        %p1007 = pneg %p113
        %p1008 = pneg %p137
        %p1009 = pneg %p134
        %p1010 = pneg %p158
        %p1011 = pneg %p155
        %p1012 = pneg %p184
        %p1013 = pneg %p181
        %s1014 = smul.u32 16, %s17
        %p1015 = scmp.lt.s32.totalorder %s1014, 63
        %s1016 = scalar_select %p1015, %s1014, 63
        %s1017 = smul.addr %s1016, 2
        %s1018 = scalar_lea.vmem %s6, %s1017
        %s1019 = smul.u32 16, %s17
        %s1020 = smul.u32 16, %s17
        %s1021 = smul.u32 16, %s17
        %s1022 = smul.u32 16, %s17
        %s1023 = smul.u32 16, %s17
        %p1024 = scmp.lt.s32.totalorder %s1023, 63
        %s1025 = scalar_select %p1024, %s1023, 63
        %s1026 = smul.addr %s1025, 2
        %s1027 = scalar_lea.vmem %s6, %s1026
        %s1028 = smul.u32 16, %s17
        %v1030 = vld [vmem:[%s4] sm:$0x3]
        %v1031 = vld [vmem:[%s959] sm:$0xff]
        %v1032 = vld [vmem:[%s959 + $0x8] sm:$0xff]
        %v1033 = vld [vmem:[%s959 + $0x10] sm:$0xff]
        %v1034 = vld [vmem:[%s959 + $0x18] sm:$0xff]
        %v1035 = vld [vmem:[%s959 + $0x20] sm:$0xff]
        %v1036 = vld [vmem:[%s959 + $0x28] sm:$0xff]
        %v1037 = vld [vmem:[%s959 + $0x30] sm:$0xff]
        %v1038 = vld [vmem:[%s959 + $0x38] sm:$0xff]
        %v1039 = vld [vmem:[%s959 + $0x40] sm:$0xff]
        %v1040 = vld [vmem:[%s959 + $0x48] sm:$0xff]
        %v1041 = vld [vmem:[%s959 + $0x50] sm:$0xff]
        %v1042 = vld [vmem:[%s959 + $0x58] sm:$0xff]
        %v1043 = vld [vmem:[%s959 + $0x60] sm:$0xff]
        %v1044 = vld [vmem:[%s959 + $0x68] sm:$0xff]
        %v1045 = vld [vmem:[%s959 + $0x70] sm:$0xff]
        %v1046 = vld [vmem:[%s959 + $0x78] sm:$0xff]
        %v1047 = vld [vmem:[%s959 + $0x80] sm:$0xff]
        %v1048 = vld [vmem:[%s959 + $0x88] sm:$0xff]
        %v1049 = vld [vmem:[%s959 + $0x90] sm:$0xff]
        %v1050 = vld [vmem:[%s959 + $0x98] sm:$0xff]
        %v1051 = vld [vmem:[%s959 + $0xa0] sm:$0xff]
        %v1052 = vld [vmem:[%s959 + $0xa8] sm:$0xff]
        %v1053 = vld [vmem:[%s959 + $0xb0] sm:$0xff]
        %v1054 = vld [vmem:[%s959 + $0xb8] sm:$0xff]
        %v1055 = vld [vmem:[%s959 + $0xc0] sm:$0xff]
        %v1056 = vld [vmem:[%s959 + $0xc8] sm:$0xff]
        %v1057 = vld [vmem:[%s959 + $0xd0] sm:$0xff]
        %v1058 = vld [vmem:[%s959 + $0xd8] sm:$0xff]
        %v1059 = vld [vmem:[%s959 + $0xe0] sm:$0xff]
        %v1060 = vld [vmem:[%s959 + $0xe8] sm:$0xff]
        %v1061 = vld [vmem:[%s959 + $0xf0] sm:$0xff]
        %v1062 = vld [vmem:[%s959 + $0xf8] sm:$0xff]
        %v1063 = vld [vmem:[%s959 + $0x100] sm:$0xff]
        %v1064 = vld [vmem:[%s959 + $0x108] sm:$0xff]
        %v1065 = vld [vmem:[%s959 + $0x110] sm:$0xff]
        %v1066 = vld [vmem:[%s959 + $0x118] sm:$0xff]
        %v1067 = vld [vmem:[%s959 + $0x120] sm:$0xff]
        %v1068 = vld [vmem:[%s959 + $0x128] sm:$0xff]
        %v1069 = vld [vmem:[%s959 + $0x130] sm:$0xff]
        %v1070 = vld [vmem:[%s959 + $0x138] sm:$0xff]
        %v1071 = vld [vmem:[%s959 + $0x140] sm:$0xff]
        %v1072 = vld [vmem:[%s959 + $0x148] sm:$0xff]
        %v1073 = vld [vmem:[%s959 + $0x150] sm:$0xff]
        %v1074 = vld [vmem:[%s959 + $0x158] sm:$0xff]
        %v1075 = vld [vmem:[%s959 + $0x160] sm:$0xff]
        %v1076 = vld [vmem:[%s959 + $0x168] sm:$0xff]
        %v1077 = vld [vmem:[%s959 + $0x170] sm:$0xff]
        %v1078 = vld [vmem:[%s959 + $0x178] sm:$0xff]
        %v1079 = vld [vmem:[%s959 + $0x180] sm:$0xff]
        %v1080 = vld [vmem:[%s959 + $0x188] sm:$0xff]
        %v1081 = vld [vmem:[%s959 + $0x190] sm:$0xff]
        %v1082 = vld [vmem:[%s959 + $0x198] sm:$0xff]
        %v1083 = vld [vmem:[%s959 + $0x1a0] sm:$0xff]
        %v1084 = vld [vmem:[%s959 + $0x1a8] sm:$0xff]
        %v1085 = vld [vmem:[%s959 + $0x1b0] sm:$0xff]
        %v1086 = vld [vmem:[%s959 + $0x1b8] sm:$0xff]
        %v1087 = vld [vmem:[%s959 + $0x1c0] sm:$0xff]
        %v1088 = vld [vmem:[%s959 + $0x1c8] sm:$0xff]
        %v1089 = vld [vmem:[%s959 + $0x1d0] sm:$0xff]
        %v1090 = vld [vmem:[%s959 + $0x1d8] sm:$0xff]
        %v1091 = vld [vmem:[%s959 + $0x1e0] sm:$0xff]
        %v1092 = vld [vmem:[%s959 + $0x1e8] sm:$0xff]
        %v1093 = vld [vmem:[%s959 + $0x1f0] sm:$0xff]
        %v1094 = vld [vmem:[%s959 + $0x1f8] sm:$0xff]
        %v1095 = vld [vmem:[%s959 + $0x200] sm:$0xff]
        %v1096 = vld [vmem:[%s959 + $0x208] sm:$0xff]
        %v1097 = vld [vmem:[%s959 + $0x210] sm:$0xff]
        %v1098 = vld [vmem:[%s959 + $0x218] sm:$0xff]
        %v1099 = vld [vmem:[%s959 + $0x220] sm:$0xff]
        %v1100 = vld [vmem:[%s959 + $0x228] sm:$0xff]
        %v1101 = vld [vmem:[%s959 + $0x230] sm:$0xff]
        %v1102 = vld [vmem:[%s959 + $0x238] sm:$0xff]
        %v1103 = vld [vmem:[%s959 + $0x240] sm:$0x33]
        %v1104 = vld [vmem:[%s959 + $0x248] sm:$0x33]
        %v1105 = vld [vmem:[%s959 + $0x250] sm:$0x33]
        %v1106 = vld [vmem:[%s959 + $0x258] sm:$0x33]
        %v1107 = vld [vmem:[%s959 + $0x260] sm:$0x33]
        %v1108 = vld [vmem:[%s959 + $0x268] sm:$0x33]
        %v1109 = vld [vmem:[%s959 + $0x270] sm:$0x33]
        %v1110 = vld [vmem:[%s959 + $0x278] sm:$0x33]
        %v1191 = vunpack.c.l.b16 %v1031
        %v1192 = vunpack.c.h.b16 %v1031
        %v1193 = vunpack.c.l.b16 %v1032
        %v1194 = vunpack.c.h.b16 %v1032
        %v1195 = vunpack.c.l.b16 %v1033
        %v1196 = vunpack.c.h.b16 %v1033
        %v1197 = vunpack.c.l.b16 %v1034
        %v1198 = vunpack.c.h.b16 %v1034
        %v1199 = vunpack.c.l.b16 %v1035
        %v1200 = vunpack.c.h.b16 %v1035
        %v1201 = vunpack.c.l.b16 %v1036
        %v1202 = vunpack.c.h.b16 %v1036
        %v1203 = vunpack.c.l.b16 %v1037
        %v1204 = vunpack.c.h.b16 %v1037
        %v1205 = vunpack.c.l.b16 %v1038
        %v1206 = vunpack.c.h.b16 %v1038
        %v1207 = vunpack.c.l.b16 %v1039
        %v1208 = vunpack.c.h.b16 %v1039
        %v1209 = vunpack.c.l.b16 %v1040
        %v1210 = vunpack.c.h.b16 %v1040
        %v1211 = vunpack.c.l.b16 %v1041
        %v1212 = vunpack.c.h.b16 %v1041
        %v1213 = vunpack.c.l.b16 %v1042
        %v1214 = vunpack.c.h.b16 %v1042
        %v1215 = vunpack.c.l.b16 %v1043
        %v1216 = vunpack.c.h.b16 %v1043
        %v1217 = vunpack.c.l.b16 %v1044
        %v1218 = vunpack.c.h.b16 %v1044
        %v1219 = vunpack.c.l.b16 %v1045
        %v1220 = vunpack.c.h.b16 %v1045
        %v1221 = vunpack.c.l.b16 %v1046
        %v1222 = vunpack.c.h.b16 %v1046
        %v1223 = vunpack.c.l.b16 %v1047
        %v1224 = vunpack.c.h.b16 %v1047
        %v1225 = vunpack.c.l.b16 %v1048
        %v1226 = vunpack.c.h.b16 %v1048
        %v1227 = vunpack.c.l.b16 %v1049
        %v1228 = vunpack.c.h.b16 %v1049
        %v1229 = vunpack.c.l.b16 %v1050
        %v1230 = vunpack.c.h.b16 %v1050
        %v1231 = vunpack.c.l.b16 %v1051
        %v1232 = vunpack.c.h.b16 %v1051
        %v1233 = vunpack.c.l.b16 %v1052
        %v1234 = vunpack.c.h.b16 %v1052
        %v1235 = vunpack.c.l.b16 %v1053
        %v1236 = vunpack.c.h.b16 %v1053
        %v1237 = vunpack.c.l.b16 %v1054
        %v1238 = vunpack.c.h.b16 %v1054
        %v1239 = vunpack.c.l.b16 %v1055
        %v1240 = vunpack.c.h.b16 %v1055
        %v1241 = vunpack.c.l.b16 %v1056
        %v1242 = vunpack.c.h.b16 %v1056
        %v1243 = vunpack.c.l.b16 %v1057
        %v1244 = vunpack.c.h.b16 %v1057
        %v1245 = vunpack.c.l.b16 %v1058
        %v1246 = vunpack.c.h.b16 %v1058
        %v1247 = vunpack.c.l.b16 %v1059
        %v1248 = vunpack.c.h.b16 %v1059
        %v1249 = vunpack.c.l.b16 %v1060
        %v1250 = vunpack.c.h.b16 %v1060
        %v1251 = vunpack.c.l.b16 %v1061
        %v1252 = vunpack.c.h.b16 %v1061
        %v1253 = vunpack.c.l.b16 %v1062
        %v1254 = vunpack.c.h.b16 %v1062
        %v1255 = vunpack.c.l.b16 %v1063
        %v1256 = vunpack.c.h.b16 %v1063
        %v1257 = vunpack.c.l.b16 %v1064
        %v1258 = vunpack.c.h.b16 %v1064
        %v1259 = vunpack.c.l.b16 %v1065
        %v1260 = vunpack.c.h.b16 %v1065
        %v1261 = vunpack.c.l.b16 %v1066
        %v1262 = vunpack.c.h.b16 %v1066
        %v1263 = vunpack.c.l.b16 %v1067
        %v1264 = vunpack.c.h.b16 %v1067
        %v1265 = vunpack.c.l.b16 %v1068
        %v1266 = vunpack.c.h.b16 %v1068
        %v1267 = vunpack.c.l.b16 %v1069
        %v1268 = vunpack.c.h.b16 %v1069
        %v1269 = vunpack.c.l.b16 %v1070
        %v1270 = vunpack.c.h.b16 %v1070
        %v1271 = vunpack.c.l.b16 %v1071
        %v1272 = vunpack.c.h.b16 %v1071
        %v1273 = vunpack.c.l.b16 %v1072
        %v1274 = vunpack.c.h.b16 %v1072
        %v1275 = vunpack.c.l.b16 %v1073
        %v1276 = vunpack.c.h.b16 %v1073
        %v1277 = vunpack.c.l.b16 %v1074
        %v1278 = vunpack.c.h.b16 %v1074
        %v1279 = vunpack.c.l.b16 %v1075
        %v1280 = vunpack.c.h.b16 %v1075
        %v1281 = vunpack.c.l.b16 %v1076
        %v1282 = vunpack.c.h.b16 %v1076
        %v1283 = vunpack.c.l.b16 %v1077
        %v1284 = vunpack.c.h.b16 %v1077
        %v1285 = vunpack.c.l.b16 %v1078
        %v1286 = vunpack.c.h.b16 %v1078
        %v1287 = vunpack.c.l.b16 %v1079
        %v1288 = vunpack.c.h.b16 %v1079
        %v1289 = vunpack.c.l.b16 %v1080
        %v1290 = vunpack.c.h.b16 %v1080
        %v1291 = vunpack.c.l.b16 %v1081
        %v1292 = vunpack.c.h.b16 %v1081
        %v1293 = vunpack.c.l.b16 %v1082
        %v1294 = vunpack.c.h.b16 %v1082
        %v1295 = vunpack.c.l.b16 %v1083
        %v1296 = vunpack.c.h.b16 %v1083
        %v1297 = vunpack.c.l.b16 %v1084
        %v1298 = vunpack.c.h.b16 %v1084
        %v1299 = vunpack.c.l.b16 %v1085
        %v1300 = vunpack.c.h.b16 %v1085
        %v1301 = vunpack.c.l.b16 %v1086
        %v1302 = vunpack.c.h.b16 %v1086
        %v1303 = vunpack.c.l.b16 %v1087
        %v1304 = vunpack.c.h.b16 %v1087
        %v1305 = vunpack.c.l.b16 %v1088
        %v1306 = vunpack.c.h.b16 %v1088
        %v1307 = vunpack.c.l.b16 %v1089
        %v1308 = vunpack.c.h.b16 %v1089
        %v1309 = vunpack.c.l.b16 %v1090
        %v1310 = vunpack.c.h.b16 %v1090
        %v1311 = vunpack.c.l.b16 %v1091
        %v1312 = vunpack.c.h.b16 %v1091
        %v1313 = vunpack.c.l.b16 %v1092
        %v1314 = vunpack.c.h.b16 %v1092
        %v1315 = vunpack.c.l.b16 %v1093
        %v1316 = vunpack.c.h.b16 %v1093
        %v1317 = vunpack.c.l.b16 %v1094
        %v1318 = vunpack.c.h.b16 %v1094
        %v1319 = vunpack.c.l.b16 %v1095
        %v1320 = vunpack.c.h.b16 %v1095
        %v1321 = vunpack.c.l.b16 %v1096
        %v1322 = vunpack.c.h.b16 %v1096
        %v1323 = vunpack.c.l.b16 %v1097
        %v1324 = vunpack.c.h.b16 %v1097
        %v1325 = vunpack.c.l.b16 %v1098
        %v1326 = vunpack.c.h.b16 %v1098
        %v1327 = vunpack.c.l.b16 %v1099
        %v1328 = vunpack.c.h.b16 %v1099
        %v1329 = vunpack.c.l.b16 %v1100
        %v1330 = vunpack.c.h.b16 %v1100
        %v1331 = vunpack.c.l.b16 %v1101
        %v1332 = vunpack.c.h.b16 %v1101
        %v1333 = vunpack.c.l.b16 %v1102
        %v1334 = vunpack.c.h.b16 %v1102
        %v1335 = vunpack.c.l.b16 %v1103
        %v1336 = vunpack.c.h.b16 %v1103
        %v1337 = vunpack.c.l.b16 %v1104
        %v1338 = vunpack.c.h.b16 %v1104
        %v1339 = vunpack.c.l.b16 %v1105
        %v1340 = vunpack.c.h.b16 %v1105
        %v1341 = vunpack.c.l.b16 %v1106
        %v1342 = vunpack.c.h.b16 %v1106
        %v1343 = vunpack.c.l.b16 %v1107
        %v1344 = vunpack.c.h.b16 %v1107
        %v1345 = vunpack.c.l.b16 %v1108
        %v1346 = vunpack.c.h.b16 %v1108
        %v1347 = vunpack.c.l.b16 %v1109
        %v1348 = vunpack.c.h.b16 %v1109
        %v1349 = vunpack.c.l.b16 %v1110
        %v1350 = vunpack.c.h.b16 %v1110
        %v1351 = vpack.c.b16 %v1207, %v1191
        %v1352 = vpack.c.b16 %v1208, %v1192
        %v1353 = vpack.c.b16 %v1209, %v1193
        %v1354 = vpack.c.b16 %v1210, %v1194
        %v1355 = vpack.c.b16 %v1211, %v1195
        %v1356 = vpack.c.b16 %v1212, %v1196
        %v1357 = vpack.c.b16 %v1213, %v1197
        %v1358 = vpack.c.b16 %v1214, %v1198
        %v1359 = vpack.c.b16 %v1215, %v1199
        %v1360 = vpack.c.b16 %v1216, %v1200
        %v1361 = vpack.c.b16 %v1217, %v1201
        %v1362 = vpack.c.b16 %v1218, %v1202
        %v1363 = vpack.c.b16 %v1219, %v1203
        %v1364 = vpack.c.b16 %v1220, %v1204
        %v1365 = vpack.c.b16 %v1221, %v1205
        %v1366 = vpack.c.b16 %v1222, %v1206
        %v1367 = vpack.c.b16 %v1239, %v1223
        %v1368 = vpack.c.b16 %v1240, %v1224
        %v1369 = vpack.c.b16 %v1241, %v1225
        %v1370 = vpack.c.b16 %v1242, %v1226
        %v1371 = vpack.c.b16 %v1243, %v1227
        %v1372 = vpack.c.b16 %v1244, %v1228
        %v1373 = vpack.c.b16 %v1245, %v1229
        %v1374 = vpack.c.b16 %v1246, %v1230
        %v1375 = vpack.c.b16 %v1247, %v1231
        %v1376 = vpack.c.b16 %v1248, %v1232
        %v1377 = vpack.c.b16 %v1249, %v1233
        %v1378 = vpack.c.b16 %v1250, %v1234
        %v1379 = vpack.c.b16 %v1251, %v1235
        %v1380 = vpack.c.b16 %v1252, %v1236
        %v1381 = vpack.c.b16 %v1253, %v1237
        %v1382 = vpack.c.b16 %v1254, %v1238
        %v1383 = vpack.c.b16 %v1271, %v1255
        %v1384 = vpack.c.b16 %v1272, %v1256
        %v1385 = vpack.c.b16 %v1273, %v1257
        %v1386 = vpack.c.b16 %v1274, %v1258
        %v1387 = vpack.c.b16 %v1275, %v1259
        %v1388 = vpack.c.b16 %v1276, %v1260
        %v1389 = vpack.c.b16 %v1277, %v1261
        %v1390 = vpack.c.b16 %v1278, %v1262
        %v1391 = vpack.c.b16 %v1279, %v1263
        %v1392 = vpack.c.b16 %v1280, %v1264
        %v1393 = vpack.c.b16 %v1281, %v1265
        %v1394 = vpack.c.b16 %v1282, %v1266
        %v1395 = vpack.c.b16 %v1283, %v1267
        %v1396 = vpack.c.b16 %v1284, %v1268
        %v1397 = vpack.c.b16 %v1285, %v1269
        %v1398 = vpack.c.b16 %v1286, %v1270
        %v1399 = vpack.c.b16 %v1303, %v1287
        %v1400 = vpack.c.b16 %v1304, %v1288
        %v1401 = vpack.c.b16 %v1305, %v1289
        %v1402 = vpack.c.b16 %v1306, %v1290
        %v1403 = vpack.c.b16 %v1307, %v1291
        %v1404 = vpack.c.b16 %v1308, %v1292
        %v1405 = vpack.c.b16 %v1309, %v1293
        %v1406 = vpack.c.b16 %v1310, %v1294
        %v1407 = vpack.c.b16 %v1311, %v1295
        %v1408 = vpack.c.b16 %v1312, %v1296
        %v1409 = vpack.c.b16 %v1313, %v1297
        %v1410 = vpack.c.b16 %v1314, %v1298
        %v1411 = vpack.c.b16 %v1315, %v1299
        %v1412 = vpack.c.b16 %v1316, %v1300
        %v1413 = vpack.c.b16 %v1317, %v1301
        %v1414 = vpack.c.b16 %v1318, %v1302
        %v1415 = vpack.c.b16 %v1335, %v1319
        %v1416 = vpack.c.b16 %v1336, %v1320
        %v1417 = vpack.c.b16 %v1337, %v1321
        %v1418 = vpack.c.b16 %v1338, %v1322
        %v1419 = vpack.c.b16 %v1339, %v1323
        %v1420 = vpack.c.b16 %v1340, %v1324
        %v1421 = vpack.c.b16 %v1341, %v1325
        %v1422 = vpack.c.b16 %v1342, %v1326
        %v1423 = vpack.c.b16 %v1343, %v1327
        %v1424 = vpack.c.b16 %v1344, %v1328
        %v1425 = vpack.c.b16 %v1345, %v1329
        %v1426 = vpack.c.b16 %v1346, %v1330
        %v1427 = vpack.c.b16 %v1347, %v1331
        %v1428 = vpack.c.b16 %v1348, %v1332
        %v1429 = vpack.c.b16 %v1349, %v1333
        %v1430 = vpack.c.b16 %v1350, %v1334
        %vm1495 = vcmask 613376
        %v1497 = vsel %vm1495, %v1030, 0
        %vm1499 = vcmask 1044480
        %vm1500 = vcmask 1045504
        %v1501 = vsel %vm1499, 4294967295, 65535
        %v1502 = vsel %vm1500, %v1501, 0
        %v1504 = vand.u32 %v1415, %v1502
        %v1507 = vand.u32 %v1416, %v1502
        %v1510 = vand.u32 %v1417, %v1502
        %v1513 = vand.u32 %v1418, %v1502
        %v1516 = vand.u32 %v1419, %v1502
        %v1519 = vand.u32 %v1420, %v1502
        %v1522 = vand.u32 %v1421, %v1502
        %v1525 = vand.u32 %v1422, %v1502
        %v1528 = vand.u32 %v1423, %v1502
        %v1531 = vand.u32 %v1424, %v1502
        %v1534 = vand.u32 %v1425, %v1502
        %v1537 = vand.u32 %v1426, %v1502
        %v1540 = vand.u32 %v1427, %v1502
        %v1543 = vand.u32 %v1428, %v1502
        %v1546 = vand.u32 %v1429, %v1502
        %v1549 = vand.u32 %v1430, %v1502
        %1551 = vmatprep.subr.bf16.mxu0 0
        %1552 = vmatpush1.bf16.msra.mxu0 0
        %1553 = vmatprep.subr.bf16.mxu0 0
        %1554 = vmatpush1.bf16.msra.mxu0 0
        %1555 = vmatprep.subr.bf16.mxu0 0
        %1556 = vmatpush1.bf16.msra.mxu0 0
        %1557 = vmatprep.subr.bf16.mxu0 %v1507
        %1558 = vmatpush1.bf16.msra.mxu0 %v1504
        %1559 = vmatprep.subr.bf16.mxu0 %v1400
        %1560 = vmatpush1.bf16.msra.mxu0 %v1399
        %1561 = vmatprep.subr.bf16.mxu0 %v1384
        %1562 = vmatpush1.bf16.msra.mxu0 %v1383
        %1563 = vmatprep.subr.bf16.mxu0 %v1368
        %1564 = vmatpush1.bf16.msra.mxu0 %v1367
        %1565 = vmatprep.subr.bf16.mxu0 %v1352
        %1566 = vmatpush1.bf16.msra.mxu0 %v1351
        %1567 = vmatprep.subr.bf16.mxu0 0
        %1568 = vmatpush2.bf16.msra.mxu0 0
        %1569 = vmatprep.subr.bf16.mxu0 0
        %1570 = vmatpush2.bf16.msra.mxu0 0
        %1571 = vmatprep.subr.bf16.mxu0 0
        %1572 = vmatpush2.bf16.msra.mxu0 0
        %1573 = vmatprep.subr.bf16.mxu0 0
        %1574 = vmatpush2.bf16.msra.mxu0 0
        %1575 = vmatprep.subr.bf16.mxu0 0
        %1576 = vmatpush2.bf16.msra.mxu0 0
        %1577 = vmatprep.subr.bf16.mxu0 0
        %1578 = vmatpush2.bf16.msra.mxu0 0
        %1579 = vmatprep.subr.bf16.mxu0 0
        %1580 = vmatpush2.bf16.msra.mxu0 0
        %1581 = vmatprep.subr.bf16.mxu0 0
        %1582 = vmatpush2.bf16.msra.mxu0 0
        %1583 = vmatprep.mubr.bf16.mxu0 0
        %1584 = vmatmul.mubr.bf16.gmra.mxu0 %v1497
        %v1585 = vpop.f32.mrf.mxu0
        %v1586 = vadd.f32 0.0, %v1585
        %v1587 = vpop.f32.mrf.mxu0
        %v1588 = vadd.f32 0.0, %v1587
        %v1589 = vpop.f32.mrf.mxu0
        %v1590 = vpop.f32.mrf.mxu0
        %1591 = vdwg.mxu0
        %1592 = vmatprep.subr.bf16.mxu0 0
        %1593 = vmatpush1.bf16.msra.mxu0 0
        %1594 = vmatprep.subr.bf16.mxu0 0
        %1595 = vmatpush1.bf16.msra.mxu0 0
        %1596 = vmatprep.subr.bf16.mxu0 0
        %1597 = vmatpush1.bf16.msra.mxu0 0
        %1598 = vmatprep.subr.bf16.mxu0 %v1513
        %1599 = vmatpush1.bf16.msra.mxu0 %v1510
        %1600 = vmatprep.subr.bf16.mxu0 %v1402
        %1601 = vmatpush1.bf16.msra.mxu0 %v1401
        %1602 = vmatprep.subr.bf16.mxu0 %v1386
        %1603 = vmatpush1.bf16.msra.mxu0 %v1385
        %1604 = vmatprep.subr.bf16.mxu0 %v1370
        %1605 = vmatpush1.bf16.msra.mxu0 %v1369
        %1606 = vmatprep.subr.bf16.mxu0 %v1354
        %1607 = vmatpush1.bf16.msra.mxu0 %v1353
        %1608 = vmatprep.subr.bf16.mxu0 0
        %1609 = vmatpush2.bf16.msra.mxu0 0
        %1610 = vmatprep.subr.bf16.mxu0 0
        %1611 = vmatpush2.bf16.msra.mxu0 0
        %1612 = vmatprep.subr.bf16.mxu0 0
        %1613 = vmatpush2.bf16.msra.mxu0 0
        %1614 = vmatprep.subr.bf16.mxu0 0
        %1615 = vmatpush2.bf16.msra.mxu0 0
        %1616 = vmatprep.subr.bf16.mxu0 0
        %1617 = vmatpush2.bf16.msra.mxu0 0
        %1618 = vmatprep.subr.bf16.mxu0 0
        %1619 = vmatpush2.bf16.msra.mxu0 0
        %1620 = vmatprep.subr.bf16.mxu0 0
        %1621 = vmatpush2.bf16.msra.mxu0 0
        %1622 = vmatprep.subr.bf16.mxu0 0
        %1623 = vmatpush2.bf16.msra.mxu0 0
        %1624 = vmatprep.mubr.bf16.mxu0 0
        %1625 = vmatmul.mubr.bf16.gmra.mxu0 %v1497
        %v1626 = vpop.f32.mrf.mxu0
        %v1627 = vadd.f32 0.0, %v1626
        %v1628 = vpop.f32.mrf.mxu0
        %v1629 = vadd.f32 0.0, %v1628
        %v1630 = vpop.f32.mrf.mxu0
        %v1631 = vpop.f32.mrf.mxu0
        %1632 = vdwg.mxu0
        %1633 = vmatprep.subr.bf16.mxu0 0
        %1634 = vmatpush1.bf16.msra.mxu0 0
        %1635 = vmatprep.subr.bf16.mxu0 0
        %1636 = vmatpush1.bf16.msra.mxu0 0
        %1637 = vmatprep.subr.bf16.mxu0 0
        %1638 = vmatpush1.bf16.msra.mxu0 0
        %1639 = vmatprep.subr.bf16.mxu0 %v1519
        %1640 = vmatpush1.bf16.msra.mxu0 %v1516
        %1641 = vmatprep.subr.bf16.mxu0 %v1404
        %1642 = vmatpush1.bf16.msra.mxu0 %v1403
        %1643 = vmatprep.subr.bf16.mxu0 %v1388
        %1644 = vmatpush1.bf16.msra.mxu0 %v1387
        %1645 = vmatprep.subr.bf16.mxu0 %v1372
        %1646 = vmatpush1.bf16.msra.mxu0 %v1371
        %1647 = vmatprep.subr.bf16.mxu0 %v1356
        %1648 = vmatpush1.bf16.msra.mxu0 %v1355
        %1649 = vmatprep.subr.bf16.mxu0 0
        %1650 = vmatpush2.bf16.msra.mxu0 0
        %1651 = vmatprep.subr.bf16.mxu0 0
        %1652 = vmatpush2.bf16.msra.mxu0 0
        %1653 = vmatprep.subr.bf16.mxu0 0
        %1654 = vmatpush2.bf16.msra.mxu0 0
        %1655 = vmatprep.subr.bf16.mxu0 0
        %1656 = vmatpush2.bf16.msra.mxu0 0
        %1657 = vmatprep.subr.bf16.mxu0 0
        %1658 = vmatpush2.bf16.msra.mxu0 0
        %1659 = vmatprep.subr.bf16.mxu0 0
        %1660 = vmatpush2.bf16.msra.mxu0 0
        %1661 = vmatprep.subr.bf16.mxu0 0
        %1662 = vmatpush2.bf16.msra.mxu0 0
        %1663 = vmatprep.subr.bf16.mxu0 0
        %1664 = vmatpush2.bf16.msra.mxu0 0
        %1665 = vmatprep.mubr.bf16.mxu0 0
        %1666 = vmatmul.mubr.bf16.gmra.mxu0 %v1497
        %v1667 = vpop.f32.mrf.mxu0
        %v1668 = vadd.f32 0.0, %v1667
        %v1669 = vpop.f32.mrf.mxu0
        %v1670 = vadd.f32 0.0, %v1669
        %v1671 = vpop.f32.mrf.mxu0
        %v1672 = vpop.f32.mrf.mxu0
        %1673 = vdwg.mxu0
        %1674 = vmatprep.subr.bf16.mxu0 0
        %1675 = vmatpush1.bf16.msra.mxu0 0
        %1676 = vmatprep.subr.bf16.mxu0 0
        %1677 = vmatpush1.bf16.msra.mxu0 0
        %1678 = vmatprep.subr.bf16.mxu0 0
        %1679 = vmatpush1.bf16.msra.mxu0 0
        %1680 = vmatprep.subr.bf16.mxu0 %v1525
        %1681 = vmatpush1.bf16.msra.mxu0 %v1522
        %1682 = vmatprep.subr.bf16.mxu0 %v1406
        %1683 = vmatpush1.bf16.msra.mxu0 %v1405
        %1684 = vmatprep.subr.bf16.mxu0 %v1390
        %1685 = vmatpush1.bf16.msra.mxu0 %v1389
        %1686 = vmatprep.subr.bf16.mxu0 %v1374
        %1687 = vmatpush1.bf16.msra.mxu0 %v1373
        %1688 = vmatprep.subr.bf16.mxu0 %v1358
        %1689 = vmatpush1.bf16.msra.mxu0 %v1357
        %1690 = vmatprep.subr.bf16.mxu0 0
        %1691 = vmatpush2.bf16.msra.mxu0 0
        %1692 = vmatprep.subr.bf16.mxu0 0
        %1693 = vmatpush2.bf16.msra.mxu0 0
        %1694 = vmatprep.subr.bf16.mxu0 0
        %1695 = vmatpush2.bf16.msra.mxu0 0
        %1696 = vmatprep.subr.bf16.mxu0 0
        %1697 = vmatpush2.bf16.msra.mxu0 0
        %1698 = vmatprep.subr.bf16.mxu0 0
        %1699 = vmatpush2.bf16.msra.mxu0 0
        %1700 = vmatprep.subr.bf16.mxu0 0
        %1701 = vmatpush2.bf16.msra.mxu0 0
        %1702 = vmatprep.subr.bf16.mxu0 0
        %1703 = vmatpush2.bf16.msra.mxu0 0
        %1704 = vmatprep.subr.bf16.mxu0 0
        %1705 = vmatpush2.bf16.msra.mxu0 0
        %1706 = vmatprep.mubr.bf16.mxu0 0
        %1707 = vmatmul.mubr.bf16.gmra.mxu0 %v1497
        %v1708 = vpop.f32.mrf.mxu0
        %v1709 = vadd.f32 0.0, %v1708
        %v1710 = vpop.f32.mrf.mxu0
        %v1711 = vadd.f32 0.0, %v1710
        %v1712 = vpop.f32.mrf.mxu0
        %v1713 = vpop.f32.mrf.mxu0
        %1714 = vdwg.mxu0
        %1715 = vmatprep.subr.bf16.mxu0 0
        %1716 = vmatpush1.bf16.msra.mxu0 0
        %1717 = vmatprep.subr.bf16.mxu0 0
        %1718 = vmatpush1.bf16.msra.mxu0 0
        %1719 = vmatprep.subr.bf16.mxu0 0
        %1720 = vmatpush1.bf16.msra.mxu0 0
        %1721 = vmatprep.subr.bf16.mxu0 %v1531
        %1722 = vmatpush1.bf16.msra.mxu0 %v1528
        %1723 = vmatprep.subr.bf16.mxu0 %v1408
        %1724 = vmatpush1.bf16.msra.mxu0 %v1407
        %1725 = vmatprep.subr.bf16.mxu0 %v1392
        %1726 = vmatpush1.bf16.msra.mxu0 %v1391
        %1727 = vmatprep.subr.bf16.mxu0 %v1376
        %1728 = vmatpush1.bf16.msra.mxu0 %v1375
        %1729 = vmatprep.subr.bf16.mxu0 %v1360
        %1730 = vmatpush1.bf16.msra.mxu0 %v1359
        %1731 = vmatprep.subr.bf16.mxu0 0
        %1732 = vmatpush2.bf16.msra.mxu0 0
        %1733 = vmatprep.subr.bf16.mxu0 0
        %1734 = vmatpush2.bf16.msra.mxu0 0
        %1735 = vmatprep.subr.bf16.mxu0 0
        %1736 = vmatpush2.bf16.msra.mxu0 0
        %1737 = vmatprep.subr.bf16.mxu0 0
        %1738 = vmatpush2.bf16.msra.mxu0 0
        %1739 = vmatprep.subr.bf16.mxu0 0
        %1740 = vmatpush2.bf16.msra.mxu0 0
        %1741 = vmatprep.subr.bf16.mxu0 0
        %1742 = vmatpush2.bf16.msra.mxu0 0
        %1743 = vmatprep.subr.bf16.mxu0 0
        %1744 = vmatpush2.bf16.msra.mxu0 0
        %1745 = vmatprep.subr.bf16.mxu0 0
        %1746 = vmatpush2.bf16.msra.mxu0 0
        %1747 = vmatprep.mubr.bf16.mxu0 0
        %1748 = vmatmul.mubr.bf16.gmra.mxu0 %v1497
        %v1749 = vpop.f32.mrf.mxu0
        %v1750 = vadd.f32 0.0, %v1749
        %v1751 = vpop.f32.mrf.mxu0
        %v1752 = vadd.f32 0.0, %v1751
        %v1753 = vpop.f32.mrf.mxu0
        %v1754 = vpop.f32.mrf.mxu0
        %1755 = vdwg.mxu0
        %1756 = vmatprep.subr.bf16.mxu0 0
        %1757 = vmatpush1.bf16.msra.mxu0 0
        %1758 = vmatprep.subr.bf16.mxu0 0
        %1759 = vmatpush1.bf16.msra.mxu0 0
        %1760 = vmatprep.subr.bf16.mxu0 0
        %1761 = vmatpush1.bf16.msra.mxu0 0
        %1762 = vmatprep.subr.bf16.mxu0 %v1537
        %1763 = vmatpush1.bf16.msra.mxu0 %v1534
        %1764 = vmatprep.subr.bf16.mxu0 %v1410
        %1765 = vmatpush1.bf16.msra.mxu0 %v1409
        %1766 = vmatprep.subr.bf16.mxu0 %v1394
        %1767 = vmatpush1.bf16.msra.mxu0 %v1393
        %1768 = vmatprep.subr.bf16.mxu0 %v1378
        %1769 = vmatpush1.bf16.msra.mxu0 %v1377
        %1770 = vmatprep.subr.bf16.mxu0 %v1362
        %1771 = vmatpush1.bf16.msra.mxu0 %v1361
        %1772 = vmatprep.subr.bf16.mxu0 0
        %1773 = vmatpush2.bf16.msra.mxu0 0
        %1774 = vmatprep.subr.bf16.mxu0 0
        %1775 = vmatpush2.bf16.msra.mxu0 0
        %1776 = vmatprep.subr.bf16.mxu0 0
        %1777 = vmatpush2.bf16.msra.mxu0 0
        %1778 = vmatprep.subr.bf16.mxu0 0
        %1779 = vmatpush2.bf16.msra.mxu0 0
        %1780 = vmatprep.subr.bf16.mxu0 0
        %1781 = vmatpush2.bf16.msra.mxu0 0
        %1782 = vmatprep.subr.bf16.mxu0 0
        %1783 = vmatpush2.bf16.msra.mxu0 0
        %1784 = vmatprep.subr.bf16.mxu0 0
        %1785 = vmatpush2.bf16.msra.mxu0 0
        %1786 = vmatprep.subr.bf16.mxu0 0
        %1787 = vmatpush2.bf16.msra.mxu0 0
        %1788 = vmatprep.mubr.bf16.mxu0 0
        %1789 = vmatmul.mubr.bf16.gmra.mxu0 %v1497
        %v1790 = vpop.f32.mrf.mxu0
        %v1791 = vadd.f32 0.0, %v1790
        %v1792 = vpop.f32.mrf.mxu0
        %v1793 = vadd.f32 0.0, %v1792
        %v1794 = vpop.f32.mrf.mxu0
        %v1795 = vpop.f32.mrf.mxu0
        %1796 = vdwg.mxu0
        %1797 = vmatprep.subr.bf16.mxu0 0
        %1798 = vmatpush1.bf16.msra.mxu0 0
        %1799 = vmatprep.subr.bf16.mxu0 0
        %1800 = vmatpush1.bf16.msra.mxu0 0
        %1801 = vmatprep.subr.bf16.mxu0 0
        %1802 = vmatpush1.bf16.msra.mxu0 0
        %1803 = vmatprep.subr.bf16.mxu0 %v1543
        %1804 = vmatpush1.bf16.msra.mxu0 %v1540
        %1805 = vmatprep.subr.bf16.mxu0 %v1412
        %1806 = vmatpush1.bf16.msra.mxu0 %v1411
        %1807 = vmatprep.subr.bf16.mxu0 %v1396
        %1808 = vmatpush1.bf16.msra.mxu0 %v1395
        %1809 = vmatprep.subr.bf16.mxu0 %v1380
        %1810 = vmatpush1.bf16.msra.mxu0 %v1379
        %1811 = vmatprep.subr.bf16.mxu0 %v1364
        %1812 = vmatpush1.bf16.msra.mxu0 %v1363
        %1813 = vmatprep.subr.bf16.mxu0 0
        %1814 = vmatpush2.bf16.msra.mxu0 0
        %1815 = vmatprep.subr.bf16.mxu0 0
        %1816 = vmatpush2.bf16.msra.mxu0 0
        %1817 = vmatprep.subr.bf16.mxu0 0
        %1818 = vmatpush2.bf16.msra.mxu0 0
        %1819 = vmatprep.subr.bf16.mxu0 0
        %1820 = vmatpush2.bf16.msra.mxu0 0
        %1821 = vmatprep.subr.bf16.mxu0 0
        %1822 = vmatpush2.bf16.msra.mxu0 0
        %1823 = vmatprep.subr.bf16.mxu0 0
        %1824 = vmatpush2.bf16.msra.mxu0 0
        %1825 = vmatprep.subr.bf16.mxu0 0
        %1826 = vmatpush2.bf16.msra.mxu0 0
        %1827 = vmatprep.subr.bf16.mxu0 0
        %1828 = vmatpush2.bf16.msra.mxu0 0
        %1829 = vmatprep.mubr.bf16.mxu0 0
        %1830 = vmatmul.mubr.bf16.gmra.mxu0 %v1497
        %v1831 = vpop.f32.mrf.mxu0
        %v1832 = vadd.f32 0.0, %v1831
        %v1833 = vpop.f32.mrf.mxu0
        %v1834 = vadd.f32 0.0, %v1833
        %v1835 = vpop.f32.mrf.mxu0
        %v1836 = vpop.f32.mrf.mxu0
        %1837 = vdwg.mxu0
        %1838 = vmatprep.subr.bf16.mxu0 0
        %1839 = vmatpush1.bf16.msra.mxu0 0
        %1840 = vmatprep.subr.bf16.mxu0 0
        %1841 = vmatpush1.bf16.msra.mxu0 0
        %1842 = vmatprep.subr.bf16.mxu0 0
        %1843 = vmatpush1.bf16.msra.mxu0 0
        %1844 = vmatprep.subr.bf16.mxu0 %v1549
        %1845 = vmatpush1.bf16.msra.mxu0 %v1546
        %1846 = vmatprep.subr.bf16.mxu0 %v1414
        %1847 = vmatpush1.bf16.msra.mxu0 %v1413
        %1848 = vmatprep.subr.bf16.mxu0 %v1398
        %1849 = vmatpush1.bf16.msra.mxu0 %v1397
        %1850 = vmatprep.subr.bf16.mxu0 %v1382
        %1851 = vmatpush1.bf16.msra.mxu0 %v1381
        %1852 = vmatprep.subr.bf16.mxu0 %v1366
        %1853 = vmatpush1.bf16.msra.mxu0 %v1365
        %1854 = vmatprep.subr.bf16.mxu0 0
        %1855 = vmatpush2.bf16.msra.mxu0 0
        %1856 = vmatprep.subr.bf16.mxu0 0
        %1857 = vmatpush2.bf16.msra.mxu0 0
        %1858 = vmatprep.subr.bf16.mxu0 0
        %1859 = vmatpush2.bf16.msra.mxu0 0
        %1860 = vmatprep.subr.bf16.mxu0 0
        %1861 = vmatpush2.bf16.msra.mxu0 0
        %1862 = vmatprep.subr.bf16.mxu0 0
        %1863 = vmatpush2.bf16.msra.mxu0 0
        %1864 = vmatprep.subr.bf16.mxu0 0
        %1865 = vmatpush2.bf16.msra.mxu0 0
        %1866 = vmatprep.subr.bf16.mxu0 0
        %1867 = vmatpush2.bf16.msra.mxu0 0
        %1868 = vmatprep.subr.bf16.mxu0 0
        %1869 = vmatpush2.bf16.msra.mxu0 0
        %1870 = vmatprep.mubr.bf16.mxu0 0
        %1871 = vmatmul.mubr.bf16.gmra.mxu0 %v1497
        %v1872 = vpop.f32.mrf.mxu0
        %v1873 = vadd.f32 0.0, %v1872
        %v1874 = vpop.f32.mrf.mxu0
        %v1875 = vadd.f32 0.0, %v1874
        %v1876 = vpop.f32.mrf.mxu0
        %v1877 = vpop.f32.mrf.mxu0
        %1878 = vdwg.mxu0
        %v1879 = vld [vmem:[%s966] sm:$0xff]
        %v1880 = vld [vmem:[%s966 + $0x8] sm:$0xff]
        %v1881 = vld [vmem:[%s966 + $0x10] sm:$0xff]
        %v1882 = vld [vmem:[%s966 + $0x18] sm:$0xff]
        %v1883 = vld [vmem:[%s966 + $0x20] sm:$0xff]
        %v1884 = vld [vmem:[%s966 + $0x28] sm:$0xff]
        %v1885 = vld [vmem:[%s966 + $0x30] sm:$0xff]
        %v1886 = vld [vmem:[%s966 + $0x38] sm:$0xff]
        %v1887 = vld [vmem:[%s966 + $0x40] sm:$0xff]
        %v1888 = vld [vmem:[%s966 + $0x48] sm:$0xff]
        %v1889 = vld [vmem:[%s966 + $0x50] sm:$0xff]
        %v1890 = vld [vmem:[%s966 + $0x58] sm:$0xff]
        %v1891 = vld [vmem:[%s966 + $0x60] sm:$0xff]
        %v1892 = vld [vmem:[%s966 + $0x68] sm:$0xff]
        %v1893 = vld [vmem:[%s966 + $0x70] sm:$0xff]
        %v1894 = vld [vmem:[%s966 + $0x78] sm:$0xff]
        %v1895 = vld [vmem:[%s966 + $0x80] sm:$0xff]
        %v1896 = vld [vmem:[%s966 + $0x88] sm:$0xff]
        %v1897 = vld [vmem:[%s966 + $0x90] sm:$0xff]
        %v1898 = vld [vmem:[%s966 + $0x98] sm:$0xff]
        %v1899 = vld [vmem:[%s966 + $0xa0] sm:$0xff]
        %v1900 = vld [vmem:[%s966 + $0xa8] sm:$0xff]
        %v1901 = vld [vmem:[%s966 + $0xb0] sm:$0xff]
        %v1902 = vld [vmem:[%s966 + $0xb8] sm:$0xff]
        %v1903 = vld [vmem:[%s966 + $0xc0] sm:$0xff]
        %v1904 = vld [vmem:[%s966 + $0xc8] sm:$0xff]
        %v1905 = vld [vmem:[%s966 + $0xd0] sm:$0xff]
        %v1906 = vld [vmem:[%s966 + $0xd8] sm:$0xff]
        %v1907 = vld [vmem:[%s966 + $0xe0] sm:$0xff]
        %v1908 = vld [vmem:[%s966 + $0xe8] sm:$0xff]
        %v1909 = vld [vmem:[%s966 + $0xf0] sm:$0xff]
        %v1910 = vld [vmem:[%s966 + $0xf8] sm:$0xff]
        %v1911 = vld [vmem:[%s966 + $0x100] sm:$0xff]
        %v1912 = vld [vmem:[%s966 + $0x108] sm:$0xff]
        %v1913 = vld [vmem:[%s966 + $0x110] sm:$0xff]
        %v1914 = vld [vmem:[%s966 + $0x118] sm:$0xff]
        %v1915 = vld [vmem:[%s966 + $0x120] sm:$0xff]
        %v1916 = vld [vmem:[%s966 + $0x128] sm:$0xff]
        %v1917 = vld [vmem:[%s966 + $0x130] sm:$0xff]
        %v1918 = vld [vmem:[%s966 + $0x138] sm:$0xff]
        %v1919 = vld [vmem:[%s966 + $0x140] sm:$0xff]
        %v1920 = vld [vmem:[%s966 + $0x148] sm:$0xff]
        %v1921 = vld [vmem:[%s966 + $0x150] sm:$0xff]
        %v1922 = vld [vmem:[%s966 + $0x158] sm:$0xff]
        %v1923 = vld [vmem:[%s966 + $0x160] sm:$0xff]
        %v1924 = vld [vmem:[%s966 + $0x168] sm:$0xff]
        %v1925 = vld [vmem:[%s966 + $0x170] sm:$0xff]
        %v1926 = vld [vmem:[%s966 + $0x178] sm:$0xff]
        %v1927 = vld [vmem:[%s966 + $0x180] sm:$0xff]
        %v1928 = vld [vmem:[%s966 + $0x188] sm:$0xff]
        %v1929 = vld [vmem:[%s966 + $0x190] sm:$0xff]
        %v1930 = vld [vmem:[%s966 + $0x198] sm:$0xff]
        %v1931 = vld [vmem:[%s966 + $0x1a0] sm:$0xff]
        %v1932 = vld [vmem:[%s966 + $0x1a8] sm:$0xff]
        %v1933 = vld [vmem:[%s966 + $0x1b0] sm:$0xff]
        %v1934 = vld [vmem:[%s966 + $0x1b8] sm:$0xff]
        %v1935 = vld [vmem:[%s966 + $0x1c0] sm:$0xff]
        %v1936 = vld [vmem:[%s966 + $0x1c8] sm:$0xff]
        %v1937 = vld [vmem:[%s966 + $0x1d0] sm:$0xff]
        %v1938 = vld [vmem:[%s966 + $0x1d8] sm:$0xff]
        %v1939 = vld [vmem:[%s966 + $0x1e0] sm:$0xff]
        %v1940 = vld [vmem:[%s966 + $0x1e8] sm:$0xff]
        %v1941 = vld [vmem:[%s966 + $0x1f0] sm:$0xff]
        %v1942 = vld [vmem:[%s966 + $0x1f8] sm:$0xff]
        %v1943 = vld [vmem:[%s966 + $0x200] sm:$0xff]
        %v1944 = vld [vmem:[%s966 + $0x208] sm:$0xff]
        %v1945 = vld [vmem:[%s966 + $0x210] sm:$0xff]
        %v1946 = vld [vmem:[%s966 + $0x218] sm:$0xff]
        %v1947 = vld [vmem:[%s966 + $0x220] sm:$0xff]
        %v1948 = vld [vmem:[%s966 + $0x228] sm:$0xff]
        %v1949 = vld [vmem:[%s966 + $0x230] sm:$0xff]
        %v1950 = vld [vmem:[%s966 + $0x238] sm:$0xff]
        %v1951 = vld [vmem:[%s966 + $0x240] sm:$0x33]
        %v1952 = vld [vmem:[%s966 + $0x248] sm:$0x33]
        %v1953 = vld [vmem:[%s966 + $0x250] sm:$0x33]
        %v1954 = vld [vmem:[%s966 + $0x258] sm:$0x33]
        %v1955 = vld [vmem:[%s966 + $0x260] sm:$0x33]
        %v1956 = vld [vmem:[%s966 + $0x268] sm:$0x33]
        %v1957 = vld [vmem:[%s966 + $0x270] sm:$0x33]
        %v1958 = vld [vmem:[%s966 + $0x278] sm:$0x33]
        %v2039 = vunpack.c.l.b16 %v1879
        %v2040 = vunpack.c.h.b16 %v1879
        %v2041 = vunpack.c.l.b16 %v1880
        %v2042 = vunpack.c.h.b16 %v1880
        %v2043 = vunpack.c.l.b16 %v1881
        %v2044 = vunpack.c.h.b16 %v1881
        %v2045 = vunpack.c.l.b16 %v1882
        %v2046 = vunpack.c.h.b16 %v1882
        %v2047 = vunpack.c.l.b16 %v1883
        %v2048 = vunpack.c.h.b16 %v1883
        %v2049 = vunpack.c.l.b16 %v1884
        %v2050 = vunpack.c.h.b16 %v1884
        %v2051 = vunpack.c.l.b16 %v1885
        %v2052 = vunpack.c.h.b16 %v1885
        %v2053 = vunpack.c.l.b16 %v1886
        %v2054 = vunpack.c.h.b16 %v1886
        %v2055 = vunpack.c.l.b16 %v1887
        %v2056 = vunpack.c.h.b16 %v1887
        %v2057 = vunpack.c.l.b16 %v1888
        %v2058 = vunpack.c.h.b16 %v1888
        %v2059 = vunpack.c.l.b16 %v1889
        %v2060 = vunpack.c.h.b16 %v1889
        %v2061 = vunpack.c.l.b16 %v1890
        %v2062 = vunpack.c.h.b16 %v1890
        %v2063 = vunpack.c.l.b16 %v1891
        %v2064 = vunpack.c.h.b16 %v1891
        %v2065 = vunpack.c.l.b16 %v1892
        %v2066 = vunpack.c.h.b16 %v1892
        %v2067 = vunpack.c.l.b16 %v1893
        %v2068 = vunpack.c.h.b16 %v1893
        %v2069 = vunpack.c.l.b16 %v1894
        %v2070 = vunpack.c.h.b16 %v1894
        %v2071 = vunpack.c.l.b16 %v1895
        %v2072 = vunpack.c.h.b16 %v1895
        %v2073 = vunpack.c.l.b16 %v1896
        %v2074 = vunpack.c.h.b16 %v1896
        %v2075 = vunpack.c.l.b16 %v1897
        %v2076 = vunpack.c.h.b16 %v1897
        %v2077 = vunpack.c.l.b16 %v1898
        %v2078 = vunpack.c.h.b16 %v1898
        %v2079 = vunpack.c.l.b16 %v1899
        %v2080 = vunpack.c.h.b16 %v1899
        %v2081 = vunpack.c.l.b16 %v1900
        %v2082 = vunpack.c.h.b16 %v1900
        %v2083 = vunpack.c.l.b16 %v1901
        %v2084 = vunpack.c.h.b16 %v1901
        %v2085 = vunpack.c.l.b16 %v1902
        %v2086 = vunpack.c.h.b16 %v1902
        %v2087 = vunpack.c.l.b16 %v1903
        %v2088 = vunpack.c.h.b16 %v1903
        %v2089 = vunpack.c.l.b16 %v1904
        %v2090 = vunpack.c.h.b16 %v1904
        %v2091 = vunpack.c.l.b16 %v1905
        %v2092 = vunpack.c.h.b16 %v1905
        %v2093 = vunpack.c.l.b16 %v1906
        %v2094 = vunpack.c.h.b16 %v1906
        %v2095 = vunpack.c.l.b16 %v1907
        %v2096 = vunpack.c.h.b16 %v1907
        %v2097 = vunpack.c.l.b16 %v1908
        %v2098 = vunpack.c.h.b16 %v1908
        %v2099 = vunpack.c.l.b16 %v1909
        %v2100 = vunpack.c.h.b16 %v1909
        %v2101 = vunpack.c.l.b16 %v1910
        %v2102 = vunpack.c.h.b16 %v1910
        %v2103 = vunpack.c.l.b16 %v1911
        %v2104 = vunpack.c.h.b16 %v1911
        %v2105 = vunpack.c.l.b16 %v1912
        %v2106 = vunpack.c.h.b16 %v1912
        %v2107 = vunpack.c.l.b16 %v1913
        %v2108 = vunpack.c.h.b16 %v1913
        %v2109 = vunpack.c.l.b16 %v1914
        %v2110 = vunpack.c.h.b16 %v1914
        %v2111 = vunpack.c.l.b16 %v1915
        %v2112 = vunpack.c.h.b16 %v1915
        %v2113 = vunpack.c.l.b16 %v1916
        %v2114 = vunpack.c.h.b16 %v1916
        %v2115 = vunpack.c.l.b16 %v1917
        %v2116 = vunpack.c.h.b16 %v1917
        %v2117 = vunpack.c.l.b16 %v1918
        %v2118 = vunpack.c.h.b16 %v1918
        %v2119 = vunpack.c.l.b16 %v1919
        %v2120 = vunpack.c.h.b16 %v1919
        %v2121 = vunpack.c.l.b16 %v1920
        %v2122 = vunpack.c.h.b16 %v1920
        %v2123 = vunpack.c.l.b16 %v1921
        %v2124 = vunpack.c.h.b16 %v1921
        %v2125 = vunpack.c.l.b16 %v1922
        %v2126 = vunpack.c.h.b16 %v1922
        %v2127 = vunpack.c.l.b16 %v1923
        %v2128 = vunpack.c.h.b16 %v1923
        %v2129 = vunpack.c.l.b16 %v1924
        %v2130 = vunpack.c.h.b16 %v1924
        %v2131 = vunpack.c.l.b16 %v1925
        %v2132 = vunpack.c.h.b16 %v1925
        %v2133 = vunpack.c.l.b16 %v1926
        %v2134 = vunpack.c.h.b16 %v1926
        %v2135 = vunpack.c.l.b16 %v1927
        %v2136 = vunpack.c.h.b16 %v1927
        %v2137 = vunpack.c.l.b16 %v1928
        %v2138 = vunpack.c.h.b16 %v1928
        %v2139 = vunpack.c.l.b16 %v1929
        %v2140 = vunpack.c.h.b16 %v1929
        %v2141 = vunpack.c.l.b16 %v1930
        %v2142 = vunpack.c.h.b16 %v1930
        %v2143 = vunpack.c.l.b16 %v1931
        %v2144 = vunpack.c.h.b16 %v1931
        %v2145 = vunpack.c.l.b16 %v1932
        %v2146 = vunpack.c.h.b16 %v1932
        %v2147 = vunpack.c.l.b16 %v1933
        %v2148 = vunpack.c.h.b16 %v1933
        %v2149 = vunpack.c.l.b16 %v1934
        %v2150 = vunpack.c.h.b16 %v1934
        %v2151 = vunpack.c.l.b16 %v1935
        %v2152 = vunpack.c.h.b16 %v1935
        %v2153 = vunpack.c.l.b16 %v1936
        %v2154 = vunpack.c.h.b16 %v1936
        %v2155 = vunpack.c.l.b16 %v1937
        %v2156 = vunpack.c.h.b16 %v1937
        %v2157 = vunpack.c.l.b16 %v1938
        %v2158 = vunpack.c.h.b16 %v1938
        %v2159 = vunpack.c.l.b16 %v1939
        %v2160 = vunpack.c.h.b16 %v1939
        %v2161 = vunpack.c.l.b16 %v1940
        %v2162 = vunpack.c.h.b16 %v1940
        %v2163 = vunpack.c.l.b16 %v1941
        %v2164 = vunpack.c.h.b16 %v1941
        %v2165 = vunpack.c.l.b16 %v1942
        %v2166 = vunpack.c.h.b16 %v1942
        %v2167 = vunpack.c.l.b16 %v1943
        %v2168 = vunpack.c.h.b16 %v1943
        %v2169 = vunpack.c.l.b16 %v1944
        %v2170 = vunpack.c.h.b16 %v1944
        %v2171 = vunpack.c.l.b16 %v1945
        %v2172 = vunpack.c.h.b16 %v1945
        %v2173 = vunpack.c.l.b16 %v1946
        %v2174 = vunpack.c.h.b16 %v1946
        %v2175 = vunpack.c.l.b16 %v1947
        %v2176 = vunpack.c.h.b16 %v1947
        %v2177 = vunpack.c.l.b16 %v1948
        %v2178 = vunpack.c.h.b16 %v1948
        %v2179 = vunpack.c.l.b16 %v1949
        %v2180 = vunpack.c.h.b16 %v1949
        %v2181 = vunpack.c.l.b16 %v1950
        %v2182 = vunpack.c.h.b16 %v1950
        %v2183 = vunpack.c.l.b16 %v1951
        %v2184 = vunpack.c.h.b16 %v1951
        %v2185 = vunpack.c.l.b16 %v1952
        %v2186 = vunpack.c.h.b16 %v1952
        %v2187 = vunpack.c.l.b16 %v1953
        %v2188 = vunpack.c.h.b16 %v1953
        %v2189 = vunpack.c.l.b16 %v1954
        %v2190 = vunpack.c.h.b16 %v1954
        %v2191 = vunpack.c.l.b16 %v1955
        %v2192 = vunpack.c.h.b16 %v1955
        %v2193 = vunpack.c.l.b16 %v1956
        %v2194 = vunpack.c.h.b16 %v1956
        %v2195 = vunpack.c.l.b16 %v1957
        %v2196 = vunpack.c.h.b16 %v1957
        %v2197 = vunpack.c.l.b16 %v1958
        %v2198 = vunpack.c.h.b16 %v1958
        %v2199 = vpack.c.b16 %v2055, %v2039
        %v2200 = vpack.c.b16 %v2056, %v2040
        %v2201 = vpack.c.b16 %v2057, %v2041
        %v2202 = vpack.c.b16 %v2058, %v2042
        %v2203 = vpack.c.b16 %v2059, %v2043
        %v2204 = vpack.c.b16 %v2060, %v2044
        %v2205 = vpack.c.b16 %v2061, %v2045
        %v2206 = vpack.c.b16 %v2062, %v2046
        %v2207 = vpack.c.b16 %v2063, %v2047
        %v2208 = vpack.c.b16 %v2064, %v2048
        %v2209 = vpack.c.b16 %v2065, %v2049
        %v2210 = vpack.c.b16 %v2066, %v2050
        %v2211 = vpack.c.b16 %v2067, %v2051
        %v2212 = vpack.c.b16 %v2068, %v2052
        %v2213 = vpack.c.b16 %v2069, %v2053
        %v2214 = vpack.c.b16 %v2070, %v2054
        %v2215 = vpack.c.b16 %v2087, %v2071
        %v2216 = vpack.c.b16 %v2088, %v2072
        %v2217 = vpack.c.b16 %v2089, %v2073
        %v2218 = vpack.c.b16 %v2090, %v2074
        %v2219 = vpack.c.b16 %v2091, %v2075
        %v2220 = vpack.c.b16 %v2092, %v2076
        %v2221 = vpack.c.b16 %v2093, %v2077
        %v2222 = vpack.c.b16 %v2094, %v2078
        %v2223 = vpack.c.b16 %v2095, %v2079
        %v2224 = vpack.c.b16 %v2096, %v2080
        %v2225 = vpack.c.b16 %v2097, %v2081
        %v2226 = vpack.c.b16 %v2098, %v2082
        %v2227 = vpack.c.b16 %v2099, %v2083
        %v2228 = vpack.c.b16 %v2100, %v2084
        %v2229 = vpack.c.b16 %v2101, %v2085
        %v2230 = vpack.c.b16 %v2102, %v2086
        %v2231 = vpack.c.b16 %v2119, %v2103
        %v2232 = vpack.c.b16 %v2120, %v2104
        %v2233 = vpack.c.b16 %v2121, %v2105
        %v2234 = vpack.c.b16 %v2122, %v2106
        %v2235 = vpack.c.b16 %v2123, %v2107
        %v2236 = vpack.c.b16 %v2124, %v2108
        %v2237 = vpack.c.b16 %v2125, %v2109
        %v2238 = vpack.c.b16 %v2126, %v2110
        %v2239 = vpack.c.b16 %v2127, %v2111
        %v2240 = vpack.c.b16 %v2128, %v2112
        %v2241 = vpack.c.b16 %v2129, %v2113
        %v2242 = vpack.c.b16 %v2130, %v2114
        %v2243 = vpack.c.b16 %v2131, %v2115
        %v2244 = vpack.c.b16 %v2132, %v2116
        %v2245 = vpack.c.b16 %v2133, %v2117
        %v2246 = vpack.c.b16 %v2134, %v2118
        %v2247 = vpack.c.b16 %v2151, %v2135
        %v2248 = vpack.c.b16 %v2152, %v2136
        %v2249 = vpack.c.b16 %v2153, %v2137
        %v2250 = vpack.c.b16 %v2154, %v2138
        %v2251 = vpack.c.b16 %v2155, %v2139
        %v2252 = vpack.c.b16 %v2156, %v2140
        %v2253 = vpack.c.b16 %v2157, %v2141
        %v2254 = vpack.c.b16 %v2158, %v2142
        %v2255 = vpack.c.b16 %v2159, %v2143
        %v2256 = vpack.c.b16 %v2160, %v2144
        %v2257 = vpack.c.b16 %v2161, %v2145
        %v2258 = vpack.c.b16 %v2162, %v2146
        %v2259 = vpack.c.b16 %v2163, %v2147
        %v2260 = vpack.c.b16 %v2164, %v2148
        %v2261 = vpack.c.b16 %v2165, %v2149
        %v2262 = vpack.c.b16 %v2166, %v2150
        %v2263 = vpack.c.b16 %v2183, %v2167
        %v2264 = vpack.c.b16 %v2184, %v2168
        %v2265 = vpack.c.b16 %v2185, %v2169
        %v2266 = vpack.c.b16 %v2186, %v2170
        %v2267 = vpack.c.b16 %v2187, %v2171
        %v2268 = vpack.c.b16 %v2188, %v2172
        %v2269 = vpack.c.b16 %v2189, %v2173
        %v2270 = vpack.c.b16 %v2190, %v2174
        %v2271 = vpack.c.b16 %v2191, %v2175
        %v2272 = vpack.c.b16 %v2192, %v2176
        %v2273 = vpack.c.b16 %v2193, %v2177
        %v2274 = vpack.c.b16 %v2194, %v2178
        %v2275 = vpack.c.b16 %v2195, %v2179
        %v2276 = vpack.c.b16 %v2196, %v2180
        %v2277 = vpack.c.b16 %v2197, %v2181
        %v2278 = vpack.c.b16 %v2198, %v2182
        %v2344 = vand.u32 %v2263, %v1502
        %v2347 = vand.u32 %v2264, %v1502
        %v2350 = vand.u32 %v2265, %v1502
        %v2353 = vand.u32 %v2266, %v1502
        %v2356 = vand.u32 %v2267, %v1502
        %v2359 = vand.u32 %v2268, %v1502
        %v2362 = vand.u32 %v2269, %v1502
        %v2365 = vand.u32 %v2270, %v1502
        %v2368 = vand.u32 %v2271, %v1502
        %v2371 = vand.u32 %v2272, %v1502
        %v2374 = vand.u32 %v2273, %v1502
        %v2377 = vand.u32 %v2274, %v1502
        %v2380 = vand.u32 %v2275, %v1502
        %v2383 = vand.u32 %v2276, %v1502
        %v2386 = vand.u32 %v2277, %v1502
        %v2389 = vand.u32 %v2278, %v1502
        %2391 = vmatprep.subr.bf16.mxu0 0
        %2392 = vmatpush1.bf16.msra.mxu0 0
        %2393 = vmatprep.subr.bf16.mxu0 0
        %2394 = vmatpush1.bf16.msra.mxu0 0
        %2395 = vmatprep.subr.bf16.mxu0 0
        %2396 = vmatpush1.bf16.msra.mxu0 0
        %2397 = vmatprep.subr.bf16.mxu0 %v2347
        %2398 = vmatpush1.bf16.msra.mxu0 %v2344
        %2399 = vmatprep.subr.bf16.mxu0 %v2248
        %2400 = vmatpush1.bf16.msra.mxu0 %v2247
        %2401 = vmatprep.subr.bf16.mxu0 %v2232
        %2402 = vmatpush1.bf16.msra.mxu0 %v2231
        %2403 = vmatprep.subr.bf16.mxu0 %v2216
        %2404 = vmatpush1.bf16.msra.mxu0 %v2215
        %2405 = vmatprep.subr.bf16.mxu0 %v2200
        %2406 = vmatpush1.bf16.msra.mxu0 %v2199
        %2407 = vmatprep.subr.bf16.mxu0 0
        %2408 = vmatpush2.bf16.msra.mxu0 0
        %2409 = vmatprep.subr.bf16.mxu0 0
        %2410 = vmatpush2.bf16.msra.mxu0 0
        %2411 = vmatprep.subr.bf16.mxu0 0
        %2412 = vmatpush2.bf16.msra.mxu0 0
        %2413 = vmatprep.subr.bf16.mxu0 0
        %2414 = vmatpush2.bf16.msra.mxu0 0
        %2415 = vmatprep.subr.bf16.mxu0 0
        %2416 = vmatpush2.bf16.msra.mxu0 0
        %2417 = vmatprep.subr.bf16.mxu0 0
        %2418 = vmatpush2.bf16.msra.mxu0 0
        %2419 = vmatprep.subr.bf16.mxu0 0
        %2420 = vmatpush2.bf16.msra.mxu0 0
        %2421 = vmatprep.subr.bf16.mxu0 0
        %2422 = vmatpush2.bf16.msra.mxu0 0
        %2423 = vmatprep.mubr.bf16.mxu0 0
        %2424 = vmatmul.mubr.bf16.gmra.mxu0 %v1497
        %v2425 = vpop.f32.mrf.mxu0
        %v2426 = vadd.f32 0.0, %v2425
        %v2427 = vpop.f32.mrf.mxu0
        %v2428 = vadd.f32 0.0, %v2427
        %v2429 = vpop.f32.mrf.mxu0
        %v2430 = vpop.f32.mrf.mxu0
        %2431 = vdwg.mxu0
        %2432 = vmatprep.subr.bf16.mxu0 0
        %2433 = vmatpush1.bf16.msra.mxu0 0
        %2434 = vmatprep.subr.bf16.mxu0 0
        %2435 = vmatpush1.bf16.msra.mxu0 0
        %2436 = vmatprep.subr.bf16.mxu0 0
        %2437 = vmatpush1.bf16.msra.mxu0 0
        %2438 = vmatprep.subr.bf16.mxu0 %v2353
        %2439 = vmatpush1.bf16.msra.mxu0 %v2350
        %2440 = vmatprep.subr.bf16.mxu0 %v2250
        %2441 = vmatpush1.bf16.msra.mxu0 %v2249
        %2442 = vmatprep.subr.bf16.mxu0 %v2234
        %2443 = vmatpush1.bf16.msra.mxu0 %v2233
        %2444 = vmatprep.subr.bf16.mxu0 %v2218
        %2445 = vmatpush1.bf16.msra.mxu0 %v2217
        %2446 = vmatprep.subr.bf16.mxu0 %v2202
        %2447 = vmatpush1.bf16.msra.mxu0 %v2201
        %2448 = vmatprep.subr.bf16.mxu0 0
        %2449 = vmatpush2.bf16.msra.mxu0 0
        %2450 = vmatprep.subr.bf16.mxu0 0
        %2451 = vmatpush2.bf16.msra.mxu0 0
        %2452 = vmatprep.subr.bf16.mxu0 0
        %2453 = vmatpush2.bf16.msra.mxu0 0
        %2454 = vmatprep.subr.bf16.mxu0 0
        %2455 = vmatpush2.bf16.msra.mxu0 0
        %2456 = vmatprep.subr.bf16.mxu0 0
        %2457 = vmatpush2.bf16.msra.mxu0 0
        %2458 = vmatprep.subr.bf16.mxu0 0
        %2459 = vmatpush2.bf16.msra.mxu0 0
        %2460 = vmatprep.subr.bf16.mxu0 0
        %2461 = vmatpush2.bf16.msra.mxu0 0
        %2462 = vmatprep.subr.bf16.mxu0 0
        %2463 = vmatpush2.bf16.msra.mxu0 0
        %2464 = vmatprep.mubr.bf16.mxu0 0
        %2465 = vmatmul.mubr.bf16.gmra.mxu0 %v1497
        %v2466 = vpop.f32.mrf.mxu0
        %v2467 = vadd.f32 0.0, %v2466
        %v2468 = vpop.f32.mrf.mxu0
        %v2469 = vadd.f32 0.0, %v2468
        %v2470 = vpop.f32.mrf.mxu0
        %v2471 = vpop.f32.mrf.mxu0
        %2472 = vdwg.mxu0
        %2473 = vmatprep.subr.bf16.mxu0 0
        %2474 = vmatpush1.bf16.msra.mxu0 0
        %2475 = vmatprep.subr.bf16.mxu0 0
        %2476 = vmatpush1.bf16.msra.mxu0 0
        %2477 = vmatprep.subr.bf16.mxu0 0
        %2478 = vmatpush1.bf16.msra.mxu0 0
        %2479 = vmatprep.subr.bf16.mxu0 %v2359
        %2480 = vmatpush1.bf16.msra.mxu0 %v2356
        %2481 = vmatprep.subr.bf16.mxu0 %v2252
        %2482 = vmatpush1.bf16.msra.mxu0 %v2251
        %2483 = vmatprep.subr.bf16.mxu0 %v2236
        %2484 = vmatpush1.bf16.msra.mxu0 %v2235
        %2485 = vmatprep.subr.bf16.mxu0 %v2220
        %2486 = vmatpush1.bf16.msra.mxu0 %v2219
        %2487 = vmatprep.subr.bf16.mxu0 %v2204
        %2488 = vmatpush1.bf16.msra.mxu0 %v2203
        %2489 = vmatprep.subr.bf16.mxu0 0
        %2490 = vmatpush2.bf16.msra.mxu0 0
        %2491 = vmatprep.subr.bf16.mxu0 0
        %2492 = vmatpush2.bf16.msra.mxu0 0
        %2493 = vmatprep.subr.bf16.mxu0 0
        %2494 = vmatpush2.bf16.msra.mxu0 0
        %2495 = vmatprep.subr.bf16.mxu0 0
        %2496 = vmatpush2.bf16.msra.mxu0 0
        %2497 = vmatprep.subr.bf16.mxu0 0
        %2498 = vmatpush2.bf16.msra.mxu0 0
        %2499 = vmatprep.subr.bf16.mxu0 0
        %2500 = vmatpush2.bf16.msra.mxu0 0
        %2501 = vmatprep.subr.bf16.mxu0 0
        %2502 = vmatpush2.bf16.msra.mxu0 0
        %2503 = vmatprep.subr.bf16.mxu0 0
        %2504 = vmatpush2.bf16.msra.mxu0 0
        %2505 = vmatprep.mubr.bf16.mxu0 0
        %2506 = vmatmul.mubr.bf16.gmra.mxu0 %v1497
        %v2507 = vpop.f32.mrf.mxu0
        %v2508 = vadd.f32 0.0, %v2507
        %v2509 = vpop.f32.mrf.mxu0
        %v2510 = vadd.f32 0.0, %v2509
        %v2511 = vpop.f32.mrf.mxu0
        %v2512 = vpop.f32.mrf.mxu0
        %2513 = vdwg.mxu0
        %2514 = vmatprep.subr.bf16.mxu0 0
        %2515 = vmatpush1.bf16.msra.mxu0 0
        %2516 = vmatprep.subr.bf16.mxu0 0
        %2517 = vmatpush1.bf16.msra.mxu0 0
        %2518 = vmatprep.subr.bf16.mxu0 0
        %2519 = vmatpush1.bf16.msra.mxu0 0
        %2520 = vmatprep.subr.bf16.mxu0 %v2365
        %2521 = vmatpush1.bf16.msra.mxu0 %v2362
        %2522 = vmatprep.subr.bf16.mxu0 %v2254
        %2523 = vmatpush1.bf16.msra.mxu0 %v2253
        %2524 = vmatprep.subr.bf16.mxu0 %v2238
        %2525 = vmatpush1.bf16.msra.mxu0 %v2237
        %2526 = vmatprep.subr.bf16.mxu0 %v2222
        %2527 = vmatpush1.bf16.msra.mxu0 %v2221
        %2528 = vmatprep.subr.bf16.mxu0 %v2206
        %2529 = vmatpush1.bf16.msra.mxu0 %v2205
        %2530 = vmatprep.subr.bf16.mxu0 0
        %2531 = vmatpush2.bf16.msra.mxu0 0
        %2532 = vmatprep.subr.bf16.mxu0 0
        %2533 = vmatpush2.bf16.msra.mxu0 0
        %2534 = vmatprep.subr.bf16.mxu0 0
        %2535 = vmatpush2.bf16.msra.mxu0 0
        %2536 = vmatprep.subr.bf16.mxu0 0
        %2537 = vmatpush2.bf16.msra.mxu0 0
        %2538 = vmatprep.subr.bf16.mxu0 0
        %2539 = vmatpush2.bf16.msra.mxu0 0
        %2540 = vmatprep.subr.bf16.mxu0 0
        %2541 = vmatpush2.bf16.msra.mxu0 0
        %2542 = vmatprep.subr.bf16.mxu0 0
        %2543 = vmatpush2.bf16.msra.mxu0 0
        %2544 = vmatprep.subr.bf16.mxu0 0
        %2545 = vmatpush2.bf16.msra.mxu0 0
        %2546 = vmatprep.mubr.bf16.mxu0 0
        %2547 = vmatmul.mubr.bf16.gmra.mxu0 %v1497
        %v2548 = vpop.f32.mrf.mxu0
        %v2549 = vadd.f32 0.0, %v2548
        %v2550 = vpop.f32.mrf.mxu0
        %v2551 = vadd.f32 0.0, %v2550
        %v2552 = vpop.f32.mrf.mxu0
        %v2553 = vpop.f32.mrf.mxu0
        %2554 = vdwg.mxu0
        %2555 = vmatprep.subr.bf16.mxu0 0
        %2556 = vmatpush1.bf16.msra.mxu0 0
        %2557 = vmatprep.subr.bf16.mxu0 0
        %2558 = vmatpush1.bf16.msra.mxu0 0
        %2559 = vmatprep.subr.bf16.mxu0 0
        %2560 = vmatpush1.bf16.msra.mxu0 0
        %2561 = vmatprep.subr.bf16.mxu0 %v2371
        %2562 = vmatpush1.bf16.msra.mxu0 %v2368
        %2563 = vmatprep.subr.bf16.mxu0 %v2256
        %2564 = vmatpush1.bf16.msra.mxu0 %v2255
        %2565 = vmatprep.subr.bf16.mxu0 %v2240
        %2566 = vmatpush1.bf16.msra.mxu0 %v2239
        %2567 = vmatprep.subr.bf16.mxu0 %v2224
        %2568 = vmatpush1.bf16.msra.mxu0 %v2223
        %2569 = vmatprep.subr.bf16.mxu0 %v2208
        %2570 = vmatpush1.bf16.msra.mxu0 %v2207
        %2571 = vmatprep.subr.bf16.mxu0 0
        %2572 = vmatpush2.bf16.msra.mxu0 0
        %2573 = vmatprep.subr.bf16.mxu0 0
        %2574 = vmatpush2.bf16.msra.mxu0 0
        %2575 = vmatprep.subr.bf16.mxu0 0
        %2576 = vmatpush2.bf16.msra.mxu0 0
        %2577 = vmatprep.subr.bf16.mxu0 0
        %2578 = vmatpush2.bf16.msra.mxu0 0
        %2579 = vmatprep.subr.bf16.mxu0 0
        %2580 = vmatpush2.bf16.msra.mxu0 0
        %2581 = vmatprep.subr.bf16.mxu0 0
        %2582 = vmatpush2.bf16.msra.mxu0 0
        %2583 = vmatprep.subr.bf16.mxu0 0
        %2584 = vmatpush2.bf16.msra.mxu0 0
        %2585 = vmatprep.subr.bf16.mxu0 0
        %2586 = vmatpush2.bf16.msra.mxu0 0
        %2587 = vmatprep.mubr.bf16.mxu0 0
        %2588 = vmatmul.mubr.bf16.gmra.mxu0 %v1497
        %v2589 = vpop.f32.mrf.mxu0
        %v2590 = vadd.f32 0.0, %v2589
        %v2591 = vpop.f32.mrf.mxu0
        %v2592 = vadd.f32 0.0, %v2591
        %v2593 = vpop.f32.mrf.mxu0
        %v2594 = vpop.f32.mrf.mxu0
        %2595 = vdwg.mxu0
        %2596 = vmatprep.subr.bf16.mxu0 0
        %2597 = vmatpush1.bf16.msra.mxu0 0
        %2598 = vmatprep.subr.bf16.mxu0 0
        %2599 = vmatpush1.bf16.msra.mxu0 0
        %2600 = vmatprep.subr.bf16.mxu0 0
        %2601 = vmatpush1.bf16.msra.mxu0 0
        %2602 = vmatprep.subr.bf16.mxu0 %v2377
        %2603 = vmatpush1.bf16.msra.mxu0 %v2374
        %2604 = vmatprep.subr.bf16.mxu0 %v2258
        %2605 = vmatpush1.bf16.msra.mxu0 %v2257
        %2606 = vmatprep.subr.bf16.mxu0 %v2242
        %2607 = vmatpush1.bf16.msra.mxu0 %v2241
        %2608 = vmatprep.subr.bf16.mxu0 %v2226
        %2609 = vmatpush1.bf16.msra.mxu0 %v2225
        %2610 = vmatprep.subr.bf16.mxu0 %v2210
        %2611 = vmatpush1.bf16.msra.mxu0 %v2209
        %2612 = vmatprep.subr.bf16.mxu0 0
        %2613 = vmatpush2.bf16.msra.mxu0 0
        %2614 = vmatprep.subr.bf16.mxu0 0
        %2615 = vmatpush2.bf16.msra.mxu0 0
        %2616 = vmatprep.subr.bf16.mxu0 0
        %2617 = vmatpush2.bf16.msra.mxu0 0
        %2618 = vmatprep.subr.bf16.mxu0 0
        %2619 = vmatpush2.bf16.msra.mxu0 0
        %2620 = vmatprep.subr.bf16.mxu0 0
        %2621 = vmatpush2.bf16.msra.mxu0 0
        %2622 = vmatprep.subr.bf16.mxu0 0
        %2623 = vmatpush2.bf16.msra.mxu0 0
        %2624 = vmatprep.subr.bf16.mxu0 0
        %2625 = vmatpush2.bf16.msra.mxu0 0
        %2626 = vmatprep.subr.bf16.mxu0 0
        %2627 = vmatpush2.bf16.msra.mxu0 0
        %2628 = vmatprep.mubr.bf16.mxu0 0
        %2629 = vmatmul.mubr.bf16.gmra.mxu0 %v1497
        %v2630 = vpop.f32.mrf.mxu0
        %v2631 = vadd.f32 0.0, %v2630
        %v2632 = vpop.f32.mrf.mxu0
        %v2633 = vadd.f32 0.0, %v2632
        %v2634 = vpop.f32.mrf.mxu0
        %v2635 = vpop.f32.mrf.mxu0
        %2636 = vdwg.mxu0
        %2637 = vmatprep.subr.bf16.mxu0 0
        %2638 = vmatpush1.bf16.msra.mxu0 0
        %2639 = vmatprep.subr.bf16.mxu0 0
        %2640 = vmatpush1.bf16.msra.mxu0 0
        %2641 = vmatprep.subr.bf16.mxu0 0
        %2642 = vmatpush1.bf16.msra.mxu0 0
        %2643 = vmatprep.subr.bf16.mxu0 %v2383
        %2644 = vmatpush1.bf16.msra.mxu0 %v2380
        %2645 = vmatprep.subr.bf16.mxu0 %v2260
        %2646 = vmatpush1.bf16.msra.mxu0 %v2259
        %2647 = vmatprep.subr.bf16.mxu0 %v2244
        %2648 = vmatpush1.bf16.msra.mxu0 %v2243
        %2649 = vmatprep.subr.bf16.mxu0 %v2228
        %2650 = vmatpush1.bf16.msra.mxu0 %v2227
        %2651 = vmatprep.subr.bf16.mxu0 %v2212
        %2652 = vmatpush1.bf16.msra.mxu0 %v2211
        %2653 = vmatprep.subr.bf16.mxu0 0
        %2654 = vmatpush2.bf16.msra.mxu0 0
        %2655 = vmatprep.subr.bf16.mxu0 0
        %2656 = vmatpush2.bf16.msra.mxu0 0
        %2657 = vmatprep.subr.bf16.mxu0 0
        %2658 = vmatpush2.bf16.msra.mxu0 0
        %2659 = vmatprep.subr.bf16.mxu0 0
        %2660 = vmatpush2.bf16.msra.mxu0 0
        %2661 = vmatprep.subr.bf16.mxu0 0
        %2662 = vmatpush2.bf16.msra.mxu0 0
        %2663 = vmatprep.subr.bf16.mxu0 0
        %2664 = vmatpush2.bf16.msra.mxu0 0
        %2665 = vmatprep.subr.bf16.mxu0 0
        %2666 = vmatpush2.bf16.msra.mxu0 0
        %2667 = vmatprep.subr.bf16.mxu0 0
        %2668 = vmatpush2.bf16.msra.mxu0 0
        %2669 = vmatprep.mubr.bf16.mxu0 0
        %2670 = vmatmul.mubr.bf16.gmra.mxu0 %v1497
        %v2671 = vpop.f32.mrf.mxu0
        %v2672 = vadd.f32 0.0, %v2671
        %v2673 = vpop.f32.mrf.mxu0
        %v2674 = vadd.f32 0.0, %v2673
        %v2675 = vpop.f32.mrf.mxu0
        %v2676 = vpop.f32.mrf.mxu0
        %2677 = vdwg.mxu0
        %2678 = vmatprep.subr.bf16.mxu0 0
        %2679 = vmatpush1.bf16.msra.mxu0 0
        %2680 = vmatprep.subr.bf16.mxu0 0
        %2681 = vmatpush1.bf16.msra.mxu0 0
        %2682 = vmatprep.subr.bf16.mxu0 0
        %2683 = vmatpush1.bf16.msra.mxu0 0
        %2684 = vmatprep.subr.bf16.mxu0 %v2389
        %2685 = vmatpush1.bf16.msra.mxu0 %v2386
        %2686 = vmatprep.subr.bf16.mxu0 %v2262
        %2687 = vmatpush1.bf16.msra.mxu0 %v2261
        %2688 = vmatprep.subr.bf16.mxu0 %v2246
        %2689 = vmatpush1.bf16.msra.mxu0 %v2245
        %2690 = vmatprep.subr.bf16.mxu0 %v2230
        %2691 = vmatpush1.bf16.msra.mxu0 %v2229
        %2692 = vmatprep.subr.bf16.mxu0 %v2214
        %2693 = vmatpush1.bf16.msra.mxu0 %v2213
        %2694 = vmatprep.subr.bf16.mxu0 0
        %2695 = vmatpush2.bf16.msra.mxu0 0
        %2696 = vmatprep.subr.bf16.mxu0 0
        %2697 = vmatpush2.bf16.msra.mxu0 0
        %2698 = vmatprep.subr.bf16.mxu0 0
        %2699 = vmatpush2.bf16.msra.mxu0 0
        %2700 = vmatprep.subr.bf16.mxu0 0
        %2701 = vmatpush2.bf16.msra.mxu0 0
        %2702 = vmatprep.subr.bf16.mxu0 0
        %2703 = vmatpush2.bf16.msra.mxu0 0
        %2704 = vmatprep.subr.bf16.mxu0 0
        %2705 = vmatpush2.bf16.msra.mxu0 0
        %2706 = vmatprep.subr.bf16.mxu0 0
        %2707 = vmatpush2.bf16.msra.mxu0 0
        %2708 = vmatprep.subr.bf16.mxu0 0
        %2709 = vmatpush2.bf16.msra.mxu0 0
        %2710 = vmatprep.mubr.bf16.mxu0 0
        %2711 = vmatmul.mubr.bf16.gmra.mxu0 %v1497
        %v2712 = vpop.f32.mrf.mxu0
        %v2713 = vadd.f32 0.0, %v2712
        %v2714 = vpop.f32.mrf.mxu0
        %v2715 = vadd.f32 0.0, %v2714
        %v2716 = vpop.f32.mrf.mxu0
        %v2717 = vpop.f32.mrf.mxu0
        %2718 = vdwg.mxu0
        %v2719 = vmax.f32 %v1586, %v2426
        %v2720 = vmax.f32 %v1588, %v2428
        %v2721 = vmax.f32 %v1627, %v2467
        %v2722 = vmax.f32 %v1629, %v2469
        %v2723 = vmax.f32 %v1668, %v2508
        %v2724 = vmax.f32 %v1670, %v2510
        %v2725 = vmax.f32 %v1709, %v2549
        %v2726 = vmax.f32 %v1711, %v2551
        %v2727 = vmax.f32 %v1750, %v2590
        %v2728 = vmax.f32 %v1752, %v2592
        %v2729 = vmax.f32 %v1791, %v2631
        %v2730 = vmax.f32 %v1793, %v2633
        %v2731 = vmax.f32 %v1832, %v2672
        %v2732 = vmax.f32 %v1834, %v2674
        %v2733 = vmax.f32 %v1873, %v2713
        %v2734 = vmax.f32 %v1875, %v2715
        %v2735 = vld [vmem:[%s973] sm:$0xff]
        %v2736 = vld [vmem:[%s973 + $0x8] sm:$0xff]
        %v2737 = vld [vmem:[%s973 + $0x10] sm:$0xff]
        %v2738 = vld [vmem:[%s973 + $0x18] sm:$0xff]
        %v2739 = vld [vmem:[%s973 + $0x20] sm:$0xff]
        %v2740 = vld [vmem:[%s973 + $0x28] sm:$0xff]
        %v2741 = vld [vmem:[%s973 + $0x30] sm:$0xff]
        %v2742 = vld [vmem:[%s973 + $0x38] sm:$0xff]
        %v2743 = vld [vmem:[%s973 + $0x40] sm:$0xff]
        %v2744 = vld [vmem:[%s973 + $0x48] sm:$0xff]
        %v2745 = vld [vmem:[%s973 + $0x50] sm:$0xff]
        %v2746 = vld [vmem:[%s973 + $0x58] sm:$0xff]
        %v2747 = vld [vmem:[%s973 + $0x60] sm:$0xff]
        %v2748 = vld [vmem:[%s973 + $0x68] sm:$0xff]
        %v2749 = vld [vmem:[%s973 + $0x70] sm:$0xff]
        %v2750 = vld [vmem:[%s973 + $0x78] sm:$0xff]
        %v2751 = vld [vmem:[%s973 + $0x80] sm:$0xff]
        %v2752 = vld [vmem:[%s973 + $0x88] sm:$0xff]
        %v2753 = vld [vmem:[%s973 + $0x90] sm:$0xff]
        %v2754 = vld [vmem:[%s973 + $0x98] sm:$0xff]
        %v2755 = vld [vmem:[%s973 + $0xa0] sm:$0xff]
        %v2756 = vld [vmem:[%s973 + $0xa8] sm:$0xff]
        %v2757 = vld [vmem:[%s973 + $0xb0] sm:$0xff]
        %v2758 = vld [vmem:[%s973 + $0xb8] sm:$0xff]
        %v2759 = vld [vmem:[%s973 + $0xc0] sm:$0xff]
        %v2760 = vld [vmem:[%s973 + $0xc8] sm:$0xff]
        %v2761 = vld [vmem:[%s973 + $0xd0] sm:$0xff]
        %v2762 = vld [vmem:[%s973 + $0xd8] sm:$0xff]
        %v2763 = vld [vmem:[%s973 + $0xe0] sm:$0xff]
        %v2764 = vld [vmem:[%s973 + $0xe8] sm:$0xff]
        %v2765 = vld [vmem:[%s973 + $0xf0] sm:$0xff]
        %v2766 = vld [vmem:[%s973 + $0xf8] sm:$0xff]
        %v2767 = vld [vmem:[%s973 + $0x100] sm:$0xff]
        %v2768 = vld [vmem:[%s973 + $0x108] sm:$0xff]
        %v2769 = vld [vmem:[%s973 + $0x110] sm:$0xff]
        %v2770 = vld [vmem:[%s973 + $0x118] sm:$0xff]
        %v2771 = vld [vmem:[%s973 + $0x120] sm:$0xff]
        %v2772 = vld [vmem:[%s973 + $0x128] sm:$0xff]
        %v2773 = vld [vmem:[%s973 + $0x130] sm:$0xff]
        %v2774 = vld [vmem:[%s973 + $0x138] sm:$0xff]
        %v2775 = vld [vmem:[%s973 + $0x140] sm:$0xff]
        %v2776 = vld [vmem:[%s973 + $0x148] sm:$0xff]
        %v2777 = vld [vmem:[%s973 + $0x150] sm:$0xff]
        %v2778 = vld [vmem:[%s973 + $0x158] sm:$0xff]
        %v2779 = vld [vmem:[%s973 + $0x160] sm:$0xff]
        %v2780 = vld [vmem:[%s973 + $0x168] sm:$0xff]
        %v2781 = vld [vmem:[%s973 + $0x170] sm:$0xff]
        %v2782 = vld [vmem:[%s973 + $0x178] sm:$0xff]
        %v2783 = vld [vmem:[%s973 + $0x180] sm:$0xff]
        %v2784 = vld [vmem:[%s973 + $0x188] sm:$0xff]
        %v2785 = vld [vmem:[%s973 + $0x190] sm:$0xff]
        %v2786 = vld [vmem:[%s973 + $0x198] sm:$0xff]
        %v2787 = vld [vmem:[%s973 + $0x1a0] sm:$0xff]
        %v2788 = vld [vmem:[%s973 + $0x1a8] sm:$0xff]
        %v2789 = vld [vmem:[%s973 + $0x1b0] sm:$0xff]
        %v2790 = vld [vmem:[%s973 + $0x1b8] sm:$0xff]
        %v2791 = vld [vmem:[%s973 + $0x1c0] sm:$0xff]
        %v2792 = vld [vmem:[%s973 + $0x1c8] sm:$0xff]
        %v2793 = vld [vmem:[%s973 + $0x1d0] sm:$0xff]
        %v2794 = vld [vmem:[%s973 + $0x1d8] sm:$0xff]
        %v2795 = vld [vmem:[%s973 + $0x1e0] sm:$0xff]
        %v2796 = vld [vmem:[%s973 + $0x1e8] sm:$0xff]
        %v2797 = vld [vmem:[%s973 + $0x1f0] sm:$0xff]
        %v2798 = vld [vmem:[%s973 + $0x1f8] sm:$0xff]
        %v2799 = vld [vmem:[%s973 + $0x200] sm:$0xff]
        %v2800 = vld [vmem:[%s973 + $0x208] sm:$0xff]
        %v2801 = vld [vmem:[%s973 + $0x210] sm:$0xff]
        %v2802 = vld [vmem:[%s973 + $0x218] sm:$0xff]
        %v2803 = vld [vmem:[%s973 + $0x220] sm:$0xff]
        %v2804 = vld [vmem:[%s973 + $0x228] sm:$0xff]
        %v2805 = vld [vmem:[%s973 + $0x230] sm:$0xff]
        %v2806 = vld [vmem:[%s973 + $0x238] sm:$0xff]
        %v2807 = vld [vmem:[%s973 + $0x240] sm:$0x33]
        %v2808 = vld [vmem:[%s973 + $0x248] sm:$0x33]
        %v2809 = vld [vmem:[%s973 + $0x250] sm:$0x33]
        %v2810 = vld [vmem:[%s973 + $0x258] sm:$0x33]
        %v2811 = vld [vmem:[%s973 + $0x260] sm:$0x33]
        %v2812 = vld [vmem:[%s973 + $0x268] sm:$0x33]
        %v2813 = vld [vmem:[%s973 + $0x270] sm:$0x33]
        %v2814 = vld [vmem:[%s973 + $0x278] sm:$0x33]
        %v2895 = vunpack.c.l.b16 %v2735
        %v2896 = vunpack.c.h.b16 %v2735
        %v2897 = vunpack.c.l.b16 %v2736
        %v2898 = vunpack.c.h.b16 %v2736
        %v2899 = vunpack.c.l.b16 %v2737
        %v2900 = vunpack.c.h.b16 %v2737
        %v2901 = vunpack.c.l.b16 %v2738
        %v2902 = vunpack.c.h.b16 %v2738
        %v2903 = vunpack.c.l.b16 %v2739
        %v2904 = vunpack.c.h.b16 %v2739
        %v2905 = vunpack.c.l.b16 %v2740
        %v2906 = vunpack.c.h.b16 %v2740
        %v2907 = vunpack.c.l.b16 %v2741
        %v2908 = vunpack.c.h.b16 %v2741
        %v2909 = vunpack.c.l.b16 %v2742
        %v2910 = vunpack.c.h.b16 %v2742
        %v2911 = vunpack.c.l.b16 %v2743
        %v2912 = vunpack.c.h.b16 %v2743
        %v2913 = vunpack.c.l.b16 %v2744
        %v2914 = vunpack.c.h.b16 %v2744
        %v2915 = vunpack.c.l.b16 %v2745
        %v2916 = vunpack.c.h.b16 %v2745
        %v2917 = vunpack.c.l.b16 %v2746
        %v2918 = vunpack.c.h.b16 %v2746
        %v2919 = vunpack.c.l.b16 %v2747
        %v2920 = vunpack.c.h.b16 %v2747
        %v2921 = vunpack.c.l.b16 %v2748
        %v2922 = vunpack.c.h.b16 %v2748
        %v2923 = vunpack.c.l.b16 %v2749
        %v2924 = vunpack.c.h.b16 %v2749
        %v2925 = vunpack.c.l.b16 %v2750
        %v2926 = vunpack.c.h.b16 %v2750
        %v2927 = vunpack.c.l.b16 %v2751
        %v2928 = vunpack.c.h.b16 %v2751
        %v2929 = vunpack.c.l.b16 %v2752
        %v2930 = vunpack.c.h.b16 %v2752
        %v2931 = vunpack.c.l.b16 %v2753
        %v2932 = vunpack.c.h.b16 %v2753
        %v2933 = vunpack.c.l.b16 %v2754
        %v2934 = vunpack.c.h.b16 %v2754
        %v2935 = vunpack.c.l.b16 %v2755
        %v2936 = vunpack.c.h.b16 %v2755
        %v2937 = vunpack.c.l.b16 %v2756
        %v2938 = vunpack.c.h.b16 %v2756
        %v2939 = vunpack.c.l.b16 %v2757
        %v2940 = vunpack.c.h.b16 %v2757
        %v2941 = vunpack.c.l.b16 %v2758
        %v2942 = vunpack.c.h.b16 %v2758
        %v2943 = vunpack.c.l.b16 %v2759
        %v2944 = vunpack.c.h.b16 %v2759
        %v2945 = vunpack.c.l.b16 %v2760
        %v2946 = vunpack.c.h.b16 %v2760
        %v2947 = vunpack.c.l.b16 %v2761
        %v2948 = vunpack.c.h.b16 %v2761
        %v2949 = vunpack.c.l.b16 %v2762
        %v2950 = vunpack.c.h.b16 %v2762
        %v2951 = vunpack.c.l.b16 %v2763
        %v2952 = vunpack.c.h.b16 %v2763
        %v2953 = vunpack.c.l.b16 %v2764
        %v2954 = vunpack.c.h.b16 %v2764
        %v2955 = vunpack.c.l.b16 %v2765
        %v2956 = vunpack.c.h.b16 %v2765
        %v2957 = vunpack.c.l.b16 %v2766
        %v2958 = vunpack.c.h.b16 %v2766
        %v2959 = vunpack.c.l.b16 %v2767
        %v2960 = vunpack.c.h.b16 %v2767
        %v2961 = vunpack.c.l.b16 %v2768
        %v2962 = vunpack.c.h.b16 %v2768
        %v2963 = vunpack.c.l.b16 %v2769
        %v2964 = vunpack.c.h.b16 %v2769
        %v2965 = vunpack.c.l.b16 %v2770
        %v2966 = vunpack.c.h.b16 %v2770
        %v2967 = vunpack.c.l.b16 %v2771
        %v2968 = vunpack.c.h.b16 %v2771
        %v2969 = vunpack.c.l.b16 %v2772
        %v2970 = vunpack.c.h.b16 %v2772
        %v2971 = vunpack.c.l.b16 %v2773
        %v2972 = vunpack.c.h.b16 %v2773
        %v2973 = vunpack.c.l.b16 %v2774
        %v2974 = vunpack.c.h.b16 %v2774
        %v2975 = vunpack.c.l.b16 %v2775
        %v2976 = vunpack.c.h.b16 %v2775
        %v2977 = vunpack.c.l.b16 %v2776
        %v2978 = vunpack.c.h.b16 %v2776
        %v2979 = vunpack.c.l.b16 %v2777
        %v2980 = vunpack.c.h.b16 %v2777
        %v2981 = vunpack.c.l.b16 %v2778
        %v2982 = vunpack.c.h.b16 %v2778
        %v2983 = vunpack.c.l.b16 %v2779
        %v2984 = vunpack.c.h.b16 %v2779
        %v2985 = vunpack.c.l.b16 %v2780
        %v2986 = vunpack.c.h.b16 %v2780
        %v2987 = vunpack.c.l.b16 %v2781
        %v2988 = vunpack.c.h.b16 %v2781
        %v2989 = vunpack.c.l.b16 %v2782
        %v2990 = vunpack.c.h.b16 %v2782
        %v2991 = vunpack.c.l.b16 %v2783
        %v2992 = vunpack.c.h.b16 %v2783
        %v2993 = vunpack.c.l.b16 %v2784
        %v2994 = vunpack.c.h.b16 %v2784
        %v2995 = vunpack.c.l.b16 %v2785
        %v2996 = vunpack.c.h.b16 %v2785
        %v2997 = vunpack.c.l.b16 %v2786
        %v2998 = vunpack.c.h.b16 %v2786
        %v2999 = vunpack.c.l.b16 %v2787
        %v3000 = vunpack.c.h.b16 %v2787
        %v3001 = vunpack.c.l.b16 %v2788
        %v3002 = vunpack.c.h.b16 %v2788
        %v3003 = vunpack.c.l.b16 %v2789
        %v3004 = vunpack.c.h.b16 %v2789
        %v3005 = vunpack.c.l.b16 %v2790
        %v3006 = vunpack.c.h.b16 %v2790
        %v3007 = vunpack.c.l.b16 %v2791
        %v3008 = vunpack.c.h.b16 %v2791
        %v3009 = vunpack.c.l.b16 %v2792
        %v3010 = vunpack.c.h.b16 %v2792
        %v3011 = vunpack.c.l.b16 %v2793
        %v3012 = vunpack.c.h.b16 %v2793
        %v3013 = vunpack.c.l.b16 %v2794
        %v3014 = vunpack.c.h.b16 %v2794
        %v3015 = vunpack.c.l.b16 %v2795
        %v3016 = vunpack.c.h.b16 %v2795
        %v3017 = vunpack.c.l.b16 %v2796
        %v3018 = vunpack.c.h.b16 %v2796
        %v3019 = vunpack.c.l.b16 %v2797
        %v3020 = vunpack.c.h.b16 %v2797
        %v3021 = vunpack.c.l.b16 %v2798
        %v3022 = vunpack.c.h.b16 %v2798
        %v3023 = vunpack.c.l.b16 %v2799
        %v3024 = vunpack.c.h.b16 %v2799
        %v3025 = vunpack.c.l.b16 %v2800
        %v3026 = vunpack.c.h.b16 %v2800
        %v3027 = vunpack.c.l.b16 %v2801
        %v3028 = vunpack.c.h.b16 %v2801
        %v3029 = vunpack.c.l.b16 %v2802
        %v3030 = vunpack.c.h.b16 %v2802
        %v3031 = vunpack.c.l.b16 %v2803
        %v3032 = vunpack.c.h.b16 %v2803
        %v3033 = vunpack.c.l.b16 %v2804
        %v3034 = vunpack.c.h.b16 %v2804
        %v3035 = vunpack.c.l.b16 %v2805
        %v3036 = vunpack.c.h.b16 %v2805
        %v3037 = vunpack.c.l.b16 %v2806
        %v3038 = vunpack.c.h.b16 %v2806
        %v3039 = vunpack.c.l.b16 %v2807
        %v3040 = vunpack.c.h.b16 %v2807
        %v3041 = vunpack.c.l.b16 %v2808
        %v3042 = vunpack.c.h.b16 %v2808
        %v3043 = vunpack.c.l.b16 %v2809
        %v3044 = vunpack.c.h.b16 %v2809
        %v3045 = vunpack.c.l.b16 %v2810
        %v3046 = vunpack.c.h.b16 %v2810
        %v3047 = vunpack.c.l.b16 %v2811
        %v3048 = vunpack.c.h.b16 %v2811
        %v3049 = vunpack.c.l.b16 %v2812
        %v3050 = vunpack.c.h.b16 %v2812
        %v3051 = vunpack.c.l.b16 %v2813
        %v3052 = vunpack.c.h.b16 %v2813
        %v3053 = vunpack.c.l.b16 %v2814
        %v3054 = vunpack.c.h.b16 %v2814
        %v3055 = vpack.c.b16 %v2911, %v2895
        %v3056 = vpack.c.b16 %v2912, %v2896
        %v3057 = vpack.c.b16 %v2913, %v2897
        %v3058 = vpack.c.b16 %v2914, %v2898
        %v3059 = vpack.c.b16 %v2915, %v2899
        %v3060 = vpack.c.b16 %v2916, %v2900
        %v3061 = vpack.c.b16 %v2917, %v2901
        %v3062 = vpack.c.b16 %v2918, %v2902
        %v3063 = vpack.c.b16 %v2919, %v2903
        %v3064 = vpack.c.b16 %v2920, %v2904
        %v3065 = vpack.c.b16 %v2921, %v2905
        %v3066 = vpack.c.b16 %v2922, %v2906
        %v3067 = vpack.c.b16 %v2923, %v2907
        %v3068 = vpack.c.b16 %v2924, %v2908
        %v3069 = vpack.c.b16 %v2925, %v2909
        %v3070 = vpack.c.b16 %v2926, %v2910
        %v3071 = vpack.c.b16 %v2943, %v2927
        %v3072 = vpack.c.b16 %v2944, %v2928
        %v3073 = vpack.c.b16 %v2945, %v2929
        %v3074 = vpack.c.b16 %v2946, %v2930
        %v3075 = vpack.c.b16 %v2947, %v2931
        %v3076 = vpack.c.b16 %v2948, %v2932
        %v3077 = vpack.c.b16 %v2949, %v2933
        %v3078 = vpack.c.b16 %v2950, %v2934
        %v3079 = vpack.c.b16 %v2951, %v2935
        %v3080 = vpack.c.b16 %v2952, %v2936
        %v3081 = vpack.c.b16 %v2953, %v2937
        %v3082 = vpack.c.b16 %v2954, %v2938
        %v3083 = vpack.c.b16 %v2955, %v2939
        %v3084 = vpack.c.b16 %v2956, %v2940
        %v3085 = vpack.c.b16 %v2957, %v2941
        %v3086 = vpack.c.b16 %v2958, %v2942
        %v3087 = vpack.c.b16 %v2975, %v2959
        %v3088 = vpack.c.b16 %v2976, %v2960
        %v3089 = vpack.c.b16 %v2977, %v2961
        %v3090 = vpack.c.b16 %v2978, %v2962
        %v3091 = vpack.c.b16 %v2979, %v2963
        %v3092 = vpack.c.b16 %v2980, %v2964
        %v3093 = vpack.c.b16 %v2981, %v2965
        %v3094 = vpack.c.b16 %v2982, %v2966
        %v3095 = vpack.c.b16 %v2983, %v2967
        %v3096 = vpack.c.b16 %v2984, %v2968
        %v3097 = vpack.c.b16 %v2985, %v2969
        %v3098 = vpack.c.b16 %v2986, %v2970
        %v3099 = vpack.c.b16 %v2987, %v2971
        %v3100 = vpack.c.b16 %v2988, %v2972
        %v3101 = vpack.c.b16 %v2989, %v2973
        %v3102 = vpack.c.b16 %v2990, %v2974
        %v3103 = vpack.c.b16 %v3007, %v2991
        %v3104 = vpack.c.b16 %v3008, %v2992
        %v3105 = vpack.c.b16 %v3009, %v2993
        %v3106 = vpack.c.b16 %v3010, %v2994
        %v3107 = vpack.c.b16 %v3011, %v2995
        %v3108 = vpack.c.b16 %v3012, %v2996
        %v3109 = vpack.c.b16 %v3013, %v2997
        %v3110 = vpack.c.b16 %v3014, %v2998
        %v3111 = vpack.c.b16 %v3015, %v2999
        %v3112 = vpack.c.b16 %v3016, %v3000
        %v3113 = vpack.c.b16 %v3017, %v3001
        %v3114 = vpack.c.b16 %v3018, %v3002
        %v3115 = vpack.c.b16 %v3019, %v3003
        %v3116 = vpack.c.b16 %v3020, %v3004
        %v3117 = vpack.c.b16 %v3021, %v3005
        %v3118 = vpack.c.b16 %v3022, %v3006
        %v3119 = vpack.c.b16 %v3039, %v3023
        %v3120 = vpack.c.b16 %v3040, %v3024
        %v3121 = vpack.c.b16 %v3041, %v3025
        %v3122 = vpack.c.b16 %v3042, %v3026
        %v3123 = vpack.c.b16 %v3043, %v3027
        %v3124 = vpack.c.b16 %v3044, %v3028
        %v3125 = vpack.c.b16 %v3045, %v3029
        %v3126 = vpack.c.b16 %v3046, %v3030
        %v3127 = vpack.c.b16 %v3047, %v3031
        %v3128 = vpack.c.b16 %v3048, %v3032
        %v3129 = vpack.c.b16 %v3049, %v3033
        %v3130 = vpack.c.b16 %v3050, %v3034
        %v3131 = vpack.c.b16 %v3051, %v3035
        %v3132 = vpack.c.b16 %v3052, %v3036
        %v3133 = vpack.c.b16 %v3053, %v3037
        %v3134 = vpack.c.b16 %v3054, %v3038
        %v3200 = vand.u32 %v3119, %v1502
        %v3203 = vand.u32 %v3120, %v1502
        %v3206 = vand.u32 %v3121, %v1502
        %v3209 = vand.u32 %v3122, %v1502
        %v3212 = vand.u32 %v3123, %v1502
        %v3215 = vand.u32 %v3124, %v1502
        %v3218 = vand.u32 %v3125, %v1502
        %v3221 = vand.u32 %v3126, %v1502
        %v3224 = vand.u32 %v3127, %v1502
        %v3227 = vand.u32 %v3128, %v1502
        %v3230 = vand.u32 %v3129, %v1502
        %v3233 = vand.u32 %v3130, %v1502
        %v3236 = vand.u32 %v3131, %v1502
        %v3239 = vand.u32 %v3132, %v1502
        %v3242 = vand.u32 %v3133, %v1502
        %v3245 = vand.u32 %v3134, %v1502
        %3247 = vmatprep.subr.bf16.mxu0 0
        %3248 = vmatpush1.bf16.msra.mxu0 0
        %3249 = vmatprep.subr.bf16.mxu0 0
        %3250 = vmatpush1.bf16.msra.mxu0 0
        %3251 = vmatprep.subr.bf16.mxu0 0
        %3252 = vmatpush1.bf16.msra.mxu0 0
        %3253 = vmatprep.subr.bf16.mxu0 %v3203
        %3254 = vmatpush1.bf16.msra.mxu0 %v3200
        %3255 = vmatprep.subr.bf16.mxu0 %v3104
        %3256 = vmatpush1.bf16.msra.mxu0 %v3103
        %3257 = vmatprep.subr.bf16.mxu0 %v3088
        %3258 = vmatpush1.bf16.msra.mxu0 %v3087
        %3259 = vmatprep.subr.bf16.mxu0 %v3072
        %3260 = vmatpush1.bf16.msra.mxu0 %v3071
        %3261 = vmatprep.subr.bf16.mxu0 %v3056
        %3262 = vmatpush1.bf16.msra.mxu0 %v3055
        %3263 = vmatprep.subr.bf16.mxu0 0
        %3264 = vmatpush2.bf16.msra.mxu0 0
        %3265 = vmatprep.subr.bf16.mxu0 0
        %3266 = vmatpush2.bf16.msra.mxu0 0
        %3267 = vmatprep.subr.bf16.mxu0 0
        %3268 = vmatpush2.bf16.msra.mxu0 0
        %3269 = vmatprep.subr.bf16.mxu0 0
        %3270 = vmatpush2.bf16.msra.mxu0 0
        %3271 = vmatprep.subr.bf16.mxu0 0
        %3272 = vmatpush2.bf16.msra.mxu0 0
        %3273 = vmatprep.subr.bf16.mxu0 0
        %3274 = vmatpush2.bf16.msra.mxu0 0
        %3275 = vmatprep.subr.bf16.mxu0 0
        %3276 = vmatpush2.bf16.msra.mxu0 0
        %3277 = vmatprep.subr.bf16.mxu0 0
        %3278 = vmatpush2.bf16.msra.mxu0 0
        %3279 = vmatprep.mubr.bf16.mxu0 0
        %3280 = vmatmul.mubr.bf16.gmra.mxu0 %v1497
        %v3281 = vpop.f32.mrf.mxu0
        %v3282 = vadd.f32 0.0, %v3281
        %v3283 = vpop.f32.mrf.mxu0
        %v3284 = vadd.f32 0.0, %v3283
        %v3285 = vpop.f32.mrf.mxu0
        %v3286 = vpop.f32.mrf.mxu0
        %3287 = vdwg.mxu0
        %3288 = vmatprep.subr.bf16.mxu0 0
        %3289 = vmatpush1.bf16.msra.mxu0 0
        %3290 = vmatprep.subr.bf16.mxu0 0
        %3291 = vmatpush1.bf16.msra.mxu0 0
        %3292 = vmatprep.subr.bf16.mxu0 0
        %3293 = vmatpush1.bf16.msra.mxu0 0
        %3294 = vmatprep.subr.bf16.mxu0 %v3209
        %3295 = vmatpush1.bf16.msra.mxu0 %v3206
        %3296 = vmatprep.subr.bf16.mxu0 %v3106
        %3297 = vmatpush1.bf16.msra.mxu0 %v3105
        %3298 = vmatprep.subr.bf16.mxu0 %v3090
        %3299 = vmatpush1.bf16.msra.mxu0 %v3089
        %3300 = vmatprep.subr.bf16.mxu0 %v3074
        %3301 = vmatpush1.bf16.msra.mxu0 %v3073
        %3302 = vmatprep.subr.bf16.mxu0 %v3058
        %3303 = vmatpush1.bf16.msra.mxu0 %v3057
        %3304 = vmatprep.subr.bf16.mxu0 0
        %3305 = vmatpush2.bf16.msra.mxu0 0
        %3306 = vmatprep.subr.bf16.mxu0 0
        %3307 = vmatpush2.bf16.msra.mxu0 0
        %3308 = vmatprep.subr.bf16.mxu0 0
        %3309 = vmatpush2.bf16.msra.mxu0 0
        %3310 = vmatprep.subr.bf16.mxu0 0
        %3311 = vmatpush2.bf16.msra.mxu0 0
        %3312 = vmatprep.subr.bf16.mxu0 0
        %3313 = vmatpush2.bf16.msra.mxu0 0
        %3314 = vmatprep.subr.bf16.mxu0 0
        %3315 = vmatpush2.bf16.msra.mxu0 0
        %3316 = vmatprep.subr.bf16.mxu0 0
        %3317 = vmatpush2.bf16.msra.mxu0 0
        %3318 = vmatprep.subr.bf16.mxu0 0
        %3319 = vmatpush2.bf16.msra.mxu0 0
        %3320 = vmatprep.mubr.bf16.mxu0 0
        %3321 = vmatmul.mubr.bf16.gmra.mxu0 %v1497
        %v3322 = vpop.f32.mrf.mxu0
        %v3323 = vadd.f32 0.0, %v3322
        %v3324 = vpop.f32.mrf.mxu0
        %v3325 = vadd.f32 0.0, %v3324
        %v3326 = vpop.f32.mrf.mxu0
        %v3327 = vpop.f32.mrf.mxu0
        %3328 = vdwg.mxu0
        %3329 = vmatprep.subr.bf16.mxu0 0
        %3330 = vmatpush1.bf16.msra.mxu0 0
        %3331 = vmatprep.subr.bf16.mxu0 0
        %3332 = vmatpush1.bf16.msra.mxu0 0
        %3333 = vmatprep.subr.bf16.mxu0 0
        %3334 = vmatpush1.bf16.msra.mxu0 0
        %3335 = vmatprep.subr.bf16.mxu0 %v3215
        %3336 = vmatpush1.bf16.msra.mxu0 %v3212
        %3337 = vmatprep.subr.bf16.mxu0 %v3108
        %3338 = vmatpush1.bf16.msra.mxu0 %v3107
        %3339 = vmatprep.subr.bf16.mxu0 %v3092
        %3340 = vmatpush1.bf16.msra.mxu0 %v3091
        %3341 = vmatprep.subr.bf16.mxu0 %v3076
        %3342 = vmatpush1.bf16.msra.mxu0 %v3075
        %3343 = vmatprep.subr.bf16.mxu0 %v3060
        %3344 = vmatpush1.bf16.msra.mxu0 %v3059
        %3345 = vmatprep.subr.bf16.mxu0 0
        %3346 = vmatpush2.bf16.msra.mxu0 0
        %3347 = vmatprep.subr.bf16.mxu0 0
        %3348 = vmatpush2.bf16.msra.mxu0 0
        %3349 = vmatprep.subr.bf16.mxu0 0
        %3350 = vmatpush2.bf16.msra.mxu0 0
        %3351 = vmatprep.subr.bf16.mxu0 0
        %3352 = vmatpush2.bf16.msra.mxu0 0
        %3353 = vmatprep.subr.bf16.mxu0 0
        %3354 = vmatpush2.bf16.msra.mxu0 0
        %3355 = vmatprep.subr.bf16.mxu0 0
        %3356 = vmatpush2.bf16.msra.mxu0 0
        %3357 = vmatprep.subr.bf16.mxu0 0
        %3358 = vmatpush2.bf16.msra.mxu0 0
        %3359 = vmatprep.subr.bf16.mxu0 0
        %3360 = vmatpush2.bf16.msra.mxu0 0
        %3361 = vmatprep.mubr.bf16.mxu0 0
        %3362 = vmatmul.mubr.bf16.gmra.mxu0 %v1497
        %v3363 = vpop.f32.mrf.mxu0
        %v3364 = vadd.f32 0.0, %v3363
        %v3365 = vpop.f32.mrf.mxu0
        %v3366 = vadd.f32 0.0, %v3365
        %v3367 = vpop.f32.mrf.mxu0
        %v3368 = vpop.f32.mrf.mxu0
        %3369 = vdwg.mxu0
        %3370 = vmatprep.subr.bf16.mxu0 0
        %3371 = vmatpush1.bf16.msra.mxu0 0
        %3372 = vmatprep.subr.bf16.mxu0 0
        %3373 = vmatpush1.bf16.msra.mxu0 0
        %3374 = vmatprep.subr.bf16.mxu0 0
        %3375 = vmatpush1.bf16.msra.mxu0 0
        %3376 = vmatprep.subr.bf16.mxu0 %v3221
        %3377 = vmatpush1.bf16.msra.mxu0 %v3218
        %3378 = vmatprep.subr.bf16.mxu0 %v3110
        %3379 = vmatpush1.bf16.msra.mxu0 %v3109
        %3380 = vmatprep.subr.bf16.mxu0 %v3094
        %3381 = vmatpush1.bf16.msra.mxu0 %v3093
        %3382 = vmatprep.subr.bf16.mxu0 %v3078
        %3383 = vmatpush1.bf16.msra.mxu0 %v3077
        %3384 = vmatprep.subr.bf16.mxu0 %v3062
        %3385 = vmatpush1.bf16.msra.mxu0 %v3061
        %3386 = vmatprep.subr.bf16.mxu0 0
        %3387 = vmatpush2.bf16.msra.mxu0 0
        %3388 = vmatprep.subr.bf16.mxu0 0
        %3389 = vmatpush2.bf16.msra.mxu0 0
        %3390 = vmatprep.subr.bf16.mxu0 0
        %3391 = vmatpush2.bf16.msra.mxu0 0
        %3392 = vmatprep.subr.bf16.mxu0 0
        %3393 = vmatpush2.bf16.msra.mxu0 0
        %3394 = vmatprep.subr.bf16.mxu0 0
        %3395 = vmatpush2.bf16.msra.mxu0 0
        %3396 = vmatprep.subr.bf16.mxu0 0
        %3397 = vmatpush2.bf16.msra.mxu0 0
        %3398 = vmatprep.subr.bf16.mxu0 0
        %3399 = vmatpush2.bf16.msra.mxu0 0
        %3400 = vmatprep.subr.bf16.mxu0 0
        %3401 = vmatpush2.bf16.msra.mxu0 0
        %3402 = vmatprep.mubr.bf16.mxu0 0
        %3403 = vmatmul.mubr.bf16.gmra.mxu0 %v1497
        %v3404 = vpop.f32.mrf.mxu0
        %v3405 = vadd.f32 0.0, %v3404
        %v3406 = vpop.f32.mrf.mxu0
        %v3407 = vadd.f32 0.0, %v3406
        %v3408 = vpop.f32.mrf.mxu0
        %v3409 = vpop.f32.mrf.mxu0
        %3410 = vdwg.mxu0
        %3411 = vmatprep.subr.bf16.mxu0 0
        %3412 = vmatpush1.bf16.msra.mxu0 0
        %3413 = vmatprep.subr.bf16.mxu0 0
        %3414 = vmatpush1.bf16.msra.mxu0 0
        %3415 = vmatprep.subr.bf16.mxu0 0
        %3416 = vmatpush1.bf16.msra.mxu0 0
        %3417 = vmatprep.subr.bf16.mxu0 %v3227
        %3418 = vmatpush1.bf16.msra.mxu0 %v3224
        %3419 = vmatprep.subr.bf16.mxu0 %v3112
        %3420 = vmatpush1.bf16.msra.mxu0 %v3111
        %3421 = vmatprep.subr.bf16.mxu0 %v3096
        %3422 = vmatpush1.bf16.msra.mxu0 %v3095
        %3423 = vmatprep.subr.bf16.mxu0 %v3080
        %3424 = vmatpush1.bf16.msra.mxu0 %v3079
        %3425 = vmatprep.subr.bf16.mxu0 %v3064
        %3426 = vmatpush1.bf16.msra.mxu0 %v3063
        %3427 = vmatprep.subr.bf16.mxu0 0
        %3428 = vmatpush2.bf16.msra.mxu0 0
        %3429 = vmatprep.subr.bf16.mxu0 0
        %3430 = vmatpush2.bf16.msra.mxu0 0
        %3431 = vmatprep.subr.bf16.mxu0 0
        %3432 = vmatpush2.bf16.msra.mxu0 0
        %3433 = vmatprep.subr.bf16.mxu0 0
        %3434 = vmatpush2.bf16.msra.mxu0 0
        %3435 = vmatprep.subr.bf16.mxu0 0
        %3436 = vmatpush2.bf16.msra.mxu0 0
        %3437 = vmatprep.subr.bf16.mxu0 0
        %3438 = vmatpush2.bf16.msra.mxu0 0
        %3439 = vmatprep.subr.bf16.mxu0 0
        %3440 = vmatpush2.bf16.msra.mxu0 0
        %3441 = vmatprep.subr.bf16.mxu0 0
        %3442 = vmatpush2.bf16.msra.mxu0 0
        %3443 = vmatprep.mubr.bf16.mxu0 0
        %3444 = vmatmul.mubr.bf16.gmra.mxu0 %v1497
        %v3445 = vpop.f32.mrf.mxu0
        %v3446 = vadd.f32 0.0, %v3445
        %v3447 = vpop.f32.mrf.mxu0
        %v3448 = vadd.f32 0.0, %v3447
        %v3449 = vpop.f32.mrf.mxu0
        %v3450 = vpop.f32.mrf.mxu0
        %3451 = vdwg.mxu0
        %3452 = vmatprep.subr.bf16.mxu0 0
        %3453 = vmatpush1.bf16.msra.mxu0 0
        %3454 = vmatprep.subr.bf16.mxu0 0
        %3455 = vmatpush1.bf16.msra.mxu0 0
        %3456 = vmatprep.subr.bf16.mxu0 0
        %3457 = vmatpush1.bf16.msra.mxu0 0
        %3458 = vmatprep.subr.bf16.mxu0 %v3233
        %3459 = vmatpush1.bf16.msra.mxu0 %v3230
        %3460 = vmatprep.subr.bf16.mxu0 %v3114
        %3461 = vmatpush1.bf16.msra.mxu0 %v3113
        %3462 = vmatprep.subr.bf16.mxu0 %v3098
        %3463 = vmatpush1.bf16.msra.mxu0 %v3097
        %3464 = vmatprep.subr.bf16.mxu0 %v3082
        %3465 = vmatpush1.bf16.msra.mxu0 %v3081
        %3466 = vmatprep.subr.bf16.mxu0 %v3066
        %3467 = vmatpush1.bf16.msra.mxu0 %v3065
        %3468 = vmatprep.subr.bf16.mxu0 0
        %3469 = vmatpush2.bf16.msra.mxu0 0
        %3470 = vmatprep.subr.bf16.mxu0 0
        %3471 = vmatpush2.bf16.msra.mxu0 0
        %3472 = vmatprep.subr.bf16.mxu0 0
        %3473 = vmatpush2.bf16.msra.mxu0 0
        %3474 = vmatprep.subr.bf16.mxu0 0
        %3475 = vmatpush2.bf16.msra.mxu0 0
        %3476 = vmatprep.subr.bf16.mxu0 0
        %3477 = vmatpush2.bf16.msra.mxu0 0
        %3478 = vmatprep.subr.bf16.mxu0 0
        %3479 = vmatpush2.bf16.msra.mxu0 0
        %3480 = vmatprep.subr.bf16.mxu0 0
        %3481 = vmatpush2.bf16.msra.mxu0 0
        %3482 = vmatprep.subr.bf16.mxu0 0
        %3483 = vmatpush2.bf16.msra.mxu0 0
        %3484 = vmatprep.mubr.bf16.mxu0 0
        %3485 = vmatmul.mubr.bf16.gmra.mxu0 %v1497
        %v3486 = vpop.f32.mrf.mxu0
        %v3487 = vadd.f32 0.0, %v3486
        %v3488 = vpop.f32.mrf.mxu0
        %v3489 = vadd.f32 0.0, %v3488
        %v3490 = vpop.f32.mrf.mxu0
        %v3491 = vpop.f32.mrf.mxu0
        %3492 = vdwg.mxu0
        %3493 = vmatprep.subr.bf16.mxu0 0
        %3494 = vmatpush1.bf16.msra.mxu0 0
        %3495 = vmatprep.subr.bf16.mxu0 0
        %3496 = vmatpush1.bf16.msra.mxu0 0
        %3497 = vmatprep.subr.bf16.mxu0 0
        %3498 = vmatpush1.bf16.msra.mxu0 0
        %3499 = vmatprep.subr.bf16.mxu0 %v3239
        %3500 = vmatpush1.bf16.msra.mxu0 %v3236
        %3501 = vmatprep.subr.bf16.mxu0 %v3116
        %3502 = vmatpush1.bf16.msra.mxu0 %v3115
        %3503 = vmatprep.subr.bf16.mxu0 %v3100
        %3504 = vmatpush1.bf16.msra.mxu0 %v3099
        %3505 = vmatprep.subr.bf16.mxu0 %v3084
        %3506 = vmatpush1.bf16.msra.mxu0 %v3083
        %3507 = vmatprep.subr.bf16.mxu0 %v3068
        %3508 = vmatpush1.bf16.msra.mxu0 %v3067
        %3509 = vmatprep.subr.bf16.mxu0 0
        %3510 = vmatpush2.bf16.msra.mxu0 0
        %3511 = vmatprep.subr.bf16.mxu0 0
        %3512 = vmatpush2.bf16.msra.mxu0 0
        %3513 = vmatprep.subr.bf16.mxu0 0
        %3514 = vmatpush2.bf16.msra.mxu0 0
        %3515 = vmatprep.subr.bf16.mxu0 0
        %3516 = vmatpush2.bf16.msra.mxu0 0
        %3517 = vmatprep.subr.bf16.mxu0 0
        %3518 = vmatpush2.bf16.msra.mxu0 0
        %3519 = vmatprep.subr.bf16.mxu0 0
        %3520 = vmatpush2.bf16.msra.mxu0 0
        %3521 = vmatprep.subr.bf16.mxu0 0
        %3522 = vmatpush2.bf16.msra.mxu0 0
        %3523 = vmatprep.subr.bf16.mxu0 0
        %3524 = vmatpush2.bf16.msra.mxu0 0
        %3525 = vmatprep.mubr.bf16.mxu0 0
        %3526 = vmatmul.mubr.bf16.gmra.mxu0 %v1497
        %v3527 = vpop.f32.mrf.mxu0
        %v3528 = vadd.f32 0.0, %v3527
        %v3529 = vpop.f32.mrf.mxu0
        %v3530 = vadd.f32 0.0, %v3529
        %v3531 = vpop.f32.mrf.mxu0
        %v3532 = vpop.f32.mrf.mxu0
        %3533 = vdwg.mxu0
        %3534 = vmatprep.subr.bf16.mxu0 0
        %3535 = vmatpush1.bf16.msra.mxu0 0
        %3536 = vmatprep.subr.bf16.mxu0 0
        %3537 = vmatpush1.bf16.msra.mxu0 0
        %3538 = vmatprep.subr.bf16.mxu0 0
        %3539 = vmatpush1.bf16.msra.mxu0 0
        %3540 = vmatprep.subr.bf16.mxu0 %v3245
        %3541 = vmatpush1.bf16.msra.mxu0 %v3242
        %3542 = vmatprep.subr.bf16.mxu0 %v3118
        %3543 = vmatpush1.bf16.msra.mxu0 %v3117
        %3544 = vmatprep.subr.bf16.mxu0 %v3102
        %3545 = vmatpush1.bf16.msra.mxu0 %v3101
        %3546 = vmatprep.subr.bf16.mxu0 %v3086
        %3547 = vmatpush1.bf16.msra.mxu0 %v3085
        %3548 = vmatprep.subr.bf16.mxu0 %v3070
        %3549 = vmatpush1.bf16.msra.mxu0 %v3069
        %3550 = vmatprep.subr.bf16.mxu0 0
        %3551 = vmatpush2.bf16.msra.mxu0 0
        %3552 = vmatprep.subr.bf16.mxu0 0
        %3553 = vmatpush2.bf16.msra.mxu0 0
        %3554 = vmatprep.subr.bf16.mxu0 0
        %3555 = vmatpush2.bf16.msra.mxu0 0
        %3556 = vmatprep.subr.bf16.mxu0 0
        %3557 = vmatpush2.bf16.msra.mxu0 0
        %3558 = vmatprep.subr.bf16.mxu0 0
        %3559 = vmatpush2.bf16.msra.mxu0 0
        %3560 = vmatprep.subr.bf16.mxu0 0
        %3561 = vmatpush2.bf16.msra.mxu0 0
        %3562 = vmatprep.subr.bf16.mxu0 0
        %3563 = vmatpush2.bf16.msra.mxu0 0
        %3564 = vmatprep.subr.bf16.mxu0 0
        %3565 = vmatpush2.bf16.msra.mxu0 0
        %3566 = vmatprep.mubr.bf16.mxu0 0
        %3567 = vmatmul.mubr.bf16.gmra.mxu0 %v1497
        %v3568 = vpop.f32.mrf.mxu0
        %v3569 = vadd.f32 0.0, %v3568
        %v3570 = vpop.f32.mrf.mxu0
        %v3571 = vadd.f32 0.0, %v3570
        %v3572 = vpop.f32.mrf.mxu0
        %v3573 = vpop.f32.mrf.mxu0
        %3574 = vdwg.mxu0
        %v3575 = vmax.f32 %v2719, %v3282
        %v3576 = vmax.f32 %v2720, %v3284
        %v3577 = vmax.f32 %v2721, %v3323
        %v3578 = vmax.f32 %v2722, %v3325
        %v3579 = vmax.f32 %v2723, %v3364
        %v3580 = vmax.f32 %v2724, %v3366
        %v3581 = vmax.f32 %v2725, %v3405
        %v3582 = vmax.f32 %v2726, %v3407
        %v3583 = vmax.f32 %v2727, %v3446
        %v3584 = vmax.f32 %v2728, %v3448
        %v3585 = vmax.f32 %v2729, %v3487
        %v3586 = vmax.f32 %v2730, %v3489
        %v3587 = vmax.f32 %v2731, %v3528
        %v3588 = vmax.f32 %v2732, %v3530
        %v3589 = vmax.f32 %v2733, %v3569
        %v3590 = vmax.f32 %v2734, %v3571
        %v3591 = vld [vmem:[%s980] sm:$0xff]
        %v3592 = vld [vmem:[%s980 + $0x8] sm:$0xff]
        %v3593 = vld [vmem:[%s980 + $0x10] sm:$0xff]
        %v3594 = vld [vmem:[%s980 + $0x18] sm:$0xff]
        %v3595 = vld [vmem:[%s980 + $0x20] sm:$0xff]
        %v3596 = vld [vmem:[%s980 + $0x28] sm:$0xff]
        %v3597 = vld [vmem:[%s980 + $0x30] sm:$0xff]
        %v3598 = vld [vmem:[%s980 + $0x38] sm:$0xff]
        %v3599 = vld [vmem:[%s980 + $0x40] sm:$0xff]
        %v3600 = vld [vmem:[%s980 + $0x48] sm:$0xff]
        %v3601 = vld [vmem:[%s980 + $0x50] sm:$0xff]
        %v3602 = vld [vmem:[%s980 + $0x58] sm:$0xff]
        %v3603 = vld [vmem:[%s980 + $0x60] sm:$0xff]
        %v3604 = vld [vmem:[%s980 + $0x68] sm:$0xff]
        %v3605 = vld [vmem:[%s980 + $0x70] sm:$0xff]
        %v3606 = vld [vmem:[%s980 + $0x78] sm:$0xff]
        %v3607 = vld [vmem:[%s980 + $0x80] sm:$0xff]
        %v3608 = vld [vmem:[%s980 + $0x88] sm:$0xff]
        %v3609 = vld [vmem:[%s980 + $0x90] sm:$0xff]
        %v3610 = vld [vmem:[%s980 + $0x98] sm:$0xff]
        %v3611 = vld [vmem:[%s980 + $0xa0] sm:$0xff]
        %v3612 = vld [vmem:[%s980 + $0xa8] sm:$0xff]
        %v3613 = vld [vmem:[%s980 + $0xb0] sm:$0xff]
        %v3614 = vld [vmem:[%s980 + $0xb8] sm:$0xff]
        %v3615 = vld [vmem:[%s980 + $0xc0] sm:$0xff]
        %v3616 = vld [vmem:[%s980 + $0xc8] sm:$0xff]
        %v3617 = vld [vmem:[%s980 + $0xd0] sm:$0xff]
        %v3618 = vld [vmem:[%s980 + $0xd8] sm:$0xff]
        %v3619 = vld [vmem:[%s980 + $0xe0] sm:$0xff]
        %v3620 = vld [vmem:[%s980 + $0xe8] sm:$0xff]
        %v3621 = vld [vmem:[%s980 + $0xf0] sm:$0xff]
        %v3622 = vld [vmem:[%s980 + $0xf8] sm:$0xff]
        %v3623 = vld [vmem:[%s980 + $0x100] sm:$0xff]
        %v3624 = vld [vmem:[%s980 + $0x108] sm:$0xff]
        %v3625 = vld [vmem:[%s980 + $0x110] sm:$0xff]
        %v3626 = vld [vmem:[%s980 + $0x118] sm:$0xff]
        %v3627 = vld [vmem:[%s980 + $0x120] sm:$0xff]
        %v3628 = vld [vmem:[%s980 + $0x128] sm:$0xff]
        %v3629 = vld [vmem:[%s980 + $0x130] sm:$0xff]
        %v3630 = vld [vmem:[%s980 + $0x138] sm:$0xff]
        %v3631 = vld [vmem:[%s980 + $0x140] sm:$0xff]
        %v3632 = vld [vmem:[%s980 + $0x148] sm:$0xff]
        %v3633 = vld [vmem:[%s980 + $0x150] sm:$0xff]
        %v3634 = vld [vmem:[%s980 + $0x158] sm:$0xff]
        %v3635 = vld [vmem:[%s980 + $0x160] sm:$0xff]
        %v3636 = vld [vmem:[%s980 + $0x168] sm:$0xff]
        %v3637 = vld [vmem:[%s980 + $0x170] sm:$0xff]
        %v3638 = vld [vmem:[%s980 + $0x178] sm:$0xff]
        %v3639 = vld [vmem:[%s980 + $0x180] sm:$0xff]
        %v3640 = vld [vmem:[%s980 + $0x188] sm:$0xff]
        %v3641 = vld [vmem:[%s980 + $0x190] sm:$0xff]
        %v3642 = vld [vmem:[%s980 + $0x198] sm:$0xff]
        %v3643 = vld [vmem:[%s980 + $0x1a0] sm:$0xff]
        %v3644 = vld [vmem:[%s980 + $0x1a8] sm:$0xff]
        %v3645 = vld [vmem:[%s980 + $0x1b0] sm:$0xff]
        %v3646 = vld [vmem:[%s980 + $0x1b8] sm:$0xff]
        %v3647 = vld [vmem:[%s980 + $0x1c0] sm:$0xff]
        %v3648 = vld [vmem:[%s980 + $0x1c8] sm:$0xff]
        %v3649 = vld [vmem:[%s980 + $0x1d0] sm:$0xff]
        %v3650 = vld [vmem:[%s980 + $0x1d8] sm:$0xff]
        %v3651 = vld [vmem:[%s980 + $0x1e0] sm:$0xff]
        %v3652 = vld [vmem:[%s980 + $0x1e8] sm:$0xff]
        %v3653 = vld [vmem:[%s980 + $0x1f0] sm:$0xff]
        %v3654 = vld [vmem:[%s980 + $0x1f8] sm:$0xff]
        %v3655 = vld [vmem:[%s980 + $0x200] sm:$0xff]
        %v3656 = vld [vmem:[%s980 + $0x208] sm:$0xff]
        %v3657 = vld [vmem:[%s980 + $0x210] sm:$0xff]
        %v3658 = vld [vmem:[%s980 + $0x218] sm:$0xff]
        %v3659 = vld [vmem:[%s980 + $0x220] sm:$0xff]
        %v3660 = vld [vmem:[%s980 + $0x228] sm:$0xff]
        %v3661 = vld [vmem:[%s980 + $0x230] sm:$0xff]
        %v3662 = vld [vmem:[%s980 + $0x238] sm:$0xff]
        %v3663 = vld [vmem:[%s980 + $0x240] sm:$0x33]
        %v3664 = vld [vmem:[%s980 + $0x248] sm:$0x33]
        %v3665 = vld [vmem:[%s980 + $0x250] sm:$0x33]
        %v3666 = vld [vmem:[%s980 + $0x258] sm:$0x33]
        %v3667 = vld [vmem:[%s980 + $0x260] sm:$0x33]
        %v3668 = vld [vmem:[%s980 + $0x268] sm:$0x33]
        %v3669 = vld [vmem:[%s980 + $0x270] sm:$0x33]
        %v3670 = vld [vmem:[%s980 + $0x278] sm:$0x33]
        %v3751 = vunpack.c.l.b16 %v3591
        %v3752 = vunpack.c.h.b16 %v3591
        %v3753 = vunpack.c.l.b16 %v3592
        %v3754 = vunpack.c.h.b16 %v3592
        %v3755 = vunpack.c.l.b16 %v3593
        %v3756 = vunpack.c.h.b16 %v3593
        %v3757 = vunpack.c.l.b16 %v3594
        %v3758 = vunpack.c.h.b16 %v3594
        %v3759 = vunpack.c.l.b16 %v3595
        %v3760 = vunpack.c.h.b16 %v3595
        %v3761 = vunpack.c.l.b16 %v3596
        %v3762 = vunpack.c.h.b16 %v3596
        %v3763 = vunpack.c.l.b16 %v3597
        %v3764 = vunpack.c.h.b16 %v3597
        %v3765 = vunpack.c.l.b16 %v3598
        %v3766 = vunpack.c.h.b16 %v3598
        %v3767 = vunpack.c.l.b16 %v3599
        %v3768 = vunpack.c.h.b16 %v3599
        %v3769 = vunpack.c.l.b16 %v3600
        %v3770 = vunpack.c.h.b16 %v3600
        %v3771 = vunpack.c.l.b16 %v3601
        %v3772 = vunpack.c.h.b16 %v3601
        %v3773 = vunpack.c.l.b16 %v3602
        %v3774 = vunpack.c.h.b16 %v3602
        %v3775 = vunpack.c.l.b16 %v3603
        %v3776 = vunpack.c.h.b16 %v3603
        %v3777 = vunpack.c.l.b16 %v3604
        %v3778 = vunpack.c.h.b16 %v3604
        %v3779 = vunpack.c.l.b16 %v3605
        %v3780 = vunpack.c.h.b16 %v3605
        %v3781 = vunpack.c.l.b16 %v3606
        %v3782 = vunpack.c.h.b16 %v3606
        %v3783 = vunpack.c.l.b16 %v3607
        %v3784 = vunpack.c.h.b16 %v3607
        %v3785 = vunpack.c.l.b16 %v3608
        %v3786 = vunpack.c.h.b16 %v3608
        %v3787 = vunpack.c.l.b16 %v3609
        %v3788 = vunpack.c.h.b16 %v3609
        %v3789 = vunpack.c.l.b16 %v3610
        %v3790 = vunpack.c.h.b16 %v3610
        %v3791 = vunpack.c.l.b16 %v3611
        %v3792 = vunpack.c.h.b16 %v3611
        %v3793 = vunpack.c.l.b16 %v3612
        %v3794 = vunpack.c.h.b16 %v3612
        %v3795 = vunpack.c.l.b16 %v3613
        %v3796 = vunpack.c.h.b16 %v3613
        %v3797 = vunpack.c.l.b16 %v3614
        %v3798 = vunpack.c.h.b16 %v3614
        %v3799 = vunpack.c.l.b16 %v3615
        %v3800 = vunpack.c.h.b16 %v3615
        %v3801 = vunpack.c.l.b16 %v3616
        %v3802 = vunpack.c.h.b16 %v3616
        %v3803 = vunpack.c.l.b16 %v3617
        %v3804 = vunpack.c.h.b16 %v3617
        %v3805 = vunpack.c.l.b16 %v3618
        %v3806 = vunpack.c.h.b16 %v3618
        %v3807 = vunpack.c.l.b16 %v3619
        %v3808 = vunpack.c.h.b16 %v3619
        %v3809 = vunpack.c.l.b16 %v3620
        %v3810 = vunpack.c.h.b16 %v3620
        %v3811 = vunpack.c.l.b16 %v3621
        %v3812 = vunpack.c.h.b16 %v3621
        %v3813 = vunpack.c.l.b16 %v3622
        %v3814 = vunpack.c.h.b16 %v3622
        %v3815 = vunpack.c.l.b16 %v3623
        %v3816 = vunpack.c.h.b16 %v3623
        %v3817 = vunpack.c.l.b16 %v3624
        %v3818 = vunpack.c.h.b16 %v3624
        %v3819 = vunpack.c.l.b16 %v3625
        %v3820 = vunpack.c.h.b16 %v3625
        %v3821 = vunpack.c.l.b16 %v3626
        %v3822 = vunpack.c.h.b16 %v3626
        %v3823 = vunpack.c.l.b16 %v3627
        %v3824 = vunpack.c.h.b16 %v3627
        %v3825 = vunpack.c.l.b16 %v3628
        %v3826 = vunpack.c.h.b16 %v3628
        %v3827 = vunpack.c.l.b16 %v3629
        %v3828 = vunpack.c.h.b16 %v3629
        %v3829 = vunpack.c.l.b16 %v3630
        %v3830 = vunpack.c.h.b16 %v3630
        %v3831 = vunpack.c.l.b16 %v3631
        %v3832 = vunpack.c.h.b16 %v3631
        %v3833 = vunpack.c.l.b16 %v3632
        %v3834 = vunpack.c.h.b16 %v3632
        %v3835 = vunpack.c.l.b16 %v3633
        %v3836 = vunpack.c.h.b16 %v3633
        %v3837 = vunpack.c.l.b16 %v3634
        %v3838 = vunpack.c.h.b16 %v3634
        %v3839 = vunpack.c.l.b16 %v3635
        %v3840 = vunpack.c.h.b16 %v3635
        %v3841 = vunpack.c.l.b16 %v3636
        %v3842 = vunpack.c.h.b16 %v3636
        %v3843 = vunpack.c.l.b16 %v3637
        %v3844 = vunpack.c.h.b16 %v3637
        %v3845 = vunpack.c.l.b16 %v3638
        %v3846 = vunpack.c.h.b16 %v3638
        %v3847 = vunpack.c.l.b16 %v3639
        %v3848 = vunpack.c.h.b16 %v3639
        %v3849 = vunpack.c.l.b16 %v3640
        %v3850 = vunpack.c.h.b16 %v3640
        %v3851 = vunpack.c.l.b16 %v3641
        %v3852 = vunpack.c.h.b16 %v3641
        %v3853 = vunpack.c.l.b16 %v3642
        %v3854 = vunpack.c.h.b16 %v3642
        %v3855 = vunpack.c.l.b16 %v3643
        %v3856 = vunpack.c.h.b16 %v3643
        %v3857 = vunpack.c.l.b16 %v3644
        %v3858 = vunpack.c.h.b16 %v3644
        %v3859 = vunpack.c.l.b16 %v3645
        %v3860 = vunpack.c.h.b16 %v3645
        %v3861 = vunpack.c.l.b16 %v3646
        %v3862 = vunpack.c.h.b16 %v3646
        %v3863 = vunpack.c.l.b16 %v3647
        %v3864 = vunpack.c.h.b16 %v3647
        %v3865 = vunpack.c.l.b16 %v3648
        %v3866 = vunpack.c.h.b16 %v3648
        %v3867 = vunpack.c.l.b16 %v3649
        %v3868 = vunpack.c.h.b16 %v3649
        %v3869 = vunpack.c.l.b16 %v3650
        %v3870 = vunpack.c.h.b16 %v3650
        %v3871 = vunpack.c.l.b16 %v3651
        %v3872 = vunpack.c.h.b16 %v3651
        %v3873 = vunpack.c.l.b16 %v3652
        %v3874 = vunpack.c.h.b16 %v3652
        %v3875 = vunpack.c.l.b16 %v3653
        %v3876 = vunpack.c.h.b16 %v3653
        %v3877 = vunpack.c.l.b16 %v3654
        %v3878 = vunpack.c.h.b16 %v3654
        %v3879 = vunpack.c.l.b16 %v3655
        %v3880 = vunpack.c.h.b16 %v3655
        %v3881 = vunpack.c.l.b16 %v3656
        %v3882 = vunpack.c.h.b16 %v3656
        %v3883 = vunpack.c.l.b16 %v3657
        %v3884 = vunpack.c.h.b16 %v3657
        %v3885 = vunpack.c.l.b16 %v3658
        %v3886 = vunpack.c.h.b16 %v3658
        %v3887 = vunpack.c.l.b16 %v3659
        %v3888 = vunpack.c.h.b16 %v3659
        %v3889 = vunpack.c.l.b16 %v3660
        %v3890 = vunpack.c.h.b16 %v3660
        %v3891 = vunpack.c.l.b16 %v3661
        %v3892 = vunpack.c.h.b16 %v3661
        %v3893 = vunpack.c.l.b16 %v3662
        %v3894 = vunpack.c.h.b16 %v3662
        %v3895 = vunpack.c.l.b16 %v3663
        %v3896 = vunpack.c.h.b16 %v3663
        %v3897 = vunpack.c.l.b16 %v3664
        %v3898 = vunpack.c.h.b16 %v3664
        %v3899 = vunpack.c.l.b16 %v3665
        %v3900 = vunpack.c.h.b16 %v3665
        %v3901 = vunpack.c.l.b16 %v3666
        %v3902 = vunpack.c.h.b16 %v3666
        %v3903 = vunpack.c.l.b16 %v3667
        %v3904 = vunpack.c.h.b16 %v3667
        %v3905 = vunpack.c.l.b16 %v3668
        %v3906 = vunpack.c.h.b16 %v3668
        %v3907 = vunpack.c.l.b16 %v3669
        %v3908 = vunpack.c.h.b16 %v3669
        %v3909 = vunpack.c.l.b16 %v3670
        %v3910 = vunpack.c.h.b16 %v3670
        %v3911 = vpack.c.b16 %v3767, %v3751
        %v3912 = vpack.c.b16 %v3768, %v3752
        %v3913 = vpack.c.b16 %v3769, %v3753
        %v3914 = vpack.c.b16 %v3770, %v3754
        %v3915 = vpack.c.b16 %v3771, %v3755
        %v3916 = vpack.c.b16 %v3772, %v3756
        %v3917 = vpack.c.b16 %v3773, %v3757
        %v3918 = vpack.c.b16 %v3774, %v3758
        %v3919 = vpack.c.b16 %v3775, %v3759
        %v3920 = vpack.c.b16 %v3776, %v3760
        %v3921 = vpack.c.b16 %v3777, %v3761
        %v3922 = vpack.c.b16 %v3778, %v3762
        %v3923 = vpack.c.b16 %v3779, %v3763
        %v3924 = vpack.c.b16 %v3780, %v3764
        %v3925 = vpack.c.b16 %v3781, %v3765
        %v3926 = vpack.c.b16 %v3782, %v3766
        %v3927 = vpack.c.b16 %v3799, %v3783
        %v3928 = vpack.c.b16 %v3800, %v3784
        %v3929 = vpack.c.b16 %v3801, %v3785
        %v3930 = vpack.c.b16 %v3802, %v3786
        %v3931 = vpack.c.b16 %v3803, %v3787
        %v3932 = vpack.c.b16 %v3804, %v3788
        %v3933 = vpack.c.b16 %v3805, %v3789
        %v3934 = vpack.c.b16 %v3806, %v3790
        %v3935 = vpack.c.b16 %v3807, %v3791
        %v3936 = vpack.c.b16 %v3808, %v3792
        %v3937 = vpack.c.b16 %v3809, %v3793
        %v3938 = vpack.c.b16 %v3810, %v3794
        %v3939 = vpack.c.b16 %v3811, %v3795
        %v3940 = vpack.c.b16 %v3812, %v3796
        %v3941 = vpack.c.b16 %v3813, %v3797
        %v3942 = vpack.c.b16 %v3814, %v3798
        %v3943 = vpack.c.b16 %v3831, %v3815
        %v3944 = vpack.c.b16 %v3832, %v3816
        %v3945 = vpack.c.b16 %v3833, %v3817
        %v3946 = vpack.c.b16 %v3834, %v3818
        %v3947 = vpack.c.b16 %v3835, %v3819
        %v3948 = vpack.c.b16 %v3836, %v3820
        %v3949 = vpack.c.b16 %v3837, %v3821
        %v3950 = vpack.c.b16 %v3838, %v3822
        %v3951 = vpack.c.b16 %v3839, %v3823
        %v3952 = vpack.c.b16 %v3840, %v3824
        %v3953 = vpack.c.b16 %v3841, %v3825
        %v3954 = vpack.c.b16 %v3842, %v3826
        %v3955 = vpack.c.b16 %v3843, %v3827
        %v3956 = vpack.c.b16 %v3844, %v3828
        %v3957 = vpack.c.b16 %v3845, %v3829
        %v3958 = vpack.c.b16 %v3846, %v3830
        %v3959 = vpack.c.b16 %v3863, %v3847
        %v3960 = vpack.c.b16 %v3864, %v3848
        %v3961 = vpack.c.b16 %v3865, %v3849
        %v3962 = vpack.c.b16 %v3866, %v3850
        %v3963 = vpack.c.b16 %v3867, %v3851
        %v3964 = vpack.c.b16 %v3868, %v3852
        %v3965 = vpack.c.b16 %v3869, %v3853
        %v3966 = vpack.c.b16 %v3870, %v3854
        %v3967 = vpack.c.b16 %v3871, %v3855
        %v3968 = vpack.c.b16 %v3872, %v3856
        %v3969 = vpack.c.b16 %v3873, %v3857
        %v3970 = vpack.c.b16 %v3874, %v3858
        %v3971 = vpack.c.b16 %v3875, %v3859
        %v3972 = vpack.c.b16 %v3876, %v3860
        %v3973 = vpack.c.b16 %v3877, %v3861
        %v3974 = vpack.c.b16 %v3878, %v3862
        %v3975 = vpack.c.b16 %v3895, %v3879
        %v3976 = vpack.c.b16 %v3896, %v3880
        %v3977 = vpack.c.b16 %v3897, %v3881
        %v3978 = vpack.c.b16 %v3898, %v3882
        %v3979 = vpack.c.b16 %v3899, %v3883
        %v3980 = vpack.c.b16 %v3900, %v3884
        %v3981 = vpack.c.b16 %v3901, %v3885
        %v3982 = vpack.c.b16 %v3902, %v3886
        %v3983 = vpack.c.b16 %v3903, %v3887
        %v3984 = vpack.c.b16 %v3904, %v3888
        %v3985 = vpack.c.b16 %v3905, %v3889
        %v3986 = vpack.c.b16 %v3906, %v3890
        %v3987 = vpack.c.b16 %v3907, %v3891
        %v3988 = vpack.c.b16 %v3908, %v3892
        %v3989 = vpack.c.b16 %v3909, %v3893
        %v3990 = vpack.c.b16 %v3910, %v3894
        %v4056 = vand.u32 %v3975, %v1502
        %v4059 = vand.u32 %v3976, %v1502
        %v4062 = vand.u32 %v3977, %v1502
        %v4065 = vand.u32 %v3978, %v1502
        %v4068 = vand.u32 %v3979, %v1502
        %v4071 = vand.u32 %v3980, %v1502
        %v4074 = vand.u32 %v3981, %v1502
        %v4077 = vand.u32 %v3982, %v1502
        %v4080 = vand.u32 %v3983, %v1502
        %v4083 = vand.u32 %v3984, %v1502
        %v4086 = vand.u32 %v3985, %v1502
        %v4089 = vand.u32 %v3986, %v1502
        %v4092 = vand.u32 %v3987, %v1502
        %v4095 = vand.u32 %v3988, %v1502
        %v4098 = vand.u32 %v3989, %v1502
        %v4101 = vand.u32 %v3990, %v1502
        %4103 = vmatprep.subr.bf16.mxu0 0
        %4104 = vmatpush1.bf16.msra.mxu0 0
        %4105 = vmatprep.subr.bf16.mxu0 0
        %4106 = vmatpush1.bf16.msra.mxu0 0
        %4107 = vmatprep.subr.bf16.mxu0 0
        %4108 = vmatpush1.bf16.msra.mxu0 0
        %4109 = vmatprep.subr.bf16.mxu0 %v4059
        %4110 = vmatpush1.bf16.msra.mxu0 %v4056
        %4111 = vmatprep.subr.bf16.mxu0 %v3960
        %4112 = vmatpush1.bf16.msra.mxu0 %v3959
        %4113 = vmatprep.subr.bf16.mxu0 %v3944
        %4114 = vmatpush1.bf16.msra.mxu0 %v3943
        %4115 = vmatprep.subr.bf16.mxu0 %v3928
        %4116 = vmatpush1.bf16.msra.mxu0 %v3927
        %4117 = vmatprep.subr.bf16.mxu0 %v3912
        %4118 = vmatpush1.bf16.msra.mxu0 %v3911
        %4119 = vmatprep.subr.bf16.mxu0 0
        %4120 = vmatpush2.bf16.msra.mxu0 0
        %4121 = vmatprep.subr.bf16.mxu0 0
        %4122 = vmatpush2.bf16.msra.mxu0 0
        %4123 = vmatprep.subr.bf16.mxu0 0
        %4124 = vmatpush2.bf16.msra.mxu0 0
        %4125 = vmatprep.subr.bf16.mxu0 0
        %4126 = vmatpush2.bf16.msra.mxu0 0
        %4127 = vmatprep.subr.bf16.mxu0 0
        %4128 = vmatpush2.bf16.msra.mxu0 0
        %4129 = vmatprep.subr.bf16.mxu0 0
        %4130 = vmatpush2.bf16.msra.mxu0 0
        %4131 = vmatprep.subr.bf16.mxu0 0
        %4132 = vmatpush2.bf16.msra.mxu0 0
        %4133 = vmatprep.subr.bf16.mxu0 0
        %4134 = vmatpush2.bf16.msra.mxu0 0
        %4135 = vmatprep.mubr.bf16.mxu0 0
        %4136 = vmatmul.mubr.bf16.gmra.mxu0 %v1497
        %v4137 = vpop.f32.mrf.mxu0
        %v4138 = vadd.f32 0.0, %v4137
        %v4139 = vpop.f32.mrf.mxu0
        %v4140 = vadd.f32 0.0, %v4139
        %v4141 = vpop.f32.mrf.mxu0
        %v4142 = vpop.f32.mrf.mxu0
        %4143 = vdwg.mxu0
        %4144 = vmatprep.subr.bf16.mxu0 0
        %4145 = vmatpush1.bf16.msra.mxu0 0
        %4146 = vmatprep.subr.bf16.mxu0 0
        %4147 = vmatpush1.bf16.msra.mxu0 0
        %4148 = vmatprep.subr.bf16.mxu0 0
        %4149 = vmatpush1.bf16.msra.mxu0 0
        %4150 = vmatprep.subr.bf16.mxu0 %v4065
        %4151 = vmatpush1.bf16.msra.mxu0 %v4062
        %4152 = vmatprep.subr.bf16.mxu0 %v3962
        %4153 = vmatpush1.bf16.msra.mxu0 %v3961
        %4154 = vmatprep.subr.bf16.mxu0 %v3946
        %4155 = vmatpush1.bf16.msra.mxu0 %v3945
        %4156 = vmatprep.subr.bf16.mxu0 %v3930
        %4157 = vmatpush1.bf16.msra.mxu0 %v3929
        %4158 = vmatprep.subr.bf16.mxu0 %v3914
        %4159 = vmatpush1.bf16.msra.mxu0 %v3913
        %4160 = vmatprep.subr.bf16.mxu0 0
        %4161 = vmatpush2.bf16.msra.mxu0 0
        %4162 = vmatprep.subr.bf16.mxu0 0
        %4163 = vmatpush2.bf16.msra.mxu0 0
        %4164 = vmatprep.subr.bf16.mxu0 0
        %4165 = vmatpush2.bf16.msra.mxu0 0
        %4166 = vmatprep.subr.bf16.mxu0 0
        %4167 = vmatpush2.bf16.msra.mxu0 0
        %4168 = vmatprep.subr.bf16.mxu0 0
        %4169 = vmatpush2.bf16.msra.mxu0 0
        %4170 = vmatprep.subr.bf16.mxu0 0
        %4171 = vmatpush2.bf16.msra.mxu0 0
        %4172 = vmatprep.subr.bf16.mxu0 0
        %4173 = vmatpush2.bf16.msra.mxu0 0
        %4174 = vmatprep.subr.bf16.mxu0 0
        %4175 = vmatpush2.bf16.msra.mxu0 0
        %4176 = vmatprep.mubr.bf16.mxu0 0
        %4177 = vmatmul.mubr.bf16.gmra.mxu0 %v1497
        %v4178 = vpop.f32.mrf.mxu0
        %v4179 = vadd.f32 0.0, %v4178
        %v4180 = vpop.f32.mrf.mxu0
        %v4181 = vadd.f32 0.0, %v4180
        %v4182 = vpop.f32.mrf.mxu0
        %v4183 = vpop.f32.mrf.mxu0
        %4184 = vdwg.mxu0
        %4185 = vmatprep.subr.bf16.mxu0 0
        %4186 = vmatpush1.bf16.msra.mxu0 0
        %4187 = vmatprep.subr.bf16.mxu0 0
        %4188 = vmatpush1.bf16.msra.mxu0 0
        %4189 = vmatprep.subr.bf16.mxu0 0
        %4190 = vmatpush1.bf16.msra.mxu0 0
        %4191 = vmatprep.subr.bf16.mxu0 %v4071
        %4192 = vmatpush1.bf16.msra.mxu0 %v4068
        %4193 = vmatprep.subr.bf16.mxu0 %v3964
        %4194 = vmatpush1.bf16.msra.mxu0 %v3963
        %4195 = vmatprep.subr.bf16.mxu0 %v3948
        %4196 = vmatpush1.bf16.msra.mxu0 %v3947
        %4197 = vmatprep.subr.bf16.mxu0 %v3932
        %4198 = vmatpush1.bf16.msra.mxu0 %v3931
        %4199 = vmatprep.subr.bf16.mxu0 %v3916
        %4200 = vmatpush1.bf16.msra.mxu0 %v3915
        %4201 = vmatprep.subr.bf16.mxu0 0
        %4202 = vmatpush2.bf16.msra.mxu0 0
        %4203 = vmatprep.subr.bf16.mxu0 0
        %4204 = vmatpush2.bf16.msra.mxu0 0
        %4205 = vmatprep.subr.bf16.mxu0 0
        %4206 = vmatpush2.bf16.msra.mxu0 0
        %4207 = vmatprep.subr.bf16.mxu0 0
        %4208 = vmatpush2.bf16.msra.mxu0 0
        %4209 = vmatprep.subr.bf16.mxu0 0
        %4210 = vmatpush2.bf16.msra.mxu0 0
        %4211 = vmatprep.subr.bf16.mxu0 0
        %4212 = vmatpush2.bf16.msra.mxu0 0
        %4213 = vmatprep.subr.bf16.mxu0 0
        %4214 = vmatpush2.bf16.msra.mxu0 0
        %4215 = vmatprep.subr.bf16.mxu0 0
        %4216 = vmatpush2.bf16.msra.mxu0 0
        %4217 = vmatprep.mubr.bf16.mxu0 0
        %4218 = vmatmul.mubr.bf16.gmra.mxu0 %v1497
        %v4219 = vpop.f32.mrf.mxu0
        %v4220 = vadd.f32 0.0, %v4219
        %v4221 = vpop.f32.mrf.mxu0
        %v4222 = vadd.f32 0.0, %v4221
        %v4223 = vpop.f32.mrf.mxu0
        %v4224 = vpop.f32.mrf.mxu0
        %4225 = vdwg.mxu0
        %4226 = vmatprep.subr.bf16.mxu0 0
        %4227 = vmatpush1.bf16.msra.mxu0 0
        %4228 = vmatprep.subr.bf16.mxu0 0
        %4229 = vmatpush1.bf16.msra.mxu0 0
        %4230 = vmatprep.subr.bf16.mxu0 0
        %4231 = vmatpush1.bf16.msra.mxu0 0
        %4232 = vmatprep.subr.bf16.mxu0 %v4077
        %4233 = vmatpush1.bf16.msra.mxu0 %v4074
        %4234 = vmatprep.subr.bf16.mxu0 %v3966
        %4235 = vmatpush1.bf16.msra.mxu0 %v3965
        %4236 = vmatprep.subr.bf16.mxu0 %v3950
        %4237 = vmatpush1.bf16.msra.mxu0 %v3949
        %4238 = vmatprep.subr.bf16.mxu0 %v3934
        %4239 = vmatpush1.bf16.msra.mxu0 %v3933
        %4240 = vmatprep.subr.bf16.mxu0 %v3918
        %4241 = vmatpush1.bf16.msra.mxu0 %v3917
        %4242 = vmatprep.subr.bf16.mxu0 0
        %4243 = vmatpush2.bf16.msra.mxu0 0
        %4244 = vmatprep.subr.bf16.mxu0 0
        %4245 = vmatpush2.bf16.msra.mxu0 0
        %4246 = vmatprep.subr.bf16.mxu0 0
        %4247 = vmatpush2.bf16.msra.mxu0 0
        %4248 = vmatprep.subr.bf16.mxu0 0
        %4249 = vmatpush2.bf16.msra.mxu0 0
        %4250 = vmatprep.subr.bf16.mxu0 0
        %4251 = vmatpush2.bf16.msra.mxu0 0
        %4252 = vmatprep.subr.bf16.mxu0 0
        %4253 = vmatpush2.bf16.msra.mxu0 0
        %4254 = vmatprep.subr.bf16.mxu0 0
        %4255 = vmatpush2.bf16.msra.mxu0 0
        %4256 = vmatprep.subr.bf16.mxu0 0
        %4257 = vmatpush2.bf16.msra.mxu0 0
        %4258 = vmatprep.mubr.bf16.mxu0 0
        %4259 = vmatmul.mubr.bf16.gmra.mxu0 %v1497
        %v4260 = vpop.f32.mrf.mxu0
        %v4261 = vadd.f32 0.0, %v4260
        %v4262 = vpop.f32.mrf.mxu0
        %v4263 = vadd.f32 0.0, %v4262
        %v4264 = vpop.f32.mrf.mxu0
        %v4265 = vpop.f32.mrf.mxu0
        %4266 = vdwg.mxu0
        %4267 = vmatprep.subr.bf16.mxu0 0
        %4268 = vmatpush1.bf16.msra.mxu0 0
        %4269 = vmatprep.subr.bf16.mxu0 0
        %4270 = vmatpush1.bf16.msra.mxu0 0
        %4271 = vmatprep.subr.bf16.mxu0 0
        %4272 = vmatpush1.bf16.msra.mxu0 0
        %4273 = vmatprep.subr.bf16.mxu0 %v4083
        %4274 = vmatpush1.bf16.msra.mxu0 %v4080
        %4275 = vmatprep.subr.bf16.mxu0 %v3968
        %4276 = vmatpush1.bf16.msra.mxu0 %v3967
        %4277 = vmatprep.subr.bf16.mxu0 %v3952
        %4278 = vmatpush1.bf16.msra.mxu0 %v3951
        %4279 = vmatprep.subr.bf16.mxu0 %v3936
        %4280 = vmatpush1.bf16.msra.mxu0 %v3935
        %4281 = vmatprep.subr.bf16.mxu0 %v3920
        %4282 = vmatpush1.bf16.msra.mxu0 %v3919
        %4283 = vmatprep.subr.bf16.mxu0 0
        %4284 = vmatpush2.bf16.msra.mxu0 0
        %4285 = vmatprep.subr.bf16.mxu0 0
        %4286 = vmatpush2.bf16.msra.mxu0 0
        %4287 = vmatprep.subr.bf16.mxu0 0
        %4288 = vmatpush2.bf16.msra.mxu0 0
        %4289 = vmatprep.subr.bf16.mxu0 0
        %4290 = vmatpush2.bf16.msra.mxu0 0
        %4291 = vmatprep.subr.bf16.mxu0 0
        %4292 = vmatpush2.bf16.msra.mxu0 0
        %4293 = vmatprep.subr.bf16.mxu0 0
        %4294 = vmatpush2.bf16.msra.mxu0 0
        %4295 = vmatprep.subr.bf16.mxu0 0
        %4296 = vmatpush2.bf16.msra.mxu0 0
        %4297 = vmatprep.subr.bf16.mxu0 0
        %4298 = vmatpush2.bf16.msra.mxu0 0
        %4299 = vmatprep.mubr.bf16.mxu0 0
        %4300 = vmatmul.mubr.bf16.gmra.mxu0 %v1497
        %v4301 = vpop.f32.mrf.mxu0
        %v4302 = vadd.f32 0.0, %v4301
        %v4303 = vpop.f32.mrf.mxu0
        %v4304 = vadd.f32 0.0, %v4303
        %v4305 = vpop.f32.mrf.mxu0
        %v4306 = vpop.f32.mrf.mxu0
        %4307 = vdwg.mxu0
        %4308 = vmatprep.subr.bf16.mxu0 0
        %4309 = vmatpush1.bf16.msra.mxu0 0
        %4310 = vmatprep.subr.bf16.mxu0 0
        %4311 = vmatpush1.bf16.msra.mxu0 0
        %4312 = vmatprep.subr.bf16.mxu0 0
        %4313 = vmatpush1.bf16.msra.mxu0 0
        %4314 = vmatprep.subr.bf16.mxu0 %v4089
        %4315 = vmatpush1.bf16.msra.mxu0 %v4086
        %4316 = vmatprep.subr.bf16.mxu0 %v3970
        %4317 = vmatpush1.bf16.msra.mxu0 %v3969
        %4318 = vmatprep.subr.bf16.mxu0 %v3954
        %4319 = vmatpush1.bf16.msra.mxu0 %v3953
        %4320 = vmatprep.subr.bf16.mxu0 %v3938
        %4321 = vmatpush1.bf16.msra.mxu0 %v3937
        %4322 = vmatprep.subr.bf16.mxu0 %v3922
        %4323 = vmatpush1.bf16.msra.mxu0 %v3921
        %4324 = vmatprep.subr.bf16.mxu0 0
        %4325 = vmatpush2.bf16.msra.mxu0 0
        %4326 = vmatprep.subr.bf16.mxu0 0
        %4327 = vmatpush2.bf16.msra.mxu0 0
        %4328 = vmatprep.subr.bf16.mxu0 0
        %4329 = vmatpush2.bf16.msra.mxu0 0
        %4330 = vmatprep.subr.bf16.mxu0 0
        %4331 = vmatpush2.bf16.msra.mxu0 0
        %4332 = vmatprep.subr.bf16.mxu0 0
        %4333 = vmatpush2.bf16.msra.mxu0 0
        %4334 = vmatprep.subr.bf16.mxu0 0
        %4335 = vmatpush2.bf16.msra.mxu0 0
        %4336 = vmatprep.subr.bf16.mxu0 0
        %4337 = vmatpush2.bf16.msra.mxu0 0
        %4338 = vmatprep.subr.bf16.mxu0 0
        %4339 = vmatpush2.bf16.msra.mxu0 0
        %4340 = vmatprep.mubr.bf16.mxu0 0
        %4341 = vmatmul.mubr.bf16.gmra.mxu0 %v1497
        %v4342 = vpop.f32.mrf.mxu0
        %v4343 = vadd.f32 0.0, %v4342
        %v4344 = vpop.f32.mrf.mxu0
        %v4345 = vadd.f32 0.0, %v4344
        %v4346 = vpop.f32.mrf.mxu0
        %v4347 = vpop.f32.mrf.mxu0
        %4348 = vdwg.mxu0
        %4349 = vmatprep.subr.bf16.mxu0 0
        %4350 = vmatpush1.bf16.msra.mxu0 0
        %4351 = vmatprep.subr.bf16.mxu0 0
        %4352 = vmatpush1.bf16.msra.mxu0 0
        %4353 = vmatprep.subr.bf16.mxu0 0
        %4354 = vmatpush1.bf16.msra.mxu0 0
        %4355 = vmatprep.subr.bf16.mxu0 %v4095
        %4356 = vmatpush1.bf16.msra.mxu0 %v4092
        %4357 = vmatprep.subr.bf16.mxu0 %v3972
        %4358 = vmatpush1.bf16.msra.mxu0 %v3971
        %4359 = vmatprep.subr.bf16.mxu0 %v3956
        %4360 = vmatpush1.bf16.msra.mxu0 %v3955
        %4361 = vmatprep.subr.bf16.mxu0 %v3940
        %4362 = vmatpush1.bf16.msra.mxu0 %v3939
        %4363 = vmatprep.subr.bf16.mxu0 %v3924
        %4364 = vmatpush1.bf16.msra.mxu0 %v3923
        %4365 = vmatprep.subr.bf16.mxu0 0
        %4366 = vmatpush2.bf16.msra.mxu0 0
        %4367 = vmatprep.subr.bf16.mxu0 0
        %4368 = vmatpush2.bf16.msra.mxu0 0
        %4369 = vmatprep.subr.bf16.mxu0 0
        %4370 = vmatpush2.bf16.msra.mxu0 0
        %4371 = vmatprep.subr.bf16.mxu0 0
        %4372 = vmatpush2.bf16.msra.mxu0 0
        %4373 = vmatprep.subr.bf16.mxu0 0
        %4374 = vmatpush2.bf16.msra.mxu0 0
        %4375 = vmatprep.subr.bf16.mxu0 0
        %4376 = vmatpush2.bf16.msra.mxu0 0
        %4377 = vmatprep.subr.bf16.mxu0 0
        %4378 = vmatpush2.bf16.msra.mxu0 0
        %4379 = vmatprep.subr.bf16.mxu0 0
        %4380 = vmatpush2.bf16.msra.mxu0 0
        %4381 = vmatprep.mubr.bf16.mxu0 0
        %4382 = vmatmul.mubr.bf16.gmra.mxu0 %v1497
        %v4383 = vpop.f32.mrf.mxu0
        %v4384 = vadd.f32 0.0, %v4383
        %v4385 = vpop.f32.mrf.mxu0
        %v4386 = vadd.f32 0.0, %v4385
        %v4387 = vpop.f32.mrf.mxu0
        %v4388 = vpop.f32.mrf.mxu0
        %4389 = vdwg.mxu0
        %4390 = vmatprep.subr.bf16.mxu0 0
        %4391 = vmatpush1.bf16.msra.mxu0 0
        %4392 = vmatprep.subr.bf16.mxu0 0
        %4393 = vmatpush1.bf16.msra.mxu0 0
        %4394 = vmatprep.subr.bf16.mxu0 0
        %4395 = vmatpush1.bf16.msra.mxu0 0
        %4396 = vmatprep.subr.bf16.mxu0 %v4101
        %4397 = vmatpush1.bf16.msra.mxu0 %v4098
        %4398 = vmatprep.subr.bf16.mxu0 %v3974
        %4399 = vmatpush1.bf16.msra.mxu0 %v3973
        %4400 = vmatprep.subr.bf16.mxu0 %v3958
        %4401 = vmatpush1.bf16.msra.mxu0 %v3957
        %4402 = vmatprep.subr.bf16.mxu0 %v3942
        %4403 = vmatpush1.bf16.msra.mxu0 %v3941
        %4404 = vmatprep.subr.bf16.mxu0 %v3926
        %4405 = vmatpush1.bf16.msra.mxu0 %v3925
        %4406 = vmatprep.subr.bf16.mxu0 0
        %4407 = vmatpush2.bf16.msra.mxu0 0
        %4408 = vmatprep.subr.bf16.mxu0 0
        %4409 = vmatpush2.bf16.msra.mxu0 0
        %4410 = vmatprep.subr.bf16.mxu0 0
        %4411 = vmatpush2.bf16.msra.mxu0 0
        %4412 = vmatprep.subr.bf16.mxu0 0
        %4413 = vmatpush2.bf16.msra.mxu0 0
        %4414 = vmatprep.subr.bf16.mxu0 0
        %4415 = vmatpush2.bf16.msra.mxu0 0
        %4416 = vmatprep.subr.bf16.mxu0 0
        %4417 = vmatpush2.bf16.msra.mxu0 0
        %4418 = vmatprep.subr.bf16.mxu0 0
        %4419 = vmatpush2.bf16.msra.mxu0 0
        %4420 = vmatprep.subr.bf16.mxu0 0
        %4421 = vmatpush2.bf16.msra.mxu0 0
        %4422 = vmatprep.mubr.bf16.mxu0 0
        %4423 = vmatmul.mubr.bf16.gmra.mxu0 %v1497
        %v4424 = vpop.f32.mrf.mxu0
        %v4425 = vadd.f32 0.0, %v4424
        %v4426 = vpop.f32.mrf.mxu0
        %v4427 = vadd.f32 0.0, %v4426
        %v4428 = vpop.f32.mrf.mxu0
        %v4429 = vpop.f32.mrf.mxu0
        %4430 = vdwg.mxu0
        %v4431 = vmax.f32 %v3575, %v4138
        %v4432 = vmax.f32 %v3576, %v4140
        %v4433 = vmax.f32 %v3577, %v4179
        %v4434 = vmax.f32 %v3578, %v4181
        %v4435 = vmax.f32 %v3579, %v4220
        %v4436 = vmax.f32 %v3580, %v4222
        %v4437 = vmax.f32 %v3581, %v4261
        %v4438 = vmax.f32 %v3582, %v4263
        %v4439 = vmax.f32 %v3583, %v4302
        %v4440 = vmax.f32 %v3584, %v4304
        %v4441 = vmax.f32 %v3585, %v4343
        %v4442 = vmax.f32 %v3586, %v4345
        %v4443 = vmax.f32 %v3587, %v4384
        %v4444 = vmax.f32 %v3588, %v4386
        %v4445 = vmax.f32 %v3589, %v4425
        %v4446 = vmax.f32 %v3590, %v4427
        %v4447 = vld [vmem:[%s5] sm:$0xf]
        %4449 = vset.pattern.permute.xlu0 0
        %4450 = vperm.xlu0 %4449, %v4447
        %v4451 = vpop.permute.xlu0 %4450
        %v4453 = vadd.f32 %v4431, %v4451
        %v4454 = vadd.f32 %v4432, %v4451
        %v4455 = vadd.f32 %v4433, %v4451
        %v4456 = vadd.f32 %v4434, %v4451
        %v4457 = vadd.f32 %v4435, %v4451
        %v4458 = vadd.f32 %v4436, %v4451
        %v4459 = vadd.f32 %v4437, %v4451
        %v4460 = vadd.f32 %v4438, %v4451
        %v4461 = vadd.f32 %v4439, %v4451
        %v4462 = vadd.f32 %v4440, %v4451
        %v4463 = vadd.f32 %v4441, %v4451
        %v4464 = vadd.f32 %v4442, %v4451
        %v4465 = vadd.f32 %v4443, %v4451
        %v4466 = vadd.f32 %v4444, %v4451
        %v4467 = vadd.f32 %v4445, %v4451
        %v4468 = vadd.f32 %v4446, %v4451
        %vm4469 = vcmp.ge.f32.partialorder %v4453, 0.0
        %vm4470 = vcmp.ge.f32.partialorder %v4454, 0.0
        %vm4471 = vcmp.ge.f32.partialorder %v4455, 0.0
        %vm4472 = vcmp.ge.f32.partialorder %v4456, 0.0
        %vm4473 = vcmp.ge.f32.partialorder %v4457, 0.0
        %vm4474 = vcmp.ge.f32.partialorder %v4458, 0.0
        %vm4475 = vcmp.ge.f32.partialorder %v4459, 0.0
        %vm4476 = vcmp.ge.f32.partialorder %v4460, 0.0
        %vm4477 = vcmp.ge.f32.partialorder %v4461, 0.0
        %vm4478 = vcmp.ge.f32.partialorder %v4462, 0.0
        %vm4479 = vcmp.ge.f32.partialorder %v4463, 0.0
        %vm4480 = vcmp.ge.f32.partialorder %v4464, 0.0
        %vm4481 = vcmp.ge.f32.partialorder %v4465, 0.0
        %vm4482 = vcmp.ge.f32.partialorder %v4466, 0.0
        %vm4483 = vcmp.ge.f32.partialorder %v4467, 0.0
        %vm4484 = vcmp.ge.f32.partialorder %v4468, 0.0
        %v4485 = vmul.f32 %v4453, 0.01
        %v4486 = vmul.f32 %v4454, 0.01
        %v4487 = vmul.f32 %v4455, 0.01
        %v4488 = vmul.f32 %v4456, 0.01
        %v4489 = vmul.f32 %v4457, 0.01
        %v4490 = vmul.f32 %v4458, 0.01
        %v4491 = vmul.f32 %v4459, 0.01
        %v4492 = vmul.f32 %v4460, 0.01
        %v4493 = vmul.f32 %v4461, 0.01
        %v4494 = vmul.f32 %v4462, 0.01
        %v4495 = vmul.f32 %v4463, 0.01
        %v4496 = vmul.f32 %v4464, 0.01
        %v4497 = vmul.f32 %v4465, 0.01
        %v4498 = vmul.f32 %v4466, 0.01
        %v4499 = vmul.f32 %v4467, 0.01
        %v4500 = vmul.f32 %v4468, 0.01
        %v4501 = vsel %vm4469, %v4453, %v4485
        %v4502 = vsel %vm4470, %v4454, %v4486
        %v4503 = vsel %vm4471, %v4455, %v4487
        %v4504 = vsel %vm4472, %v4456, %v4488
        %v4505 = vsel %vm4473, %v4457, %v4489
        %v4506 = vsel %vm4474, %v4458, %v4490
        %v4507 = vsel %vm4475, %v4459, %v4491
        %v4508 = vsel %vm4476, %v4460, %v4492
        %v4509 = vsel %vm4477, %v4461, %v4493
        %v4510 = vsel %vm4478, %v4462, %v4494
        %v4511 = vsel %vm4479, %v4463, %v4495
        %v4512 = vsel %vm4480, %v4464, %v4496
        %v4513 = vsel %vm4481, %v4465, %v4497
        %v4514 = vsel %vm4482, %v4466, %v4498
        %v4515 = vsel %vm4483, %v4467, %v4499
        %v4516 = vsel %vm4484, %v4468, %v4500
        %v4517 = vpack.c.bf16 %v4501, %v4501
        %v4518 = vpack.c.bf16 %v4502, %v4502
        %v4519 = vpack.c.bf16 %v4503, %v4503
        %v4520 = vpack.c.bf16 %v4504, %v4504
        %v4521 = vpack.c.bf16 %v4505, %v4505
        %v4522 = vpack.c.bf16 %v4506, %v4506
        %v4523 = vpack.c.bf16 %v4507, %v4507
        %v4524 = vpack.c.bf16 %v4508, %v4508
        %v4525 = vpack.c.bf16 %v4509, %v4509
        %v4526 = vpack.c.bf16 %v4510, %v4510
        %v4527 = vpack.c.bf16 %v4511, %v4511
        %v4528 = vpack.c.bf16 %v4512, %v4512
        %v4529 = vpack.c.bf16 %v4513, %v4513
        %v4530 = vpack.c.bf16 %v4514, %v4514
        %v4531 = vpack.c.bf16 %v4515, %v4515
        %v4532 = vpack.c.bf16 %v4516, %v4516
        %v4549 = vcombine.low %v4517, %v4518
        %v4550 = vcombine.low %v4519, %v4520
        %v4552 = vunpack.c.l.s4 1983009808
        %v4553 = vunpack.c.0.s8 %v4552
        %v4554 = vlaneseq
        %v4555 = vshrl.u32 %v4554, 7
        %v4556 = vsub.s32 %v4553, %v4555
        %v4557 = vrot.slane %v4549, %v4556
        %v4559 = vunpack.c.l.s4 1983009808
        %v4560 = vunpack.c.0.s8 %v4559
        %v4561 = vlaneseq
        %v4562 = vshrl.u32 %v4561, 7
        %v4563 = vsub.s32 %v4560, %v4562
        %v4564 = vrot.slane %v4550, %v4563
        %v4565 = vcombine.low %v4557, %v4564
        %v4566 = vcombine.low %v4521, %v4522
        %v4567 = vcombine.low %v4523, %v4524
        %v4569 = vunpack.c.l.s4 1983009808
        %v4570 = vunpack.c.0.s8 %v4569
        %v4571 = vlaneseq
        %v4572 = vshrl.u32 %v4571, 7
        %v4573 = vsub.s32 %v4570, %v4572
        %v4574 = vrot.slane %v4566, %v4573
        %v4576 = vunpack.c.l.s4 1983009808
        %v4577 = vunpack.c.0.s8 %v4576
        %v4578 = vlaneseq
        %v4579 = vshrl.u32 %v4578, 7
        %v4580 = vsub.s32 %v4577, %v4579
        %v4581 = vrot.slane %v4567, %v4580
        %v4582 = vcombine.low %v4574, %v4581
        %v4583 = vcombine.low %v4525, %v4526
        %v4584 = vcombine.low %v4527, %v4528
        %v4586 = vunpack.c.l.s4 1983009808
        %v4587 = vunpack.c.0.s8 %v4586
        %v4588 = vlaneseq
        %v4589 = vshrl.u32 %v4588, 7
        %v4590 = vsub.s32 %v4587, %v4589
        %v4591 = vrot.slane %v4583, %v4590
        %v4593 = vunpack.c.l.s4 1983009808
        %v4594 = vunpack.c.0.s8 %v4593
        %v4595 = vlaneseq
        %v4596 = vshrl.u32 %v4595, 7
        %v4597 = vsub.s32 %v4594, %v4596
        %v4598 = vrot.slane %v4584, %v4597
        %v4599 = vcombine.low %v4591, %v4598
        %v4600 = vcombine.low %v4529, %v4530
        %v4601 = vcombine.low %v4531, %v4532
        %v4603 = vunpack.c.l.s4 1983009808
        %v4604 = vunpack.c.0.s8 %v4603
        %v4605 = vlaneseq
        %v4606 = vshrl.u32 %v4605, 7
        %v4607 = vsub.s32 %v4604, %v4606
        %v4608 = vrot.slane %v4600, %v4607
        %v4610 = vunpack.c.l.s4 1983009808
        %v4611 = vunpack.c.0.s8 %v4610
        %v4612 = vlaneseq
        %v4613 = vshrl.u32 %v4612, 7
        %v4614 = vsub.s32 %v4611, %v4613
        %v4615 = vrot.slane %v4601, %v4614
        %v4616 = vcombine.low %v4608, %v4615
        %4621 = vst [vmem:[%s1027] sm:$0xff] %v4565
        %4622 = vst [vmem:[%s1027 + $0x8] sm:$0xff] %v4582
        %4623 = vst [vmem:[%s1027 + $0x10] sm:$0xff] %v4599
        %4624 = vst [vmem:[%s1027 + $0x18] sm:$0xff] %v4616
        %s4625 = smul.u32 16, %s17
        %p4626 = scmp.lt.s32.totalorder %s4625, 63
        %s4627 = scalar_select %p4626, %s4625, 63
        %s4628 = smul.addr %s4627, 2
        %s4629 = scalar_lea.vmem %s6, %s4628
        // Predicated region
        $region137: #{classifier_forward.6} parent=119 // pred_check
          %p4630 = pneg %p181
        $region138: #{classifier_forward.6} parent=119 // pred_check_branch
          %4632 = sbr.rel (%p4630) target = $region140
        $region139: #{classifier_forward.6} parent=119 // pred_region
          %s4633 = smul.u32 16, %s17
        $region140: #{classifier_forward.6} parent=119 // pred_fallthru
          _
      $region120: #{classifier_forward.6} parent=5 // pred_fallthru
        _
      %p4634 = scmp.le.s32.totalorder 2, %s12
      // Predicated region
      $region141: #{classifier_forward.6} parent=5 // pred_check
        %p4635 = pneg %p4634
      $region142: #{classifier_forward.6} parent=5 // pred_check_branch
        %4637 = sbr.rel (%p4635) target = $region144
      $region143: #{classifier_forward.6} parent=5 // pred_region
        %s4638 = ssub.s32 %s12, 2
        // Predicated region
        $region145: #{classifier_forward.6} parent=143 // pred_check
          %p4639 = pneg %p187
        $region146: #{classifier_forward.6} parent=143 // pred_check_branch
          %4641 = sbr.rel (%p4639) target = $region148
        $region147: #{classifier_forward.6} parent=143 // pred_region
          %s4642 = smul.u32 16, %s18
          %p4643 = scmp.lt.s32.totalorder %s4642, 63
          %s4644 = scalar_select %p4643, %s4642, 63
          %s4645 = smul.addr %s4644, 2
          %s4646 = scalar_lea.vmem %s6, %s4645
        $region148: #{classifier_forward.6} parent=143 // pred_fallthru
          _
      $region144: #{classifier_forward.6} parent=5 // pred_fallthru
        _
    $region6: #{classifier_forward.6} parent=1 // loop_footer
      %s16 = sadd.s32 1, %s12
    $region7: #{classifier_forward.6} parent=1 // loop_footer_branch
      %11 = sbr.rel target = $region3
    $region8: #{classifier_forward.6} parent=1 // loop_exit
      _

// kernel: classifier_forward.7
$region0: #{classifier_forward.7}
  #allocation0 [shape = 'u32[]', space=smem, size = 0x4, offset = 0x4, fixed_abs, tag = 'smem constant byte address 0x4 - core index']
  #allocation1 [shape = 'u32[144,128]{1,0:T(1,128)}', space=vmem, size = 0x12000, scoped, tag = 'internal scratch']
  %s0 = inlined_call_operand.vmem [shape: bf16[36,2048], index: 0, kind: input, shape index: {}]
  %s1 = inlined_call_operand.vmem [shape: bf16[36,2048], index: 1, kind: input, shape index: {}]
  %s2 = inlined_call_operand.vmem [shape: bf16[36,2048], index: 2, kind: input, shape index: {}]
  %s3 = inlined_call_operand.vmem [shape: bf16[36,2048], index: 3, kind: input, shape index: {}]
  %s4 = inlined_call_operand.vmem [shape: bf16[8,36], index: 4, kind: input, shape index: {}]
  %s5 = inlined_call_operand.vmem [shape: f32[8,1], index: 5, kind: input, shape index: {}]
  %s6 = inlined_call_operand.vmem [shape: bf16[8,2048], index: 6, kind: output, shape index: {}]
  %s7 = sld [smem:[#allocation0]]
  $region149: #{classifier_forward.7} parent=0
    _
  %s9 = ssub.s32 1, %s7
  %s10 = scalar_select 0, %s9, %s7
  $region1: #{classifier_forward.7} parent=0
    #allocation2 [shape = 'u8[163840]{0}', space=vmem, size = 0x28000, scoped, tag = 'input window, operand 0']
    #allocation3 [shape = 'u8[163840]{0}', space=vmem, size = 0x28000, scoped, tag = 'input window, operand 1']
    #allocation4 [shape = 'u8[163840]{0}', space=vmem, size = 0x28000, scoped, tag = 'input window, operand 2']
    #allocation5 [shape = 'u8[163840]{0}', space=vmem, size = 0x28000, scoped, tag = 'input window, operand 3']
    loop: start=0, step=1, limit=4
    $region2: #{classifier_forward.7} parent=1 // loop_pre_header
      _
    $region3: #{classifier_forward.7} parent=1 // loop_header
      %s12 = sphi 0, %s16
      %p13 = scmp.ge.s32.totalorder %s12, 4
      %s22 = sphi 0, %s24
      %s25 = sphi 0, %s22
      %s26 = sphi 0, %s25
      %s42 = sphi 0, %s26
      %s48 = sphi 0, %s50
      %s51 = sphi 0, %s48
      %s52 = sphi 0, %s51
      %s68 = sphi 0, %s52
      %s74 = sphi 0, %s76
      %s77 = sphi 0, %s74
      %s78 = sphi 0, %s77
      %s94 = sphi 0, %s78
      %s100 = sphi 0, %s102
      %s103 = sphi 0, %s100
      %s104 = sphi 0, %s103
      %s120 = sphi 0, %s104
      %s124 = sphi 0, %s124
      %s126 = sphi 0, %s124
      %s127 = sphi 0, %s126
      %s141 = sphi 0, %s127
      %s145 = sphi 0, %s145
      %s147 = sphi 0, %s145
      %s148 = sphi 0, %s147
      %s162 = sphi 0, %s148
      %s168 = sphi 0, %s170
      %s171 = sphi 0, %s168
      %s172 = sphi 0, %s171
      %s188 = sphi 0, %s172
    $region4: #{classifier_forward.7} parent=1 // loop_header_branch
      %15 = sbr.rel (%p13) target = $region8
    $region5: #{classifier_forward.7} parent=1 // loop_body
      %s17 = ssub.s32 %s12, 1
      %s18 = ssub.s32 %s12, 2
      %s19 = sadd.s32 %s12, 1
      %s20 = ssub.s32 %s12, %s19
      %p21 = scmp.eq.s32.totalorder %s20, 0
      %s23 = sadd.s32 %s22, 1
      %s24 = scalar_select %p21, %s22, %s23
      %p27 = pneg %p21
      %p28 = scmp.eq.s32.totalorder %s12, 1
      %p29 = por %p27, %p28
      %p30 = scmp.ne.s32.totalorder %s22, %s25
      %p31 = scmp.eq.s32.totalorder %s12, 0
      %p32 = por %p30, %p31
      %p33 = scmp.ne.s32.totalorder %s22, %s25
      %p34 = scmp.eq.s32.totalorder %s17, 1
      %p35 = por %p33, %p34
      %p36 = scmp.ne.s32.totalorder %s25, %s26
      %p37 = scmp.eq.s32.totalorder %s17, 0
      %p38 = por %p36, %p37
      %p39 = scmp.ne.s32.totalorder %s25, %s26
      %p40 = scmp.eq.s32.totalorder %s18, 1
      %p41 = por %p39, %p40
      %p43 = scmp.ne.s32.totalorder %s26, %s42
      %p44 = scmp.eq.s32.totalorder %s18, 0
      %p45 = por %p43, %p44
      %s46 = ssub.s32 %s12, %s19
      %p47 = scmp.eq.s32.totalorder %s46, 0
      %s49 = sadd.s32 %s48, 1
      %s50 = scalar_select %p47, %s48, %s49
      %p53 = pneg %p47
      %p54 = scmp.eq.s32.totalorder %s12, 1
      %p55 = por %p53, %p54
      %p56 = scmp.ne.s32.totalorder %s48, %s51
      %p57 = scmp.eq.s32.totalorder %s12, 0
      %p58 = por %p56, %p57
      %p59 = scmp.ne.s32.totalorder %s48, %s51
      %p60 = scmp.eq.s32.totalorder %s17, 1
      %p61 = por %p59, %p60
      %p62 = scmp.ne.s32.totalorder %s51, %s52
      %p63 = scmp.eq.s32.totalorder %s17, 0
      %p64 = por %p62, %p63
      %p65 = scmp.ne.s32.totalorder %s51, %s52
      %p66 = scmp.eq.s32.totalorder %s18, 1
      %p67 = por %p65, %p66
      %p69 = scmp.ne.s32.totalorder %s52, %s68
      %p70 = scmp.eq.s32.totalorder %s18, 0
      %p71 = por %p69, %p70
      %s72 = ssub.s32 %s12, %s19
      %p73 = scmp.eq.s32.totalorder %s72, 0
      %s75 = sadd.s32 %s74, 1
      %s76 = scalar_select %p73, %s74, %s75
      %p79 = pneg %p73
      %p80 = scmp.eq.s32.totalorder %s12, 1
      %p81 = por %p79, %p80
      %p82 = scmp.ne.s32.totalorder %s74, %s77
      %p83 = scmp.eq.s32.totalorder %s12, 0
      %p84 = por %p82, %p83
      %p85 = scmp.ne.s32.totalorder %s74, %s77
      %p86 = scmp.eq.s32.totalorder %s17, 1
      %p87 = por %p85, %p86
      %p88 = scmp.ne.s32.totalorder %s77, %s78
      %p89 = scmp.eq.s32.totalorder %s17, 0
      %p90 = por %p88, %p89
      %p91 = scmp.ne.s32.totalorder %s77, %s78
      %p92 = scmp.eq.s32.totalorder %s18, 1
      %p93 = por %p91, %p92
      %p95 = scmp.ne.s32.totalorder %s78, %s94
      %p96 = scmp.eq.s32.totalorder %s18, 0
      %p97 = por %p95, %p96
      %s98 = ssub.s32 %s12, %s19
      %p99 = scmp.eq.s32.totalorder %s98, 0
      %s101 = sadd.s32 %s100, 1
      %s102 = scalar_select %p99, %s100, %s101
      %p105 = pneg %p99
      %p106 = scmp.eq.s32.totalorder %s12, 1
      %p107 = por %p105, %p106
      %p108 = scmp.ne.s32.totalorder %s100, %s103
      %p109 = scmp.eq.s32.totalorder %s12, 0
      %p110 = por %p108, %p109
      %p111 = scmp.ne.s32.totalorder %s100, %s103
      %p112 = scmp.eq.s32.totalorder %s17, 1
      %p113 = por %p111, %p112
      %p114 = scmp.ne.s32.totalorder %s103, %s104
      %p115 = scmp.eq.s32.totalorder %s17, 0
      %p116 = por %p114, %p115
      %p117 = scmp.ne.s32.totalorder %s103, %s104
      %p118 = scmp.eq.s32.totalorder %s18, 1
      %p119 = por %p117, %p118
      %p121 = scmp.ne.s32.totalorder %s104, %s120
      %p122 = scmp.eq.s32.totalorder %s18, 0
      %p123 = por %p121, %p122
      %s125 = sadd.s32 %s124, 1
      %p128 = scmp.eq.s32.totalorder %s12, 1
      %p129 = scmp.ne.s32.totalorder %s124, %s126
      %p130 = scmp.eq.s32.totalorder %s12, 0
      %p131 = por %p129, %p130
      %p132 = scmp.ne.s32.totalorder %s124, %s126
      %p133 = scmp.eq.s32.totalorder %s17, 1
      %p134 = por %p132, %p133
      %p135 = scmp.ne.s32.totalorder %s126, %s127
      %p136 = scmp.eq.s32.totalorder %s17, 0
      %p137 = por %p135, %p136
      %p138 = scmp.ne.s32.totalorder %s126, %s127
      %p139 = scmp.eq.s32.totalorder %s18, 1
      %p140 = por %p138, %p139
      %p142 = scmp.ne.s32.totalorder %s127, %s141
      %p143 = scmp.eq.s32.totalorder %s18, 0
      %p144 = por %p142, %p143
      %s146 = sadd.s32 %s145, 1
      %p149 = scmp.eq.s32.totalorder %s12, 1
      %p150 = scmp.ne.s32.totalorder %s145, %s147
      %p151 = scmp.eq.s32.totalorder %s12, 0
      %p152 = por %p150, %p151
      %p153 = scmp.ne.s32.totalorder %s145, %s147
      %p154 = scmp.eq.s32.totalorder %s17, 1
      %p155 = por %p153, %p154
      %p156 = scmp.ne.s32.totalorder %s147, %s148
      %p157 = scmp.eq.s32.totalorder %s17, 0
      %p158 = por %p156, %p157
      %p159 = scmp.ne.s32.totalorder %s147, %s148
      %p160 = scmp.eq.s32.totalorder %s18, 1
      %p161 = por %p159, %p160
      %p163 = scmp.ne.s32.totalorder %s148, %s162
      %p164 = scmp.eq.s32.totalorder %s18, 0
      %p165 = por %p163, %p164
      %s166 = ssub.s32 %s12, %s19
      %p167 = scmp.eq.s32.totalorder %s166, 0
      %s169 = sadd.s32 %s168, 1
      %s170 = scalar_select %p167, %s168, %s169
      %p173 = pneg %p167
      %p174 = scmp.eq.s32.totalorder %s12, 1
      %p175 = por %p173, %p174
      %p176 = scmp.ne.s32.totalorder %s168, %s171
      %p177 = scmp.eq.s32.totalorder %s12, 0
      %p178 = por %p176, %p177
      %p179 = scmp.ne.s32.totalorder %s168, %s171
      %p180 = scmp.eq.s32.totalorder %s17, 1
      %p181 = por %p179, %p180
      %p182 = scmp.ne.s32.totalorder %s171, %s172
      %p183 = scmp.eq.s32.totalorder %s17, 0
      %p184 = por %p182, %p183
      %p185 = scmp.ne.s32.totalorder %s171, %s172
      %p186 = scmp.eq.s32.totalorder %s18, 1
      %p187 = por %p185, %p186
      %p189 = scmp.ne.s32.totalorder %s172, %s188
      %p190 = scmp.eq.s32.totalorder %s18, 0
      %p191 = por %p189, %p190
      %p192 = scmp.le.s32.totalorder 1, %s12
      %p193 = scmp.lt.s32.totalorder %s12, 3
      %p194 = pnand %p192, %p193
      %p195 = pneg %p194
      // Predicated region
      $region9: #{classifier_forward.7} parent=5 // pred_check
        _
      $region10: #{classifier_forward.7} parent=5 // pred_check_branch
        %197 = sbr.rel (%p194) target = $region12
      $region11: #{classifier_forward.7} parent=5 // pred_region
        %s198 = ssub.s32 %s12, 1
        // Predicated region
        $region13: #{classifier_forward.7} parent=11 // pred_check
          %p199 = pneg %p137
        $region14: #{classifier_forward.7} parent=11 // pred_check_branch
          %201 = sbr.rel (%p199) target = $region16
        $region15: #{classifier_forward.7} parent=11 // pred_region
          _
        $region16: #{classifier_forward.7} parent=11 // pred_fallthru
          _
        // Predicated region
        $region17: #{classifier_forward.7} parent=11 // pred_check
          %p202 = pneg %p158
        $region18: #{classifier_forward.7} parent=11 // pred_check_branch
          %204 = sbr.rel (%p202) target = $region20
        $region19: #{classifier_forward.7} parent=11 // pred_region
          _
        $region20: #{classifier_forward.7} parent=11 // pred_fallthru
          _
      $region12: #{classifier_forward.7} parent=5 // pred_fallthru
        _
      %p205 = scmp.lt.s32.totalorder %s12, 2
      // Predicated region
      $region21: #{classifier_forward.7} parent=5 // pred_check
        %p206 = pneg %p205
      $region22: #{classifier_forward.7} parent=5 // pred_check_branch
        %208 = sbr.rel (%p206) target = $region24
      $region23: #{classifier_forward.7} parent=5 // pred_region
        // Predicated region
        $region25: #{classifier_forward.7} parent=23 // pred_check
          %p209 = pneg %p32
        $region26: #{classifier_forward.7} parent=23 // pred_check_branch
          %211 = sbr.rel (%p209) target = $region28
        $region27: #{classifier_forward.7} parent=23 // pred_region
          %s212 = sand.u32 %s22, 1
          %s213 = sand.u32 %s22, 1
          %s214 = smul.addr %s213, 160
          %s215 = scalar_lea.vmem [#allocation2], %s214
          %s216 = smul.u32 8, %s12
          %s217 = smul.addr %s216, 4
          %s218 = scalar_lea.vmem %s0, %s217
          // Predicated region
          $region29: #{classifier_forward.7} parent=27 // pred_check
            _
          $region30: #{classifier_forward.7} parent=27 // pred_check_branch
            %220 = sbr.rel (0) target = $region32
          $region31: #{classifier_forward.7} parent=27 // pred_region
            // Predicated region
            $region33: #{classifier_forward.7} parent=31 // pred_check
              _
            $region34: #{classifier_forward.7} parent=31 // pred_check_branch
              %222 = sbr.rel (0) target = $region36
            $region35: #{classifier_forward.7} parent=31 // pred_region
              loop: start=0, step=1, limit=1
              $region37: #{classifier_forward.7} parent=35 // loop_pre_header
                _
              $region38: #{classifier_forward.7} parent=35 // loop_header
                %s224 = sphi 0, %s228
                %p225 = scmp.ge.s32.totalorder %s224, 1
                %s229 = sphi %s218, %s218
                %s230 = sphi %s215, %s215
              $region39: #{classifier_forward.7} parent=35 // loop_header_branch
                %227 = sbr.rel (%p225) target = $region43
              $region40: #{classifier_forward.7} parent=35 // loop_body
                %v231 = vld [vmem:[%s229] sm:$0xff]
                %232 = vst [vmem:[%s230] sm:$0xff] %v231
                %v233 = vld [vmem:[%s229 + $0x8] sm:$0xff]
                %234 = vst [vmem:[%s230 + $0x8] sm:$0xff] %v233
                %v235 = vld [vmem:[%s229 + $0x10] sm:$0xff]
                %236 = vst [vmem:[%s230 + $0x10] sm:$0xff] %v235
                %v237 = vld [vmem:[%s229 + $0x18] sm:$0xff]
                %238 = vst [vmem:[%s230 + $0x18] sm:$0xff] %v237
                %v239 = vld [vmem:[%s229 + $0x40] sm:$0xff]
                %240 = vst [vmem:[%s230 + $0x20] sm:$0xff] %v239
                %v241 = vld [vmem:[%s229 + $0x48] sm:$0xff]
                %242 = vst [vmem:[%s230 + $0x28] sm:$0xff] %v241
                %v243 = vld [vmem:[%s229 + $0x50] sm:$0xff]
                %244 = vst [vmem:[%s230 + $0x30] sm:$0xff] %v243
                %v245 = vld [vmem:[%s229 + $0x58] sm:$0xff]
                %246 = vst [vmem:[%s230 + $0x38] sm:$0xff] %v245
                %v247 = vld [vmem:[%s229 + $0x80] sm:$0xff]
                %248 = vst [vmem:[%s230 + $0x40] sm:$0xff] %v247
                %v249 = vld [vmem:[%s229 + $0x88] sm:$0xff]
                %250 = vst [vmem:[%s230 + $0x48] sm:$0xff] %v249
                %v251 = vld [vmem:[%s229 + $0x90] sm:$0xff]
                %252 = vst [vmem:[%s230 + $0x50] sm:$0xff] %v251
                %v253 = vld [vmem:[%s229 + $0x98] sm:$0xff]
                %254 = vst [vmem:[%s230 + $0x58] sm:$0xff] %v253
                %v255 = vld [vmem:[%s229 + $0xc0] sm:$0xff]
                %256 = vst [vmem:[%s230 + $0x60] sm:$0xff] %v255
                %v257 = vld [vmem:[%s229 + $0xc8] sm:$0xff]
                %258 = vst [vmem:[%s230 + $0x68] sm:$0xff] %v257
                %v259 = vld [vmem:[%s229 + $0xd0] sm:$0xff]
                %260 = vst [vmem:[%s230 + $0x70] sm:$0xff] %v259
                %v261 = vld [vmem:[%s229 + $0xd8] sm:$0xff]
                %262 = vst [vmem:[%s230 + $0x78] sm:$0xff] %v261
                %v263 = vld [vmem:[%s229 + $0x100] sm:$0xff]
                %264 = vst [vmem:[%s230 + $0x80] sm:$0xff] %v263
                %v265 = vld [vmem:[%s229 + $0x108] sm:$0xff]
                %266 = vst [vmem:[%s230 + $0x88] sm:$0xff] %v265
                %v267 = vld [vmem:[%s229 + $0x110] sm:$0xff]
                %268 = vst [vmem:[%s230 + $0x90] sm:$0xff] %v267
                %v269 = vld [vmem:[%s229 + $0x118] sm:$0xff]
                %270 = vst [vmem:[%s230 + $0x98] sm:$0xff] %v269
              $region41: #{classifier_forward.7} parent=35 // loop_footer
                %s228 = sadd.s32 1, %s224
              $region42: #{classifier_forward.7} parent=35 // loop_footer_branch
                %223 = sbr.rel target = $region38
              $region43: #{classifier_forward.7} parent=35 // loop_exit
                _
            $region36: #{classifier_forward.7} parent=31 // pred_fallthru
              _
            // Predicated region
            $region44: #{classifier_forward.7} parent=31 // pred_check
              _
            $region45: #{classifier_forward.7} parent=31 // pred_check_branch
              %272 = sbr.rel target = $region47
            $region46: #{classifier_forward.7} parent=31 // pred_region
              _
            $region47: #{classifier_forward.7} parent=31 // pred_fallthru
              _
          $region32: #{classifier_forward.7} parent=27 // pred_fallthru
            _
          %273 = vnop
        $region28: #{classifier_forward.7} parent=23 // pred_fallthru
          _
        // Predicated region
        $region48: #{classifier_forward.7} parent=23 // pred_check
          %p274 = pneg %p58
        $region49: #{classifier_forward.7} parent=23 // pred_check_branch
          %276 = sbr.rel (%p274) target = $region51
        $region50: #{classifier_forward.7} parent=23 // pred_region
          %s277 = sand.u32 %s48, 1
          %s278 = sand.u32 %s48, 1
          %s279 = smul.addr %s278, 160
          %s280 = scalar_lea.vmem [#allocation3], %s279
          %s281 = smul.u32 8, %s12
          %s282 = smul.addr %s281, 4
          %s283 = scalar_lea.vmem %s1, %s282
          // Predicated region
          $region52: #{classifier_forward.7} parent=50 // pred_check
            _
          $region53: #{classifier_forward.7} parent=50 // pred_check_branch
            %285 = sbr.rel (0) target = $region55
          $region54: #{classifier_forward.7} parent=50 // pred_region
            // Predicated region
            $region56: #{classifier_forward.7} parent=54 // pred_check
              _
            $region57: #{classifier_forward.7} parent=54 // pred_check_branch
              %287 = sbr.rel (0) target = $region59
            $region58: #{classifier_forward.7} parent=54 // pred_region
              loop: start=0, step=1, limit=1
              $region60: #{classifier_forward.7} parent=58 // loop_pre_header
                _
              $region61: #{classifier_forward.7} parent=58 // loop_header
                %s289 = sphi 0, %s293
                %p290 = scmp.ge.s32.totalorder %s289, 1
                %s294 = sphi %s283, %s283
                %s295 = sphi %s280, %s280
              $region62: #{classifier_forward.7} parent=58 // loop_header_branch
                %292 = sbr.rel (%p290) target = $region66
              $region63: #{classifier_forward.7} parent=58 // loop_body
                %v296 = vld [vmem:[%s294] sm:$0xff]
                %297 = vst [vmem:[%s295] sm:$0xff] %v296
                %v298 = vld [vmem:[%s294 + $0x8] sm:$0xff]
                %299 = vst [vmem:[%s295 + $0x8] sm:$0xff] %v298
                %v300 = vld [vmem:[%s294 + $0x10] sm:$0xff]
                %301 = vst [vmem:[%s295 + $0x10] sm:$0xff] %v300
                %v302 = vld [vmem:[%s294 + $0x18] sm:$0xff]
                %303 = vst [vmem:[%s295 + $0x18] sm:$0xff] %v302
                %v304 = vld [vmem:[%s294 + $0x40] sm:$0xff]
                %305 = vst [vmem:[%s295 + $0x20] sm:$0xff] %v304
                %v306 = vld [vmem:[%s294 + $0x48] sm:$0xff]
                %307 = vst [vmem:[%s295 + $0x28] sm:$0xff] %v306
                %v308 = vld [vmem:[%s294 + $0x50] sm:$0xff]
                %309 = vst [vmem:[%s295 + $0x30] sm:$0xff] %v308
                %v310 = vld [vmem:[%s294 + $0x58] sm:$0xff]
                %311 = vst [vmem:[%s295 + $0x38] sm:$0xff] %v310
                %v312 = vld [vmem:[%s294 + $0x80] sm:$0xff]
                %313 = vst [vmem:[%s295 + $0x40] sm:$0xff] %v312
                %v314 = vld [vmem:[%s294 + $0x88] sm:$0xff]
                %315 = vst [vmem:[%s295 + $0x48] sm:$0xff] %v314
                %v316 = vld [vmem:[%s294 + $0x90] sm:$0xff]
                %317 = vst [vmem:[%s295 + $0x50] sm:$0xff] %v316
                %v318 = vld [vmem:[%s294 + $0x98] sm:$0xff]
                %319 = vst [vmem:[%s295 + $0x58] sm:$0xff] %v318
                %v320 = vld [vmem:[%s294 + $0xc0] sm:$0xff]
                %321 = vst [vmem:[%s295 + $0x60] sm:$0xff] %v320
                %v322 = vld [vmem:[%s294 + $0xc8] sm:$0xff]
                %323 = vst [vmem:[%s295 + $0x68] sm:$0xff] %v322
                %v324 = vld [vmem:[%s294 + $0xd0] sm:$0xff]
                %325 = vst [vmem:[%s295 + $0x70] sm:$0xff] %v324
                %v326 = vld [vmem:[%s294 + $0xd8] sm:$0xff]
                %327 = vst [vmem:[%s295 + $0x78] sm:$0xff] %v326
                %v328 = vld [vmem:[%s294 + $0x100] sm:$0xff]
                %329 = vst [vmem:[%s295 + $0x80] sm:$0xff] %v328
                %v330 = vld [vmem:[%s294 + $0x108] sm:$0xff]
                %331 = vst [vmem:[%s295 + $0x88] sm:$0xff] %v330
                %v332 = vld [vmem:[%s294 + $0x110] sm:$0xff]
                %333 = vst [vmem:[%s295 + $0x90] sm:$0xff] %v332
                %v334 = vld [vmem:[%s294 + $0x118] sm:$0xff]
                %335 = vst [vmem:[%s295 + $0x98] sm:$0xff] %v334
              $region64: #{classifier_forward.7} parent=58 // loop_footer
                %s293 = sadd.s32 1, %s289
              $region65: #{classifier_forward.7} parent=58 // loop_footer_branch
                %288 = sbr.rel target = $region61
              $region66: #{classifier_forward.7} parent=58 // loop_exit
                _
            $region59: #{classifier_forward.7} parent=54 // pred_fallthru
              _
            // Predicated region
            $region67: #{classifier_forward.7} parent=54 // pred_check
              _
            $region68: #{classifier_forward.7} parent=54 // pred_check_branch
              %337 = sbr.rel target = $region70
            $region69: #{classifier_forward.7} parent=54 // pred_region
              _
            $region70: #{classifier_forward.7} parent=54 // pred_fallthru
              _
          $region55: #{classifier_forward.7} parent=50 // pred_fallthru
            _
          %338 = vnop
        $region51: #{classifier_forward.7} parent=23 // pred_fallthru
          _
        // Predicated region
        $region71: #{classifier_forward.7} parent=23 // pred_check
          %p339 = pneg %p84
        $region72: #{classifier_forward.7} parent=23 // pred_check_branch
          %341 = sbr.rel (%p339) target = $region74
        $region73: #{classifier_forward.7} parent=23 // pred_region
          %s342 = sand.u32 %s74, 1
          %s343 = sand.u32 %s74, 1
          %s344 = smul.addr %s343, 160
          %s345 = scalar_lea.vmem [#allocation4], %s344
          %s346 = smul.u32 8, %s12
          %s347 = smul.addr %s346, 4
          %s348 = scalar_lea.vmem %s2, %s347
          // Predicated region
          $region75: #{classifier_forward.7} parent=73 // pred_check
            _
          $region76: #{classifier_forward.7} parent=73 // pred_check_branch
            %350 = sbr.rel (0) target = $region78
          $region77: #{classifier_forward.7} parent=73 // pred_region
            // Predicated region
            $region79: #{classifier_forward.7} parent=77 // pred_check
              _
            $region80: #{classifier_forward.7} parent=77 // pred_check_branch
              %352 = sbr.rel (0) target = $region82
            $region81: #{classifier_forward.7} parent=77 // pred_region
              loop: start=0, step=1, limit=1
              $region83: #{classifier_forward.7} parent=81 // loop_pre_header
                _
              $region84: #{classifier_forward.7} parent=81 // loop_header
                %s354 = sphi 0, %s358
                %p355 = scmp.ge.s32.totalorder %s354, 1
                %s359 = sphi %s348, %s348
                %s360 = sphi %s345, %s345
              $region85: #{classifier_forward.7} parent=81 // loop_header_branch
                %357 = sbr.rel (%p355) target = $region89
              $region86: #{classifier_forward.7} parent=81 // loop_body
                %v361 = vld [vmem:[%s359] sm:$0xff]
                %362 = vst [vmem:[%s360] sm:$0xff] %v361
                %v363 = vld [vmem:[%s359 + $0x8] sm:$0xff]
                %364 = vst [vmem:[%s360 + $0x8] sm:$0xff] %v363
                %v365 = vld [vmem:[%s359 + $0x10] sm:$0xff]
                %366 = vst [vmem:[%s360 + $0x10] sm:$0xff] %v365
                %v367 = vld [vmem:[%s359 + $0x18] sm:$0xff]
                %368 = vst [vmem:[%s360 + $0x18] sm:$0xff] %v367
                %v369 = vld [vmem:[%s359 + $0x40] sm:$0xff]
                %370 = vst [vmem:[%s360 + $0x20] sm:$0xff] %v369
                %v371 = vld [vmem:[%s359 + $0x48] sm:$0xff]
                %372 = vst [vmem:[%s360 + $0x28] sm:$0xff] %v371
                %v373 = vld [vmem:[%s359 + $0x50] sm:$0xff]
                %374 = vst [vmem:[%s360 + $0x30] sm:$0xff] %v373
                %v375 = vld [vmem:[%s359 + $0x58] sm:$0xff]
                %376 = vst [vmem:[%s360 + $0x38] sm:$0xff] %v375
                %v377 = vld [vmem:[%s359 + $0x80] sm:$0xff]
                %378 = vst [vmem:[%s360 + $0x40] sm:$0xff] %v377
                %v379 = vld [vmem:[%s359 + $0x88] sm:$0xff]
                %380 = vst [vmem:[%s360 + $0x48] sm:$0xff] %v379
                %v381 = vld [vmem:[%s359 + $0x90] sm:$0xff]
                %382 = vst [vmem:[%s360 + $0x50] sm:$0xff] %v381
                %v383 = vld [vmem:[%s359 + $0x98] sm:$0xff]
                %384 = vst [vmem:[%s360 + $0x58] sm:$0xff] %v383
                %v385 = vld [vmem:[%s359 + $0xc0] sm:$0xff]
                %386 = vst [vmem:[%s360 + $0x60] sm:$0xff] %v385
                %v387 = vld [vmem:[%s359 + $0xc8] sm:$0xff]
                %388 = vst [vmem:[%s360 + $0x68] sm:$0xff] %v387
                %v389 = vld [vmem:[%s359 + $0xd0] sm:$0xff]
                %390 = vst [vmem:[%s360 + $0x70] sm:$0xff] %v389
                %v391 = vld [vmem:[%s359 + $0xd8] sm:$0xff]
                %392 = vst [vmem:[%s360 + $0x78] sm:$0xff] %v391
                %v393 = vld [vmem:[%s359 + $0x100] sm:$0xff]
                %394 = vst [vmem:[%s360 + $0x80] sm:$0xff] %v393
                %v395 = vld [vmem:[%s359 + $0x108] sm:$0xff]
                %396 = vst [vmem:[%s360 + $0x88] sm:$0xff] %v395
                %v397 = vld [vmem:[%s359 + $0x110] sm:$0xff]
                %398 = vst [vmem:[%s360 + $0x90] sm:$0xff] %v397
                %v399 = vld [vmem:[%s359 + $0x118] sm:$0xff]
                %400 = vst [vmem:[%s360 + $0x98] sm:$0xff] %v399
              $region87: #{classifier_forward.7} parent=81 // loop_footer
                %s358 = sadd.s32 1, %s354
              $region88: #{classifier_forward.7} parent=81 // loop_footer_branch
                %353 = sbr.rel target = $region84
              $region89: #{classifier_forward.7} parent=81 // loop_exit
                _
            $region82: #{classifier_forward.7} parent=77 // pred_fallthru
              _
            // Predicated region
            $region90: #{classifier_forward.7} parent=77 // pred_check
              _
            $region91: #{classifier_forward.7} parent=77 // pred_check_branch
              %402 = sbr.rel target = $region93
            $region92: #{classifier_forward.7} parent=77 // pred_region
              _
            $region93: #{classifier_forward.7} parent=77 // pred_fallthru
              _
          $region78: #{classifier_forward.7} parent=73 // pred_fallthru
            _
          %403 = vnop
        $region74: #{classifier_forward.7} parent=23 // pred_fallthru
          _
        // Predicated region
        $region94: #{classifier_forward.7} parent=23 // pred_check
          %p404 = pneg %p110
        $region95: #{classifier_forward.7} parent=23 // pred_check_branch
          %406 = sbr.rel (%p404) target = $region97
        $region96: #{classifier_forward.7} parent=23 // pred_region
          %s407 = sand.u32 %s100, 1
          %s408 = sand.u32 %s100, 1
          %s409 = smul.addr %s408, 160
          %s410 = scalar_lea.vmem [#allocation5], %s409
          %s411 = smul.u32 8, %s12
          %s412 = smul.addr %s411, 4
          %s413 = scalar_lea.vmem %s3, %s412
          // Predicated region
          $region98: #{classifier_forward.7} parent=96 // pred_check
            _
          $region99: #{classifier_forward.7} parent=96 // pred_check_branch
            %415 = sbr.rel (0) target = $region101
          $region100: #{classifier_forward.7} parent=96 // pred_region
            // Predicated region
            $region102: #{classifier_forward.7} parent=100 // pred_check
              _
            $region103: #{classifier_forward.7} parent=100 // pred_check_branch
              %417 = sbr.rel (0) target = $region105
            $region104: #{classifier_forward.7} parent=100 // pred_region
              loop: start=0, step=1, limit=1
              $region106: #{classifier_forward.7} parent=104 // loop_pre_header
                _
              $region107: #{classifier_forward.7} parent=104 // loop_header
                %s419 = sphi 0, %s423
                %p420 = scmp.ge.s32.totalorder %s419, 1
                %s424 = sphi %s413, %s413
                %s425 = sphi %s410, %s410
              $region108: #{classifier_forward.7} parent=104 // loop_header_branch
                %422 = sbr.rel (%p420) target = $region112
              $region109: #{classifier_forward.7} parent=104 // loop_body
                %v426 = vld [vmem:[%s424] sm:$0xff]
                %427 = vst [vmem:[%s425] sm:$0xff] %v426
                %v428 = vld [vmem:[%s424 + $0x8] sm:$0xff]
                %429 = vst [vmem:[%s425 + $0x8] sm:$0xff] %v428
                %v430 = vld [vmem:[%s424 + $0x10] sm:$0xff]
                %431 = vst [vmem:[%s425 + $0x10] sm:$0xff] %v430
                %v432 = vld [vmem:[%s424 + $0x18] sm:$0xff]
                %433 = vst [vmem:[%s425 + $0x18] sm:$0xff] %v432
                %v434 = vld [vmem:[%s424 + $0x40] sm:$0xff]
                %435 = vst [vmem:[%s425 + $0x20] sm:$0xff] %v434
                %v436 = vld [vmem:[%s424 + $0x48] sm:$0xff]
                %437 = vst [vmem:[%s425 + $0x28] sm:$0xff] %v436
                %v438 = vld [vmem:[%s424 + $0x50] sm:$0xff]
                %439 = vst [vmem:[%s425 + $0x30] sm:$0xff] %v438
                %v440 = vld [vmem:[%s424 + $0x58] sm:$0xff]
                %441 = vst [vmem:[%s425 + $0x38] sm:$0xff] %v440
                %v442 = vld [vmem:[%s424 + $0x80] sm:$0xff]
                %443 = vst [vmem:[%s425 + $0x40] sm:$0xff] %v442
                %v444 = vld [vmem:[%s424 + $0x88] sm:$0xff]
                %445 = vst [vmem:[%s425 + $0x48] sm:$0xff] %v444
                %v446 = vld [vmem:[%s424 + $0x90] sm:$0xff]
                %447 = vst [vmem:[%s425 + $0x50] sm:$0xff] %v446
                %v448 = vld [vmem:[%s424 + $0x98] sm:$0xff]
                %449 = vst [vmem:[%s425 + $0x58] sm:$0xff] %v448
                %v450 = vld [vmem:[%s424 + $0xc0] sm:$0xff]
                %451 = vst [vmem:[%s425 + $0x60] sm:$0xff] %v450
                %v452 = vld [vmem:[%s424 + $0xc8] sm:$0xff]
                %453 = vst [vmem:[%s425 + $0x68] sm:$0xff] %v452
                %v454 = vld [vmem:[%s424 + $0xd0] sm:$0xff]
                %455 = vst [vmem:[%s425 + $0x70] sm:$0xff] %v454
                %v456 = vld [vmem:[%s424 + $0xd8] sm:$0xff]
                %457 = vst [vmem:[%s425 + $0x78] sm:$0xff] %v456
                %v458 = vld [vmem:[%s424 + $0x100] sm:$0xff]
                %459 = vst [vmem:[%s425 + $0x80] sm:$0xff] %v458
                %v460 = vld [vmem:[%s424 + $0x108] sm:$0xff]
                %461 = vst [vmem:[%s425 + $0x88] sm:$0xff] %v460
                %v462 = vld [vmem:[%s424 + $0x110] sm:$0xff]
                %463 = vst [vmem:[%s425 + $0x90] sm:$0xff] %v462
                %v464 = vld [vmem:[%s424 + $0x118] sm:$0xff]
                %465 = vst [vmem:[%s425 + $0x98] sm:$0xff] %v464
              $region110: #{classifier_forward.7} parent=104 // loop_footer
                %s423 = sadd.s32 1, %s419
              $region111: #{classifier_forward.7} parent=104 // loop_footer_branch
                %418 = sbr.rel target = $region107
              $region112: #{classifier_forward.7} parent=104 // loop_exit
                _
            $region105: #{classifier_forward.7} parent=100 // pred_fallthru
              _
            // Predicated region
            $region113: #{classifier_forward.7} parent=100 // pred_check
              _
            $region114: #{classifier_forward.7} parent=100 // pred_check_branch
              %467 = sbr.rel target = $region116
            $region115: #{classifier_forward.7} parent=100 // pred_region
              _
            $region116: #{classifier_forward.7} parent=100 // pred_fallthru
              _
          $region101: #{classifier_forward.7} parent=96 // pred_fallthru
            _
          %468 = vnop
        $region97: #{classifier_forward.7} parent=23 // pred_fallthru
          _
      $region24: #{classifier_forward.7} parent=5 // pred_fallthru
        _
      %p469 = scmp.le.s32.totalorder 1, %s12
      %p470 = scmp.lt.s32.totalorder %s12, 3
      %p471 = pnand %p469, %p470
      %p472 = pneg %p471
      // Predicated region
      $region117: #{classifier_forward.7} parent=5 // pred_check
        _
      $region118: #{classifier_forward.7} parent=5 // pred_check_branch
        %474 = sbr.rel (%p471) target = $region120
      $region119: #{classifier_forward.7} parent=5 // pred_region
        %s475 = ssub.s32 %s12, 1
        %s476 = sand.u32 %s25, 1
        %s477 = sand.u32 %s25, 1
        %s478 = smul.addr %s477, 160
        %s479 = scalar_lea.vmem [#allocation2], %s478
        // Predicated region
        $region121: #{classifier_forward.7} parent=119 // pred_check
          %p480 = pneg %p38
        $region122: #{classifier_forward.7} parent=119 // pred_check_branch
          %482 = sbr.rel (%p480) target = $region124
        $region123: #{classifier_forward.7} parent=119 // pred_region
          _
        $region124: #{classifier_forward.7} parent=119 // pred_fallthru
          _
        %s483 = sand.u32 %s51, 1
        %s484 = sand.u32 %s51, 1
        %s485 = smul.addr %s484, 160
        %s486 = scalar_lea.vmem [#allocation3], %s485
        // Predicated region
        $region125: #{classifier_forward.7} parent=119 // pred_check
          %p487 = pneg %p64
        $region126: #{classifier_forward.7} parent=119 // pred_check_branch
          %489 = sbr.rel (%p487) target = $region128
        $region127: #{classifier_forward.7} parent=119 // pred_region
          _
        $region128: #{classifier_forward.7} parent=119 // pred_fallthru
          _
        %s490 = sand.u32 %s77, 1
        %s491 = sand.u32 %s77, 1
        %s492 = smul.addr %s491, 160
        %s493 = scalar_lea.vmem [#allocation4], %s492
        // Predicated region
        $region129: #{classifier_forward.7} parent=119 // pred_check
          %p494 = pneg %p90
        $region130: #{classifier_forward.7} parent=119 // pred_check_branch
          %496 = sbr.rel (%p494) target = $region132
        $region131: #{classifier_forward.7} parent=119 // pred_region
          _
        $region132: #{classifier_forward.7} parent=119 // pred_fallthru
          _
        %s497 = sand.u32 %s103, 1
        %s498 = sand.u32 %s103, 1
        %s499 = smul.addr %s498, 160
        %s500 = scalar_lea.vmem [#allocation5], %s499
        // Predicated region
        $region133: #{classifier_forward.7} parent=119 // pred_check
          %p501 = pneg %p116
        $region134: #{classifier_forward.7} parent=119 // pred_check_branch
          %503 = sbr.rel (%p501) target = $region136
        $region135: #{classifier_forward.7} parent=119 // pred_region
          _
        $region136: #{classifier_forward.7} parent=119 // pred_fallthru
          _
        %s504 = sand.u32 %s25, 1
        %s505 = sand.u32 %s25, 1
        %s506 = smul.addr %s505, 160
        %s507 = scalar_lea.vmem [#allocation2], %s506
        %p508 = pneg %p38
        %p509 = pneg %p35
        %s510 = sand.u32 %s51, 1
        %s511 = sand.u32 %s51, 1
        %s512 = smul.addr %s511, 160
        %s513 = scalar_lea.vmem [#allocation3], %s512
        %p514 = pneg %p64
        %p515 = pneg %p61
        %s516 = sand.u32 %s77, 1
        %s517 = sand.u32 %s77, 1
        %s518 = smul.addr %s517, 160
        %s519 = scalar_lea.vmem [#allocation4], %s518
        %p520 = pneg %p90
        %p521 = pneg %p87
        %s522 = sand.u32 %s103, 1
        %s523 = sand.u32 %s103, 1
        %s524 = smul.addr %s523, 160
        %s525 = scalar_lea.vmem [#allocation5], %s524
        %p526 = pneg %p116
        %p527 = pneg %p113
        %p528 = pneg %p137
        %p529 = pneg %p134
        %p530 = pneg %p158
        %p531 = pneg %p155
        %p532 = pneg %p184
        %p533 = pneg %p181
        %s534 = smul.u32 8, %s17
        %p535 = scmp.lt.s32.totalorder %s534, 15
        %s536 = scalar_select %p535, %s534, 15
        %s537 = smul.addr %s536, 4
        %s538 = scalar_lea.vmem %s6, %s537
        %s539 = smul.u32 8, %s17
        %s540 = smul.u32 8, %s17
        %s541 = smul.u32 8, %s17
        %s542 = smul.u32 8, %s17
        %s543 = smul.u32 8, %s17
        %p544 = scmp.lt.s32.totalorder %s543, 15
        %s545 = scalar_select %p544, %s543, 15
        %s546 = smul.addr %s545, 4
        %s547 = scalar_lea.vmem %s6, %s546
        %s548 = smul.u32 8, %s17
        %v550 = vld [vmem:[%s4] sm:$0xf]
        %v551 = vld [vmem:[%s479] sm:$0xff]
        %v552 = vld [vmem:[%s479 + $0x8] sm:$0xff]
        %v553 = vld [vmem:[%s479 + $0x10] sm:$0xff]
        %v554 = vld [vmem:[%s479 + $0x18] sm:$0xff]
        %v555 = vld [vmem:[%s479 + $0x20] sm:$0xff]
        %v556 = vld [vmem:[%s479 + $0x28] sm:$0xff]
        %v557 = vld [vmem:[%s479 + $0x30] sm:$0xff]
        %v558 = vld [vmem:[%s479 + $0x38] sm:$0xff]
        %v559 = vld [vmem:[%s479 + $0x40] sm:$0xff]
        %v560 = vld [vmem:[%s479 + $0x48] sm:$0xff]
        %v561 = vld [vmem:[%s479 + $0x50] sm:$0xff]
        %v562 = vld [vmem:[%s479 + $0x58] sm:$0xff]
        %v563 = vld [vmem:[%s479 + $0x60] sm:$0xff]
        %v564 = vld [vmem:[%s479 + $0x68] sm:$0xff]
        %v565 = vld [vmem:[%s479 + $0x70] sm:$0xff]
        %v566 = vld [vmem:[%s479 + $0x78] sm:$0xff]
        %v567 = vld [vmem:[%s479 + $0x80] sm:$0x33]
        %v568 = vld [vmem:[%s479 + $0x88] sm:$0x33]
        %v569 = vld [vmem:[%s479 + $0x90] sm:$0x33]
        %v570 = vld [vmem:[%s479 + $0x98] sm:$0x33]
        %v591 = vunpack.c.l.b16 %v551
        %v592 = vunpack.c.h.b16 %v551
        %v593 = vunpack.c.l.b16 %v552
        %v594 = vunpack.c.h.b16 %v552
        %v595 = vunpack.c.l.b16 %v553
        %v596 = vunpack.c.h.b16 %v553
        %v597 = vunpack.c.l.b16 %v554
        %v598 = vunpack.c.h.b16 %v554
        %v599 = vunpack.c.l.b16 %v555
        %v600 = vunpack.c.h.b16 %v555
        %v601 = vunpack.c.l.b16 %v556
        %v602 = vunpack.c.h.b16 %v556
        %v603 = vunpack.c.l.b16 %v557
        %v604 = vunpack.c.h.b16 %v557
        %v605 = vunpack.c.l.b16 %v558
        %v606 = vunpack.c.h.b16 %v558
        %v607 = vunpack.c.l.b16 %v559
        %v608 = vunpack.c.h.b16 %v559
        %v609 = vunpack.c.l.b16 %v560
        %v610 = vunpack.c.h.b16 %v560
        %v611 = vunpack.c.l.b16 %v561
        %v612 = vunpack.c.h.b16 %v561
        %v613 = vunpack.c.l.b16 %v562
        %v614 = vunpack.c.h.b16 %v562
        %v615 = vunpack.c.l.b16 %v563
        %v616 = vunpack.c.h.b16 %v563
        %v617 = vunpack.c.l.b16 %v564
        %v618 = vunpack.c.h.b16 %v564
        %v619 = vunpack.c.l.b16 %v565
        %v620 = vunpack.c.h.b16 %v565
        %v621 = vunpack.c.l.b16 %v566
        %v622 = vunpack.c.h.b16 %v566
        %v623 = vunpack.c.l.b16 %v567
        %v624 = vunpack.c.h.b16 %v567
        %v625 = vunpack.c.l.b16 %v568
        %v626 = vunpack.c.h.b16 %v568
        %v627 = vunpack.c.l.b16 %v569
        %v628 = vunpack.c.h.b16 %v569
        %v629 = vunpack.c.l.b16 %v570
        %v630 = vunpack.c.h.b16 %v570
        %v631 = vpack.c.b16 %v599, %v591
        %v632 = vpack.c.b16 %v600, %v592
        %v633 = vpack.c.b16 %v601, %v593
        %v634 = vpack.c.b16 %v602, %v594
        %v635 = vpack.c.b16 %v603, %v595
        %v636 = vpack.c.b16 %v604, %v596
        %v637 = vpack.c.b16 %v605, %v597
        %v638 = vpack.c.b16 %v606, %v598
        %v639 = vpack.c.b16 %v615, %v607
        %v640 = vpack.c.b16 %v616, %v608
        %v641 = vpack.c.b16 %v617, %v609
        %v642 = vpack.c.b16 %v618, %v610
        %v643 = vpack.c.b16 %v619, %v611
        %v644 = vpack.c.b16 %v620, %v612
        %v645 = vpack.c.b16 %v621, %v613
        %v646 = vpack.c.b16 %v622, %v614
        %v647 = vpack.c.b16 %v623, %v623
        %v648 = vpack.c.b16 %v624, %v624
        %v649 = vpack.c.b16 %v625, %v625
        %v650 = vpack.c.b16 %v626, %v626
        %v651 = vpack.c.b16 %v627, %v627
        %v652 = vpack.c.b16 %v628, %v628
        %v653 = vpack.c.b16 %v629, %v629
        %v654 = vpack.c.b16 %v630, %v630
        %vm671 = vcmask 293888
        %v673 = vsel %vm671, %v550, 0
        %vm675 = vcmask 1041408
        %v677 = vsel %vm675, %v647, 0
        %v680 = vsel %vm675, %v648, 0
        %v683 = vsel %vm675, %v649, 0
        %v686 = vsel %vm675, %v650, 0
        %v689 = vsel %vm675, %v651, 0
        %v692 = vsel %vm675, %v652, 0
        %v695 = vsel %vm675, %v653, 0
        %v698 = vsel %vm675, %v654, 0
        %700 = vmatprep.subr.bf16.mxu0 0
        %701 = vmatpush1.bf16.msra.mxu0 0
        %702 = vmatprep.subr.bf16.mxu0 0
        %703 = vmatpush1.bf16.msra.mxu0 0
        %704 = vmatprep.subr.bf16.mxu0 0
        %705 = vmatpush1.bf16.msra.mxu0 0
        %706 = vmatprep.subr.bf16.mxu0 0
        %707 = vmatpush1.bf16.msra.mxu0 0
        %708 = vmatprep.subr.bf16.mxu0 0
        %709 = vmatpush1.bf16.msra.mxu0 0
        %710 = vmatprep.subr.bf16.mxu0 %v680
        %711 = vmatpush1.bf16.msra.mxu0 %v677
        %712 = vmatprep.subr.bf16.mxu0 %v640
        %713 = vmatpush1.bf16.msra.mxu0 %v639
        %714 = vmatprep.subr.bf16.mxu0 %v632
        %715 = vmatpush1.bf16.msra.mxu0 %v631
        %716 = vmatprep.subr.bf16.mxu0 0
        %717 = vmatpush2.bf16.msra.mxu0 0
        %718 = vmatprep.subr.bf16.mxu0 0
        %719 = vmatpush2.bf16.msra.mxu0 0
        %720 = vmatprep.subr.bf16.mxu0 0
        %721 = vmatpush2.bf16.msra.mxu0 0
        %722 = vmatprep.subr.bf16.mxu0 0
        %723 = vmatpush2.bf16.msra.mxu0 0
        %724 = vmatprep.subr.bf16.mxu0 0
        %725 = vmatpush2.bf16.msra.mxu0 0
        %726 = vmatprep.subr.bf16.mxu0 0
        %727 = vmatpush2.bf16.msra.mxu0 0
        %728 = vmatprep.subr.bf16.mxu0 0
        %729 = vmatpush2.bf16.msra.mxu0 0
        %730 = vmatprep.subr.bf16.mxu0 0
        %731 = vmatpush2.bf16.msra.mxu0 0
        %732 = vmatprep.mubr.bf16.mxu0 0
        %733 = vmatmul.mubr.bf16.gmra.mxu0 %v673
        %v734 = vpop.f32.mrf.mxu0
        %v735 = vadd.f32 0.0, %v734
        %v736 = vpop.f32.mrf.mxu0
        %v737 = vadd.f32 0.0, %v736
        %v738 = vpop.f32.mrf.mxu0
        %v739 = vpop.f32.mrf.mxu0
        %740 = vdwg.mxu0
        %741 = vmatprep.subr.bf16.mxu0 0
        %742 = vmatpush1.bf16.msra.mxu0 0
        %743 = vmatprep.subr.bf16.mxu0 0
        %744 = vmatpush1.bf16.msra.mxu0 0
        %745 = vmatprep.subr.bf16.mxu0 0
        %746 = vmatpush1.bf16.msra.mxu0 0
        %747 = vmatprep.subr.bf16.mxu0 0
        %748 = vmatpush1.bf16.msra.mxu0 0
        %749 = vmatprep.subr.bf16.mxu0 0
        %750 = vmatpush1.bf16.msra.mxu0 0
        %751 = vmatprep.subr.bf16.mxu0 %v686
        %752 = vmatpush1.bf16.msra.mxu0 %v683
        %753 = vmatprep.subr.bf16.mxu0 %v642
        %754 = vmatpush1.bf16.msra.mxu0 %v641
        %755 = vmatprep.subr.bf16.mxu0 %v634
        %756 = vmatpush1.bf16.msra.mxu0 %v633
        %757 = vmatprep.subr.bf16.mxu0 0
        %758 = vmatpush2.bf16.msra.mxu0 0
        %759 = vmatprep.subr.bf16.mxu0 0
        %760 = vmatpush2.bf16.msra.mxu0 0
        %761 = vmatprep.subr.bf16.mxu0 0
        %762 = vmatpush2.bf16.msra.mxu0 0
        %763 = vmatprep.subr.bf16.mxu0 0
        %764 = vmatpush2.bf16.msra.mxu0 0
        %765 = vmatprep.subr.bf16.mxu0 0
        %766 = vmatpush2.bf16.msra.mxu0 0
        %767 = vmatprep.subr.bf16.mxu0 0
        %768 = vmatpush2.bf16.msra.mxu0 0
        %769 = vmatprep.subr.bf16.mxu0 0
        %770 = vmatpush2.bf16.msra.mxu0 0
        %771 = vmatprep.subr.bf16.mxu0 0
        %772 = vmatpush2.bf16.msra.mxu0 0
        %773 = vmatprep.mubr.bf16.mxu0 0
        %774 = vmatmul.mubr.bf16.gmra.mxu0 %v673
        %v775 = vpop.f32.mrf.mxu0
        %v776 = vadd.f32 0.0, %v775
        %v777 = vpop.f32.mrf.mxu0
        %v778 = vadd.f32 0.0, %v777
        %v779 = vpop.f32.mrf.mxu0
        %v780 = vpop.f32.mrf.mxu0
        %781 = vdwg.mxu0
        %782 = vmatprep.subr.bf16.mxu0 0
        %783 = vmatpush1.bf16.msra.mxu0 0
        %784 = vmatprep.subr.bf16.mxu0 0
        %785 = vmatpush1.bf16.msra.mxu0 0
        %786 = vmatprep.subr.bf16.mxu0 0
        %787 = vmatpush1.bf16.msra.mxu0 0
        %788 = vmatprep.subr.bf16.mxu0 0
        %789 = vmatpush1.bf16.msra.mxu0 0
        %790 = vmatprep.subr.bf16.mxu0 0
        %791 = vmatpush1.bf16.msra.mxu0 0
        %792 = vmatprep.subr.bf16.mxu0 %v692
        %793 = vmatpush1.bf16.msra.mxu0 %v689
        %794 = vmatprep.subr.bf16.mxu0 %v644
        %795 = vmatpush1.bf16.msra.mxu0 %v643
        %796 = vmatprep.subr.bf16.mxu0 %v636
        %797 = vmatpush1.bf16.msra.mxu0 %v635
        %798 = vmatprep.subr.bf16.mxu0 0
        %799 = vmatpush2.bf16.msra.mxu0 0
        %800 = vmatprep.subr.bf16.mxu0 0
        %801 = vmatpush2.bf16.msra.mxu0 0
        %802 = vmatprep.subr.bf16.mxu0 0
        %803 = vmatpush2.bf16.msra.mxu0 0
        %804 = vmatprep.subr.bf16.mxu0 0
        %805 = vmatpush2.bf16.msra.mxu0 0
        %806 = vmatprep.subr.bf16.mxu0 0
        %807 = vmatpush2.bf16.msra.mxu0 0
        %808 = vmatprep.subr.bf16.mxu0 0
        %809 = vmatpush2.bf16.msra.mxu0 0
        %810 = vmatprep.subr.bf16.mxu0 0
        %811 = vmatpush2.bf16.msra.mxu0 0
        %812 = vmatprep.subr.bf16.mxu0 0
        %813 = vmatpush2.bf16.msra.mxu0 0
        %814 = vmatprep.mubr.bf16.mxu0 0
        %815 = vmatmul.mubr.bf16.gmra.mxu0 %v673
        %v816 = vpop.f32.mrf.mxu0
        %v817 = vadd.f32 0.0, %v816
        %v818 = vpop.f32.mrf.mxu0
        %v819 = vadd.f32 0.0, %v818
        %v820 = vpop.f32.mrf.mxu0
        %v821 = vpop.f32.mrf.mxu0
        %822 = vdwg.mxu0
        %823 = vmatprep.subr.bf16.mxu0 0
        %824 = vmatpush1.bf16.msra.mxu0 0
        %825 = vmatprep.subr.bf16.mxu0 0
        %826 = vmatpush1.bf16.msra.mxu0 0
        %827 = vmatprep.subr.bf16.mxu0 0
        %828 = vmatpush1.bf16.msra.mxu0 0
        %829 = vmatprep.subr.bf16.mxu0 0
        %830 = vmatpush1.bf16.msra.mxu0 0
        %831 = vmatprep.subr.bf16.mxu0 0
        %832 = vmatpush1.bf16.msra.mxu0 0
        %833 = vmatprep.subr.bf16.mxu0 %v698
        %834 = vmatpush1.bf16.msra.mxu0 %v695
        %835 = vmatprep.subr.bf16.mxu0 %v646
        %836 = vmatpush1.bf16.msra.mxu0 %v645
        %837 = vmatprep.subr.bf16.mxu0 %v638
        %838 = vmatpush1.bf16.msra.mxu0 %v637
        %839 = vmatprep.subr.bf16.mxu0 0
        %840 = vmatpush2.bf16.msra.mxu0 0
        %841 = vmatprep.subr.bf16.mxu0 0
        %842 = vmatpush2.bf16.msra.mxu0 0
        %843 = vmatprep.subr.bf16.mxu0 0
        %844 = vmatpush2.bf16.msra.mxu0 0
        %845 = vmatprep.subr.bf16.mxu0 0
        %846 = vmatpush2.bf16.msra.mxu0 0
        %847 = vmatprep.subr.bf16.mxu0 0
        %848 = vmatpush2.bf16.msra.mxu0 0
        %849 = vmatprep.subr.bf16.mxu0 0
        %850 = vmatpush2.bf16.msra.mxu0 0
        %851 = vmatprep.subr.bf16.mxu0 0
        %852 = vmatpush2.bf16.msra.mxu0 0
        %853 = vmatprep.subr.bf16.mxu0 0
        %854 = vmatpush2.bf16.msra.mxu0 0
        %855 = vmatprep.mubr.bf16.mxu0 0
        %856 = vmatmul.mubr.bf16.gmra.mxu0 %v673
        %v857 = vpop.f32.mrf.mxu0
        %v858 = vadd.f32 0.0, %v857
        %v859 = vpop.f32.mrf.mxu0
        %v860 = vadd.f32 0.0, %v859
        %v861 = vpop.f32.mrf.mxu0
        %v862 = vpop.f32.mrf.mxu0
        %863 = vdwg.mxu0
        %v864 = vld [vmem:[%s486] sm:$0xff]
        %v865 = vld [vmem:[%s486 + $0x8] sm:$0xff]
        %v866 = vld [vmem:[%s486 + $0x10] sm:$0xff]
        %v867 = vld [vmem:[%s486 + $0x18] sm:$0xff]
        %v868 = vld [vmem:[%s486 + $0x20] sm:$0xff]
        %v869 = vld [vmem:[%s486 + $0x28] sm:$0xff]
        %v870 = vld [vmem:[%s486 + $0x30] sm:$0xff]
        %v871 = vld [vmem:[%s486 + $0x38] sm:$0xff]
        %v872 = vld [vmem:[%s486 + $0x40] sm:$0xff]
        %v873 = vld [vmem:[%s486 + $0x48] sm:$0xff]
        %v874 = vld [vmem:[%s486 + $0x50] sm:$0xff]
        %v875 = vld [vmem:[%s486 + $0x58] sm:$0xff]
        %v876 = vld [vmem:[%s486 + $0x60] sm:$0xff]
        %v877 = vld [vmem:[%s486 + $0x68] sm:$0xff]
        %v878 = vld [vmem:[%s486 + $0x70] sm:$0xff]
        %v879 = vld [vmem:[%s486 + $0x78] sm:$0xff]
        %v880 = vld [vmem:[%s486 + $0x80] sm:$0x33]
        %v881 = vld [vmem:[%s486 + $0x88] sm:$0x33]
        %v882 = vld [vmem:[%s486 + $0x90] sm:$0x33]
        %v883 = vld [vmem:[%s486 + $0x98] sm:$0x33]
        %v904 = vunpack.c.l.b16 %v864
        %v905 = vunpack.c.h.b16 %v864
        %v906 = vunpack.c.l.b16 %v865
        %v907 = vunpack.c.h.b16 %v865
        %v908 = vunpack.c.l.b16 %v866
        %v909 = vunpack.c.h.b16 %v866
        %v910 = vunpack.c.l.b16 %v867
        %v911 = vunpack.c.h.b16 %v867
        %v912 = vunpack.c.l.b16 %v868
        %v913 = vunpack.c.h.b16 %v868
        %v914 = vunpack.c.l.b16 %v869
        %v915 = vunpack.c.h.b16 %v869
        %v916 = vunpack.c.l.b16 %v870
        %v917 = vunpack.c.h.b16 %v870
        %v918 = vunpack.c.l.b16 %v871
        %v919 = vunpack.c.h.b16 %v871
        %v920 = vunpack.c.l.b16 %v872
        %v921 = vunpack.c.h.b16 %v872
        %v922 = vunpack.c.l.b16 %v873
        %v923 = vunpack.c.h.b16 %v873
        %v924 = vunpack.c.l.b16 %v874
        %v925 = vunpack.c.h.b16 %v874
        %v926 = vunpack.c.l.b16 %v875
        %v927 = vunpack.c.h.b16 %v875
        %v928 = vunpack.c.l.b16 %v876
        %v929 = vunpack.c.h.b16 %v876
        %v930 = vunpack.c.l.b16 %v877
        %v931 = vunpack.c.h.b16 %v877
        %v932 = vunpack.c.l.b16 %v878
        %v933 = vunpack.c.h.b16 %v878
        %v934 = vunpack.c.l.b16 %v879
        %v935 = vunpack.c.h.b16 %v879
        %v936 = vunpack.c.l.b16 %v880
        %v937 = vunpack.c.h.b16 %v880
        %v938 = vunpack.c.l.b16 %v881
        %v939 = vunpack.c.h.b16 %v881
        %v940 = vunpack.c.l.b16 %v882
        %v941 = vunpack.c.h.b16 %v882
        %v942 = vunpack.c.l.b16 %v883
        %v943 = vunpack.c.h.b16 %v883
        %v944 = vpack.c.b16 %v912, %v904
        %v945 = vpack.c.b16 %v913, %v905
        %v946 = vpack.c.b16 %v914, %v906
        %v947 = vpack.c.b16 %v915, %v907
        %v948 = vpack.c.b16 %v916, %v908
        %v949 = vpack.c.b16 %v917, %v909
        %v950 = vpack.c.b16 %v918, %v910
        %v951 = vpack.c.b16 %v919, %v911
        %v952 = vpack.c.b16 %v928, %v920
        %v953 = vpack.c.b16 %v929, %v921
        %v954 = vpack.c.b16 %v930, %v922
        %v955 = vpack.c.b16 %v931, %v923
        %v956 = vpack.c.b16 %v932, %v924
        %v957 = vpack.c.b16 %v933, %v925
        %v958 = vpack.c.b16 %v934, %v926
        %v959 = vpack.c.b16 %v935, %v927
        %v960 = vpack.c.b16 %v936, %v936
        %v961 = vpack.c.b16 %v937, %v937
        %v962 = vpack.c.b16 %v938, %v938
        %v963 = vpack.c.b16 %v939, %v939
        %v964 = vpack.c.b16 %v940, %v940
        %v965 = vpack.c.b16 %v941, %v941
        %v966 = vpack.c.b16 %v942, %v942
        %v967 = vpack.c.b16 %v943, %v943
        %v985 = vsel %vm675, %v960, 0
        %v988 = vsel %vm675, %v961, 0
        %v991 = vsel %vm675, %v962, 0
        %v994 = vsel %vm675, %v963, 0
        %v997 = vsel %vm675, %v964, 0
        %v1000 = vsel %vm675, %v965, 0
        %v1003 = vsel %vm675, %v966, 0
        %v1006 = vsel %vm675, %v967, 0
        %1008 = vmatprep.subr.bf16.mxu0 0
        %1009 = vmatpush1.bf16.msra.mxu0 0
        %1010 = vmatprep.subr.bf16.mxu0 0
        %1011 = vmatpush1.bf16.msra.mxu0 0
        %1012 = vmatprep.subr.bf16.mxu0 0
        %1013 = vmatpush1.bf16.msra.mxu0 0
        %1014 = vmatprep.subr.bf16.mxu0 0
        %1015 = vmatpush1.bf16.msra.mxu0 0
        %1016 = vmatprep.subr.bf16.mxu0 0
        %1017 = vmatpush1.bf16.msra.mxu0 0
        %1018 = vmatprep.subr.bf16.mxu0 %v988
        %1019 = vmatpush1.bf16.msra.mxu0 %v985
        %1020 = vmatprep.subr.bf16.mxu0 %v953
        %1021 = vmatpush1.bf16.msra.mxu0 %v952
        %1022 = vmatprep.subr.bf16.mxu0 %v945
        %1023 = vmatpush1.bf16.msra.mxu0 %v944
        %1024 = vmatprep.subr.bf16.mxu0 0
        %1025 = vmatpush2.bf16.msra.mxu0 0
        %1026 = vmatprep.subr.bf16.mxu0 0
        %1027 = vmatpush2.bf16.msra.mxu0 0
        %1028 = vmatprep.subr.bf16.mxu0 0
        %1029 = vmatpush2.bf16.msra.mxu0 0
        %1030 = vmatprep.subr.bf16.mxu0 0
        %1031 = vmatpush2.bf16.msra.mxu0 0
        %1032 = vmatprep.subr.bf16.mxu0 0
        %1033 = vmatpush2.bf16.msra.mxu0 0
        %1034 = vmatprep.subr.bf16.mxu0 0
        %1035 = vmatpush2.bf16.msra.mxu0 0
        %1036 = vmatprep.subr.bf16.mxu0 0
        %1037 = vmatpush2.bf16.msra.mxu0 0
        %1038 = vmatprep.subr.bf16.mxu0 0
        %1039 = vmatpush2.bf16.msra.mxu0 0
        %1040 = vmatprep.mubr.bf16.mxu0 0
        %1041 = vmatmul.mubr.bf16.gmra.mxu0 %v673
        %v1042 = vpop.f32.mrf.mxu0
        %v1043 = vadd.f32 0.0, %v1042
        %v1044 = vpop.f32.mrf.mxu0
        %v1045 = vadd.f32 0.0, %v1044
        %v1046 = vpop.f32.mrf.mxu0
        %v1047 = vpop.f32.mrf.mxu0
        %1048 = vdwg.mxu0
        %1049 = vmatprep.subr.bf16.mxu0 0
        %1050 = vmatpush1.bf16.msra.mxu0 0
        %1051 = vmatprep.subr.bf16.mxu0 0
        %1052 = vmatpush1.bf16.msra.mxu0 0
        %1053 = vmatprep.subr.bf16.mxu0 0
        %1054 = vmatpush1.bf16.msra.mxu0 0
        %1055 = vmatprep.subr.bf16.mxu0 0
        %1056 = vmatpush1.bf16.msra.mxu0 0
        %1057 = vmatprep.subr.bf16.mxu0 0
        %1058 = vmatpush1.bf16.msra.mxu0 0
        %1059 = vmatprep.subr.bf16.mxu0 %v994
        %1060 = vmatpush1.bf16.msra.mxu0 %v991
        %1061 = vmatprep.subr.bf16.mxu0 %v955
        %1062 = vmatpush1.bf16.msra.mxu0 %v954
        %1063 = vmatprep.subr.bf16.mxu0 %v947
        %1064 = vmatpush1.bf16.msra.mxu0 %v946
        %1065 = vmatprep.subr.bf16.mxu0 0
        %1066 = vmatpush2.bf16.msra.mxu0 0
        %1067 = vmatprep.subr.bf16.mxu0 0
        %1068 = vmatpush2.bf16.msra.mxu0 0
        %1069 = vmatprep.subr.bf16.mxu0 0
        %1070 = vmatpush2.bf16.msra.mxu0 0
        %1071 = vmatprep.subr.bf16.mxu0 0
        %1072 = vmatpush2.bf16.msra.mxu0 0
        %1073 = vmatprep.subr.bf16.mxu0 0
        %1074 = vmatpush2.bf16.msra.mxu0 0
        %1075 = vmatprep.subr.bf16.mxu0 0
        %1076 = vmatpush2.bf16.msra.mxu0 0
        %1077 = vmatprep.subr.bf16.mxu0 0
        %1078 = vmatpush2.bf16.msra.mxu0 0
        %1079 = vmatprep.subr.bf16.mxu0 0
        %1080 = vmatpush2.bf16.msra.mxu0 0
        %1081 = vmatprep.mubr.bf16.mxu0 0
        %1082 = vmatmul.mubr.bf16.gmra.mxu0 %v673
        %v1083 = vpop.f32.mrf.mxu0
        %v1084 = vadd.f32 0.0, %v1083
        %v1085 = vpop.f32.mrf.mxu0
        %v1086 = vadd.f32 0.0, %v1085
        %v1087 = vpop.f32.mrf.mxu0
        %v1088 = vpop.f32.mrf.mxu0
        %1089 = vdwg.mxu0
        %1090 = vmatprep.subr.bf16.mxu0 0
        %1091 = vmatpush1.bf16.msra.mxu0 0
        %1092 = vmatprep.subr.bf16.mxu0 0
        %1093 = vmatpush1.bf16.msra.mxu0 0
        %1094 = vmatprep.subr.bf16.mxu0 0
        %1095 = vmatpush1.bf16.msra.mxu0 0
        %1096 = vmatprep.subr.bf16.mxu0 0
        %1097 = vmatpush1.bf16.msra.mxu0 0
        %1098 = vmatprep.subr.bf16.mxu0 0
        %1099 = vmatpush1.bf16.msra.mxu0 0
        %1100 = vmatprep.subr.bf16.mxu0 %v1000
        %1101 = vmatpush1.bf16.msra.mxu0 %v997
        %1102 = vmatprep.subr.bf16.mxu0 %v957
        %1103 = vmatpush1.bf16.msra.mxu0 %v956
        %1104 = vmatprep.subr.bf16.mxu0 %v949
        %1105 = vmatpush1.bf16.msra.mxu0 %v948
        %1106 = vmatprep.subr.bf16.mxu0 0
        %1107 = vmatpush2.bf16.msra.mxu0 0
        %1108 = vmatprep.subr.bf16.mxu0 0
        %1109 = vmatpush2.bf16.msra.mxu0 0
        %1110 = vmatprep.subr.bf16.mxu0 0
        %1111 = vmatpush2.bf16.msra.mxu0 0
        %1112 = vmatprep.subr.bf16.mxu0 0
        %1113 = vmatpush2.bf16.msra.mxu0 0
        %1114 = vmatprep.subr.bf16.mxu0 0
        %1115 = vmatpush2.bf16.msra.mxu0 0
        %1116 = vmatprep.subr.bf16.mxu0 0
        %1117 = vmatpush2.bf16.msra.mxu0 0
        %1118 = vmatprep.subr.bf16.mxu0 0
        %1119 = vmatpush2.bf16.msra.mxu0 0
        %1120 = vmatprep.subr.bf16.mxu0 0
        %1121 = vmatpush2.bf16.msra.mxu0 0
        %1122 = vmatprep.mubr.bf16.mxu0 0
        %1123 = vmatmul.mubr.bf16.gmra.mxu0 %v673
        %v1124 = vpop.f32.mrf.mxu0
        %v1125 = vadd.f32 0.0, %v1124
        %v1126 = vpop.f32.mrf.mxu0
        %v1127 = vadd.f32 0.0, %v1126
        %v1128 = vpop.f32.mrf.mxu0
        %v1129 = vpop.f32.mrf.mxu0
        %1130 = vdwg.mxu0
        %1131 = vmatprep.subr.bf16.mxu0 0
        %1132 = vmatpush1.bf16.msra.mxu0 0
        %1133 = vmatprep.subr.bf16.mxu0 0
        %1134 = vmatpush1.bf16.msra.mxu0 0
        %1135 = vmatprep.subr.bf16.mxu0 0
        %1136 = vmatpush1.bf16.msra.mxu0 0
        %1137 = vmatprep.subr.bf16.mxu0 0
        %1138 = vmatpush1.bf16.msra.mxu0 0
        %1139 = vmatprep.subr.bf16.mxu0 0
        %1140 = vmatpush1.bf16.msra.mxu0 0
        %1141 = vmatprep.subr.bf16.mxu0 %v1006
        %1142 = vmatpush1.bf16.msra.mxu0 %v1003
        %1143 = vmatprep.subr.bf16.mxu0 %v959
        %1144 = vmatpush1.bf16.msra.mxu0 %v958
        %1145 = vmatprep.subr.bf16.mxu0 %v951
        %1146 = vmatpush1.bf16.msra.mxu0 %v950
        %1147 = vmatprep.subr.bf16.mxu0 0
        %1148 = vmatpush2.bf16.msra.mxu0 0
        %1149 = vmatprep.subr.bf16.mxu0 0
        %1150 = vmatpush2.bf16.msra.mxu0 0
        %1151 = vmatprep.subr.bf16.mxu0 0
        %1152 = vmatpush2.bf16.msra.mxu0 0
        %1153 = vmatprep.subr.bf16.mxu0 0
        %1154 = vmatpush2.bf16.msra.mxu0 0
        %1155 = vmatprep.subr.bf16.mxu0 0
        %1156 = vmatpush2.bf16.msra.mxu0 0
        %1157 = vmatprep.subr.bf16.mxu0 0
        %1158 = vmatpush2.bf16.msra.mxu0 0
        %1159 = vmatprep.subr.bf16.mxu0 0
        %1160 = vmatpush2.bf16.msra.mxu0 0
        %1161 = vmatprep.subr.bf16.mxu0 0
        %1162 = vmatpush2.bf16.msra.mxu0 0
        %1163 = vmatprep.mubr.bf16.mxu0 0
        %1164 = vmatmul.mubr.bf16.gmra.mxu0 %v673
        %v1165 = vpop.f32.mrf.mxu0
        %v1166 = vadd.f32 0.0, %v1165
        %v1167 = vpop.f32.mrf.mxu0
        %v1168 = vadd.f32 0.0, %v1167
        %v1169 = vpop.f32.mrf.mxu0
        %v1170 = vpop.f32.mrf.mxu0
        %1171 = vdwg.mxu0
        %v1172 = vmax.f32 %v735, %v1043
        %v1173 = vmax.f32 %v737, %v1045
        %v1174 = vmax.f32 %v776, %v1084
        %v1175 = vmax.f32 %v778, %v1086
        %v1176 = vmax.f32 %v817, %v1125
        %v1177 = vmax.f32 %v819, %v1127
        %v1178 = vmax.f32 %v858, %v1166
        %v1179 = vmax.f32 %v860, %v1168
        %v1180 = vld [vmem:[%s493] sm:$0xff]
        %v1181 = vld [vmem:[%s493 + $0x8] sm:$0xff]
        %v1182 = vld [vmem:[%s493 + $0x10] sm:$0xff]
        %v1183 = vld [vmem:[%s493 + $0x18] sm:$0xff]
        %v1184 = vld [vmem:[%s493 + $0x20] sm:$0xff]
        %v1185 = vld [vmem:[%s493 + $0x28] sm:$0xff]
        %v1186 = vld [vmem:[%s493 + $0x30] sm:$0xff]
        %v1187 = vld [vmem:[%s493 + $0x38] sm:$0xff]
        %v1188 = vld [vmem:[%s493 + $0x40] sm:$0xff]
        %v1189 = vld [vmem:[%s493 + $0x48] sm:$0xff]
        %v1190 = vld [vmem:[%s493 + $0x50] sm:$0xff]
        %v1191 = vld [vmem:[%s493 + $0x58] sm:$0xff]
        %v1192 = vld [vmem:[%s493 + $0x60] sm:$0xff]
        %v1193 = vld [vmem:[%s493 + $0x68] sm:$0xff]
        %v1194 = vld [vmem:[%s493 + $0x70] sm:$0xff]
        %v1195 = vld [vmem:[%s493 + $0x78] sm:$0xff]
        %v1196 = vld [vmem:[%s493 + $0x80] sm:$0x33]
        %v1197 = vld [vmem:[%s493 + $0x88] sm:$0x33]
        %v1198 = vld [vmem:[%s493 + $0x90] sm:$0x33]
        %v1199 = vld [vmem:[%s493 + $0x98] sm:$0x33]
        %v1220 = vunpack.c.l.b16 %v1180
        %v1221 = vunpack.c.h.b16 %v1180
        %v1222 = vunpack.c.l.b16 %v1181
        %v1223 = vunpack.c.h.b16 %v1181
        %v1224 = vunpack.c.l.b16 %v1182
        %v1225 = vunpack.c.h.b16 %v1182
        %v1226 = vunpack.c.l.b16 %v1183
        %v1227 = vunpack.c.h.b16 %v1183
        %v1228 = vunpack.c.l.b16 %v1184
        %v1229 = vunpack.c.h.b16 %v1184
        %v1230 = vunpack.c.l.b16 %v1185
        %v1231 = vunpack.c.h.b16 %v1185
        %v1232 = vunpack.c.l.b16 %v1186
        %v1233 = vunpack.c.h.b16 %v1186
        %v1234 = vunpack.c.l.b16 %v1187
        %v1235 = vunpack.c.h.b16 %v1187
        %v1236 = vunpack.c.l.b16 %v1188
        %v1237 = vunpack.c.h.b16 %v1188
        %v1238 = vunpack.c.l.b16 %v1189
        %v1239 = vunpack.c.h.b16 %v1189
        %v1240 = vunpack.c.l.b16 %v1190
        %v1241 = vunpack.c.h.b16 %v1190
        %v1242 = vunpack.c.l.b16 %v1191
        %v1243 = vunpack.c.h.b16 %v1191
        %v1244 = vunpack.c.l.b16 %v1192
        %v1245 = vunpack.c.h.b16 %v1192
        %v1246 = vunpack.c.l.b16 %v1193
        %v1247 = vunpack.c.h.b16 %v1193
        %v1248 = vunpack.c.l.b16 %v1194
        %v1249 = vunpack.c.h.b16 %v1194
        %v1250 = vunpack.c.l.b16 %v1195
        %v1251 = vunpack.c.h.b16 %v1195
        %v1252 = vunpack.c.l.b16 %v1196
        %v1253 = vunpack.c.h.b16 %v1196
        %v1254 = vunpack.c.l.b16 %v1197
        %v1255 = vunpack.c.h.b16 %v1197
        %v1256 = vunpack.c.l.b16 %v1198
        %v1257 = vunpack.c.h.b16 %v1198
        %v1258 = vunpack.c.l.b16 %v1199
        %v1259 = vunpack.c.h.b16 %v1199
        %v1260 = vpack.c.b16 %v1228, %v1220
        %v1261 = vpack.c.b16 %v1229, %v1221
        %v1262 = vpack.c.b16 %v1230, %v1222
        %v1263 = vpack.c.b16 %v1231, %v1223
        %v1264 = vpack.c.b16 %v1232, %v1224
        %v1265 = vpack.c.b16 %v1233, %v1225
        %v1266 = vpack.c.b16 %v1234, %v1226
        %v1267 = vpack.c.b16 %v1235, %v1227
        %v1268 = vpack.c.b16 %v1244, %v1236
        %v1269 = vpack.c.b16 %v1245, %v1237
        %v1270 = vpack.c.b16 %v1246, %v1238
        %v1271 = vpack.c.b16 %v1247, %v1239
        %v1272 = vpack.c.b16 %v1248, %v1240
        %v1273 = vpack.c.b16 %v1249, %v1241
        %v1274 = vpack.c.b16 %v1250, %v1242
        %v1275 = vpack.c.b16 %v1251, %v1243
        %v1276 = vpack.c.b16 %v1252, %v1252
        %v1277 = vpack.c.b16 %v1253, %v1253
        %v1278 = vpack.c.b16 %v1254, %v1254
        %v1279 = vpack.c.b16 %v1255, %v1255
        %v1280 = vpack.c.b16 %v1256, %v1256
        %v1281 = vpack.c.b16 %v1257, %v1257
        %v1282 = vpack.c.b16 %v1258, %v1258
        %v1283 = vpack.c.b16 %v1259, %v1259
        %v1301 = vsel %vm675, %v1276, 0
        %v1304 = vsel %vm675, %v1277, 0
        %v1307 = vsel %vm675, %v1278, 0
        %v1310 = vsel %vm675, %v1279, 0
        %v1313 = vsel %vm675, %v1280, 0
        %v1316 = vsel %vm675, %v1281, 0
        %v1319 = vsel %vm675, %v1282, 0
        %v1322 = vsel %vm675, %v1283, 0
        %1324 = vmatprep.subr.bf16.mxu0 0
        %1325 = vmatpush1.bf16.msra.mxu0 0
        %1326 = vmatprep.subr.bf16.mxu0 0
        %1327 = vmatpush1.bf16.msra.mxu0 0
        %1328 = vmatprep.subr.bf16.mxu0 0
        %1329 = vmatpush1.bf16.msra.mxu0 0
        %1330 = vmatprep.subr.bf16.mxu0 0
        %1331 = vmatpush1.bf16.msra.mxu0 0
        %1332 = vmatprep.subr.bf16.mxu0 0
        %1333 = vmatpush1.bf16.msra.mxu0 0
        %1334 = vmatprep.subr.bf16.mxu0 %v1304
        %1335 = vmatpush1.bf16.msra.mxu0 %v1301
        %1336 = vmatprep.subr.bf16.mxu0 %v1269
        %1337 = vmatpush1.bf16.msra.mxu0 %v1268
        %1338 = vmatprep.subr.bf16.mxu0 %v1261
        %1339 = vmatpush1.bf16.msra.mxu0 %v1260
        %1340 = vmatprep.subr.bf16.mxu0 0
        %1341 = vmatpush2.bf16.msra.mxu0 0
        %1342 = vmatprep.subr.bf16.mxu0 0
        %1343 = vmatpush2.bf16.msra.mxu0 0
        %1344 = vmatprep.subr.bf16.mxu0 0
        %1345 = vmatpush2.bf16.msra.mxu0 0
        %1346 = vmatprep.subr.bf16.mxu0 0
        %1347 = vmatpush2.bf16.msra.mxu0 0
        %1348 = vmatprep.subr.bf16.mxu0 0
        %1349 = vmatpush2.bf16.msra.mxu0 0
        %1350 = vmatprep.subr.bf16.mxu0 0
        %1351 = vmatpush2.bf16.msra.mxu0 0
        %1352 = vmatprep.subr.bf16.mxu0 0
        %1353 = vmatpush2.bf16.msra.mxu0 0
        %1354 = vmatprep.subr.bf16.mxu0 0
        %1355 = vmatpush2.bf16.msra.mxu0 0
        %1356 = vmatprep.mubr.bf16.mxu0 0
        %1357 = vmatmul.mubr.bf16.gmra.mxu0 %v673
        %v1358 = vpop.f32.mrf.mxu0
        %v1359 = vadd.f32 0.0, %v1358
        %v1360 = vpop.f32.mrf.mxu0
        %v1361 = vadd.f32 0.0, %v1360
        %v1362 = vpop.f32.mrf.mxu0
        %v1363 = vpop.f32.mrf.mxu0
        %1364 = vdwg.mxu0
        %1365 = vmatprep.subr.bf16.mxu0 0
        %1366 = vmatpush1.bf16.msra.mxu0 0
        %1367 = vmatprep.subr.bf16.mxu0 0
        %1368 = vmatpush1.bf16.msra.mxu0 0
        %1369 = vmatprep.subr.bf16.mxu0 0
        %1370 = vmatpush1.bf16.msra.mxu0 0
        %1371 = vmatprep.subr.bf16.mxu0 0
        %1372 = vmatpush1.bf16.msra.mxu0 0
        %1373 = vmatprep.subr.bf16.mxu0 0
        %1374 = vmatpush1.bf16.msra.mxu0 0
        %1375 = vmatprep.subr.bf16.mxu0 %v1310
        %1376 = vmatpush1.bf16.msra.mxu0 %v1307
        %1377 = vmatprep.subr.bf16.mxu0 %v1271
        %1378 = vmatpush1.bf16.msra.mxu0 %v1270
        %1379 = vmatprep.subr.bf16.mxu0 %v1263
        %1380 = vmatpush1.bf16.msra.mxu0 %v1262
        %1381 = vmatprep.subr.bf16.mxu0 0
        %1382 = vmatpush2.bf16.msra.mxu0 0
        %1383 = vmatprep.subr.bf16.mxu0 0
        %1384 = vmatpush2.bf16.msra.mxu0 0
        %1385 = vmatprep.subr.bf16.mxu0 0
        %1386 = vmatpush2.bf16.msra.mxu0 0
        %1387 = vmatprep.subr.bf16.mxu0 0
        %1388 = vmatpush2.bf16.msra.mxu0 0
        %1389 = vmatprep.subr.bf16.mxu0 0
        %1390 = vmatpush2.bf16.msra.mxu0 0
        %1391 = vmatprep.subr.bf16.mxu0 0
        %1392 = vmatpush2.bf16.msra.mxu0 0
        %1393 = vmatprep.subr.bf16.mxu0 0
        %1394 = vmatpush2.bf16.msra.mxu0 0
        %1395 = vmatprep.subr.bf16.mxu0 0
        %1396 = vmatpush2.bf16.msra.mxu0 0
        %1397 = vmatprep.mubr.bf16.mxu0 0
        %1398 = vmatmul.mubr.bf16.gmra.mxu0 %v673
        %v1399 = vpop.f32.mrf.mxu0
        %v1400 = vadd.f32 0.0, %v1399
        %v1401 = vpop.f32.mrf.mxu0
        %v1402 = vadd.f32 0.0, %v1401
        %v1403 = vpop.f32.mrf.mxu0
        %v1404 = vpop.f32.mrf.mxu0
        %1405 = vdwg.mxu0
        %1406 = vmatprep.subr.bf16.mxu0 0
        %1407 = vmatpush1.bf16.msra.mxu0 0
        %1408 = vmatprep.subr.bf16.mxu0 0
        %1409 = vmatpush1.bf16.msra.mxu0 0
        %1410 = vmatprep.subr.bf16.mxu0 0
        %1411 = vmatpush1.bf16.msra.mxu0 0
        %1412 = vmatprep.subr.bf16.mxu0 0
        %1413 = vmatpush1.bf16.msra.mxu0 0
        %1414 = vmatprep.subr.bf16.mxu0 0
        %1415 = vmatpush1.bf16.msra.mxu0 0
        %1416 = vmatprep.subr.bf16.mxu0 %v1316
        %1417 = vmatpush1.bf16.msra.mxu0 %v1313
        %1418 = vmatprep.subr.bf16.mxu0 %v1273
        %1419 = vmatpush1.bf16.msra.mxu0 %v1272
        %1420 = vmatprep.subr.bf16.mxu0 %v1265
        %1421 = vmatpush1.bf16.msra.mxu0 %v1264
        %1422 = vmatprep.subr.bf16.mxu0 0
        %1423 = vmatpush2.bf16.msra.mxu0 0
        %1424 = vmatprep.subr.bf16.mxu0 0
        %1425 = vmatpush2.bf16.msra.mxu0 0
        %1426 = vmatprep.subr.bf16.mxu0 0
        %1427 = vmatpush2.bf16.msra.mxu0 0
        %1428 = vmatprep.subr.bf16.mxu0 0
        %1429 = vmatpush2.bf16.msra.mxu0 0
        %1430 = vmatprep.subr.bf16.mxu0 0
        %1431 = vmatpush2.bf16.msra.mxu0 0
        %1432 = vmatprep.subr.bf16.mxu0 0
        %1433 = vmatpush2.bf16.msra.mxu0 0
        %1434 = vmatprep.subr.bf16.mxu0 0
        %1435 = vmatpush2.bf16.msra.mxu0 0
        %1436 = vmatprep.subr.bf16.mxu0 0
        %1437 = vmatpush2.bf16.msra.mxu0 0
        %1438 = vmatprep.mubr.bf16.mxu0 0
        %1439 = vmatmul.mubr.bf16.gmra.mxu0 %v673
        %v1440 = vpop.f32.mrf.mxu0
        %v1441 = vadd.f32 0.0, %v1440
        %v1442 = vpop.f32.mrf.mxu0
        %v1443 = vadd.f32 0.0, %v1442
        %v1444 = vpop.f32.mrf.mxu0
        %v1445 = vpop.f32.mrf.mxu0
        %1446 = vdwg.mxu0
        %1447 = vmatprep.subr.bf16.mxu0 0
        %1448 = vmatpush1.bf16.msra.mxu0 0
        %1449 = vmatprep.subr.bf16.mxu0 0
        %1450 = vmatpush1.bf16.msra.mxu0 0
        %1451 = vmatprep.subr.bf16.mxu0 0
        %1452 = vmatpush1.bf16.msra.mxu0 0
        %1453 = vmatprep.subr.bf16.mxu0 0
        %1454 = vmatpush1.bf16.msra.mxu0 0
        %1455 = vmatprep.subr.bf16.mxu0 0
        %1456 = vmatpush1.bf16.msra.mxu0 0
        %1457 = vmatprep.subr.bf16.mxu0 %v1322
        %1458 = vmatpush1.bf16.msra.mxu0 %v1319
        %1459 = vmatprep.subr.bf16.mxu0 %v1275
        %1460 = vmatpush1.bf16.msra.mxu0 %v1274
        %1461 = vmatprep.subr.bf16.mxu0 %v1267
        %1462 = vmatpush1.bf16.msra.mxu0 %v1266
        %1463 = vmatprep.subr.bf16.mxu0 0
        %1464 = vmatpush2.bf16.msra.mxu0 0
        %1465 = vmatprep.subr.bf16.mxu0 0
        %1466 = vmatpush2.bf16.msra.mxu0 0
        %1467 = vmatprep.subr.bf16.mxu0 0
        %1468 = vmatpush2.bf16.msra.mxu0 0
        %1469 = vmatprep.subr.bf16.mxu0 0
        %1470 = vmatpush2.bf16.msra.mxu0 0
        %1471 = vmatprep.subr.bf16.mxu0 0
        %1472 = vmatpush2.bf16.msra.mxu0 0
        %1473 = vmatprep.subr.bf16.mxu0 0
        %1474 = vmatpush2.bf16.msra.mxu0 0
        %1475 = vmatprep.subr.bf16.mxu0 0
        %1476 = vmatpush2.bf16.msra.mxu0 0
        %1477 = vmatprep.subr.bf16.mxu0 0
        %1478 = vmatpush2.bf16.msra.mxu0 0
        %1479 = vmatprep.mubr.bf16.mxu0 0
        %1480 = vmatmul.mubr.bf16.gmra.mxu0 %v673
        %v1481 = vpop.f32.mrf.mxu0
        %v1482 = vadd.f32 0.0, %v1481
        %v1483 = vpop.f32.mrf.mxu0
        %v1484 = vadd.f32 0.0, %v1483
        %v1485 = vpop.f32.mrf.mxu0
        %v1486 = vpop.f32.mrf.mxu0
        %1487 = vdwg.mxu0
        %v1488 = vmax.f32 %v1172, %v1359
        %v1489 = vmax.f32 %v1173, %v1361
        %v1490 = vmax.f32 %v1174, %v1400
        %v1491 = vmax.f32 %v1175, %v1402
        %v1492 = vmax.f32 %v1176, %v1441
        %v1493 = vmax.f32 %v1177, %v1443
        %v1494 = vmax.f32 %v1178, %v1482
        %v1495 = vmax.f32 %v1179, %v1484
        %v1496 = vld [vmem:[%s500] sm:$0xff]
        %v1497 = vld [vmem:[%s500 + $0x8] sm:$0xff]
        %v1498 = vld [vmem:[%s500 + $0x10] sm:$0xff]
        %v1499 = vld [vmem:[%s500 + $0x18] sm:$0xff]
        %v1500 = vld [vmem:[%s500 + $0x20] sm:$0xff]
        %v1501 = vld [vmem:[%s500 + $0x28] sm:$0xff]
        %v1502 = vld [vmem:[%s500 + $0x30] sm:$0xff]
        %v1503 = vld [vmem:[%s500 + $0x38] sm:$0xff]
        %v1504 = vld [vmem:[%s500 + $0x40] sm:$0xff]
        %v1505 = vld [vmem:[%s500 + $0x48] sm:$0xff]
        %v1506 = vld [vmem:[%s500 + $0x50] sm:$0xff]
        %v1507 = vld [vmem:[%s500 + $0x58] sm:$0xff]
        %v1508 = vld [vmem:[%s500 + $0x60] sm:$0xff]
        %v1509 = vld [vmem:[%s500 + $0x68] sm:$0xff]
        %v1510 = vld [vmem:[%s500 + $0x70] sm:$0xff]
        %v1511 = vld [vmem:[%s500 + $0x78] sm:$0xff]
        %v1512 = vld [vmem:[%s500 + $0x80] sm:$0x33]
        %v1513 = vld [vmem:[%s500 + $0x88] sm:$0x33]
        %v1514 = vld [vmem:[%s500 + $0x90] sm:$0x33]
        %v1515 = vld [vmem:[%s500 + $0x98] sm:$0x33]
        %v1536 = vunpack.c.l.b16 %v1496
        %v1537 = vunpack.c.h.b16 %v1496
        %v1538 = vunpack.c.l.b16 %v1497
        %v1539 = vunpack.c.h.b16 %v1497
        %v1540 = vunpack.c.l.b16 %v1498
        %v1541 = vunpack.c.h.b16 %v1498
        %v1542 = vunpack.c.l.b16 %v1499
        %v1543 = vunpack.c.h.b16 %v1499
        %v1544 = vunpack.c.l.b16 %v1500
        %v1545 = vunpack.c.h.b16 %v1500
        %v1546 = vunpack.c.l.b16 %v1501
        %v1547 = vunpack.c.h.b16 %v1501
        %v1548 = vunpack.c.l.b16 %v1502
        %v1549 = vunpack.c.h.b16 %v1502
        %v1550 = vunpack.c.l.b16 %v1503
        %v1551 = vunpack.c.h.b16 %v1503
        %v1552 = vunpack.c.l.b16 %v1504
        %v1553 = vunpack.c.h.b16 %v1504
        %v1554 = vunpack.c.l.b16 %v1505
        %v1555 = vunpack.c.h.b16 %v1505
        %v1556 = vunpack.c.l.b16 %v1506
        %v1557 = vunpack.c.h.b16 %v1506
        %v1558 = vunpack.c.l.b16 %v1507
        %v1559 = vunpack.c.h.b16 %v1507
        %v1560 = vunpack.c.l.b16 %v1508
        %v1561 = vunpack.c.h.b16 %v1508
        %v1562 = vunpack.c.l.b16 %v1509
        %v1563 = vunpack.c.h.b16 %v1509
        %v1564 = vunpack.c.l.b16 %v1510
        %v1565 = vunpack.c.h.b16 %v1510
        %v1566 = vunpack.c.l.b16 %v1511
        %v1567 = vunpack.c.h.b16 %v1511
        %v1568 = vunpack.c.l.b16 %v1512
        %v1569 = vunpack.c.h.b16 %v1512
        %v1570 = vunpack.c.l.b16 %v1513
        %v1571 = vunpack.c.h.b16 %v1513
        %v1572 = vunpack.c.l.b16 %v1514
        %v1573 = vunpack.c.h.b16 %v1514
        %v1574 = vunpack.c.l.b16 %v1515
        %v1575 = vunpack.c.h.b16 %v1515
        %v1576 = vpack.c.b16 %v1544, %v1536
        %v1577 = vpack.c.b16 %v1545, %v1537
        %v1578 = vpack.c.b16 %v1546, %v1538
        %v1579 = vpack.c.b16 %v1547, %v1539
        %v1580 = vpack.c.b16 %v1548, %v1540
        %v1581 = vpack.c.b16 %v1549, %v1541
        %v1582 = vpack.c.b16 %v1550, %v1542
        %v1583 = vpack.c.b16 %v1551, %v1543
        %v1584 = vpack.c.b16 %v1560, %v1552
        %v1585 = vpack.c.b16 %v1561, %v1553
        %v1586 = vpack.c.b16 %v1562, %v1554
        %v1587 = vpack.c.b16 %v1563, %v1555
        %v1588 = vpack.c.b16 %v1564, %v1556
        %v1589 = vpack.c.b16 %v1565, %v1557
        %v1590 = vpack.c.b16 %v1566, %v1558
        %v1591 = vpack.c.b16 %v1567, %v1559
        %v1592 = vpack.c.b16 %v1568, %v1568
        %v1593 = vpack.c.b16 %v1569, %v1569
        %v1594 = vpack.c.b16 %v1570, %v1570
        %v1595 = vpack.c.b16 %v1571, %v1571
        %v1596 = vpack.c.b16 %v1572, %v1572
        %v1597 = vpack.c.b16 %v1573, %v1573
        %v1598 = vpack.c.b16 %v1574, %v1574
        %v1599 = vpack.c.b16 %v1575, %v1575
        %v1617 = vsel %vm675, %v1592, 0
        %v1620 = vsel %vm675, %v1593, 0
        %v1623 = vsel %vm675, %v1594, 0
        %v1626 = vsel %vm675, %v1595, 0
        %v1629 = vsel %vm675, %v1596, 0
        %v1632 = vsel %vm675, %v1597, 0
        %v1635 = vsel %vm675, %v1598, 0
        %v1638 = vsel %vm675, %v1599, 0
        %1640 = vmatprep.subr.bf16.mxu0 0
        %1641 = vmatpush1.bf16.msra.mxu0 0
        %1642 = vmatprep.subr.bf16.mxu0 0
        %1643 = vmatpush1.bf16.msra.mxu0 0
        %1644 = vmatprep.subr.bf16.mxu0 0
        %1645 = vmatpush1.bf16.msra.mxu0 0
        %1646 = vmatprep.subr.bf16.mxu0 0
        %1647 = vmatpush1.bf16.msra.mxu0 0
        %1648 = vmatprep.subr.bf16.mxu0 0
        %1649 = vmatpush1.bf16.msra.mxu0 0
        %1650 = vmatprep.subr.bf16.mxu0 %v1620
        %1651 = vmatpush1.bf16.msra.mxu0 %v1617
        %1652 = vmatprep.subr.bf16.mxu0 %v1585
        %1653 = vmatpush1.bf16.msra.mxu0 %v1584
        %1654 = vmatprep.subr.bf16.mxu0 %v1577
        %1655 = vmatpush1.bf16.msra.mxu0 %v1576
        %1656 = vmatprep.subr.bf16.mxu0 0
        %1657 = vmatpush2.bf16.msra.mxu0 0
        %1658 = vmatprep.subr.bf16.mxu0 0
        %1659 = vmatpush2.bf16.msra.mxu0 0
        %1660 = vmatprep.subr.bf16.mxu0 0
        %1661 = vmatpush2.bf16.msra.mxu0 0
        %1662 = vmatprep.subr.bf16.mxu0 0
        %1663 = vmatpush2.bf16.msra.mxu0 0
        %1664 = vmatprep.subr.bf16.mxu0 0
        %1665 = vmatpush2.bf16.msra.mxu0 0
        %1666 = vmatprep.subr.bf16.mxu0 0
        %1667 = vmatpush2.bf16.msra.mxu0 0
        %1668 = vmatprep.subr.bf16.mxu0 0
        %1669 = vmatpush2.bf16.msra.mxu0 0
        %1670 = vmatprep.subr.bf16.mxu0 0
        %1671 = vmatpush2.bf16.msra.mxu0 0
        %1672 = vmatprep.mubr.bf16.mxu0 0
        %1673 = vmatmul.mubr.bf16.gmra.mxu0 %v673
        %v1674 = vpop.f32.mrf.mxu0
        %v1675 = vadd.f32 0.0, %v1674
        %v1676 = vpop.f32.mrf.mxu0
        %v1677 = vadd.f32 0.0, %v1676
        %v1678 = vpop.f32.mrf.mxu0
        %v1679 = vpop.f32.mrf.mxu0
        %1680 = vdwg.mxu0
        %1681 = vmatprep.subr.bf16.mxu0 0
        %1682 = vmatpush1.bf16.msra.mxu0 0
        %1683 = vmatprep.subr.bf16.mxu0 0
        %1684 = vmatpush1.bf16.msra.mxu0 0
        %1685 = vmatprep.subr.bf16.mxu0 0
        %1686 = vmatpush1.bf16.msra.mxu0 0
        %1687 = vmatprep.subr.bf16.mxu0 0
        %1688 = vmatpush1.bf16.msra.mxu0 0
        %1689 = vmatprep.subr.bf16.mxu0 0
        %1690 = vmatpush1.bf16.msra.mxu0 0
        %1691 = vmatprep.subr.bf16.mxu0 %v1626
        %1692 = vmatpush1.bf16.msra.mxu0 %v1623
        %1693 = vmatprep.subr.bf16.mxu0 %v1587
        %1694 = vmatpush1.bf16.msra.mxu0 %v1586
        %1695 = vmatprep.subr.bf16.mxu0 %v1579
        %1696 = vmatpush1.bf16.msra.mxu0 %v1578
        %1697 = vmatprep.subr.bf16.mxu0 0
        %1698 = vmatpush2.bf16.msra.mxu0 0
        %1699 = vmatprep.subr.bf16.mxu0 0
        %1700 = vmatpush2.bf16.msra.mxu0 0
        %1701 = vmatprep.subr.bf16.mxu0 0
        %1702 = vmatpush2.bf16.msra.mxu0 0
        %1703 = vmatprep.subr.bf16.mxu0 0
        %1704 = vmatpush2.bf16.msra.mxu0 0
        %1705 = vmatprep.subr.bf16.mxu0 0
        %1706 = vmatpush2.bf16.msra.mxu0 0
        %1707 = vmatprep.subr.bf16.mxu0 0
        %1708 = vmatpush2.bf16.msra.mxu0 0
        %1709 = vmatprep.subr.bf16.mxu0 0
        %1710 = vmatpush2.bf16.msra.mxu0 0
        %1711 = vmatprep.subr.bf16.mxu0 0
        %1712 = vmatpush2.bf16.msra.mxu0 0
        %1713 = vmatprep.mubr.bf16.mxu0 0
        %1714 = vmatmul.mubr.bf16.gmra.mxu0 %v673
        %v1715 = vpop.f32.mrf.mxu0
        %v1716 = vadd.f32 0.0, %v1715
        %v1717 = vpop.f32.mrf.mxu0
        %v1718 = vadd.f32 0.0, %v1717
        %v1719 = vpop.f32.mrf.mxu0
        %v1720 = vpop.f32.mrf.mxu0
        %1721 = vdwg.mxu0
        %1722 = vmatprep.subr.bf16.mxu0 0
        %1723 = vmatpush1.bf16.msra.mxu0 0
        %1724 = vmatprep.subr.bf16.mxu0 0
        %1725 = vmatpush1.bf16.msra.mxu0 0
        %1726 = vmatprep.subr.bf16.mxu0 0
        %1727 = vmatpush1.bf16.msra.mxu0 0
        %1728 = vmatprep.subr.bf16.mxu0 0
        %1729 = vmatpush1.bf16.msra.mxu0 0
        %1730 = vmatprep.subr.bf16.mxu0 0
        %1731 = vmatpush1.bf16.msra.mxu0 0
        %1732 = vmatprep.subr.bf16.mxu0 %v1632
        %1733 = vmatpush1.bf16.msra.mxu0 %v1629
        %1734 = vmatprep.subr.bf16.mxu0 %v1589
        %1735 = vmatpush1.bf16.msra.mxu0 %v1588
        %1736 = vmatprep.subr.bf16.mxu0 %v1581
        %1737 = vmatpush1.bf16.msra.mxu0 %v1580
        %1738 = vmatprep.subr.bf16.mxu0 0
        %1739 = vmatpush2.bf16.msra.mxu0 0
        %1740 = vmatprep.subr.bf16.mxu0 0
        %1741 = vmatpush2.bf16.msra.mxu0 0
        %1742 = vmatprep.subr.bf16.mxu0 0
        %1743 = vmatpush2.bf16.msra.mxu0 0
        %1744 = vmatprep.subr.bf16.mxu0 0
        %1745 = vmatpush2.bf16.msra.mxu0 0
        %1746 = vmatprep.subr.bf16.mxu0 0
        %1747 = vmatpush2.bf16.msra.mxu0 0
        %1748 = vmatprep.subr.bf16.mxu0 0
        %1749 = vmatpush2.bf16.msra.mxu0 0
        %1750 = vmatprep.subr.bf16.mxu0 0
        %1751 = vmatpush2.bf16.msra.mxu0 0
        %1752 = vmatprep.subr.bf16.mxu0 0
        %1753 = vmatpush2.bf16.msra.mxu0 0
        %1754 = vmatprep.mubr.bf16.mxu0 0
        %1755 = vmatmul.mubr.bf16.gmra.mxu0 %v673
        %v1756 = vpop.f32.mrf.mxu0
        %v1757 = vadd.f32 0.0, %v1756
        %v1758 = vpop.f32.mrf.mxu0
        %v1759 = vadd.f32 0.0, %v1758
        %v1760 = vpop.f32.mrf.mxu0
        %v1761 = vpop.f32.mrf.mxu0
        %1762 = vdwg.mxu0
        %1763 = vmatprep.subr.bf16.mxu0 0
        %1764 = vmatpush1.bf16.msra.mxu0 0
        %1765 = vmatprep.subr.bf16.mxu0 0
        %1766 = vmatpush1.bf16.msra.mxu0 0
        %1767 = vmatprep.subr.bf16.mxu0 0
        %1768 = vmatpush1.bf16.msra.mxu0 0
        %1769 = vmatprep.subr.bf16.mxu0 0
        %1770 = vmatpush1.bf16.msra.mxu0 0
        %1771 = vmatprep.subr.bf16.mxu0 0
        %1772 = vmatpush1.bf16.msra.mxu0 0
        %1773 = vmatprep.subr.bf16.mxu0 %v1638
        %1774 = vmatpush1.bf16.msra.mxu0 %v1635
        %1775 = vmatprep.subr.bf16.mxu0 %v1591
        %1776 = vmatpush1.bf16.msra.mxu0 %v1590
        %1777 = vmatprep.subr.bf16.mxu0 %v1583
        %1778 = vmatpush1.bf16.msra.mxu0 %v1582
        %1779 = vmatprep.subr.bf16.mxu0 0
        %1780 = vmatpush2.bf16.msra.mxu0 0
        %1781 = vmatprep.subr.bf16.mxu0 0
        %1782 = vmatpush2.bf16.msra.mxu0 0
        %1783 = vmatprep.subr.bf16.mxu0 0
        %1784 = vmatpush2.bf16.msra.mxu0 0
        %1785 = vmatprep.subr.bf16.mxu0 0
        %1786 = vmatpush2.bf16.msra.mxu0 0
        %1787 = vmatprep.subr.bf16.mxu0 0
        %1788 = vmatpush2.bf16.msra.mxu0 0
        %1789 = vmatprep.subr.bf16.mxu0 0
        %1790 = vmatpush2.bf16.msra.mxu0 0
        %1791 = vmatprep.subr.bf16.mxu0 0
        %1792 = vmatpush2.bf16.msra.mxu0 0
        %1793 = vmatprep.subr.bf16.mxu0 0
        %1794 = vmatpush2.bf16.msra.mxu0 0
        %1795 = vmatprep.mubr.bf16.mxu0 0
        %1796 = vmatmul.mubr.bf16.gmra.mxu0 %v673
        %v1797 = vpop.f32.mrf.mxu0
        %v1798 = vadd.f32 0.0, %v1797
        %v1799 = vpop.f32.mrf.mxu0
        %v1800 = vadd.f32 0.0, %v1799
        %v1801 = vpop.f32.mrf.mxu0
        %v1802 = vpop.f32.mrf.mxu0
        %1803 = vdwg.mxu0
        %v1804 = vmax.f32 %v1488, %v1675
        %v1805 = vmax.f32 %v1489, %v1677
        %v1806 = vmax.f32 %v1490, %v1716
        %v1807 = vmax.f32 %v1491, %v1718
        %v1808 = vmax.f32 %v1492, %v1757
        %v1809 = vmax.f32 %v1493, %v1759
        %v1810 = vmax.f32 %v1494, %v1798
        %v1811 = vmax.f32 %v1495, %v1800
        %v1812 = vld [vmem:[%s5] sm:$0xff]
        %1814 = vset.pattern.permute.xlu0 0
        %1815 = vperm.xlu0 %1814, %v1812
        %v1816 = vpop.permute.xlu0 %1815
        %v1818 = vadd.f32 %v1804, %v1816
        %v1819 = vadd.f32 %v1805, %v1816
        %v1820 = vadd.f32 %v1806, %v1816
        %v1821 = vadd.f32 %v1807, %v1816
        %v1822 = vadd.f32 %v1808, %v1816
        %v1823 = vadd.f32 %v1809, %v1816
        %v1824 = vadd.f32 %v1810, %v1816
        %v1825 = vadd.f32 %v1811, %v1816
        %vm1826 = vcmp.ge.f32.partialorder %v1818, 0.0
        %vm1827 = vcmp.ge.f32.partialorder %v1819, 0.0
        %vm1828 = vcmp.ge.f32.partialorder %v1820, 0.0
        %vm1829 = vcmp.ge.f32.partialorder %v1821, 0.0
        %vm1830 = vcmp.ge.f32.partialorder %v1822, 0.0
        %vm1831 = vcmp.ge.f32.partialorder %v1823, 0.0
        %vm1832 = vcmp.ge.f32.partialorder %v1824, 0.0
        %vm1833 = vcmp.ge.f32.partialorder %v1825, 0.0
        %v1834 = vmul.f32 %v1818, 0.01
        %v1835 = vmul.f32 %v1819, 0.01
        %v1836 = vmul.f32 %v1820, 0.01
        %v1837 = vmul.f32 %v1821, 0.01
        %v1838 = vmul.f32 %v1822, 0.01
        %v1839 = vmul.f32 %v1823, 0.01
        %v1840 = vmul.f32 %v1824, 0.01
        %v1841 = vmul.f32 %v1825, 0.01
        %v1842 = vsel %vm1826, %v1818, %v1834
        %v1843 = vsel %vm1827, %v1819, %v1835
        %v1844 = vsel %vm1828, %v1820, %v1836
        %v1845 = vsel %vm1829, %v1821, %v1837
        %v1846 = vsel %vm1830, %v1822, %v1838
        %v1847 = vsel %vm1831, %v1823, %v1839
        %v1848 = vsel %vm1832, %v1824, %v1840
        %v1849 = vsel %vm1833, %v1825, %v1841
        %v1850 = vpack.c.bf16 %v1842, %v1842
        %v1851 = vpack.c.bf16 %v1843, %v1843
        %v1852 = vpack.c.bf16 %v1844, %v1844
        %v1853 = vpack.c.bf16 %v1845, %v1845
        %v1854 = vpack.c.bf16 %v1846, %v1846
        %v1855 = vpack.c.bf16 %v1847, %v1847
        %v1856 = vpack.c.bf16 %v1848, %v1848
        %v1857 = vpack.c.bf16 %v1849, %v1849
        %v1866 = vunpack.c.l.b16 %v1850
        %v1867 = vunpack.c.l.b16 %v1851
        %v1868 = vunpack.c.l.b16 %v1852
        %v1869 = vunpack.c.l.b16 %v1853
        %v1870 = vunpack.c.l.b16 %v1854
        %v1871 = vunpack.c.l.b16 %v1855
        %v1872 = vunpack.c.l.b16 %v1856
        %v1873 = vunpack.c.l.b16 %v1857
        %v1874 = vpack.c.b16 %v1867, %v1866
        %v1875 = vpack.c.b16 %v1869, %v1868
        %v1876 = vpack.c.b16 %v1871, %v1870
        %v1877 = vpack.c.b16 %v1873, %v1872
        %1882 = vst [vmem:[%s547] sm:$0xff] %v1874
        %1883 = vst [vmem:[%s547 + $0x8] sm:$0xff] %v1875
        %1884 = vst [vmem:[%s547 + $0x10] sm:$0xff] %v1876
        %1885 = vst [vmem:[%s547 + $0x18] sm:$0xff] %v1877
        %s1886 = smul.u32 8, %s17
        %p1887 = scmp.lt.s32.totalorder %s1886, 15
        %s1888 = scalar_select %p1887, %s1886, 15
        %s1889 = smul.addr %s1888, 4
        %s1890 = scalar_lea.vmem %s6, %s1889
        // Predicated region
        $region137: #{classifier_forward.7} parent=119 // pred_check
          %p1891 = pneg %p181
        $region138: #{classifier_forward.7} parent=119 // pred_check_branch
          %1893 = sbr.rel (%p1891) target = $region140
        $region139: #{classifier_forward.7} parent=119 // pred_region
          %s1894 = smul.u32 8, %s17
        $region140: #{classifier_forward.7} parent=119 // pred_fallthru
          _
      $region120: #{classifier_forward.7} parent=5 // pred_fallthru
        _
      %p1895 = scmp.le.s32.totalorder 2, %s12
      // Predicated region
      $region141: #{classifier_forward.7} parent=5 // pred_check
        %p1896 = pneg %p1895
      $region142: #{classifier_forward.7} parent=5 // pred_check_branch
        %1898 = sbr.rel (%p1896) target = $region144
      $region143: #{classifier_forward.7} parent=5 // pred_region
        %s1899 = ssub.s32 %s12, 2
        // Predicated region
        $region145: #{classifier_forward.7} parent=143 // pred_check
          %p1900 = pneg %p187
        $region146: #{classifier_forward.7} parent=143 // pred_check_branch
          %1902 = sbr.rel (%p1900) target = $region148
        $region147: #{classifier_forward.7} parent=143 // pred_region
          %s1903 = smul.u32 8, %s18
          %p1904 = scmp.lt.s32.totalorder %s1903, 15
          %s1905 = scalar_select %p1904, %s1903, 15
          %s1906 = smul.addr %s1905, 4
          %s1907 = scalar_lea.vmem %s6, %s1906
        $region148: #{classifier_forward.7} parent=143 // pred_fallthru
          _
      $region144: #{classifier_forward.7} parent=5 // pred_fallthru
        _
    $region6: #{classifier_forward.7} parent=1 // loop_footer
      %s16 = sadd.s32 1, %s12
    $region7: #{classifier_forward.7} parent=1 // loop_footer_branch
      %11 = sbr.rel target = $region3
    $region8: #{classifier_forward.7} parent=1 // loop_exit
      _

// kernel: classifier_forward.8
$region0: #{classifier_forward.8}
  #allocation0 [shape = 'u32[]', space=smem, size = 0x4, offset = 0x4, fixed_abs, tag = 'smem constant byte address 0x4 - core index']
  #allocation1 [shape = 'u32[144,128]{1,0:T(1,128)}', space=vmem, size = 0x12000, scoped, tag = 'internal scratch']
  %s0 = inlined_call_operand.vmem [shape: bf16[72,512], index: 0, kind: input, shape index: {}]
  %s1 = inlined_call_operand.vmem [shape: bf16[72,512], index: 1, kind: input, shape index: {}]
  %s2 = inlined_call_operand.vmem [shape: bf16[72,512], index: 2, kind: input, shape index: {}]
  %s3 = inlined_call_operand.vmem [shape: bf16[72,512], index: 3, kind: input, shape index: {}]
  %s4 = inlined_call_operand.vmem [shape: bf16[16,72], index: 4, kind: input, shape index: {}]
  %s5 = inlined_call_operand.vmem [shape: f32[16,1], index: 5, kind: input, shape index: {}]
  %s6 = inlined_call_operand.vmem [shape: bf16[16,512], index: 6, kind: output, shape index: {}]
  %s7 = sld [smem:[#allocation0]]
  $region243: #{classifier_forward.8} parent=0
    _
  %s9 = ssub.s32 1, %s7
  %s10 = scalar_select 0, %s9, %s7
  $region1: #{classifier_forward.8} parent=0
    #allocation2 [shape = 'u8[73728]{0}', space=vmem, size = 0x12000, scoped, tag = 'input window, operand 0']
    #allocation3 [shape = 'u8[73728]{0}', space=vmem, size = 0x12000, scoped, tag = 'input window, operand 1']
    #allocation4 [shape = 'u8[73728]{0}', space=vmem, size = 0x12000, scoped, tag = 'input window, operand 2']
    #allocation5 [shape = 'u8[73728]{0}', space=vmem, size = 0x12000, scoped, tag = 'input window, operand 3']
    #allocation6 [shape = 'u8[16384]{0}', space=vmem, size = 0x4000, scoped, tag = 'output window, operand 0']
    loop: start=0, step=1, limit=4
    $region2: #{classifier_forward.8} parent=1 // loop_pre_header
      _
    $region3: #{classifier_forward.8} parent=1 // loop_header
      %s12 = sphi 0, %s16
      %p13 = scmp.ge.s32.totalorder %s12, 4
      %s22 = sphi 0, %s24
      %s25 = sphi 0, %s22
      %s26 = sphi 0, %s25
      %s42 = sphi 0, %s26
      %s48 = sphi 0, %s50
      %s51 = sphi 0, %s48
      %s52 = sphi 0, %s51
      %s68 = sphi 0, %s52
      %s74 = sphi 0, %s76
      %s77 = sphi 0, %s74
      %s78 = sphi 0, %s77
      %s94 = sphi 0, %s78
      %s100 = sphi 0, %s102
      %s103 = sphi 0, %s100
      %s104 = sphi 0, %s103
      %s120 = sphi 0, %s104
      %s124 = sphi 0, %s124
      %s126 = sphi 0, %s124
      %s127 = sphi 0, %s126
      %s141 = sphi 0, %s127
      %s145 = sphi 0, %s145
      %s147 = sphi 0, %s145
      %s148 = sphi 0, %s147
      %s162 = sphi 0, %s148
      %s168 = sphi 0, %s170
      %s171 = sphi 0, %s168
      %s172 = sphi 0, %s171
      %s188 = sphi 0, %s172
    $region4: #{classifier_forward.8} parent=1 // loop_header_branch
      %15 = sbr.rel (%p13) target = $region8
    $region5: #{classifier_forward.8} parent=1 // loop_body
      %s17 = ssub.s32 %s12, 1
      %s18 = ssub.s32 %s12, 2
      %s19 = sadd.s32 %s12, 1
      %s20 = ssub.s32 %s12, %s19
      %p21 = scmp.eq.s32.totalorder %s20, 0
      %s23 = sadd.s32 %s22, 1
      %s24 = scalar_select %p21, %s22, %s23
      %p27 = pneg %p21
      %p28 = scmp.eq.s32.totalorder %s12, 1
      %p29 = por %p27, %p28
      %p30 = scmp.ne.s32.totalorder %s22, %s25
      %p31 = scmp.eq.s32.totalorder %s12, 0
      %p32 = por %p30, %p31
      %p33 = scmp.ne.s32.totalorder %s22, %s25
      %p34 = scmp.eq.s32.totalorder %s17, 1
      %p35 = por %p33, %p34
      %p36 = scmp.ne.s32.totalorder %s25, %s26
      %p37 = scmp.eq.s32.totalorder %s17, 0
      %p38 = por %p36, %p37
      %p39 = scmp.ne.s32.totalorder %s25, %s26
      %p40 = scmp.eq.s32.totalorder %s18, 1
      %p41 = por %p39, %p40
      %p43 = scmp.ne.s32.totalorder %s26, %s42
      %p44 = scmp.eq.s32.totalorder %s18, 0
      %p45 = por %p43, %p44
      %s46 = ssub.s32 %s12, %s19
      %p47 = scmp.eq.s32.totalorder %s46, 0
      %s49 = sadd.s32 %s48, 1
      %s50 = scalar_select %p47, %s48, %s49
      %p53 = pneg %p47
      %p54 = scmp.eq.s32.totalorder %s12, 1
      %p55 = por %p53, %p54
      %p56 = scmp.ne.s32.totalorder %s48, %s51
      %p57 = scmp.eq.s32.totalorder %s12, 0
      %p58 = por %p56, %p57
      %p59 = scmp.ne.s32.totalorder %s48, %s51
      %p60 = scmp.eq.s32.totalorder %s17, 1
      %p61 = por %p59, %p60
      %p62 = scmp.ne.s32.totalorder %s51, %s52
      %p63 = scmp.eq.s32.totalorder %s17, 0
      %p64 = por %p62, %p63
      %p65 = scmp.ne.s32.totalorder %s51, %s52
      %p66 = scmp.eq.s32.totalorder %s18, 1
      %p67 = por %p65, %p66
      %p69 = scmp.ne.s32.totalorder %s52, %s68
      %p70 = scmp.eq.s32.totalorder %s18, 0
      %p71 = por %p69, %p70
      %s72 = ssub.s32 %s12, %s19
      %p73 = scmp.eq.s32.totalorder %s72, 0
      %s75 = sadd.s32 %s74, 1
      %s76 = scalar_select %p73, %s74, %s75
      %p79 = pneg %p73
      %p80 = scmp.eq.s32.totalorder %s12, 1
      %p81 = por %p79, %p80
      %p82 = scmp.ne.s32.totalorder %s74, %s77
      %p83 = scmp.eq.s32.totalorder %s12, 0
      %p84 = por %p82, %p83
      %p85 = scmp.ne.s32.totalorder %s74, %s77
      %p86 = scmp.eq.s32.totalorder %s17, 1
      %p87 = por %p85, %p86
      %p88 = scmp.ne.s32.totalorder %s77, %s78
      %p89 = scmp.eq.s32.totalorder %s17, 0
      %p90 = por %p88, %p89
      %p91 = scmp.ne.s32.totalorder %s77, %s78
      %p92 = scmp.eq.s32.totalorder %s18, 1
      %p93 = por %p91, %p92
      %p95 = scmp.ne.s32.totalorder %s78, %s94
      %p96 = scmp.eq.s32.totalorder %s18, 0
      %p97 = por %p95, %p96
      %s98 = ssub.s32 %s12, %s19
      %p99 = scmp.eq.s32.totalorder %s98, 0
      %s101 = sadd.s32 %s100, 1
      %s102 = scalar_select %p99, %s100, %s101
      %p105 = pneg %p99
      %p106 = scmp.eq.s32.totalorder %s12, 1
      %p107 = por %p105, %p106
      %p108 = scmp.ne.s32.totalorder %s100, %s103
      %p109 = scmp.eq.s32.totalorder %s12, 0
      %p110 = por %p108, %p109
      %p111 = scmp.ne.s32.totalorder %s100, %s103
      %p112 = scmp.eq.s32.totalorder %s17, 1
      %p113 = por %p111, %p112
      %p114 = scmp.ne.s32.totalorder %s103, %s104
      %p115 = scmp.eq.s32.totalorder %s17, 0
      %p116 = por %p114, %p115
      %p117 = scmp.ne.s32.totalorder %s103, %s104
      %p118 = scmp.eq.s32.totalorder %s18, 1
      %p119 = por %p117, %p118
      %p121 = scmp.ne.s32.totalorder %s104, %s120
      %p122 = scmp.eq.s32.totalorder %s18, 0
      %p123 = por %p121, %p122
      %s125 = sadd.s32 %s124, 1
      %p128 = scmp.eq.s32.totalorder %s12, 1
      %p129 = scmp.ne.s32.totalorder %s124, %s126
      %p130 = scmp.eq.s32.totalorder %s12, 0
      %p131 = por %p129, %p130
      %p132 = scmp.ne.s32.totalorder %s124, %s126
      %p133 = scmp.eq.s32.totalorder %s17, 1
      %p134 = por %p132, %p133
      %p135 = scmp.ne.s32.totalorder %s126, %s127
      %p136 = scmp.eq.s32.totalorder %s17, 0
      %p137 = por %p135, %p136
      %p138 = scmp.ne.s32.totalorder %s126, %s127
      %p139 = scmp.eq.s32.totalorder %s18, 1
      %p140 = por %p138, %p139
      %p142 = scmp.ne.s32.totalorder %s127, %s141
      %p143 = scmp.eq.s32.totalorder %s18, 0
      %p144 = por %p142, %p143
      %s146 = sadd.s32 %s145, 1
      %p149 = scmp.eq.s32.totalorder %s12, 1
      %p150 = scmp.ne.s32.totalorder %s145, %s147
      %p151 = scmp.eq.s32.totalorder %s12, 0
      %p152 = por %p150, %p151
      %p153 = scmp.ne.s32.totalorder %s145, %s147
      %p154 = scmp.eq.s32.totalorder %s17, 1
      %p155 = por %p153, %p154
      %p156 = scmp.ne.s32.totalorder %s147, %s148
      %p157 = scmp.eq.s32.totalorder %s17, 0
      %p158 = por %p156, %p157
      %p159 = scmp.ne.s32.totalorder %s147, %s148
      %p160 = scmp.eq.s32.totalorder %s18, 1
      %p161 = por %p159, %p160
      %p163 = scmp.ne.s32.totalorder %s148, %s162
      %p164 = scmp.eq.s32.totalorder %s18, 0
      %p165 = por %p163, %p164
      %s166 = ssub.s32 %s12, %s19
      %p167 = scmp.eq.s32.totalorder %s166, 0
      %s169 = sadd.s32 %s168, 1
      %s170 = scalar_select %p167, %s168, %s169
      %p173 = pneg %p167
      %p174 = scmp.eq.s32.totalorder %s12, 1
      %p175 = por %p173, %p174
      %p176 = scmp.ne.s32.totalorder %s168, %s171
      %p177 = scmp.eq.s32.totalorder %s12, 0
      %p178 = por %p176, %p177
      %p179 = scmp.ne.s32.totalorder %s168, %s171
      %p180 = scmp.eq.s32.totalorder %s17, 1
      %p181 = por %p179, %p180
      %p182 = scmp.ne.s32.totalorder %s171, %s172
      %p183 = scmp.eq.s32.totalorder %s17, 0
      %p184 = por %p182, %p183
      %p185 = scmp.ne.s32.totalorder %s171, %s172
      %p186 = scmp.eq.s32.totalorder %s18, 1
      %p187 = por %p185, %p186
      %p189 = scmp.ne.s32.totalorder %s172, %s188
      %p190 = scmp.eq.s32.totalorder %s18, 0
      %p191 = por %p189, %p190
      %p192 = scmp.le.s32.totalorder 1, %s12
      %p193 = scmp.lt.s32.totalorder %s12, 3
      %p194 = pnand %p192, %p193
      %p195 = pneg %p194
      // Predicated region
      $region9: #{classifier_forward.8} parent=5 // pred_check
        _
      $region10: #{classifier_forward.8} parent=5 // pred_check_branch
        %197 = sbr.rel (%p194) target = $region12
      $region11: #{classifier_forward.8} parent=5 // pred_region
        %s198 = ssub.s32 %s12, 1
        // Predicated region
        $region13: #{classifier_forward.8} parent=11 // pred_check
          %p199 = pneg %p137
        $region14: #{classifier_forward.8} parent=11 // pred_check_branch
          %201 = sbr.rel (%p199) target = $region16
        $region15: #{classifier_forward.8} parent=11 // pred_region
          _
        $region16: #{classifier_forward.8} parent=11 // pred_fallthru
          _
        // Predicated region
        $region17: #{classifier_forward.8} parent=11 // pred_check
          %p202 = pneg %p158
        $region18: #{classifier_forward.8} parent=11 // pred_check_branch
          %204 = sbr.rel (%p202) target = $region20
        $region19: #{classifier_forward.8} parent=11 // pred_region
          _
        $region20: #{classifier_forward.8} parent=11 // pred_fallthru
          _
      $region12: #{classifier_forward.8} parent=5 // pred_fallthru
        _
      %p205 = scmp.lt.s32.totalorder %s12, 2
      // Predicated region
      $region21: #{classifier_forward.8} parent=5 // pred_check
        %p206 = pneg %p205
      $region22: #{classifier_forward.8} parent=5 // pred_check_branch
        %208 = sbr.rel (%p206) target = $region24
      $region23: #{classifier_forward.8} parent=5 // pred_region
        // Predicated region
        $region25: #{classifier_forward.8} parent=23 // pred_check
          %p209 = pneg %p32
        $region26: #{classifier_forward.8} parent=23 // pred_check_branch
          %211 = sbr.rel (%p209) target = $region28
        $region27: #{classifier_forward.8} parent=23 // pred_region
          %s212 = sand.u32 %s22, 1
          %s213 = sand.u32 %s22, 1
          %s214 = smul.addr %s213, 72
          %s215 = scalar_lea.vmem [#allocation2], %s214
          %s216 = smul.u32 2, %s12
          %s217 = smul.addr %s216, 4
          %s218 = scalar_lea.vmem %s0, %s217
          // Predicated region
          $region29: #{classifier_forward.8} parent=27 // pred_check
            _
          $region30: #{classifier_forward.8} parent=27 // pred_check_branch
            %220 = sbr.rel (0) target = $region32
          $region31: #{classifier_forward.8} parent=27 // pred_region
            // Predicated region
            $region33: #{classifier_forward.8} parent=31 // pred_check
              _
            $region34: #{classifier_forward.8} parent=31 // pred_check_branch
              %222 = sbr.rel (0) target = $region36
            $region35: #{classifier_forward.8} parent=31 // pred_region
              // Predicated region
              $region48: #{classifier_forward.8} parent=35 // pred_check
                _
              $region49: #{classifier_forward.8} parent=35 // pred_check_branch
                %254 = sbr.rel (0) target = $region51
              $region50: #{classifier_forward.8} parent=35 // pred_region
                loop: start=0, step=1, limit=1
                $region52: #{classifier_forward.8} parent=50 // loop_pre_header
                  _
                $region53: #{classifier_forward.8} parent=50 // loop_header
                  %s256 = sphi 0, %s260
                  %p257 = scmp.ge.s32.totalorder %s256, 1
                  %s261 = sphi %s218, %s218
                  %s262 = sphi %s215, %s215
                $region54: #{classifier_forward.8} parent=50 // loop_header_branch
                  %259 = sbr.rel (%p257) target = $region58
                $region55: #{classifier_forward.8} parent=50 // loop_body
                  %v263 = vld [vmem:[%s261] sm:$0xff]
                  %264 = vst [vmem:[%s262] sm:$0xff] %v263
                  %v265 = vld [vmem:[%s261 + $0x10] sm:$0xff]
                  %266 = vst [vmem:[%s262 + $0x8] sm:$0xff] %v265
                  %v267 = vld [vmem:[%s261 + $0x20] sm:$0xff]
                  %268 = vst [vmem:[%s262 + $0x10] sm:$0xff] %v267
                  %v269 = vld [vmem:[%s261 + $0x30] sm:$0xff]
                  %270 = vst [vmem:[%s262 + $0x18] sm:$0xff] %v269
                  %v271 = vld [vmem:[%s261 + $0x40] sm:$0xff]
                  %272 = vst [vmem:[%s262 + $0x20] sm:$0xff] %v271
                  %v273 = vld [vmem:[%s261 + $0x50] sm:$0xff]
                  %274 = vst [vmem:[%s262 + $0x28] sm:$0xff] %v273
                  %v275 = vld [vmem:[%s261 + $0x60] sm:$0xff]
                  %276 = vst [vmem:[%s262 + $0x30] sm:$0xff] %v275
                  %v277 = vld [vmem:[%s261 + $0x70] sm:$0xff]
                  %278 = vst [vmem:[%s262 + $0x38] sm:$0xff] %v277
                  %v279 = vld [vmem:[%s261 + $0x80] sm:$0xff]
                  %280 = vst [vmem:[%s262 + $0x40] sm:$0xff] %v279
                $region56: #{classifier_forward.8} parent=50 // loop_footer
                  %s260 = sadd.s32 1, %s256
                $region57: #{classifier_forward.8} parent=50 // loop_footer_branch
                  %255 = sbr.rel target = $region53
                $region58: #{classifier_forward.8} parent=50 // loop_exit
                  _
              $region51: #{classifier_forward.8} parent=35 // pred_fallthru
                _
              // Predicated region
              $region59: #{classifier_forward.8} parent=35 // pred_check
                _
              $region60: #{classifier_forward.8} parent=35 // pred_check_branch
                %282 = sbr.rel target = $region62
              $region61: #{classifier_forward.8} parent=35 // pred_region
                _
              $region62: #{classifier_forward.8} parent=35 // pred_fallthru
                _
            $region36: #{classifier_forward.8} parent=31 // pred_fallthru
              _
            // Predicated region
            $region37: #{classifier_forward.8} parent=31 // pred_check
              _
            $region38: #{classifier_forward.8} parent=31 // pred_check_branch
              %224 = sbr.rel target = $region40
            $region39: #{classifier_forward.8} parent=31 // pred_region
              %s226 = ssub.s32 256, 1
              loop: start=0, step=1, limit=1
              $region41: #{classifier_forward.8} parent=39 // loop_pre_header
                _
              $region42: #{classifier_forward.8} parent=39 // loop_header
                %s228 = sphi 0, %s232
                %p229 = scmp.ge.s32.totalorder %s228, 1
                %s233 = sphi %s218, %s218
                %s234 = sphi %s215, %s215
              $region43: #{classifier_forward.8} parent=39 // loop_header_branch
                %231 = sbr.rel (%p229) target = $region47
              $region44: #{classifier_forward.8} parent=39 // loop_body
                %v235 = vld [vmem:[%s233] sm:%s226]
                %236 = vst [vmem:[%s234] sm:%s226] %v235
                %v237 = vld [vmem:[%s233 + $0x10] sm:%s226]
                %238 = vst [vmem:[%s234 + $0x8] sm:%s226] %v237
                %v239 = vld [vmem:[%s233 + $0x20] sm:%s226]
                %240 = vst [vmem:[%s234 + $0x10] sm:%s226] %v239
                %v241 = vld [vmem:[%s233 + $0x30] sm:%s226]
                %242 = vst [vmem:[%s234 + $0x18] sm:%s226] %v241
                %v243 = vld [vmem:[%s233 + $0x40] sm:%s226]
                %244 = vst [vmem:[%s234 + $0x20] sm:%s226] %v243
                %v245 = vld [vmem:[%s233 + $0x50] sm:%s226]
                %246 = vst [vmem:[%s234 + $0x28] sm:%s226] %v245
                %v247 = vld [vmem:[%s233 + $0x60] sm:%s226]
                %248 = vst [vmem:[%s234 + $0x30] sm:%s226] %v247
                %v249 = vld [vmem:[%s233 + $0x70] sm:%s226]
                %250 = vst [vmem:[%s234 + $0x38] sm:%s226] %v249
                %v251 = vld [vmem:[%s233 + $0x80] sm:%s226]
                %252 = vst [vmem:[%s234 + $0x40] sm:%s226] %v251
              $region45: #{classifier_forward.8} parent=39 // loop_footer
                %s232 = sadd.s32 1, %s228
              $region46: #{classifier_forward.8} parent=39 // loop_footer_branch
                %227 = sbr.rel target = $region42
              $region47: #{classifier_forward.8} parent=39 // loop_exit
                _
            $region40: #{classifier_forward.8} parent=31 // pred_fallthru
              _
          $region32: #{classifier_forward.8} parent=27 // pred_fallthru
            _
          %283 = vnop
        $region28: #{classifier_forward.8} parent=23 // pred_fallthru
          _
        // Predicated region
        $region63: #{classifier_forward.8} parent=23 // pred_check
          %p284 = pneg %p58
        $region64: #{classifier_forward.8} parent=23 // pred_check_branch
          %286 = sbr.rel (%p284) target = $region66
        $region65: #{classifier_forward.8} parent=23 // pred_region
          %s287 = sand.u32 %s48, 1
          %s288 = sand.u32 %s48, 1
          %s289 = smul.addr %s288, 72
          %s290 = scalar_lea.vmem [#allocation3], %s289
          %s291 = smul.u32 2, %s12
          %s292 = smul.addr %s291, 4
          %s293 = scalar_lea.vmem %s1, %s292
          // Predicated region
          $region67: #{classifier_forward.8} parent=65 // pred_check
            _
          $region68: #{classifier_forward.8} parent=65 // pred_check_branch
            %295 = sbr.rel (0) target = $region70
          $region69: #{classifier_forward.8} parent=65 // pred_region
            // Predicated region
            $region71: #{classifier_forward.8} parent=69 // pred_check
              _
            $region72: #{classifier_forward.8} parent=69 // pred_check_branch
              %297 = sbr.rel (0) target = $region74
            $region73: #{classifier_forward.8} parent=69 // pred_region
              // Predicated region
              $region86: #{classifier_forward.8} parent=73 // pred_check
                _
              $region87: #{classifier_forward.8} parent=73 // pred_check_branch
                %329 = sbr.rel (0) target = $region89
              $region88: #{classifier_forward.8} parent=73 // pred_region
                loop: start=0, step=1, limit=1
                $region90: #{classifier_forward.8} parent=88 // loop_pre_header
                  _
                $region91: #{classifier_forward.8} parent=88 // loop_header
                  %s331 = sphi 0, %s335
                  %p332 = scmp.ge.s32.totalorder %s331, 1
                  %s336 = sphi %s293, %s293
                  %s337 = sphi %s290, %s290
                $region92: #{classifier_forward.8} parent=88 // loop_header_branch
                  %334 = sbr.rel (%p332) target = $region96
                $region93: #{classifier_forward.8} parent=88 // loop_body
                  %v338 = vld [vmem:[%s336] sm:$0xff]
                  %339 = vst [vmem:[%s337] sm:$0xff] %v338
                  %v340 = vld [vmem:[%s336 + $0x10] sm:$0xff]
                  %341 = vst [vmem:[%s337 + $0x8] sm:$0xff] %v340
                  %v342 = vld [vmem:[%s336 + $0x20] sm:$0xff]
                  %343 = vst [vmem:[%s337 + $0x10] sm:$0xff] %v342
                  %v344 = vld [vmem:[%s336 + $0x30] sm:$0xff]
                  %345 = vst [vmem:[%s337 + $0x18] sm:$0xff] %v344
                  %v346 = vld [vmem:[%s336 + $0x40] sm:$0xff]
                  %347 = vst [vmem:[%s337 + $0x20] sm:$0xff] %v346
                  %v348 = vld [vmem:[%s336 + $0x50] sm:$0xff]
                  %349 = vst [vmem:[%s337 + $0x28] sm:$0xff] %v348
                  %v350 = vld [vmem:[%s336 + $0x60] sm:$0xff]
                  %351 = vst [vmem:[%s337 + $0x30] sm:$0xff] %v350
                  %v352 = vld [vmem:[%s336 + $0x70] sm:$0xff]
                  %353 = vst [vmem:[%s337 + $0x38] sm:$0xff] %v352
                  %v354 = vld [vmem:[%s336 + $0x80] sm:$0xff]
                  %355 = vst [vmem:[%s337 + $0x40] sm:$0xff] %v354
                $region94: #{classifier_forward.8} parent=88 // loop_footer
                  %s335 = sadd.s32 1, %s331
                $region95: #{classifier_forward.8} parent=88 // loop_footer_branch
                  %330 = sbr.rel target = $region91
                $region96: #{classifier_forward.8} parent=88 // loop_exit
                  _
              $region89: #{classifier_forward.8} parent=73 // pred_fallthru
                _
              // Predicated region
              $region97: #{classifier_forward.8} parent=73 // pred_check
                _
              $region98: #{classifier_forward.8} parent=73 // pred_check_branch
                %357 = sbr.rel target = $region100
              $region99: #{classifier_forward.8} parent=73 // pred_region
                _
              $region100: #{classifier_forward.8} parent=73 // pred_fallthru
                _
            $region74: #{classifier_forward.8} parent=69 // pred_fallthru
              _
            // Predicated region
            $region75: #{classifier_forward.8} parent=69 // pred_check
              _
            $region76: #{classifier_forward.8} parent=69 // pred_check_branch
              %299 = sbr.rel target = $region78
            $region77: #{classifier_forward.8} parent=69 // pred_region
              %s301 = ssub.s32 256, 1
              loop: start=0, step=1, limit=1
              $region79: #{classifier_forward.8} parent=77 // loop_pre_header
                _
              $region80: #{classifier_forward.8} parent=77 // loop_header
                %s303 = sphi 0, %s307
                %p304 = scmp.ge.s32.totalorder %s303, 1
                %s308 = sphi %s293, %s293
                %s309 = sphi %s290, %s290
              $region81: #{classifier_forward.8} parent=77 // loop_header_branch
                %306 = sbr.rel (%p304) target = $region85
              $region82: #{classifier_forward.8} parent=77 // loop_body
                %v310 = vld [vmem:[%s308] sm:%s301]
                %311 = vst [vmem:[%s309] sm:%s301] %v310
                %v312 = vld [vmem:[%s308 + $0x10] sm:%s301]
                %313 = vst [vmem:[%s309 + $0x8] sm:%s301] %v312
                %v314 = vld [vmem:[%s308 + $0x20] sm:%s301]
                %315 = vst [vmem:[%s309 + $0x10] sm:%s301] %v314
                %v316 = vld [vmem:[%s308 + $0x30] sm:%s301]
                %317 = vst [vmem:[%s309 + $0x18] sm:%s301] %v316
                %v318 = vld [vmem:[%s308 + $0x40] sm:%s301]
                %319 = vst [vmem:[%s309 + $0x20] sm:%s301] %v318
                %v320 = vld [vmem:[%s308 + $0x50] sm:%s301]
                %321 = vst [vmem:[%s309 + $0x28] sm:%s301] %v320
                %v322 = vld [vmem:[%s308 + $0x60] sm:%s301]
                %323 = vst [vmem:[%s309 + $0x30] sm:%s301] %v322
                %v324 = vld [vmem:[%s308 + $0x70] sm:%s301]
                %325 = vst [vmem:[%s309 + $0x38] sm:%s301] %v324
                %v326 = vld [vmem:[%s308 + $0x80] sm:%s301]
                %327 = vst [vmem:[%s309 + $0x40] sm:%s301] %v326
              $region83: #{classifier_forward.8} parent=77 // loop_footer
                %s307 = sadd.s32 1, %s303
              $region84: #{classifier_forward.8} parent=77 // loop_footer_branch
                %302 = sbr.rel target = $region80
              $region85: #{classifier_forward.8} parent=77 // loop_exit
                _
            $region78: #{classifier_forward.8} parent=69 // pred_fallthru
              _
          $region70: #{classifier_forward.8} parent=65 // pred_fallthru
            _
          %358 = vnop
        $region66: #{classifier_forward.8} parent=23 // pred_fallthru
          _
        // Predicated region
        $region101: #{classifier_forward.8} parent=23 // pred_check
          %p359 = pneg %p84
        $region102: #{classifier_forward.8} parent=23 // pred_check_branch
          %361 = sbr.rel (%p359) target = $region104
        $region103: #{classifier_forward.8} parent=23 // pred_region
          %s362 = sand.u32 %s74, 1
          %s363 = sand.u32 %s74, 1
          %s364 = smul.addr %s363, 72
          %s365 = scalar_lea.vmem [#allocation4], %s364
          %s366 = smul.u32 2, %s12
          %s367 = smul.addr %s366, 4
          %s368 = scalar_lea.vmem %s2, %s367
          // Predicated region
          $region105: #{classifier_forward.8} parent=103 // pred_check
            _
          $region106: #{classifier_forward.8} parent=103 // pred_check_branch
            %370 = sbr.rel (0) target = $region108
          $region107: #{classifier_forward.8} parent=103 // pred_region
            // Predicated region
            $region109: #{classifier_forward.8} parent=107 // pred_check
              _
            $region110: #{classifier_forward.8} parent=107 // pred_check_branch
              %372 = sbr.rel (0) target = $region112
            $region111: #{classifier_forward.8} parent=107 // pred_region
              // Predicated region
              $region124: #{classifier_forward.8} parent=111 // pred_check
                _
              $region125: #{classifier_forward.8} parent=111 // pred_check_branch
                %404 = sbr.rel (0) target = $region127
              $region126: #{classifier_forward.8} parent=111 // pred_region
                loop: start=0, step=1, limit=1
                $region128: #{classifier_forward.8} parent=126 // loop_pre_header
                  _
                $region129: #{classifier_forward.8} parent=126 // loop_header
                  %s406 = sphi 0, %s410
                  %p407 = scmp.ge.s32.totalorder %s406, 1
                  %s411 = sphi %s368, %s368
                  %s412 = sphi %s365, %s365
                $region130: #{classifier_forward.8} parent=126 // loop_header_branch
                  %409 = sbr.rel (%p407) target = $region134
                $region131: #{classifier_forward.8} parent=126 // loop_body
                  %v413 = vld [vmem:[%s411] sm:$0xff]
                  %414 = vst [vmem:[%s412] sm:$0xff] %v413
                  %v415 = vld [vmem:[%s411 + $0x10] sm:$0xff]
                  %416 = vst [vmem:[%s412 + $0x8] sm:$0xff] %v415
                  %v417 = vld [vmem:[%s411 + $0x20] sm:$0xff]
                  %418 = vst [vmem:[%s412 + $0x10] sm:$0xff] %v417
                  %v419 = vld [vmem:[%s411 + $0x30] sm:$0xff]
                  %420 = vst [vmem:[%s412 + $0x18] sm:$0xff] %v419
                  %v421 = vld [vmem:[%s411 + $0x40] sm:$0xff]
                  %422 = vst [vmem:[%s412 + $0x20] sm:$0xff] %v421
                  %v423 = vld [vmem:[%s411 + $0x50] sm:$0xff]
                  %424 = vst [vmem:[%s412 + $0x28] sm:$0xff] %v423
                  %v425 = vld [vmem:[%s411 + $0x60] sm:$0xff]
                  %426 = vst [vmem:[%s412 + $0x30] sm:$0xff] %v425
                  %v427 = vld [vmem:[%s411 + $0x70] sm:$0xff]
                  %428 = vst [vmem:[%s412 + $0x38] sm:$0xff] %v427
                  %v429 = vld [vmem:[%s411 + $0x80] sm:$0xff]
                  %430 = vst [vmem:[%s412 + $0x40] sm:$0xff] %v429
                $region132: #{classifier_forward.8} parent=126 // loop_footer
                  %s410 = sadd.s32 1, %s406
                $region133: #{classifier_forward.8} parent=126 // loop_footer_branch
                  %405 = sbr.rel target = $region129
                $region134: #{classifier_forward.8} parent=126 // loop_exit
                  _
              $region127: #{classifier_forward.8} parent=111 // pred_fallthru
                _
              // Predicated region
              $region135: #{classifier_forward.8} parent=111 // pred_check
                _
              $region136: #{classifier_forward.8} parent=111 // pred_check_branch
                %432 = sbr.rel target = $region138
              $region137: #{classifier_forward.8} parent=111 // pred_region
                _
              $region138: #{classifier_forward.8} parent=111 // pred_fallthru
                _
            $region112: #{classifier_forward.8} parent=107 // pred_fallthru
              _
            // Predicated region
            $region113: #{classifier_forward.8} parent=107 // pred_check
              _
            $region114: #{classifier_forward.8} parent=107 // pred_check_branch
              %374 = sbr.rel target = $region116
            $region115: #{classifier_forward.8} parent=107 // pred_region
              %s376 = ssub.s32 256, 1
              loop: start=0, step=1, limit=1
              $region117: #{classifier_forward.8} parent=115 // loop_pre_header
                _
              $region118: #{classifier_forward.8} parent=115 // loop_header
                %s378 = sphi 0, %s382
                %p379 = scmp.ge.s32.totalorder %s378, 1
                %s383 = sphi %s368, %s368
                %s384 = sphi %s365, %s365
              $region119: #{classifier_forward.8} parent=115 // loop_header_branch
                %381 = sbr.rel (%p379) target = $region123
              $region120: #{classifier_forward.8} parent=115 // loop_body
                %v385 = vld [vmem:[%s383] sm:%s376]
                %386 = vst [vmem:[%s384] sm:%s376] %v385
                %v387 = vld [vmem:[%s383 + $0x10] sm:%s376]
                %388 = vst [vmem:[%s384 + $0x8] sm:%s376] %v387
                %v389 = vld [vmem:[%s383 + $0x20] sm:%s376]
                %390 = vst [vmem:[%s384 + $0x10] sm:%s376] %v389
                %v391 = vld [vmem:[%s383 + $0x30] sm:%s376]
                %392 = vst [vmem:[%s384 + $0x18] sm:%s376] %v391
                %v393 = vld [vmem:[%s383 + $0x40] sm:%s376]
                %394 = vst [vmem:[%s384 + $0x20] sm:%s376] %v393
                %v395 = vld [vmem:[%s383 + $0x50] sm:%s376]
                %396 = vst [vmem:[%s384 + $0x28] sm:%s376] %v395
                %v397 = vld [vmem:[%s383 + $0x60] sm:%s376]
                %398 = vst [vmem:[%s384 + $0x30] sm:%s376] %v397
                %v399 = vld [vmem:[%s383 + $0x70] sm:%s376]
                %400 = vst [vmem:[%s384 + $0x38] sm:%s376] %v399
                %v401 = vld [vmem:[%s383 + $0x80] sm:%s376]
                %402 = vst [vmem:[%s384 + $0x40] sm:%s376] %v401
              $region121: #{classifier_forward.8} parent=115 // loop_footer
                %s382 = sadd.s32 1, %s378
              $region122: #{classifier_forward.8} parent=115 // loop_footer_branch
                %377 = sbr.rel target = $region118
              $region123: #{classifier_forward.8} parent=115 // loop_exit
                _
            $region116: #{classifier_forward.8} parent=107 // pred_fallthru
              _
          $region108: #{classifier_forward.8} parent=103 // pred_fallthru
            _
          %433 = vnop
        $region104: #{classifier_forward.8} parent=23 // pred_fallthru
          _
        // Predicated region
        $region139: #{classifier_forward.8} parent=23 // pred_check
          %p434 = pneg %p110
        $region140: #{classifier_forward.8} parent=23 // pred_check_branch
          %436 = sbr.rel (%p434) target = $region142
        $region141: #{classifier_forward.8} parent=23 // pred_region
          %s437 = sand.u32 %s100, 1
          %s438 = sand.u32 %s100, 1
          %s439 = smul.addr %s438, 72
          %s440 = scalar_lea.vmem [#allocation5], %s439
          %s441 = smul.u32 2, %s12
          %s442 = smul.addr %s441, 4
          %s443 = scalar_lea.vmem %s3, %s442
          // Predicated region
          $region143: #{classifier_forward.8} parent=141 // pred_check
            _
          $region144: #{classifier_forward.8} parent=141 // pred_check_branch
            %445 = sbr.rel (0) target = $region146
          $region145: #{classifier_forward.8} parent=141 // pred_region
            // Predicated region
            $region147: #{classifier_forward.8} parent=145 // pred_check
              _
            $region148: #{classifier_forward.8} parent=145 // pred_check_branch
              %447 = sbr.rel (0) target = $region150
            $region149: #{classifier_forward.8} parent=145 // pred_region
              // Predicated region
              $region162: #{classifier_forward.8} parent=149 // pred_check
                _
              $region163: #{classifier_forward.8} parent=149 // pred_check_branch
                %479 = sbr.rel (0) target = $region165
              $region164: #{classifier_forward.8} parent=149 // pred_region
                loop: start=0, step=1, limit=1
                $region166: #{classifier_forward.8} parent=164 // loop_pre_header
                  _
                $region167: #{classifier_forward.8} parent=164 // loop_header
                  %s481 = sphi 0, %s485
                  %p482 = scmp.ge.s32.totalorder %s481, 1
                  %s486 = sphi %s443, %s443
                  %s487 = sphi %s440, %s440
                $region168: #{classifier_forward.8} parent=164 // loop_header_branch
                  %484 = sbr.rel (%p482) target = $region172
                $region169: #{classifier_forward.8} parent=164 // loop_body
                  %v488 = vld [vmem:[%s486] sm:$0xff]
                  %489 = vst [vmem:[%s487] sm:$0xff] %v488
                  %v490 = vld [vmem:[%s486 + $0x10] sm:$0xff]
                  %491 = vst [vmem:[%s487 + $0x8] sm:$0xff] %v490
                  %v492 = vld [vmem:[%s486 + $0x20] sm:$0xff]
                  %493 = vst [vmem:[%s487 + $0x10] sm:$0xff] %v492
                  %v494 = vld [vmem:[%s486 + $0x30] sm:$0xff]
                  %495 = vst [vmem:[%s487 + $0x18] sm:$0xff] %v494
                  %v496 = vld [vmem:[%s486 + $0x40] sm:$0xff]
                  %497 = vst [vmem:[%s487 + $0x20] sm:$0xff] %v496
                  %v498 = vld [vmem:[%s486 + $0x50] sm:$0xff]
                  %499 = vst [vmem:[%s487 + $0x28] sm:$0xff] %v498
                  %v500 = vld [vmem:[%s486 + $0x60] sm:$0xff]
                  %501 = vst [vmem:[%s487 + $0x30] sm:$0xff] %v500
                  %v502 = vld [vmem:[%s486 + $0x70] sm:$0xff]
                  %503 = vst [vmem:[%s487 + $0x38] sm:$0xff] %v502
                  %v504 = vld [vmem:[%s486 + $0x80] sm:$0xff]
                  %505 = vst [vmem:[%s487 + $0x40] sm:$0xff] %v504
                $region170: #{classifier_forward.8} parent=164 // loop_footer
                  %s485 = sadd.s32 1, %s481
                $region171: #{classifier_forward.8} parent=164 // loop_footer_branch
                  %480 = sbr.rel target = $region167
                $region172: #{classifier_forward.8} parent=164 // loop_exit
                  _
              $region165: #{classifier_forward.8} parent=149 // pred_fallthru
                _
              // Predicated region
              $region173: #{classifier_forward.8} parent=149 // pred_check
                _
              $region174: #{classifier_forward.8} parent=149 // pred_check_branch
                %507 = sbr.rel target = $region176
              $region175: #{classifier_forward.8} parent=149 // pred_region
                _
              $region176: #{classifier_forward.8} parent=149 // pred_fallthru
                _
            $region150: #{classifier_forward.8} parent=145 // pred_fallthru
              _
            // Predicated region
            $region151: #{classifier_forward.8} parent=145 // pred_check
              _
            $region152: #{classifier_forward.8} parent=145 // pred_check_branch
              %449 = sbr.rel target = $region154
            $region153: #{classifier_forward.8} parent=145 // pred_region
              %s451 = ssub.s32 256, 1
              loop: start=0, step=1, limit=1
              $region155: #{classifier_forward.8} parent=153 // loop_pre_header
                _
              $region156: #{classifier_forward.8} parent=153 // loop_header
                %s453 = sphi 0, %s457
                %p454 = scmp.ge.s32.totalorder %s453, 1
                %s458 = sphi %s443, %s443
                %s459 = sphi %s440, %s440
              $region157: #{classifier_forward.8} parent=153 // loop_header_branch
                %456 = sbr.rel (%p454) target = $region161
              $region158: #{classifier_forward.8} parent=153 // loop_body
                %v460 = vld [vmem:[%s458] sm:%s451]
                %461 = vst [vmem:[%s459] sm:%s451] %v460
                %v462 = vld [vmem:[%s458 + $0x10] sm:%s451]
                %463 = vst [vmem:[%s459 + $0x8] sm:%s451] %v462
                %v464 = vld [vmem:[%s458 + $0x20] sm:%s451]
                %465 = vst [vmem:[%s459 + $0x10] sm:%s451] %v464
                %v466 = vld [vmem:[%s458 + $0x30] sm:%s451]
                %467 = vst [vmem:[%s459 + $0x18] sm:%s451] %v466
                %v468 = vld [vmem:[%s458 + $0x40] sm:%s451]
                %469 = vst [vmem:[%s459 + $0x20] sm:%s451] %v468
                %v470 = vld [vmem:[%s458 + $0x50] sm:%s451]
                %471 = vst [vmem:[%s459 + $0x28] sm:%s451] %v470
                %v472 = vld [vmem:[%s458 + $0x60] sm:%s451]
                %473 = vst [vmem:[%s459 + $0x30] sm:%s451] %v472
                %v474 = vld [vmem:[%s458 + $0x70] sm:%s451]
                %475 = vst [vmem:[%s459 + $0x38] sm:%s451] %v474
                %v476 = vld [vmem:[%s458 + $0x80] sm:%s451]
                %477 = vst [vmem:[%s459 + $0x40] sm:%s451] %v476
              $region159: #{classifier_forward.8} parent=153 // loop_footer
                %s457 = sadd.s32 1, %s453
              $region160: #{classifier_forward.8} parent=153 // loop_footer_branch
                %452 = sbr.rel target = $region156
              $region161: #{classifier_forward.8} parent=153 // loop_exit
                _
            $region154: #{classifier_forward.8} parent=145 // pred_fallthru
              _
          $region146: #{classifier_forward.8} parent=141 // pred_fallthru
            _
          %508 = vnop
        $region142: #{classifier_forward.8} parent=23 // pred_fallthru
          _
      $region24: #{classifier_forward.8} parent=5 // pred_fallthru
        _
      %p509 = scmp.le.s32.totalorder 1, %s12
      %p510 = scmp.lt.s32.totalorder %s12, 3
      %p511 = pnand %p509, %p510
      %p512 = pneg %p511
      // Predicated region
      $region177: #{classifier_forward.8} parent=5 // pred_check
        _
      $region178: #{classifier_forward.8} parent=5 // pred_check_branch
        %514 = sbr.rel (%p511) target = $region180
      $region179: #{classifier_forward.8} parent=5 // pred_region
        %s515 = ssub.s32 %s12, 1
        %s516 = sand.u32 %s25, 1
        %s517 = sand.u32 %s25, 1
        %s518 = smul.addr %s517, 72
        %s519 = scalar_lea.vmem [#allocation2], %s518
        // Predicated region
        $region181: #{classifier_forward.8} parent=179 // pred_check
          %p520 = pneg %p38
        $region182: #{classifier_forward.8} parent=179 // pred_check_branch
          %522 = sbr.rel (%p520) target = $region184
        $region183: #{classifier_forward.8} parent=179 // pred_region
          _
        $region184: #{classifier_forward.8} parent=179 // pred_fallthru
          _
        %s523 = sand.u32 %s51, 1
        %s524 = sand.u32 %s51, 1
        %s525 = smul.addr %s524, 72
        %s526 = scalar_lea.vmem [#allocation3], %s525
        // Predicated region
        $region185: #{classifier_forward.8} parent=179 // pred_check
          %p527 = pneg %p64
        $region186: #{classifier_forward.8} parent=179 // pred_check_branch
          %529 = sbr.rel (%p527) target = $region188
        $region187: #{classifier_forward.8} parent=179 // pred_region
          _
        $region188: #{classifier_forward.8} parent=179 // pred_fallthru
          _
        %s530 = sand.u32 %s77, 1
        %s531 = sand.u32 %s77, 1
        %s532 = smul.addr %s531, 72
        %s533 = scalar_lea.vmem [#allocation4], %s532
        // Predicated region
        $region189: #{classifier_forward.8} parent=179 // pred_check
          %p534 = pneg %p90
        $region190: #{classifier_forward.8} parent=179 // pred_check_branch
          %536 = sbr.rel (%p534) target = $region192
        $region191: #{classifier_forward.8} parent=179 // pred_region
          _
        $region192: #{classifier_forward.8} parent=179 // pred_fallthru
          _
        %s537 = sand.u32 %s103, 1
        %s538 = sand.u32 %s103, 1
        %s539 = smul.addr %s538, 72
        %s540 = scalar_lea.vmem [#allocation5], %s539
        // Predicated region
        $region193: #{classifier_forward.8} parent=179 // pred_check
          %p541 = pneg %p116
        $region194: #{classifier_forward.8} parent=179 // pred_check_branch
          %543 = sbr.rel (%p541) target = $region196
        $region195: #{classifier_forward.8} parent=179 // pred_region
          _
        $region196: #{classifier_forward.8} parent=179 // pred_fallthru
          _
        %s544 = sand.u32 %s25, 1
        %s545 = sand.u32 %s25, 1
        %s546 = smul.addr %s545, 72
        %s547 = scalar_lea.vmem [#allocation2], %s546
        %p548 = pneg %p38
        %p549 = pneg %p35
        %s550 = sand.u32 %s51, 1
        %s551 = sand.u32 %s51, 1
        %s552 = smul.addr %s551, 72
        %s553 = scalar_lea.vmem [#allocation3], %s552
        %p554 = pneg %p64
        %p555 = pneg %p61
        %s556 = sand.u32 %s77, 1
        %s557 = sand.u32 %s77, 1
        %s558 = smul.addr %s557, 72
        %s559 = scalar_lea.vmem [#allocation4], %s558
        %p560 = pneg %p90
        %p561 = pneg %p87
        %s562 = sand.u32 %s103, 1
        %s563 = sand.u32 %s103, 1
        %s564 = smul.addr %s563, 72
        %s565 = scalar_lea.vmem [#allocation5], %s564
        %p566 = pneg %p116
        %p567 = pneg %p113
        %p568 = pneg %p137
        %p569 = pneg %p134
        %p570 = pneg %p158
        %p571 = pneg %p155
        %p572 = pneg %p184
        %p573 = pneg %p181
        %s574 = sand.u32 %s171, 1
        %s575 = sand.u32 %s171, 1
        %s576 = smul.addr %s575, 16
        %s577 = scalar_lea.vmem [#allocation6], %s576
        %s578 = smul.u32 2, %s17
        %s579 = smul.u32 2, %s17
        %s580 = smul.u32 2, %s17
        %s581 = smul.u32 2, %s17
        %s582 = smul.u32 2, %s17
        %v584 = vld [vmem:[%s4] sm:$0xf]
        %v585 = vld [vmem:[%s4 + $0x4] sm:$0xf]
        %v586 = vld [vmem:[%s519] sm:$0xff]
        %v587 = vld [vmem:[%s519 + $0x8] sm:$0xff]
        %v588 = vld [vmem:[%s519 + $0x10] sm:$0xff]
        %v589 = vld [vmem:[%s519 + $0x18] sm:$0xff]
        %v590 = vld [vmem:[%s519 + $0x20] sm:$0xff]
        %v591 = vld [vmem:[%s519 + $0x28] sm:$0xff]
        %v592 = vld [vmem:[%s519 + $0x30] sm:$0xff]
        %v593 = vld [vmem:[%s519 + $0x38] sm:$0xff]
        %v594 = vld [vmem:[%s519 + $0x40] sm:$0xff]
        %v597 = vunpack.c.l.b16 %v584
        %v598 = vunpack.c.l.b16 %v585
        %v599 = vpack.c.b16 %v598, %v597
        %v609 = vunpack.c.l.b16 %v586
        %v610 = vunpack.c.h.b16 %v586
        %v611 = vunpack.c.l.b16 %v587
        %v612 = vunpack.c.h.b16 %v587
        %v613 = vunpack.c.l.b16 %v588
        %v614 = vunpack.c.h.b16 %v588
        %v615 = vunpack.c.l.b16 %v589
        %v616 = vunpack.c.h.b16 %v589
        %v617 = vunpack.c.l.b16 %v590
        %v618 = vunpack.c.h.b16 %v590
        %v619 = vunpack.c.l.b16 %v591
        %v620 = vunpack.c.h.b16 %v591
        %v621 = vunpack.c.l.b16 %v592
        %v622 = vunpack.c.h.b16 %v592
        %v623 = vunpack.c.l.b16 %v593
        %v624 = vunpack.c.h.b16 %v593
        %v625 = vunpack.c.l.b16 %v594
        %v626 = vunpack.c.h.b16 %v594
        %v627 = vpack.c.b16 %v611, %v609
        %v628 = vpack.c.b16 %v612, %v610
        %v629 = vpack.c.b16 %v615, %v613
        %v630 = vpack.c.b16 %v616, %v614
        %v631 = vpack.c.b16 %v619, %v617
        %v632 = vpack.c.b16 %v620, %v618
        %v633 = vpack.c.b16 %v623, %v621
        %v634 = vpack.c.b16 %v624, %v622
        %v635 = vpack.c.b16 %v625, %v625
        %v636 = vpack.c.b16 %v626, %v626
        %vm645 = vcmask 588800
        %v647 = vsel %vm645, %v599, 0
        %vm649 = vcmask 1043456
        %v651 = vsel %vm649, %v635, 0
        %v654 = vsel %vm649, %v636, 0
        %656 = vmatprep.subr.bf16.mxu0 0
        %657 = vmatpush1.bf16.msra.mxu0 0
        %658 = vmatprep.subr.bf16.mxu0 0
        %659 = vmatpush1.bf16.msra.mxu0 0
        %660 = vmatprep.subr.bf16.mxu0 0
        %661 = vmatpush1.bf16.msra.mxu0 0
        %662 = vmatprep.subr.bf16.mxu0 %v654
        %663 = vmatpush1.bf16.msra.mxu0 %v651
        %664 = vmatprep.subr.bf16.mxu0 %v634
        %665 = vmatpush1.bf16.msra.mxu0 %v633
        %666 = vmatprep.subr.bf16.mxu0 %v632
        %667 = vmatpush1.bf16.msra.mxu0 %v631
        %668 = vmatprep.subr.bf16.mxu0 %v630
        %669 = vmatpush1.bf16.msra.mxu0 %v629
        %670 = vmatprep.subr.bf16.mxu0 %v628
        %671 = vmatpush1.bf16.msra.mxu0 %v627
        %672 = vmatprep.subr.bf16.mxu0 0
        %673 = vmatpush2.bf16.msra.mxu0 0
        %674 = vmatprep.subr.bf16.mxu0 0
        %675 = vmatpush2.bf16.msra.mxu0 0
        %676 = vmatprep.subr.bf16.mxu0 0
        %677 = vmatpush2.bf16.msra.mxu0 0
        %678 = vmatprep.subr.bf16.mxu0 0
        %679 = vmatpush2.bf16.msra.mxu0 0
        %680 = vmatprep.subr.bf16.mxu0 0
        %681 = vmatpush2.bf16.msra.mxu0 0
        %682 = vmatprep.subr.bf16.mxu0 0
        %683 = vmatpush2.bf16.msra.mxu0 0
        %684 = vmatprep.subr.bf16.mxu0 0
        %685 = vmatpush2.bf16.msra.mxu0 0
        %686 = vmatprep.subr.bf16.mxu0 0
        %687 = vmatpush2.bf16.msra.mxu0 0
        %688 = vmatprep.mubr.bf16.mxu0 0
        %689 = vmatmul.mubr.bf16.gmra.mxu0 %v647
        %v690 = vpop.f32.mrf.mxu0
        %v691 = vadd.f32 0.0, %v690
        %v692 = vpop.f32.mrf.mxu0
        %v693 = vadd.f32 0.0, %v692
        %v694 = vpop.f32.mrf.mxu0
        %v695 = vadd.f32 0.0, %v694
        %v696 = vpop.f32.mrf.mxu0
        %v697 = vadd.f32 0.0, %v696
        %698 = vdwg.mxu0
        %v699 = vld [vmem:[%s526] sm:$0xff]
        %v700 = vld [vmem:[%s526 + $0x8] sm:$0xff]
        %v701 = vld [vmem:[%s526 + $0x10] sm:$0xff]
        %v702 = vld [vmem:[%s526 + $0x18] sm:$0xff]
        %v703 = vld [vmem:[%s526 + $0x20] sm:$0xff]
        %v704 = vld [vmem:[%s526 + $0x28] sm:$0xff]
        %v705 = vld [vmem:[%s526 + $0x30] sm:$0xff]
        %v706 = vld [vmem:[%s526 + $0x38] sm:$0xff]
        %v707 = vld [vmem:[%s526 + $0x40] sm:$0xff]
        %v717 = vunpack.c.l.b16 %v699
        %v718 = vunpack.c.h.b16 %v699
        %v719 = vunpack.c.l.b16 %v700
        %v720 = vunpack.c.h.b16 %v700
        %v721 = vunpack.c.l.b16 %v701
        %v722 = vunpack.c.h.b16 %v701
        %v723 = vunpack.c.l.b16 %v702
        %v724 = vunpack.c.h.b16 %v702
        %v725 = vunpack.c.l.b16 %v703
        %v726 = vunpack.c.h.b16 %v703
        %v727 = vunpack.c.l.b16 %v704
        %v728 = vunpack.c.h.b16 %v704
        %v729 = vunpack.c.l.b16 %v705
        %v730 = vunpack.c.h.b16 %v705
        %v731 = vunpack.c.l.b16 %v706
        %v732 = vunpack.c.h.b16 %v706
        %v733 = vunpack.c.l.b16 %v707
        %v734 = vunpack.c.h.b16 %v707
        %v735 = vpack.c.b16 %v719, %v717
        %v736 = vpack.c.b16 %v720, %v718
        %v737 = vpack.c.b16 %v723, %v721
        %v738 = vpack.c.b16 %v724, %v722
        %v739 = vpack.c.b16 %v727, %v725
        %v740 = vpack.c.b16 %v728, %v726
        %v741 = vpack.c.b16 %v731, %v729
        %v742 = vpack.c.b16 %v732, %v730
        %v743 = vpack.c.b16 %v733, %v733
        %v744 = vpack.c.b16 %v734, %v734
        %v754 = vsel %vm649, %v743, 0
        %v757 = vsel %vm649, %v744, 0
        %759 = vmatprep.subr.bf16.mxu0 0
        %760 = vmatpush1.bf16.msra.mxu0 0
        %761 = vmatprep.subr.bf16.mxu0 0
        %762 = vmatpush1.bf16.msra.mxu0 0
        %763 = vmatprep.subr.bf16.mxu0 0
        %764 = vmatpush1.bf16.msra.mxu0 0
        %765 = vmatprep.subr.bf16.mxu0 %v757
        %766 = vmatpush1.bf16.msra.mxu0 %v754
        %767 = vmatprep.subr.bf16.mxu0 %v742
        %768 = vmatpush1.bf16.msra.mxu0 %v741
        %769 = vmatprep.subr.bf16.mxu0 %v740
        %770 = vmatpush1.bf16.msra.mxu0 %v739
        %771 = vmatprep.subr.bf16.mxu0 %v738
        %772 = vmatpush1.bf16.msra.mxu0 %v737
        %773 = vmatprep.subr.bf16.mxu0 %v736
        %774 = vmatpush1.bf16.msra.mxu0 %v735
        %775 = vmatprep.subr.bf16.mxu0 0
        %776 = vmatpush2.bf16.msra.mxu0 0
        %777 = vmatprep.subr.bf16.mxu0 0
        %778 = vmatpush2.bf16.msra.mxu0 0
        %779 = vmatprep.subr.bf16.mxu0 0
        %780 = vmatpush2.bf16.msra.mxu0 0
        %781 = vmatprep.subr.bf16.mxu0 0
        %782 = vmatpush2.bf16.msra.mxu0 0
        %783 = vmatprep.subr.bf16.mxu0 0
        %784 = vmatpush2.bf16.msra.mxu0 0
        %785 = vmatprep.subr.bf16.mxu0 0
        %786 = vmatpush2.bf16.msra.mxu0 0
        %787 = vmatprep.subr.bf16.mxu0 0
        %788 = vmatpush2.bf16.msra.mxu0 0
        %789 = vmatprep.subr.bf16.mxu0 0
        %790 = vmatpush2.bf16.msra.mxu0 0
        %791 = vmatprep.mubr.bf16.mxu0 0
        %792 = vmatmul.mubr.bf16.gmra.mxu0 %v647
        %v793 = vpop.f32.mrf.mxu0
        %v794 = vadd.f32 0.0, %v793
        %v795 = vpop.f32.mrf.mxu0
        %v796 = vadd.f32 0.0, %v795
        %v797 = vpop.f32.mrf.mxu0
        %v798 = vadd.f32 0.0, %v797
        %v799 = vpop.f32.mrf.mxu0
        %v800 = vadd.f32 0.0, %v799
        %801 = vdwg.mxu0
        %v802 = vmax.f32 %v691, %v794
        %v803 = vmax.f32 %v693, %v796
        %v804 = vmax.f32 %v695, %v798
        %v805 = vmax.f32 %v697, %v800
        %v806 = vld [vmem:[%s533] sm:$0xff]
        %v807 = vld [vmem:[%s533 + $0x8] sm:$0xff]
        %v808 = vld [vmem:[%s533 + $0x10] sm:$0xff]
        %v809 = vld [vmem:[%s533 + $0x18] sm:$0xff]
        %v810 = vld [vmem:[%s533 + $0x20] sm:$0xff]
        %v811 = vld [vmem:[%s533 + $0x28] sm:$0xff]
        %v812 = vld [vmem:[%s533 + $0x30] sm:$0xff]
        %v813 = vld [vmem:[%s533 + $0x38] sm:$0xff]
        %v814 = vld [vmem:[%s533 + $0x40] sm:$0xff]
        %v824 = vunpack.c.l.b16 %v806
        %v825 = vunpack.c.h.b16 %v806
        %v826 = vunpack.c.l.b16 %v807
        %v827 = vunpack.c.h.b16 %v807
        %v828 = vunpack.c.l.b16 %v808
        %v829 = vunpack.c.h.b16 %v808
        %v830 = vunpack.c.l.b16 %v809
        %v831 = vunpack.c.h.b16 %v809
        %v832 = vunpack.c.l.b16 %v810
        %v833 = vunpack.c.h.b16 %v810
        %v834 = vunpack.c.l.b16 %v811
        %v835 = vunpack.c.h.b16 %v811
        %v836 = vunpack.c.l.b16 %v812
        %v837 = vunpack.c.h.b16 %v812
        %v838 = vunpack.c.l.b16 %v813
        %v839 = vunpack.c.h.b16 %v813
        %v840 = vunpack.c.l.b16 %v814
        %v841 = vunpack.c.h.b16 %v814
        %v842 = vpack.c.b16 %v826, %v824
        %v843 = vpack.c.b16 %v827, %v825
        %v844 = vpack.c.b16 %v830, %v828
        %v845 = vpack.c.b16 %v831, %v829
        %v846 = vpack.c.b16 %v834, %v832
        %v847 = vpack.c.b16 %v835, %v833
        %v848 = vpack.c.b16 %v838, %v836
        %v849 = vpack.c.b16 %v839, %v837
        %v850 = vpack.c.b16 %v840, %v840
        %v851 = vpack.c.b16 %v841, %v841
        %v861 = vsel %vm649, %v850, 0
        %v864 = vsel %vm649, %v851, 0
        %866 = vmatprep.subr.bf16.mxu0 0
        %867 = vmatpush1.bf16.msra.mxu0 0
        %868 = vmatprep.subr.bf16.mxu0 0
        %869 = vmatpush1.bf16.msra.mxu0 0
        %870 = vmatprep.subr.bf16.mxu0 0
        %871 = vmatpush1.bf16.msra.mxu0 0
        %872 = vmatprep.subr.bf16.mxu0 %v864
        %873 = vmatpush1.bf16.msra.mxu0 %v861
        %874 = vmatprep.subr.bf16.mxu0 %v849
        %875 = vmatpush1.bf16.msra.mxu0 %v848
        %876 = vmatprep.subr.bf16.mxu0 %v847
        %877 = vmatpush1.bf16.msra.mxu0 %v846
        %878 = vmatprep.subr.bf16.mxu0 %v845
        %879 = vmatpush1.bf16.msra.mxu0 %v844
        %880 = vmatprep.subr.bf16.mxu0 %v843
        %881 = vmatpush1.bf16.msra.mxu0 %v842
        %882 = vmatprep.subr.bf16.mxu0 0
        %883 = vmatpush2.bf16.msra.mxu0 0
        %884 = vmatprep.subr.bf16.mxu0 0
        %885 = vmatpush2.bf16.msra.mxu0 0
        %886 = vmatprep.subr.bf16.mxu0 0
        %887 = vmatpush2.bf16.msra.mxu0 0
        %888 = vmatprep.subr.bf16.mxu0 0
        %889 = vmatpush2.bf16.msra.mxu0 0
        %890 = vmatprep.subr.bf16.mxu0 0
        %891 = vmatpush2.bf16.msra.mxu0 0
        %892 = vmatprep.subr.bf16.mxu0 0
        %893 = vmatpush2.bf16.msra.mxu0 0
        %894 = vmatprep.subr.bf16.mxu0 0
        %895 = vmatpush2.bf16.msra.mxu0 0
        %896 = vmatprep.subr.bf16.mxu0 0
        %897 = vmatpush2.bf16.msra.mxu0 0
        %898 = vmatprep.mubr.bf16.mxu0 0
        %899 = vmatmul.mubr.bf16.gmra.mxu0 %v647
        %v900 = vpop.f32.mrf.mxu0
        %v901 = vadd.f32 0.0, %v900
        %v902 = vpop.f32.mrf.mxu0
        %v903 = vadd.f32 0.0, %v902
        %v904 = vpop.f32.mrf.mxu0
        %v905 = vadd.f32 0.0, %v904
        %v906 = vpop.f32.mrf.mxu0
        %v907 = vadd.f32 0.0, %v906
        %908 = vdwg.mxu0
        %v909 = vmax.f32 %v802, %v901
        %v910 = vmax.f32 %v803, %v903
        %v911 = vmax.f32 %v804, %v905
        %v912 = vmax.f32 %v805, %v907
        %v913 = vld [vmem:[%s540] sm:$0xff]
        %v914 = vld [vmem:[%s540 + $0x8] sm:$0xff]
        %v915 = vld [vmem:[%s540 + $0x10] sm:$0xff]
        %v916 = vld [vmem:[%s540 + $0x18] sm:$0xff]
        %v917 = vld [vmem:[%s540 + $0x20] sm:$0xff]
        %v918 = vld [vmem:[%s540 + $0x28] sm:$0xff]
        %v919 = vld [vmem:[%s540 + $0x30] sm:$0xff]
        %v920 = vld [vmem:[%s540 + $0x38] sm:$0xff]
        %v921 = vld [vmem:[%s540 + $0x40] sm:$0xff]
        %v931 = vunpack.c.l.b16 %v913
        %v932 = vunpack.c.h.b16 %v913
        %v933 = vunpack.c.l.b16 %v914
        %v934 = vunpack.c.h.b16 %v914
        %v935 = vunpack.c.l.b16 %v915
        %v936 = vunpack.c.h.b16 %v915
        %v937 = vunpack.c.l.b16 %v916
        %v938 = vunpack.c.h.b16 %v916
        %v939 = vunpack.c.l.b16 %v917
        %v940 = vunpack.c.h.b16 %v917
        %v941 = vunpack.c.l.b16 %v918
        %v942 = vunpack.c.h.b16 %v918
        %v943 = vunpack.c.l.b16 %v919
        %v944 = vunpack.c.h.b16 %v919
        %v945 = vunpack.c.l.b16 %v920
        %v946 = vunpack.c.h.b16 %v920
        %v947 = vunpack.c.l.b16 %v921
        %v948 = vunpack.c.h.b16 %v921
        %v949 = vpack.c.b16 %v933, %v931
        %v950 = vpack.c.b16 %v934, %v932
        %v951 = vpack.c.b16 %v937, %v935
        %v952 = vpack.c.b16 %v938, %v936
        %v953 = vpack.c.b16 %v941, %v939
        %v954 = vpack.c.b16 %v942, %v940
        %v955 = vpack.c.b16 %v945, %v943
        %v956 = vpack.c.b16 %v946, %v944
        %v957 = vpack.c.b16 %v947, %v947
        %v958 = vpack.c.b16 %v948, %v948
        %v968 = vsel %vm649, %v957, 0
        %v971 = vsel %vm649, %v958, 0
        %973 = vmatprep.subr.bf16.mxu0 0
        %974 = vmatpush1.bf16.msra.mxu0 0
        %975 = vmatprep.subr.bf16.mxu0 0
        %976 = vmatpush1.bf16.msra.mxu0 0
        %977 = vmatprep.subr.bf16.mxu0 0
        %978 = vmatpush1.bf16.msra.mxu0 0
        %979 = vmatprep.subr.bf16.mxu0 %v971
        %980 = vmatpush1.bf16.msra.mxu0 %v968
        %981 = vmatprep.subr.bf16.mxu0 %v956
        %982 = vmatpush1.bf16.msra.mxu0 %v955
        %983 = vmatprep.subr.bf16.mxu0 %v954
        %984 = vmatpush1.bf16.msra.mxu0 %v953
        %985 = vmatprep.subr.bf16.mxu0 %v952
        %986 = vmatpush1.bf16.msra.mxu0 %v951
        %987 = vmatprep.subr.bf16.mxu0 %v950
        %988 = vmatpush1.bf16.msra.mxu0 %v949
        %989 = vmatprep.subr.bf16.mxu0 0
        %990 = vmatpush2.bf16.msra.mxu0 0
        %991 = vmatprep.subr.bf16.mxu0 0
        %992 = vmatpush2.bf16.msra.mxu0 0
        %993 = vmatprep.subr.bf16.mxu0 0
        %994 = vmatpush2.bf16.msra.mxu0 0
        %995 = vmatprep.subr.bf16.mxu0 0
        %996 = vmatpush2.bf16.msra.mxu0 0
        %997 = vmatprep.subr.bf16.mxu0 0
        %998 = vmatpush2.bf16.msra.mxu0 0
        %999 = vmatprep.subr.bf16.mxu0 0
        %1000 = vmatpush2.bf16.msra.mxu0 0
        %1001 = vmatprep.subr.bf16.mxu0 0
        %1002 = vmatpush2.bf16.msra.mxu0 0
        %1003 = vmatprep.subr.bf16.mxu0 0
        %1004 = vmatpush2.bf16.msra.mxu0 0
        %1005 = vmatprep.mubr.bf16.mxu0 0
        %1006 = vmatmul.mubr.bf16.gmra.mxu0 %v647
        %v1007 = vpop.f32.mrf.mxu0
        %v1008 = vadd.f32 0.0, %v1007
        %v1009 = vpop.f32.mrf.mxu0
        %v1010 = vadd.f32 0.0, %v1009
        %v1011 = vpop.f32.mrf.mxu0
        %v1012 = vadd.f32 0.0, %v1011
        %v1013 = vpop.f32.mrf.mxu0
        %v1014 = vadd.f32 0.0, %v1013
        %1015 = vdwg.mxu0
        %v1016 = vmax.f32 %v909, %v1008
        %v1017 = vmax.f32 %v910, %v1010
        %v1018 = vmax.f32 %v911, %v1012
        %v1019 = vmax.f32 %v912, %v1014
        %v1020 = vld [vmem:[%s5] sm:$0xff]
        %v1021 = vld [vmem:[%s5 + $0x8] sm:$0xff]
        %1023 = vset.pattern.permute.xlu0 0
        %1024 = vperm.xlu0 %1023, %v1020
        %v1025 = vpop.permute.xlu0 %1024
        %1028 = vset.pattern.permute.xlu0 0
        %1029 = vperm.xlu0 %1028, %v1021
        %v1030 = vpop.permute.xlu0 %1029
        %v1032 = vadd.f32 %v1016, %v1025
        %v1033 = vadd.f32 %v1017, %v1025
        %v1034 = vadd.f32 %v1018, %v1030
        %v1035 = vadd.f32 %v1019, %v1030
        %vm1036 = vcmp.ge.f32.partialorder %v1032, 0.0
        %vm1037 = vcmp.ge.f32.partialorder %v1033, 0.0
        %vm1038 = vcmp.ge.f32.partialorder %v1034, 0.0
        %vm1039 = vcmp.ge.f32.partialorder %v1035, 0.0
        %v1040 = vmul.f32 %v1032, 0.01
        %v1041 = vmul.f32 %v1033, 0.01
        %v1042 = vmul.f32 %v1034, 0.01
        %v1043 = vmul.f32 %v1035, 0.01
        %v1044 = vsel %vm1036, %v1032, %v1040
        %v1045 = vsel %vm1037, %v1033, %v1041
        %v1046 = vsel %vm1038, %v1034, %v1042
        %v1047 = vsel %vm1039, %v1035, %v1043
        %v1048 = vpack.c.bf16 %v1046, %v1044
        %v1049 = vpack.c.bf16 %v1047, %v1045
        %v1052 = vunpack.c.l.b16 %v1048
        %v1053 = vunpack.c.l.b16 %v1049
        %v1054 = vunpack.c.h.b16 %v1048
        %v1055 = vunpack.c.h.b16 %v1049
        %v1056 = vpack.c.b16 %v1053, %v1052
        %v1057 = vpack.c.b16 %v1055, %v1054
        %1060 = vst [vmem:[%s577] sm:$0xff] %v1056
        %1061 = vst [vmem:[%s577 + $0x8] sm:$0xff] %v1057
        %s1062 = sand.u32 %s171, 1
        %s1063 = sand.u32 %s171, 1
        %s1064 = smul.addr %s1063, 16
        %s1065 = scalar_lea.vmem [#allocation6], %s1064
        // Predicated region
        $region197: #{classifier_forward.8} parent=179 // pred_check
          %p1066 = pneg %p181
        $region198: #{classifier_forward.8} parent=179 // pred_check_branch
          %1068 = sbr.rel (%p1066) target = $region200
        $region199: #{classifier_forward.8} parent=179 // pred_region
          %s1069 = smul.u32 2, %s17
          %s1070 = smul.addr %s1069, 4
          %s1071 = scalar_lea.vmem %s6, %s1070
          // Predicated region
          $region201: #{classifier_forward.8} parent=199 // pred_check
            _
          $region202: #{classifier_forward.8} parent=199 // pred_check_branch
            %1073 = sbr.rel (0) target = $region204
          $region203: #{classifier_forward.8} parent=199 // pred_region
            // Predicated region
            $region205: #{classifier_forward.8} parent=203 // pred_check
              _
            $region206: #{classifier_forward.8} parent=203 // pred_check_branch
              %1075 = sbr.rel (0) target = $region208
            $region207: #{classifier_forward.8} parent=203 // pred_region
              // Predicated region
              $region220: #{classifier_forward.8} parent=207 // pred_check
                _
              $region221: #{classifier_forward.8} parent=207 // pred_check_branch
                %1093 = sbr.rel (0) target = $region223
              $region222: #{classifier_forward.8} parent=207 // pred_region
                loop: start=0, step=1, limit=1
                $region224: #{classifier_forward.8} parent=222 // loop_pre_header
                  _
                $region225: #{classifier_forward.8} parent=222 // loop_header
                  %s1095 = sphi 0, %s1099
                  %p1096 = scmp.ge.s32.totalorder %s1095, 1
                  %s1100 = sphi %s1065, %s1065
                  %s1101 = sphi %s1071, %s1071
                $region226: #{classifier_forward.8} parent=222 // loop_header_branch
                  %1098 = sbr.rel (%p1096) target = $region230
                $region227: #{classifier_forward.8} parent=222 // loop_body
                  %v1102 = vld [vmem:[%s1100] sm:$0xff]
                  %1103 = vst [vmem:[%s1101] sm:$0xff] %v1102
                  %v1104 = vld [vmem:[%s1100 + $0x8] sm:$0xff]
                  %1105 = vst [vmem:[%s1101 + $0x10] sm:$0xff] %v1104
                $region228: #{classifier_forward.8} parent=222 // loop_footer
                  %s1099 = sadd.s32 1, %s1095
                $region229: #{classifier_forward.8} parent=222 // loop_footer_branch
                  %1094 = sbr.rel target = $region225
                $region230: #{classifier_forward.8} parent=222 // loop_exit
                  _
              $region223: #{classifier_forward.8} parent=207 // pred_fallthru
                _
              // Predicated region
              $region231: #{classifier_forward.8} parent=207 // pred_check
                _
              $region232: #{classifier_forward.8} parent=207 // pred_check_branch
                %1107 = sbr.rel target = $region234
              $region233: #{classifier_forward.8} parent=207 // pred_region
                _
              $region234: #{classifier_forward.8} parent=207 // pred_fallthru
                _
            $region208: #{classifier_forward.8} parent=203 // pred_fallthru
              _
            // Predicated region
            $region209: #{classifier_forward.8} parent=203 // pred_check
              _
            $region210: #{classifier_forward.8} parent=203 // pred_check_branch
              %1077 = sbr.rel target = $region212
            $region211: #{classifier_forward.8} parent=203 // pred_region
              %s1079 = ssub.s32 256, 1
              loop: start=0, step=1, limit=1
              $region213: #{classifier_forward.8} parent=211 // loop_pre_header
                _
              $region214: #{classifier_forward.8} parent=211 // loop_header
                %s1081 = sphi 0, %s1085
                %p1082 = scmp.ge.s32.totalorder %s1081, 1
                %s1086 = sphi %s1065, %s1065
                %s1087 = sphi %s1071, %s1071
              $region215: #{classifier_forward.8} parent=211 // loop_header_branch
                %1084 = sbr.rel (%p1082) target = $region219
              $region216: #{classifier_forward.8} parent=211 // loop_body
                %v1088 = vld [vmem:[%s1086] sm:%s1079]
                %1089 = vst [vmem:[%s1087] sm:%s1079] %v1088
                %v1090 = vld [vmem:[%s1086 + $0x8] sm:%s1079]
                %1091 = vst [vmem:[%s1087 + $0x10] sm:%s1079] %v1090
              $region217: #{classifier_forward.8} parent=211 // loop_footer
                %s1085 = sadd.s32 1, %s1081
              $region218: #{classifier_forward.8} parent=211 // loop_footer_branch
                %1080 = sbr.rel target = $region214
              $region219: #{classifier_forward.8} parent=211 // loop_exit
                _
            $region212: #{classifier_forward.8} parent=203 // pred_fallthru
              _
          $region204: #{classifier_forward.8} parent=199 // pred_fallthru
            _
          %1108 = vnop
        $region200: #{classifier_forward.8} parent=179 // pred_fallthru
          _
      $region180: #{classifier_forward.8} parent=5 // pred_fallthru
        _
      %p1109 = scmp.le.s32.totalorder 2, %s12
      // Predicated region
      $region235: #{classifier_forward.8} parent=5 // pred_check
        %p1110 = pneg %p1109
      $region236: #{classifier_forward.8} parent=5 // pred_check_branch
        %1112 = sbr.rel (%p1110) target = $region238
      $region237: #{classifier_forward.8} parent=5 // pred_region
        %s1113 = ssub.s32 %s12, 2
        // Predicated region
        $region239: #{classifier_forward.8} parent=237 // pred_check
          %p1114 = pneg %p187
        $region240: #{classifier_forward.8} parent=237 // pred_check_branch
          %1116 = sbr.rel (%p1114) target = $region242
        $region241: #{classifier_forward.8} parent=237 // pred_region
          %s1117 = sand.u32 %s172, 1
          %s1118 = sand.u32 %s172, 1
          %s1119 = smul.addr %s1118, 16
          %s1120 = scalar_lea.vmem [#allocation6], %s1119
        $region242: #{classifier_forward.8} parent=237 // pred_fallthru
          _
      $region238: #{classifier_forward.8} parent=5 // pred_fallthru
        _
    $region6: #{classifier_forward.8} parent=1 // loop_footer
      %s16 = sadd.s32 1, %s12
    $region7: #{classifier_forward.8} parent=1 // loop_footer_branch
      %11 = sbr.rel target = $region3
    $region8: #{classifier_forward.8} parent=1 // loop_exit
      _

// kernel: classifier_forward.9
$region0: #{classifier_forward.9}
  #allocation0 [shape = 'u32[]', space=smem, size = 0x4, offset = 0x4, fixed_abs, tag = 'smem constant byte address 0x4 - core index']
  #allocation1 [shape = 'u32[144,128]{1,0:T(1,128)}', space=vmem, size = 0x12000, scoped, tag = 'internal scratch']
  %s0 = inlined_call_operand.vmem [shape: bf16[144,128], index: 0, kind: input, shape index: {}]
  %s1 = inlined_call_operand.vmem [shape: bf16[144,128], index: 1, kind: input, shape index: {}]
  %s2 = inlined_call_operand.vmem [shape: bf16[144,128], index: 2, kind: input, shape index: {}]
  %s3 = inlined_call_operand.vmem [shape: bf16[144,128], index: 3, kind: input, shape index: {}]
  %s4 = inlined_call_operand.vmem [shape: bf16[32,144], index: 4, kind: input, shape index: {}]
  %s5 = inlined_call_operand.vmem [shape: f32[32,1], index: 5, kind: input, shape index: {}]
  %s6 = inlined_call_operand.vmem [shape: bf16[32,128], index: 6, kind: output, shape index: {}]
  %s7 = sld [smem:[#allocation0]]
  $region34: #{classifier_forward.9} parent=0
    _
  %s9 = ssub.s32 1, %s7
  %s10 = scalar_select 0, %s9, %s7
  // Predicated region
  $region2: #{classifier_forward.9} parent=0 // pred_check
    _
  $region3: #{classifier_forward.9} parent=0 // pred_check_branch
    %12 = sbr.rel (0) target = $region5
  $region4: #{classifier_forward.9} parent=0 // pred_region
    _
  $region5: #{classifier_forward.9} parent=0 // pred_fallthru
    _
  // Predicated region
  $region6: #{classifier_forward.9} parent=0 // pred_check
    _
  $region7: #{classifier_forward.9} parent=0 // pred_check_branch
    %14 = sbr.rel (0) target = $region9
  $region8: #{classifier_forward.9} parent=0 // pred_region
    _
  $region9: #{classifier_forward.9} parent=0 // pred_fallthru
    _
  // Predicated region
  $region10: #{classifier_forward.9} parent=0 // pred_check
    _
  $region11: #{classifier_forward.9} parent=0 // pred_check_branch
    %16 = sbr.rel (0) target = $region13
  $region12: #{classifier_forward.9} parent=0 // pred_region
    _
  $region13: #{classifier_forward.9} parent=0 // pred_fallthru
    _
  // Predicated region
  $region14: #{classifier_forward.9} parent=0 // pred_check
    _
  $region15: #{classifier_forward.9} parent=0 // pred_check_branch
    %18 = sbr.rel (0) target = $region17
  $region16: #{classifier_forward.9} parent=0 // pred_region
    _
  $region17: #{classifier_forward.9} parent=0 // pred_fallthru
    _
  // Predicated region
  $region18: #{classifier_forward.9} parent=0 // pred_check
    _
  $region19: #{classifier_forward.9} parent=0 // pred_check_branch
    %20 = sbr.rel (0) target = $region21
  $region20: #{classifier_forward.9} parent=0 // pred_region
    _
  $region21: #{classifier_forward.9} parent=0 // pred_fallthru
    _
  // Predicated region
  $region22: #{classifier_forward.9} parent=0 // pred_check
    _
  $region23: #{classifier_forward.9} parent=0 // pred_check_branch
    %22 = sbr.rel (0) target = $region25
  $region24: #{classifier_forward.9} parent=0 // pred_region
    _
  $region25: #{classifier_forward.9} parent=0 // pred_fallthru
    _
  %v24 = vld [vmem:[%s4] sm:$0xff]
  %v25 = vld [vmem:[%s4 + $0x8] sm:$0xff]
  %v26 = vld [vmem:[%s4 + $0x10] sm:$0xff]
  %v27 = vld [vmem:[%s4 + $0x18] sm:$0xff]
  %v28 = vld [vmem:[%s0] sm:$0xf]
  %v29 = vld [vmem:[%s0 + $0x4] sm:$0xf]
  %v30 = vld [vmem:[%s0 + $0x8] sm:$0xf]
  %v31 = vld [vmem:[%s0 + $0xc] sm:$0xf]
  %v32 = vld [vmem:[%s0 + $0x10] sm:$0xf]
  %v33 = vld [vmem:[%s0 + $0x14] sm:$0xf]
  %v34 = vld [vmem:[%s0 + $0x18] sm:$0xf]
  %v35 = vld [vmem:[%s0 + $0x1c] sm:$0xf]
  %v36 = vld [vmem:[%s0 + $0x20] sm:$0xf]
  %v37 = vld [vmem:[%s0 + $0x24] sm:$0xf]
  %v38 = vld [vmem:[%s0 + $0x28] sm:$0xf]
  %v39 = vld [vmem:[%s0 + $0x2c] sm:$0xf]
  %v40 = vld [vmem:[%s0 + $0x30] sm:$0xf]
  %v41 = vld [vmem:[%s0 + $0x34] sm:$0xf]
  %v42 = vld [vmem:[%s0 + $0x38] sm:$0xf]
  %v43 = vld [vmem:[%s0 + $0x3c] sm:$0xf]
  %v44 = vld [vmem:[%s0 + $0x40] sm:$0xf]
  %v45 = vld [vmem:[%s0 + $0x44] sm:$0xf]
  %v50 = vunpack.c.l.b16 %v24
  %v51 = vunpack.c.h.b16 %v24
  %v52 = vunpack.c.l.b16 %v25
  %v53 = vunpack.c.h.b16 %v25
  %v54 = vunpack.c.l.b16 %v26
  %v55 = vunpack.c.h.b16 %v26
  %v56 = vunpack.c.l.b16 %v27
  %v57 = vunpack.c.h.b16 %v27
  %v58 = vpack.c.b16 %v52, %v50
  %v59 = vpack.c.b16 %v53, %v51
  %v60 = vpack.c.b16 %v56, %v54
  %v61 = vpack.c.b16 %v57, %v55
  %v82 = vunpack.c.l.b16 %v28
  %v83 = vunpack.c.l.b16 %v29
  %v84 = vunpack.c.l.b16 %v30
  %v85 = vunpack.c.l.b16 %v31
  %v86 = vunpack.c.l.b16 %v32
  %v87 = vunpack.c.l.b16 %v33
  %v88 = vunpack.c.l.b16 %v34
  %v89 = vunpack.c.l.b16 %v35
  %v90 = vunpack.c.l.b16 %v36
  %v91 = vunpack.c.l.b16 %v37
  %v92 = vunpack.c.l.b16 %v38
  %v93 = vunpack.c.l.b16 %v39
  %v94 = vunpack.c.l.b16 %v40
  %v95 = vunpack.c.l.b16 %v41
  %v96 = vunpack.c.l.b16 %v42
  %v97 = vunpack.c.l.b16 %v43
  %v98 = vunpack.c.l.b16 %v44
  %v99 = vunpack.c.l.b16 %v45
  %v100 = vpack.c.b16 %v83, %v82
  %v101 = vpack.c.b16 %v85, %v84
  %v102 = vpack.c.b16 %v87, %v86
  %v103 = vpack.c.b16 %v89, %v88
  %v104 = vpack.c.b16 %v91, %v90
  %v105 = vpack.c.b16 %v93, %v92
  %v106 = vpack.c.b16 %v95, %v94
  %v107 = vpack.c.b16 %v97, %v96
  %v108 = vpack.c.b16 %v99, %v98
  %vm118 = vcmask 130048
  %v120 = vsel %vm118, %v59, 0
  %v123 = vsel %vm118, %v61, 0
  %125 = vmatprep.subr.bf16.mxu0 0
  %126 = vmatpush1.bf16.msra.mxu0 %v107
  %127 = vmatprep.subr.bf16.mxu0 0
  %128 = vmatpush1.bf16.msra.mxu0 %v106
  %129 = vmatprep.subr.bf16.mxu0 0
  %130 = vmatpush1.bf16.msra.mxu0 %v105
  %131 = vmatprep.subr.bf16.mxu0 0
  %132 = vmatpush1.bf16.msra.mxu0 %v104
  %133 = vmatprep.subr.bf16.mxu0 0
  %134 = vmatpush1.bf16.msra.mxu0 %v103
  %135 = vmatprep.subr.bf16.mxu0 0
  %136 = vmatpush1.bf16.msra.mxu0 %v102
  %137 = vmatprep.subr.bf16.mxu0 0
  %138 = vmatpush1.bf16.msra.mxu0 %v101
  %139 = vmatprep.subr.bf16.mxu0 0
  %140 = vmatpush1.bf16.msra.mxu0 %v100
  %141 = vmatprep.subr.bf16.mxu0 0
  %142 = vmatpush2.bf16.msra.mxu0 0
  %143 = vmatprep.subr.bf16.mxu0 0
  %144 = vmatpush2.bf16.msra.mxu0 0
  %145 = vmatprep.subr.bf16.mxu0 0
  %146 = vmatpush2.bf16.msra.mxu0 0
  %147 = vmatprep.subr.bf16.mxu0 0
  %148 = vmatpush2.bf16.msra.mxu0 0
  %149 = vmatprep.subr.bf16.mxu0 0
  %150 = vmatpush2.bf16.msra.mxu0 0
  %151 = vmatprep.subr.bf16.mxu0 0
  %152 = vmatpush2.bf16.msra.mxu0 0
  %153 = vmatprep.subr.bf16.mxu0 0
  %154 = vmatpush2.bf16.msra.mxu0 0
  %155 = vmatprep.subr.bf16.mxu0 0
  %156 = vmatpush2.bf16.msra.mxu0 %v108
  %157 = vmatprep.mubr.bf16.mxu0 %v120
  %158 = vmatmul.mubr.bf16.gmra.mxu0 %v58
  %v159 = vpop.f32.mrf.mxu0
  %v160 = vadd.f32 0.0, %v159
  %v161 = vpop.f32.mrf.mxu0
  %v162 = vpop.f32.mrf.mxu0
  %v163 = vadd.f32 0.0, %v162
  %v164 = vpop.f32.mrf.mxu0
  %165 = vmatprep.mubr.bf16.mxu0 %v123
  %166 = vmatmul.mubr.bf16.gmra.mxu0 %v60
  %v167 = vpop.f32.mrf.mxu0
  %v168 = vadd.f32 0.0, %v167
  %v169 = vpop.f32.mrf.mxu0
  %v170 = vpop.f32.mrf.mxu0
  %v171 = vadd.f32 0.0, %v170
  %v172 = vpop.f32.mrf.mxu0
  %173 = vdwg.mxu0
  %v174 = vld [vmem:[%s1] sm:$0xf]
  %v175 = vld [vmem:[%s1 + $0x4] sm:$0xf]
  %v176 = vld [vmem:[%s1 + $0x8] sm:$0xf]
  %v177 = vld [vmem:[%s1 + $0xc] sm:$0xf]
  %v178 = vld [vmem:[%s1 + $0x10] sm:$0xf]
  %v179 = vld [vmem:[%s1 + $0x14] sm:$0xf]
  %v180 = vld [vmem:[%s1 + $0x18] sm:$0xf]
  %v181 = vld [vmem:[%s1 + $0x1c] sm:$0xf]
  %v182 = vld [vmem:[%s1 + $0x20] sm:$0xf]
  %v183 = vld [vmem:[%s1 + $0x24] sm:$0xf]
  %v184 = vld [vmem:[%s1 + $0x28] sm:$0xf]
  %v185 = vld [vmem:[%s1 + $0x2c] sm:$0xf]
  %v186 = vld [vmem:[%s1 + $0x30] sm:$0xf]
  %v187 = vld [vmem:[%s1 + $0x34] sm:$0xf]
  %v188 = vld [vmem:[%s1 + $0x38] sm:$0xf]
  %v189 = vld [vmem:[%s1 + $0x3c] sm:$0xf]
  %v190 = vld [vmem:[%s1 + $0x40] sm:$0xf]
  %v191 = vld [vmem:[%s1 + $0x44] sm:$0xf]
  %v210 = vunpack.c.l.b16 %v174
  %v211 = vunpack.c.l.b16 %v175
  %v212 = vunpack.c.l.b16 %v176
  %v213 = vunpack.c.l.b16 %v177
  %v214 = vunpack.c.l.b16 %v178
  %v215 = vunpack.c.l.b16 %v179
  %v216 = vunpack.c.l.b16 %v180
  %v217 = vunpack.c.l.b16 %v181
  %v218 = vunpack.c.l.b16 %v182
  %v219 = vunpack.c.l.b16 %v183
  %v220 = vunpack.c.l.b16 %v184
  %v221 = vunpack.c.l.b16 %v185
  %v222 = vunpack.c.l.b16 %v186
  %v223 = vunpack.c.l.b16 %v187
  %v224 = vunpack.c.l.b16 %v188
  %v225 = vunpack.c.l.b16 %v189
  %v226 = vunpack.c.l.b16 %v190
  %v227 = vunpack.c.l.b16 %v191
  %v228 = vpack.c.b16 %v211, %v210
  %v229 = vpack.c.b16 %v213, %v212
  %v230 = vpack.c.b16 %v215, %v214
  %v231 = vpack.c.b16 %v217, %v216
  %v232 = vpack.c.b16 %v219, %v218
  %v233 = vpack.c.b16 %v221, %v220
  %v234 = vpack.c.b16 %v223, %v222
  %v235 = vpack.c.b16 %v225, %v224
  %v236 = vpack.c.b16 %v227, %v226
  %246 = vmatprep.subr.bf16.mxu0 0
  %247 = vmatpush1.bf16.msra.mxu0 %v235
  %248 = vmatprep.subr.bf16.mxu0 0
  %249 = vmatpush1.bf16.msra.mxu0 %v234
  %250 = vmatprep.subr.bf16.mxu0 0
  %251 = vmatpush1.bf16.msra.mxu0 %v233
  %252 = vmatprep.subr.bf16.mxu0 0
  %253 = vmatpush1.bf16.msra.mxu0 %v232
  %254 = vmatprep.subr.bf16.mxu0 0
  %255 = vmatpush1.bf16.msra.mxu0 %v231
  %256 = vmatprep.subr.bf16.mxu0 0
  %257 = vmatpush1.bf16.msra.mxu0 %v230
  %258 = vmatprep.subr.bf16.mxu0 0
  %259 = vmatpush1.bf16.msra.mxu0 %v229
  %260 = vmatprep.subr.bf16.mxu0 0
  %261 = vmatpush1.bf16.msra.mxu0 %v228
  %262 = vmatprep.subr.bf16.mxu0 0
  %263 = vmatpush2.bf16.msra.mxu0 0
  %264 = vmatprep.subr.bf16.mxu0 0
  %265 = vmatpush2.bf16.msra.mxu0 0
  %266 = vmatprep.subr.bf16.mxu0 0
  %267 = vmatpush2.bf16.msra.mxu0 0
  %268 = vmatprep.subr.bf16.mxu0 0
  %269 = vmatpush2.bf16.msra.mxu0 0
  %270 = vmatprep.subr.bf16.mxu0 0
  %271 = vmatpush2.bf16.msra.mxu0 0
  %272 = vmatprep.subr.bf16.mxu0 0
  %273 = vmatpush2.bf16.msra.mxu0 0
  %274 = vmatprep.subr.bf16.mxu0 0
  %275 = vmatpush2.bf16.msra.mxu0 0
  %276 = vmatprep.subr.bf16.mxu0 0
  %277 = vmatpush2.bf16.msra.mxu0 %v236
  %278 = vmatprep.mubr.bf16.mxu0 %v120
  %279 = vmatmul.mubr.bf16.gmra.mxu0 %v58
  %v280 = vpop.f32.mrf.mxu0
  %v281 = vadd.f32 0.0, %v280
  %v282 = vpop.f32.mrf.mxu0
  %v283 = vpop.f32.mrf.mxu0
  %v284 = vadd.f32 0.0, %v283
  %v285 = vpop.f32.mrf.mxu0
  %286 = vmatprep.mubr.bf16.mxu0 %v123
  %287 = vmatmul.mubr.bf16.gmra.mxu0 %v60
  %v288 = vpop.f32.mrf.mxu0
  %v289 = vadd.f32 0.0, %v288
  %v290 = vpop.f32.mrf.mxu0
  %v291 = vpop.f32.mrf.mxu0
  %v292 = vadd.f32 0.0, %v291
  %v293 = vpop.f32.mrf.mxu0
  %294 = vdwg.mxu0
  %v295 = vmax.f32 %v160, %v281
  %v296 = vmax.f32 %v163, %v284
  %v297 = vmax.f32 %v168, %v289
  %v298 = vmax.f32 %v171, %v292
  %v299 = vld [vmem:[%s2] sm:$0xf]
  %v300 = vld [vmem:[%s2 + $0x4] sm:$0xf]
  %v301 = vld [vmem:[%s2 + $0x8] sm:$0xf]
  %v302 = vld [vmem:[%s2 + $0xc] sm:$0xf]
  %v303 = vld [vmem:[%s2 + $0x10] sm:$0xf]
  %v304 = vld [vmem:[%s2 + $0x14] sm:$0xf]
  %v305 = vld [vmem:[%s2 + $0x18] sm:$0xf]
  %v306 = vld [vmem:[%s2 + $0x1c] sm:$0xf]
  %v307 = vld [vmem:[%s2 + $0x20] sm:$0xf]
  %v308 = vld [vmem:[%s2 + $0x24] sm:$0xf]
  %v309 = vld [vmem:[%s2 + $0x28] sm:$0xf]
  %v310 = vld [vmem:[%s2 + $0x2c] sm:$0xf]
  %v311 = vld [vmem:[%s2 + $0x30] sm:$0xf]
  %v312 = vld [vmem:[%s2 + $0x34] sm:$0xf]
  %v313 = vld [vmem:[%s2 + $0x38] sm:$0xf]
  %v314 = vld [vmem:[%s2 + $0x3c] sm:$0xf]
  %v315 = vld [vmem:[%s2 + $0x40] sm:$0xf]
  %v316 = vld [vmem:[%s2 + $0x44] sm:$0xf]
  %v335 = vunpack.c.l.b16 %v299
  %v336 = vunpack.c.l.b16 %v300
  %v337 = vunpack.c.l.b16 %v301
  %v338 = vunpack.c.l.b16 %v302
  %v339 = vunpack.c.l.b16 %v303
  %v340 = vunpack.c.l.b16 %v304
  %v341 = vunpack.c.l.b16 %v305
  %v342 = vunpack.c.l.b16 %v306
  %v343 = vunpack.c.l.b16 %v307
  %v344 = vunpack.c.l.b16 %v308
  %v345 = vunpack.c.l.b16 %v309
  %v346 = vunpack.c.l.b16 %v310
  %v347 = vunpack.c.l.b16 %v311
  %v348 = vunpack.c.l.b16 %v312
  %v349 = vunpack.c.l.b16 %v313
  %v350 = vunpack.c.l.b16 %v314
  %v351 = vunpack.c.l.b16 %v315
  %v352 = vunpack.c.l.b16 %v316
  %v353 = vpack.c.b16 %v336, %v335
  %v354 = vpack.c.b16 %v338, %v337
  %v355 = vpack.c.b16 %v340, %v339
  %v356 = vpack.c.b16 %v342, %v341
  %v357 = vpack.c.b16 %v344, %v343
  %v358 = vpack.c.b16 %v346, %v345
  %v359 = vpack.c.b16 %v348, %v347
  %v360 = vpack.c.b16 %v350, %v349
  %v361 = vpack.c.b16 %v352, %v351
  %371 = vmatprep.subr.bf16.mxu0 0
  %372 = vmatpush1.bf16.msra.mxu0 %v360
  %373 = vmatprep.subr.bf16.mxu0 0
  %374 = vmatpush1.bf16.msra.mxu0 %v359
  %375 = vmatprep.subr.bf16.mxu0 0
  %376 = vmatpush1.bf16.msra.mxu0 %v358
  %377 = vmatprep.subr.bf16.mxu0 0
  %378 = vmatpush1.bf16.msra.mxu0 %v357
  %379 = vmatprep.subr.bf16.mxu0 0
  %380 = vmatpush1.bf16.msra.mxu0 %v356
  %381 = vmatprep.subr.bf16.mxu0 0
  %382 = vmatpush1.bf16.msra.mxu0 %v355
  %383 = vmatprep.subr.bf16.mxu0 0
  %384 = vmatpush1.bf16.msra.mxu0 %v354
  %385 = vmatprep.subr.bf16.mxu0 0
  %386 = vmatpush1.bf16.msra.mxu0 %v353
  %387 = vmatprep.subr.bf16.mxu0 0
  %388 = vmatpush2.bf16.msra.mxu0 0
  %389 = vmatprep.subr.bf16.mxu0 0
  %390 = vmatpush2.bf16.msra.mxu0 0
  %391 = vmatprep.subr.bf16.mxu0 0
  %392 = vmatpush2.bf16.msra.mxu0 0
  %393 = vmatprep.subr.bf16.mxu0 0
  %394 = vmatpush2.bf16.msra.mxu0 0
  %395 = vmatprep.subr.bf16.mxu0 0
  %396 = vmatpush2.bf16.msra.mxu0 0
  %397 = vmatprep.subr.bf16.mxu0 0
  %398 = vmatpush2.bf16.msra.mxu0 0
  %399 = vmatprep.subr.bf16.mxu0 0
  %400 = vmatpush2.bf16.msra.mxu0 0
  %401 = vmatprep.subr.bf16.mxu0 0
  %402 = vmatpush2.bf16.msra.mxu0 %v361
  %403 = vmatprep.mubr.bf16.mxu0 %v120
  %404 = vmatmul.mubr.bf16.gmra.mxu0 %v58
  %v405 = vpop.f32.mrf.mxu0
  %v406 = vadd.f32 0.0, %v405
  %v407 = vpop.f32.mrf.mxu0
  %v408 = vpop.f32.mrf.mxu0
  %v409 = vadd.f32 0.0, %v408
  %v410 = vpop.f32.mrf.mxu0
  %411 = vmatprep.mubr.bf16.mxu0 %v123
  %412 = vmatmul.mubr.bf16.gmra.mxu0 %v60
  %v413 = vpop.f32.mrf.mxu0
  %v414 = vadd.f32 0.0, %v413
  %v415 = vpop.f32.mrf.mxu0
  %v416 = vpop.f32.mrf.mxu0
  %v417 = vadd.f32 0.0, %v416
  %v418 = vpop.f32.mrf.mxu0
  %419 = vdwg.mxu0
  %v420 = vmax.f32 %v295, %v406
  %v421 = vmax.f32 %v296, %v409
  %v422 = vmax.f32 %v297, %v414
  %v423 = vmax.f32 %v298, %v417
  %v424 = vld [vmem:[%s3] sm:$0xf]
  %v425 = vld [vmem:[%s3 + $0x4] sm:$0xf]
  %v426 = vld [vmem:[%s3 + $0x8] sm:$0xf]
  %v427 = vld [vmem:[%s3 + $0xc] sm:$0xf]
  %v428 = vld [vmem:[%s3 + $0x10] sm:$0xf]
  %v429 = vld [vmem:[%s3 + $0x14] sm:$0xf]
  %v430 = vld [vmem:[%s3 + $0x18] sm:$0xf]
  %v431 = vld [vmem:[%s3 + $0x1c] sm:$0xf]
  %v432 = vld [vmem:[%s3 + $0x20] sm:$0xf]
  %v433 = vld [vmem:[%s3 + $0x24] sm:$0xf]
  %v434 = vld [vmem:[%s3 + $0x28] sm:$0xf]
  %v435 = vld [vmem:[%s3 + $0x2c] sm:$0xf]
  %v436 = vld [vmem:[%s3 + $0x30] sm:$0xf]
  %v437 = vld [vmem:[%s3 + $0x34] sm:$0xf]
  %v438 = vld [vmem:[%s3 + $0x38] sm:$0xf]
  %v439 = vld [vmem:[%s3 + $0x3c] sm:$0xf]
  %v440 = vld [vmem:[%s3 + $0x40] sm:$0xf]
  %v441 = vld [vmem:[%s3 + $0x44] sm:$0xf]
  %v460 = vunpack.c.l.b16 %v424
  %v461 = vunpack.c.l.b16 %v425
  %v462 = vunpack.c.l.b16 %v426
  %v463 = vunpack.c.l.b16 %v427
  %v464 = vunpack.c.l.b16 %v428
  %v465 = vunpack.c.l.b16 %v429
  %v466 = vunpack.c.l.b16 %v430
  %v467 = vunpack.c.l.b16 %v431
  %v468 = vunpack.c.l.b16 %v432
  %v469 = vunpack.c.l.b16 %v433
  %v470 = vunpack.c.l.b16 %v434
  %v471 = vunpack.c.l.b16 %v435
  %v472 = vunpack.c.l.b16 %v436
  %v473 = vunpack.c.l.b16 %v437
  %v474 = vunpack.c.l.b16 %v438
  %v475 = vunpack.c.l.b16 %v439
  %v476 = vunpack.c.l.b16 %v440
  %v477 = vunpack.c.l.b16 %v441
  %v478 = vpack.c.b16 %v461, %v460
  %v479 = vpack.c.b16 %v463, %v462
  %v480 = vpack.c.b16 %v465, %v464
  %v481 = vpack.c.b16 %v467, %v466
  %v482 = vpack.c.b16 %v469, %v468
  %v483 = vpack.c.b16 %v471, %v470
  %v484 = vpack.c.b16 %v473, %v472
  %v485 = vpack.c.b16 %v475, %v474
  %v486 = vpack.c.b16 %v477, %v476
  %496 = vmatprep.subr.bf16.mxu0 0
  %497 = vmatpush1.bf16.msra.mxu0 %v485
  %498 = vmatprep.subr.bf16.mxu0 0
  %499 = vmatpush1.bf16.msra.mxu0 %v484
  %500 = vmatprep.subr.bf16.mxu0 0
  %501 = vmatpush1.bf16.msra.mxu0 %v483
  %502 = vmatprep.subr.bf16.mxu0 0
  %503 = vmatpush1.bf16.msra.mxu0 %v482
  %504 = vmatprep.subr.bf16.mxu0 0
  %505 = vmatpush1.bf16.msra.mxu0 %v481
  %506 = vmatprep.subr.bf16.mxu0 0
  %507 = vmatpush1.bf16.msra.mxu0 %v480
  %508 = vmatprep.subr.bf16.mxu0 0
  %509 = vmatpush1.bf16.msra.mxu0 %v479
  %510 = vmatprep.subr.bf16.mxu0 0
  %511 = vmatpush1.bf16.msra.mxu0 %v478
  %512 = vmatprep.subr.bf16.mxu0 0
  %513 = vmatpush2.bf16.msra.mxu0 0
  %514 = vmatprep.subr.bf16.mxu0 0
  %515 = vmatpush2.bf16.msra.mxu0 0
  %516 = vmatprep.subr.bf16.mxu0 0
  %517 = vmatpush2.bf16.msra.mxu0 0
  %518 = vmatprep.subr.bf16.mxu0 0
  %519 = vmatpush2.bf16.msra.mxu0 0
  %520 = vmatprep.subr.bf16.mxu0 0
  %521 = vmatpush2.bf16.msra.mxu0 0
  %522 = vmatprep.subr.bf16.mxu0 0
  %523 = vmatpush2.bf16.msra.mxu0 0
  %524 = vmatprep.subr.bf16.mxu0 0
  %525 = vmatpush2.bf16.msra.mxu0 0
  %526 = vmatprep.subr.bf16.mxu0 0
  %527 = vmatpush2.bf16.msra.mxu0 %v486
  %528 = vmatprep.mubr.bf16.mxu0 %v120
  %529 = vmatmul.mubr.bf16.gmra.mxu0 %v58
  %v530 = vpop.f32.mrf.mxu0
  %v531 = vadd.f32 0.0, %v530
  %v532 = vpop.f32.mrf.mxu0
  %v533 = vpop.f32.mrf.mxu0
  %v534 = vadd.f32 0.0, %v533
  %v535 = vpop.f32.mrf.mxu0
  %536 = vmatprep.mubr.bf16.mxu0 %v123
  %537 = vmatmul.mubr.bf16.gmra.mxu0 %v60
  %v538 = vpop.f32.mrf.mxu0
  %v539 = vadd.f32 0.0, %v538
  %v540 = vpop.f32.mrf.mxu0
  %v541 = vpop.f32.mrf.mxu0
  %v542 = vadd.f32 0.0, %v541
  %v543 = vpop.f32.mrf.mxu0
  %544 = vdwg.mxu0
  %v545 = vmax.f32 %v420, %v531
  %v546 = vmax.f32 %v421, %v534
  %v547 = vmax.f32 %v422, %v539
  %v548 = vmax.f32 %v423, %v542
  %v549 = vld [vmem:[%s5] sm:$0xff]
  %v550 = vld [vmem:[%s5 + $0x8] sm:$0xff]
  %v551 = vld [vmem:[%s5 + $0x10] sm:$0xff]
  %v552 = vld [vmem:[%s5 + $0x18] sm:$0xff]
  %554 = vset.pattern.permute.xlu0 0
  %555 = vperm.xlu0 %554, %v549
  %v556 = vpop.permute.xlu0 %555
  %559 = vset.pattern.permute.xlu0 0
  %560 = vperm.xlu0 %559, %v550
  %v561 = vpop.permute.xlu0 %560
  %564 = vset.pattern.permute.xlu0 0
  %565 = vperm.xlu0 %564, %v551
  %v566 = vpop.permute.xlu0 %565
  %569 = vset.pattern.permute.xlu0 0
  %570 = vperm.xlu0 %569, %v552
  %v571 = vpop.permute.xlu0 %570
  %v573 = vadd.f32 %v545, %v556
  %v574 = vadd.f32 %v546, %v561
  %v575 = vadd.f32 %v547, %v566
  %v576 = vadd.f32 %v548, %v571
  %vm577 = vcmp.ge.f32.partialorder %v573, 0.0
  %vm578 = vcmp.ge.f32.partialorder %v574, 0.0
  %vm579 = vcmp.ge.f32.partialorder %v575, 0.0
  %vm580 = vcmp.ge.f32.partialorder %v576, 0.0
  %v581 = vmul.f32 %v573, 0.01
  %v582 = vmul.f32 %v574, 0.01
  %v583 = vmul.f32 %v575, 0.01
  %v584 = vmul.f32 %v576, 0.01
  %v585 = vsel %vm577, %v573, %v581
  %v586 = vsel %vm578, %v574, %v582
  %v587 = vsel %vm579, %v575, %v583
  %v588 = vsel %vm580, %v576, %v584
  %v589 = vpack.c.bf16 %v586, %v585
  %v590 = vpack.c.bf16 %v588, %v587
  %v593 = vunpack.c.l.b16 %v589
  %v594 = vunpack.c.h.b16 %v589
  %v595 = vunpack.c.l.b16 %v590
  %v596 = vunpack.c.h.b16 %v590
  %v597 = vpack.c.b16 %v593, %v593
  %v598 = vpack.c.b16 %v594, %v594
  %v599 = vpack.c.b16 %v595, %v595
  %v600 = vpack.c.b16 %v596, %v596
  %605 = vst [vmem:[%s6] sm:$0xf] %v597
  %606 = vst [vmem:[%s6 + $0x4] sm:$0xf] %v598
  %607 = vst [vmem:[%s6 + $0x8] sm:$0xf] %v599
  %608 = vst [vmem:[%s6 + $0xc] sm:$0xf] %v600
  // Predicated region
  $region26: #{classifier_forward.9} parent=0 // pred_check
    _
  $region27: #{classifier_forward.9} parent=0 // pred_check_branch
    %610 = sbr.rel (0) target = $region29
  $region28: #{classifier_forward.9} parent=0 // pred_region
    _
  $region29: #{classifier_forward.9} parent=0 // pred_fallthru
    _
  // Predicated region
  $region30: #{classifier_forward.9} parent=0 // pred_check
    _
  $region31: #{classifier_forward.9} parent=0 // pred_check_branch
    %612 = sbr.rel (0) target = $region33
  $region32: #{classifier_forward.9} parent=0 // pred_region
    _
  $region33: #{classifier_forward.9} parent=0 // pred_fallthru
    _

// kernel: classifier_forward.11
$region0: #{classifier_forward.11}
  #allocation0 [shape = 'u32[]', space=smem, size = 0x4, offset = 0x4, fixed_abs, tag = 'smem constant byte address 0x4 - core index']
  #allocation1 [shape = 'u32[144,128]{1,0:T(1,128)}', space=vmem, size = 0x12000, scoped, tag = 'internal scratch']
  %s0 = inlined_call_operand.vmem [shape: bf16[2,1024], index: 0, kind: input, shape index: {}]
  %s1 = inlined_call_operand.vmem [shape: bf16[1024,8], index: 1, kind: input, shape index: {}]
  %s2 = inlined_call_operand.vmem [shape: f32[1,8], index: 2, kind: input, shape index: {}]
  %s3 = inlined_call_operand.vmem [shape: f32[1,8], index: 3, kind: input, shape index: {}]
  %s4 = inlined_call_operand.vmem [shape: bf16[8,2], index: 4, kind: input, shape index: {}]
  %s5 = inlined_call_operand.vmem [shape: f32[1,2], index: 5, kind: input, shape index: {}]
  %s6 = inlined_call_operand.hbm [shape: f32[2,2], index: 6, kind: output, shape index: {}]
  %s7 = sld [smem:[#allocation0]]
  $region34: #{classifier_forward.11} parent=0
    _
  %s9 = ssub.s32 1, %s7
  %s10 = scalar_select 0, %s9, %s7
  $region1: #{classifier_forward.11} parent=0
    #allocation2 [shape = 'u8[1024]{0}', space=vmem, size = 0x400, scoped, tag = 'output window, operand 0, single buffered']
    #allocation3 [shape = 's32[1]{0}', space=sflag, size = 0x4, scoped, tag = 'scoped memory for classifier_forward.11']
    %11 = vsyncpa [#allocation3], 0
    // Predicated region
    $region2: #{classifier_forward.11} parent=1 // pred_check
      _
    $region3: #{classifier_forward.11} parent=1 // pred_check_branch
      %13 = sbr.rel (0) target = $region5
    $region4: #{classifier_forward.11} parent=1 // pred_region
      _
    $region5: #{classifier_forward.11} parent=1 // pred_fallthru
      _
    // Predicated region
    $region6: #{classifier_forward.11} parent=1 // pred_check
      _
    $region7: #{classifier_forward.11} parent=1 // pred_check_branch
      %15 = sbr.rel (0) target = $region9
    $region8: #{classifier_forward.11} parent=1 // pred_region
      _
    $region9: #{classifier_forward.11} parent=1 // pred_fallthru
      _
    // Predicated region
    $region10: #{classifier_forward.11} parent=1 // pred_check
      _
    $region11: #{classifier_forward.11} parent=1 // pred_check_branch
      %17 = sbr.rel (0) target = $region13
    $region12: #{classifier_forward.11} parent=1 // pred_region
      _
    $region13: #{classifier_forward.11} parent=1 // pred_fallthru
      _
    // Predicated region
    $region14: #{classifier_forward.11} parent=1 // pred_check
      _
    $region15: #{classifier_forward.11} parent=1 // pred_check_branch
      %19 = sbr.rel (0) target = $region17
    $region16: #{classifier_forward.11} parent=1 // pred_region
      _
    $region17: #{classifier_forward.11} parent=1 // pred_fallthru
      _
    // Predicated region
    $region18: #{classifier_forward.11} parent=1 // pred_check
      _
    $region19: #{classifier_forward.11} parent=1 // pred_check_branch
      %21 = sbr.rel (0) target = $region21
    $region20: #{classifier_forward.11} parent=1 // pred_region
      _
    $region21: #{classifier_forward.11} parent=1 // pred_fallthru
      _
    // Predicated region
    $region22: #{classifier_forward.11} parent=1 // pred_check
      _
    $region23: #{classifier_forward.11} parent=1 // pred_check_branch
      %23 = sbr.rel (0) target = $region25
    $region24: #{classifier_forward.11} parent=1 // pred_region
      _
    $region25: #{classifier_forward.11} parent=1 // pred_fallthru
      _
    %v25 = vld [vmem:[%s0] sm:$0xff]
    %v26 = vld [vmem:[%s1] sm:$0xf]
    %v27 = vld [vmem:[%s1 + $0x4] sm:$0xf]
    %v28 = vld [vmem:[%s1 + $0x8] sm:$0xf]
    %v29 = vld [vmem:[%s1 + $0xc] sm:$0xf]
    %v30 = vld [vmem:[%s1 + $0x10] sm:$0xf]
    %v31 = vld [vmem:[%s1 + $0x14] sm:$0xf]
    %v32 = vld [vmem:[%s1 + $0x18] sm:$0xf]
    %v33 = vld [vmem:[%s1 + $0x1c] sm:$0xf]
    %v34 = vld [vmem:[%s1 + $0x20] sm:$0xf]
    %v35 = vld [vmem:[%s1 + $0x24] sm:$0xf]
    %v36 = vld [vmem:[%s1 + $0x28] sm:$0xf]
    %v37 = vld [vmem:[%s1 + $0x2c] sm:$0xf]
    %v38 = vld [vmem:[%s1 + $0x30] sm:$0xf]
    %v39 = vld [vmem:[%s1 + $0x34] sm:$0xf]
    %v40 = vld [vmem:[%s1 + $0x38] sm:$0xf]
    %v41 = vld [vmem:[%s1 + $0x3c] sm:$0xf]
    %v42 = vld [vmem:[%s1 + $0x40] sm:$0xf]
    %v43 = vld [vmem:[%s1 + $0x44] sm:$0xf]
    %v44 = vld [vmem:[%s1 + $0x48] sm:$0xf]
    %v45 = vld [vmem:[%s1 + $0x4c] sm:$0xf]
    %v46 = vld [vmem:[%s1 + $0x50] sm:$0xf]
    %v47 = vld [vmem:[%s1 + $0x54] sm:$0xf]
    %v48 = vld [vmem:[%s1 + $0x58] sm:$0xf]
    %v49 = vld [vmem:[%s1 + $0x5c] sm:$0xf]
    %v50 = vld [vmem:[%s1 + $0x60] sm:$0xf]
    %v51 = vld [vmem:[%s1 + $0x64] sm:$0xf]
    %v52 = vld [vmem:[%s1 + $0x68] sm:$0xf]
    %v53 = vld [vmem:[%s1 + $0x6c] sm:$0xf]
    %v54 = vld [vmem:[%s1 + $0x70] sm:$0xf]
    %v55 = vld [vmem:[%s1 + $0x74] sm:$0xf]
    %v56 = vld [vmem:[%s1 + $0x78] sm:$0xf]
    %v57 = vld [vmem:[%s1 + $0x7c] sm:$0xf]
    %v58 = vld [vmem:[%s1 + $0x80] sm:$0xf]
    %v59 = vld [vmem:[%s1 + $0x84] sm:$0xf]
    %v60 = vld [vmem:[%s1 + $0x88] sm:$0xf]
    %v61 = vld [vmem:[%s1 + $0x8c] sm:$0xf]
    %v62 = vld [vmem:[%s1 + $0x90] sm:$0xf]
    %v63 = vld [vmem:[%s1 + $0x94] sm:$0xf]
    %v64 = vld [vmem:[%s1 + $0x98] sm:$0xf]
    %v65 = vld [vmem:[%s1 + $0x9c] sm:$0xf]
    %v66 = vld [vmem:[%s1 + $0xa0] sm:$0xf]
    %v67 = vld [vmem:[%s1 + $0xa4] sm:$0xf]
    %v68 = vld [vmem:[%s1 + $0xa8] sm:$0xf]
    %v69 = vld [vmem:[%s1 + $0xac] sm:$0xf]
    %v70 = vld [vmem:[%s1 + $0xb0] sm:$0xf]
    %v71 = vld [vmem:[%s1 + $0xb4] sm:$0xf]
    %v72 = vld [vmem:[%s1 + $0xb8] sm:$0xf]
    %v73 = vld [vmem:[%s1 + $0xbc] sm:$0xf]
    %v74 = vld [vmem:[%s1 + $0xc0] sm:$0xf]
    %v75 = vld [vmem:[%s1 + $0xc4] sm:$0xf]
    %v76 = vld [vmem:[%s1 + $0xc8] sm:$0xf]
    %v77 = vld [vmem:[%s1 + $0xcc] sm:$0xf]
    %v78 = vld [vmem:[%s1 + $0xd0] sm:$0xf]
    %v79 = vld [vmem:[%s1 + $0xd4] sm:$0xf]
    %v80 = vld [vmem:[%s1 + $0xd8] sm:$0xf]
    %v81 = vld [vmem:[%s1 + $0xdc] sm:$0xf]
    %v82 = vld [vmem:[%s1 + $0xe0] sm:$0xf]
    %v83 = vld [vmem:[%s1 + $0xe4] sm:$0xf]
    %v84 = vld [vmem:[%s1 + $0xe8] sm:$0xf]
    %v85 = vld [vmem:[%s1 + $0xec] sm:$0xf]
    %v86 = vld [vmem:[%s1 + $0xf0] sm:$0xf]
    %v87 = vld [vmem:[%s1 + $0xf4] sm:$0xf]
    %v88 = vld [vmem:[%s1 + $0xf8] sm:$0xf]
    %v89 = vld [vmem:[%s1 + $0xfc] sm:$0xf]
    %v90 = vld [vmem:[%s1 + $0x100] sm:$0xf]
    %v91 = vld [vmem:[%s1 + $0x104] sm:$0xf]
    %v92 = vld [vmem:[%s1 + $0x108] sm:$0xf]
    %v93 = vld [vmem:[%s1 + $0x10c] sm:$0xf]
    %v94 = vld [vmem:[%s1 + $0x110] sm:$0xf]
    %v95 = vld [vmem:[%s1 + $0x114] sm:$0xf]
    %v96 = vld [vmem:[%s1 + $0x118] sm:$0xf]
    %v97 = vld [vmem:[%s1 + $0x11c] sm:$0xf]
    %v98 = vld [vmem:[%s1 + $0x120] sm:$0xf]
    %v99 = vld [vmem:[%s1 + $0x124] sm:$0xf]
    %v100 = vld [vmem:[%s1 + $0x128] sm:$0xf]
    %v101 = vld [vmem:[%s1 + $0x12c] sm:$0xf]
    %v102 = vld [vmem:[%s1 + $0x130] sm:$0xf]
    %v103 = vld [vmem:[%s1 + $0x134] sm:$0xf]
    %v104 = vld [vmem:[%s1 + $0x138] sm:$0xf]
    %v105 = vld [vmem:[%s1 + $0x13c] sm:$0xf]
    %v106 = vld [vmem:[%s1 + $0x140] sm:$0xf]
    %v107 = vld [vmem:[%s1 + $0x144] sm:$0xf]
    %v108 = vld [vmem:[%s1 + $0x148] sm:$0xf]
    %v109 = vld [vmem:[%s1 + $0x14c] sm:$0xf]
    %v110 = vld [vmem:[%s1 + $0x150] sm:$0xf]
    %v111 = vld [vmem:[%s1 + $0x154] sm:$0xf]
    %v112 = vld [vmem:[%s1 + $0x158] sm:$0xf]
    %v113 = vld [vmem:[%s1 + $0x15c] sm:$0xf]
    %v114 = vld [vmem:[%s1 + $0x160] sm:$0xf]
    %v115 = vld [vmem:[%s1 + $0x164] sm:$0xf]
    %v116 = vld [vmem:[%s1 + $0x168] sm:$0xf]
    %v117 = vld [vmem:[%s1 + $0x16c] sm:$0xf]
    %v118 = vld [vmem:[%s1 + $0x170] sm:$0xf]
    %v119 = vld [vmem:[%s1 + $0x174] sm:$0xf]
    %v120 = vld [vmem:[%s1 + $0x178] sm:$0xf]
    %v121 = vld [vmem:[%s1 + $0x17c] sm:$0xf]
    %v122 = vld [vmem:[%s1 + $0x180] sm:$0xf]
    %v123 = vld [vmem:[%s1 + $0x184] sm:$0xf]
    %v124 = vld [vmem:[%s1 + $0x188] sm:$0xf]
    %v125 = vld [vmem:[%s1 + $0x18c] sm:$0xf]
    %v126 = vld [vmem:[%s1 + $0x190] sm:$0xf]
    %v127 = vld [vmem:[%s1 + $0x194] sm:$0xf]
    %v128 = vld [vmem:[%s1 + $0x198] sm:$0xf]
    %v129 = vld [vmem:[%s1 + $0x19c] sm:$0xf]
    %v130 = vld [vmem:[%s1 + $0x1a0] sm:$0xf]
    %v131 = vld [vmem:[%s1 + $0x1a4] sm:$0xf]
    %v132 = vld [vmem:[%s1 + $0x1a8] sm:$0xf]
    %v133 = vld [vmem:[%s1 + $0x1ac] sm:$0xf]
    %v134 = vld [vmem:[%s1 + $0x1b0] sm:$0xf]
    %v135 = vld [vmem:[%s1 + $0x1b4] sm:$0xf]
    %v136 = vld [vmem:[%s1 + $0x1b8] sm:$0xf]
    %v137 = vld [vmem:[%s1 + $0x1bc] sm:$0xf]
    %v138 = vld [vmem:[%s1 + $0x1c0] sm:$0xf]
    %v139 = vld [vmem:[%s1 + $0x1c4] sm:$0xf]
    %v140 = vld [vmem:[%s1 + $0x1c8] sm:$0xf]
    %v141 = vld [vmem:[%s1 + $0x1cc] sm:$0xf]
    %v142 = vld [vmem:[%s1 + $0x1d0] sm:$0xf]
    %v143 = vld [vmem:[%s1 + $0x1d4] sm:$0xf]
    %v144 = vld [vmem:[%s1 + $0x1d8] sm:$0xf]
    %v145 = vld [vmem:[%s1 + $0x1dc] sm:$0xf]
    %v146 = vld [vmem:[%s1 + $0x1e0] sm:$0xf]
    %v147 = vld [vmem:[%s1 + $0x1e4] sm:$0xf]
    %v148 = vld [vmem:[%s1 + $0x1e8] sm:$0xf]
    %v149 = vld [vmem:[%s1 + $0x1ec] sm:$0xf]
    %v150 = vld [vmem:[%s1 + $0x1f0] sm:$0xf]
    %v151 = vld [vmem:[%s1 + $0x1f4] sm:$0xf]
    %v152 = vld [vmem:[%s1 + $0x1f8] sm:$0xf]
    %v153 = vld [vmem:[%s1 + $0x1fc] sm:$0xf]
    %v155 = vcombine.high %v25, %v25
    %v157 = vunpack.c.l.s4 1966171168
    %v158 = vunpack.c.0.s8 %v157
    %v159 = vlaneseq
    %v160 = vshrl.u32 %v159, 7
    %v161 = vsub.s32 %v158, %v160
    %v162 = vrot.slane %v25, %v161
    %v164 = vunpack.c.l.s4 1966171168
    %v165 = vunpack.c.0.s8 %v164
    %v166 = vlaneseq
    %v167 = vshrl.u32 %v166, 7
    %v168 = vsub.s32 %v165, %v167
    %v169 = vrot.slane %v155, %v168
    %v170 = vcombine.high %v162, %v162
    %v171 = vcombine.high %v169, %v169
    %v173 = vunpack.c.l.s4 1966171168
    %v174 = vunpack.c.0.s8 %v173
    %v175 = vlaneseq
    %v176 = vshrl.u32 %v175, 7
    %v177 = vsub.s32 %v174, %v176
    %v178 = vrot.slane %v162, %v177
    %v180 = vunpack.c.l.s4 1966171168
    %v181 = vunpack.c.0.s8 %v180
    %v182 = vlaneseq
    %v183 = vshrl.u32 %v182, 7
    %v184 = vsub.s32 %v181, %v183
    %v185 = vrot.slane %v169, %v184
    %v187 = vunpack.c.l.s4 1966171168
    %v188 = vunpack.c.0.s8 %v187
    %v189 = vlaneseq
    %v190 = vshrl.u32 %v189, 7
    %v191 = vsub.s32 %v188, %v190
    %v192 = vrot.slane %v170, %v191
    %v194 = vunpack.c.l.s4 1966171168
    %v195 = vunpack.c.0.s8 %v194
    %v196 = vlaneseq
    %v197 = vshrl.u32 %v196, 7
    %v198 = vsub.s32 %v195, %v197
    %v199 = vrot.slane %v171, %v198
    %v200 = vcombine.high %v178, %v178
    %v201 = vcombine.high %v185, %v185
    %v202 = vcombine.high %v192, %v192
    %v203 = vcombine.high %v199, %v199
    %v340 = vunpack.c.l.b16 %v26
    %v341 = vunpack.c.l.b16 %v27
    %v342 = vunpack.c.l.b16 %v28
    %v343 = vunpack.c.l.b16 %v29
    %v344 = vunpack.c.l.b16 %v30
    %v345 = vunpack.c.l.b16 %v31
    %v346 = vunpack.c.l.b16 %v32
    %v347 = vunpack.c.l.b16 %v33
    %v348 = vunpack.c.l.b16 %v34
    %v349 = vunpack.c.l.b16 %v35
    %v350 = vunpack.c.l.b16 %v36
    %v351 = vunpack.c.l.b16 %v37
    %v352 = vunpack.c.l.b16 %v38
    %v353 = vunpack.c.l.b16 %v39
    %v354 = vunpack.c.l.b16 %v40
    %v355 = vunpack.c.l.b16 %v41
    %v356 = vunpack.c.l.b16 %v42
    %v357 = vunpack.c.l.b16 %v43
    %v358 = vunpack.c.l.b16 %v44
    %v359 = vunpack.c.l.b16 %v45
    %v360 = vunpack.c.l.b16 %v46
    %v361 = vunpack.c.l.b16 %v47
    %v362 = vunpack.c.l.b16 %v48
    %v363 = vunpack.c.l.b16 %v49
    %v364 = vunpack.c.l.b16 %v50
    %v365 = vunpack.c.l.b16 %v51
    %v366 = vunpack.c.l.b16 %v52
    %v367 = vunpack.c.l.b16 %v53
    %v368 = vunpack.c.l.b16 %v54
    %v369 = vunpack.c.l.b16 %v55
    %v370 = vunpack.c.l.b16 %v56
    %v371 = vunpack.c.l.b16 %v57
    %v372 = vunpack.c.l.b16 %v58
    %v373 = vunpack.c.l.b16 %v59
    %v374 = vunpack.c.l.b16 %v60
    %v375 = vunpack.c.l.b16 %v61
    %v376 = vunpack.c.l.b16 %v62
    %v377 = vunpack.c.l.b16 %v63
    %v378 = vunpack.c.l.b16 %v64
    %v379 = vunpack.c.l.b16 %v65
    %v380 = vunpack.c.l.b16 %v66
    %v381 = vunpack.c.l.b16 %v67
    %v382 = vunpack.c.l.b16 %v68
    %v383 = vunpack.c.l.b16 %v69
    %v384 = vunpack.c.l.b16 %v70
    %v385 = vunpack.c.l.b16 %v71
    %v386 = vunpack.c.l.b16 %v72
    %v387 = vunpack.c.l.b16 %v73
    %v388 = vunpack.c.l.b16 %v74
    %v389 = vunpack.c.l.b16 %v75
    %v390 = vunpack.c.l.b16 %v76
    %v391 = vunpack.c.l.b16 %v77
    %v392 = vunpack.c.l.b16 %v78
    %v393 = vunpack.c.l.b16 %v79
    %v394 = vunpack.c.l.b16 %v80
    %v395 = vunpack.c.l.b16 %v81
    %v396 = vunpack.c.l.b16 %v82
    %v397 = vunpack.c.l.b16 %v83
    %v398 = vunpack.c.l.b16 %v84
    %v399 = vunpack.c.l.b16 %v85
    %v400 = vunpack.c.l.b16 %v86
    %v401 = vunpack.c.l.b16 %v87
    %v402 = vunpack.c.l.b16 %v88
    %v403 = vunpack.c.l.b16 %v89
    %v404 = vunpack.c.l.b16 %v90
    %v405 = vunpack.c.l.b16 %v91
    %v406 = vunpack.c.l.b16 %v92
    %v407 = vunpack.c.l.b16 %v93
    %v408 = vunpack.c.l.b16 %v94
    %v409 = vunpack.c.l.b16 %v95
    %v410 = vunpack.c.l.b16 %v96
    %v411 = vunpack.c.l.b16 %v97
    %v412 = vunpack.c.l.b16 %v98
    %v413 = vunpack.c.l.b16 %v99
    %v414 = vunpack.c.l.b16 %v100
    %v415 = vunpack.c.l.b16 %v101
    %v416 = vunpack.c.l.b16 %v102
    %v417 = vunpack.c.l.b16 %v103
    %v418 = vunpack.c.l.b16 %v104
    %v419 = vunpack.c.l.b16 %v105
    %v420 = vunpack.c.l.b16 %v106
    %v421 = vunpack.c.l.b16 %v107
    %v422 = vunpack.c.l.b16 %v108
    %v423 = vunpack.c.l.b16 %v109
    %v424 = vunpack.c.l.b16 %v110
    %v425 = vunpack.c.l.b16 %v111
    %v426 = vunpack.c.l.b16 %v112
    %v427 = vunpack.c.l.b16 %v113
    %v428 = vunpack.c.l.b16 %v114
    %v429 = vunpack.c.l.b16 %v115
    %v430 = vunpack.c.l.b16 %v116
    %v431 = vunpack.c.l.b16 %v117
    %v432 = vunpack.c.l.b16 %v118
    %v433 = vunpack.c.l.b16 %v119
    %v434 = vunpack.c.l.b16 %v120
    %v435 = vunpack.c.l.b16 %v121
    %v436 = vunpack.c.l.b16 %v122
    %v437 = vunpack.c.l.b16 %v123
    %v438 = vunpack.c.l.b16 %v124
    %v439 = vunpack.c.l.b16 %v125
    %v440 = vunpack.c.l.b16 %v126
    %v441 = vunpack.c.l.b16 %v127
    %v442 = vunpack.c.l.b16 %v128
    %v443 = vunpack.c.l.b16 %v129
    %v444 = vunpack.c.l.b16 %v130
    %v445 = vunpack.c.l.b16 %v131
    %v446 = vunpack.c.l.b16 %v132
    %v447 = vunpack.c.l.b16 %v133
    %v448 = vunpack.c.l.b16 %v134
    %v449 = vunpack.c.l.b16 %v135
    %v450 = vunpack.c.l.b16 %v136
    %v451 = vunpack.c.l.b16 %v137
    %v452 = vunpack.c.l.b16 %v138
    %v453 = vunpack.c.l.b16 %v139
    %v454 = vunpack.c.l.b16 %v140
    %v455 = vunpack.c.l.b16 %v141
    %v456 = vunpack.c.l.b16 %v142
    %v457 = vunpack.c.l.b16 %v143
    %v458 = vunpack.c.l.b16 %v144
    %v459 = vunpack.c.l.b16 %v145
    %v460 = vunpack.c.l.b16 %v146
    %v461 = vunpack.c.l.b16 %v147
    %v462 = vunpack.c.l.b16 %v148
    %v463 = vunpack.c.l.b16 %v149
    %v464 = vunpack.c.l.b16 %v150
    %v465 = vunpack.c.l.b16 %v151
    %v466 = vunpack.c.l.b16 %v152
    %v467 = vunpack.c.l.b16 %v153
    %v468 = vpack.c.b16 %v341, %v340
    %v469 = vpack.c.b16 %v343, %v342
    %v470 = vpack.c.b16 %v345, %v344
    %v471 = vpack.c.b16 %v347, %v346
    %v472 = vpack.c.b16 %v349, %v348
    %v473 = vpack.c.b16 %v351, %v350
    %v474 = vpack.c.b16 %v353, %v352
    %v475 = vpack.c.b16 %v355, %v354
    %v476 = vpack.c.b16 %v357, %v356
    %v477 = vpack.c.b16 %v359, %v358
    %v478 = vpack.c.b16 %v361, %v360
    %v479 = vpack.c.b16 %v363, %v362
    %v480 = vpack.c.b16 %v365, %v364
    %v481 = vpack.c.b16 %v367, %v366
    %v482 = vpack.c.b16 %v369, %v368
    %v483 = vpack.c.b16 %v371, %v370
    %v484 = vpack.c.b16 %v373, %v372
    %v485 = vpack.c.b16 %v375, %v374
    %v486 = vpack.c.b16 %v377, %v376
    %v487 = vpack.c.b16 %v379, %v378
    %v488 = vpack.c.b16 %v381, %v380
    %v489 = vpack.c.b16 %v383, %v382
    %v490 = vpack.c.b16 %v385, %v384
    %v491 = vpack.c.b16 %v387, %v386
    %v492 = vpack.c.b16 %v389, %v388
    %v493 = vpack.c.b16 %v391, %v390
    %v494 = vpack.c.b16 %v393, %v392
    %v495 = vpack.c.b16 %v395, %v394
    %v496 = vpack.c.b16 %v397, %v396
    %v497 = vpack.c.b16 %v399, %v398
    %v498 = vpack.c.b16 %v401, %v400
    %v499 = vpack.c.b16 %v403, %v402
    %v500 = vpack.c.b16 %v405, %v404
    %v501 = vpack.c.b16 %v407, %v406
    %v502 = vpack.c.b16 %v409, %v408
    %v503 = vpack.c.b16 %v411, %v410
    %v504 = vpack.c.b16 %v413, %v412
    %v505 = vpack.c.b16 %v415, %v414
    %v506 = vpack.c.b16 %v417, %v416
    %v507 = vpack.c.b16 %v419, %v418
    %v508 = vpack.c.b16 %v421, %v420
    %v509 = vpack.c.b16 %v423, %v422
    %v510 = vpack.c.b16 %v425, %v424
    %v511 = vpack.c.b16 %v427, %v426
    %v512 = vpack.c.b16 %v429, %v428
    %v513 = vpack.c.b16 %v431, %v430
    %v514 = vpack.c.b16 %v433, %v432
    %v515 = vpack.c.b16 %v435, %v434
    %v516 = vpack.c.b16 %v437, %v436
    %v517 = vpack.c.b16 %v439, %v438
    %v518 = vpack.c.b16 %v441, %v440
    %v519 = vpack.c.b16 %v443, %v442
    %v520 = vpack.c.b16 %v445, %v444
    %v521 = vpack.c.b16 %v447, %v446
    %v522 = vpack.c.b16 %v449, %v448
    %v523 = vpack.c.b16 %v451, %v450
    %v524 = vpack.c.b16 %v453, %v452
    %v525 = vpack.c.b16 %v455, %v454
    %v526 = vpack.c.b16 %v457, %v456
    %v527 = vpack.c.b16 %v459, %v458
    %v528 = vpack.c.b16 %v461, %v460
    %v529 = vpack.c.b16 %v463, %v462
    %v530 = vpack.c.b16 %v465, %v464
    %v531 = vpack.c.b16 %v467, %v466
    %596 = vmatprep.subr.bf16.mxu0 0
    %597 = vmatpush1.bf16.msra.mxu0 %v475
    %598 = vmatprep.subr.bf16.mxu0 0
    %599 = vmatpush1.bf16.msra.mxu0 %v474
    %600 = vmatprep.subr.bf16.mxu0 0
    %601 = vmatpush1.bf16.msra.mxu0 %v473
    %602 = vmatprep.subr.bf16.mxu0 0
    %603 = vmatpush1.bf16.msra.mxu0 %v472
    %604 = vmatprep.subr.bf16.mxu0 0
    %605 = vmatpush1.bf16.msra.mxu0 %v471
    %606 = vmatprep.subr.bf16.mxu0 0
    %607 = vmatpush1.bf16.msra.mxu0 %v470
    %608 = vmatprep.subr.bf16.mxu0 0
    %609 = vmatpush1.bf16.msra.mxu0 %v469
    %610 = vmatprep.subr.bf16.mxu0 0
    %611 = vmatpush1.bf16.msra.mxu0 %v468
    %612 = vmatprep.subr.bf16.mxu0 0
    %613 = vmatpush2.bf16.msra.mxu0 %v483
    %614 = vmatprep.subr.bf16.mxu0 0
    %615 = vmatpush2.bf16.msra.mxu0 %v482
    %616 = vmatprep.subr.bf16.mxu0 0
    %617 = vmatpush2.bf16.msra.mxu0 %v481
    %618 = vmatprep.subr.bf16.mxu0 0
    %619 = vmatpush2.bf16.msra.mxu0 %v480
    %620 = vmatprep.subr.bf16.mxu0 0
    %621 = vmatpush2.bf16.msra.mxu0 %v479
    %622 = vmatprep.subr.bf16.mxu0 0
    %623 = vmatpush2.bf16.msra.mxu0 %v478
    %624 = vmatprep.subr.bf16.mxu0 0
    %625 = vmatpush2.bf16.msra.mxu0 %v477
    %626 = vmatprep.subr.bf16.mxu0 0
    %627 = vmatpush2.bf16.msra.mxu0 %v476
    %628 = vmatprep.mubr.bf16.mxu0 %v192
    %629 = vmatmul.mubr.bf16.gmra.mxu0 %v178
    %v630 = vpop.f32.mrf.mxu0
    %v631 = vadd.f32 0.0, %v630
    %v632 = vpop.f32.mrf.mxu0
    %v633 = vpop.f32.mrf.mxu0
    %v634 = vpop.f32.mrf.mxu0
    %635 = vdwg.mxu0
    %636 = vmatprep.subr.bf16.mxu0 0
    %637 = vmatpush1.bf16.msra.mxu0 %v491
    %638 = vmatprep.subr.bf16.mxu0 0
    %639 = vmatpush1.bf16.msra.mxu0 %v490
    %640 = vmatprep.subr.bf16.mxu0 0
    %641 = vmatpush1.bf16.msra.mxu0 %v489
    %642 = vmatprep.subr.bf16.mxu0 0
    %643 = vmatpush1.bf16.msra.mxu0 %v488
    %644 = vmatprep.subr.bf16.mxu0 0
    %645 = vmatpush1.bf16.msra.mxu0 %v487
    %646 = vmatprep.subr.bf16.mxu0 0
    %647 = vmatpush1.bf16.msra.mxu0 %v486
    %648 = vmatprep.subr.bf16.mxu0 0
    %649 = vmatpush1.bf16.msra.mxu0 %v485
    %650 = vmatprep.subr.bf16.mxu0 0
    %651 = vmatpush1.bf16.msra.mxu0 %v484
    %652 = vmatprep.subr.bf16.mxu0 0
    %653 = vmatpush2.bf16.msra.mxu0 %v499
    %654 = vmatprep.subr.bf16.mxu0 0
    %655 = vmatpush2.bf16.msra.mxu0 %v498
    %656 = vmatprep.subr.bf16.mxu0 0
    %657 = vmatpush2.bf16.msra.mxu0 %v497
    %658 = vmatprep.subr.bf16.mxu0 0
    %659 = vmatpush2.bf16.msra.mxu0 %v496
    %660 = vmatprep.subr.bf16.mxu0 0
    %661 = vmatpush2.bf16.msra.mxu0 %v495
    %662 = vmatprep.subr.bf16.mxu0 0
    %663 = vmatpush2.bf16.msra.mxu0 %v494
    %664 = vmatprep.subr.bf16.mxu0 0
    %665 = vmatpush2.bf16.msra.mxu0 %v493
    %666 = vmatprep.subr.bf16.mxu0 0
    %667 = vmatpush2.bf16.msra.mxu0 %v492
    %668 = vmatprep.mubr.bf16.mxu0 %v202
    %669 = vmatmul.mubr.bf16.gmra.mxu0 %v200
    %v670 = vpop.f32.mrf.mxu0
    %v671 = vadd.f32 %v631, %v670
    %v672 = vpop.f32.mrf.mxu0
    %v673 = vpop.f32.mrf.mxu0
    %v674 = vpop.f32.mrf.mxu0
    %675 = vdwg.mxu0
    %676 = vmatprep.subr.bf16.mxu0 0
    %677 = vmatpush1.bf16.msra.mxu0 %v507
    %678 = vmatprep.subr.bf16.mxu0 0
    %679 = vmatpush1.bf16.msra.mxu0 %v506
    %680 = vmatprep.subr.bf16.mxu0 0
    %681 = vmatpush1.bf16.msra.mxu0 %v505
    %682 = vmatprep.subr.bf16.mxu0 0
    %683 = vmatpush1.bf16.msra.mxu0 %v504
    %684 = vmatprep.subr.bf16.mxu0 0
    %685 = vmatpush1.bf16.msra.mxu0 %v503
    %686 = vmatprep.subr.bf16.mxu0 0
    %687 = vmatpush1.bf16.msra.mxu0 %v502
    %688 = vmatprep.subr.bf16.mxu0 0
    %689 = vmatpush1.bf16.msra.mxu0 %v501
    %690 = vmatprep.subr.bf16.mxu0 0
    %691 = vmatpush1.bf16.msra.mxu0 %v500
    %692 = vmatprep.subr.bf16.mxu0 0
    %693 = vmatpush2.bf16.msra.mxu0 %v515
    %694 = vmatprep.subr.bf16.mxu0 0
    %695 = vmatpush2.bf16.msra.mxu0 %v514
    %696 = vmatprep.subr.bf16.mxu0 0
    %697 = vmatpush2.bf16.msra.mxu0 %v513
    %698 = vmatprep.subr.bf16.mxu0 0
    %699 = vmatpush2.bf16.msra.mxu0 %v512
    %700 = vmatprep.subr.bf16.mxu0 0
    %701 = vmatpush2.bf16.msra.mxu0 %v511
    %702 = vmatprep.subr.bf16.mxu0 0
    %703 = vmatpush2.bf16.msra.mxu0 %v510
    %704 = vmatprep.subr.bf16.mxu0 0
    %705 = vmatpush2.bf16.msra.mxu0 %v509
    %706 = vmatprep.subr.bf16.mxu0 0
    %707 = vmatpush2.bf16.msra.mxu0 %v508
    %708 = vmatprep.mubr.bf16.mxu0 %v199
    %709 = vmatmul.mubr.bf16.gmra.mxu0 %v185
    %v710 = vpop.f32.mrf.mxu0
    %v711 = vadd.f32 %v671, %v710
    %v712 = vpop.f32.mrf.mxu0
    %v713 = vpop.f32.mrf.mxu0
    %v714 = vpop.f32.mrf.mxu0
    %715 = vdwg.mxu0
    %716 = vmatprep.subr.bf16.mxu0 0
    %717 = vmatpush1.bf16.msra.mxu0 %v523
    %718 = vmatprep.subr.bf16.mxu0 0
    %719 = vmatpush1.bf16.msra.mxu0 %v522
    %720 = vmatprep.subr.bf16.mxu0 0
    %721 = vmatpush1.bf16.msra.mxu0 %v521
    %722 = vmatprep.subr.bf16.mxu0 0
    %723 = vmatpush1.bf16.msra.mxu0 %v520
    %724 = vmatprep.subr.bf16.mxu0 0
    %725 = vmatpush1.bf16.msra.mxu0 %v519
    %726 = vmatprep.subr.bf16.mxu0 0
    %727 = vmatpush1.bf16.msra.mxu0 %v518
    %728 = vmatprep.subr.bf16.mxu0 0
    %729 = vmatpush1.bf16.msra.mxu0 %v517
    %730 = vmatprep.subr.bf16.mxu0 0
    %731 = vmatpush1.bf16.msra.mxu0 %v516
    %732 = vmatprep.subr.bf16.mxu0 0
    %733 = vmatpush2.bf16.msra.mxu0 %v531
    %734 = vmatprep.subr.bf16.mxu0 0
    %735 = vmatpush2.bf16.msra.mxu0 %v530
    %736 = vmatprep.subr.bf16.mxu0 0
    %737 = vmatpush2.bf16.msra.mxu0 %v529
    %738 = vmatprep.subr.bf16.mxu0 0
    %739 = vmatpush2.bf16.msra.mxu0 %v528
    %740 = vmatprep.subr.bf16.mxu0 0
    %741 = vmatpush2.bf16.msra.mxu0 %v527
    %742 = vmatprep.subr.bf16.mxu0 0
    %743 = vmatpush2.bf16.msra.mxu0 %v526
    %744 = vmatprep.subr.bf16.mxu0 0
    %745 = vmatpush2.bf16.msra.mxu0 %v525
    %746 = vmatprep.subr.bf16.mxu0 0
    %747 = vmatpush2.bf16.msra.mxu0 %v524
    %748 = vmatprep.mubr.bf16.mxu0 %v203
    %749 = vmatmul.mubr.bf16.gmra.mxu0 %v201
    %v750 = vpop.f32.mrf.mxu0
    %v751 = vadd.f32 %v711, %v750
    %v752 = vpop.f32.mrf.mxu0
    %v753 = vpop.f32.mrf.mxu0
    %v754 = vpop.f32.mrf.mxu0
    %755 = vdwg.mxu0
    %v756 = vld [vmem:[%s2] sm:$0x1]
    %v758 = vlaneseq
    %v759 = vshrl.u32 %v758, 7
    %v760 = vsub.s32 0, %v759
    %v761 = vrot.slane %v756, %v760
    %v763 = vmul.f32 %v751, %v761
    %v764 = vld [vmem:[%s3] sm:$0x1]
    %v766 = vlaneseq
    %v767 = vshrl.u32 %v766, 7
    %v768 = vsub.s32 0, %v767
    %v769 = vrot.slane %v764, %v768
    %v771 = vadd.f32 %v763, %v769
    %vm772 = vcmp.ge.f32.partialorder %v771, 0.0
    %v773 = vmul.f32 %v771, 0.01
    %v774 = vsel %vm772, %v771, %v773
    %v775 = vld [vmem:[%s4] sm:$0xf]
    %v776 = vunpack.c.l.bf16 %v775
    %v777 = vld [vmem:[%s5] sm:$0x1]
    %v779 = vlaneseq
    %v780 = vshrl.u32 %v779, 7
    %v781 = vsub.s32 0, %v780
    %v782 = vrot.slane %v777, %v781
    %vm784 = vcmask 64512
    %v786 = vsel %vm784, %v774, 0
    %788 = vmatprep.subr.mxu0 0.0
    %789 = vmatpush1.msra.mxu0 0.0
    %790 = vmatprep.subr.mxu0 0.0
    %791 = vmatpush1.msra.mxu0 0.0
    %792 = vmatprep.subr.mxu0 0.0
    %793 = vmatpush1.msra.mxu0 0.0
    %794 = vmatprep.subr.mxu0 0.0
    %795 = vmatpush1.msra.mxu0 0.0
    %796 = vmatprep.subr.mxu0 0.0
    %797 = vmatpush1.msra.mxu0 0.0
    %798 = vmatprep.subr.mxu0 0.0
    %799 = vmatpush1.msra.mxu0 0.0
    %800 = vmatprep.subr.mxu0 0.0
    %801 = vmatpush1.msra.mxu0 0.0
    %802 = vmatprep.subr.mxu0 0.0
    %803 = vmatpush1.msra.mxu0 0.0
    %804 = vmatprep.subr.mxu0 0.0
    %805 = vmatpush1.msra.mxu0 0.0
    %806 = vmatprep.subr.mxu0 0.0
    %807 = vmatpush1.msra.mxu0 0.0
    %808 = vmatprep.subr.mxu0 0.0
    %809 = vmatpush1.msra.mxu0 0.0
    %810 = vmatprep.subr.mxu0 0.0
    %811 = vmatpush1.msra.mxu0 0.0
    %812 = vmatprep.subr.mxu0 0.0
    %813 = vmatpush1.msra.mxu0 0.0
    %814 = vmatprep.subr.mxu0 0.0
    %815 = vmatpush1.msra.mxu0 0.0
    %816 = vmatprep.subr.mxu0 0.0
    %817 = vmatpush1.msra.mxu0 0.0
    %818 = vmatprep.subr.mxu0 0.0
    %819 = vmatpush1.msra.mxu0 %v776
    %820 = vmatprep.subr.mxu0 0.0
    %821 = vmatpush2.msra.mxu0 0.0
    %822 = vmatprep.subr.mxu0 0.0
    %823 = vmatpush2.msra.mxu0 0.0
    %824 = vmatprep.subr.mxu0 0.0
    %825 = vmatpush2.msra.mxu0 0.0
    %826 = vmatprep.subr.mxu0 0.0
    %827 = vmatpush2.msra.mxu0 0.0
    %828 = vmatprep.subr.mxu0 0.0
    %829 = vmatpush2.msra.mxu0 0.0
    %830 = vmatprep.subr.mxu0 0.0
    %831 = vmatpush2.msra.mxu0 0.0
    %832 = vmatprep.subr.mxu0 0.0
    %833 = vmatpush2.msra.mxu0 0.0
    %834 = vmatprep.subr.mxu0 0.0
    %835 = vmatpush2.msra.mxu0 0.0
    %836 = vmatprep.subr.mxu0 0.0
    %837 = vmatpush2.msra.mxu0 0.0
    %838 = vmatprep.subr.mxu0 0.0
    %839 = vmatpush2.msra.mxu0 0.0
    %840 = vmatprep.subr.mxu0 0.0
    %841 = vmatpush2.msra.mxu0 0.0
    %842 = vmatprep.subr.mxu0 0.0
    %843 = vmatpush2.msra.mxu0 0.0
    %844 = vmatprep.subr.mxu0 0.0
    %845 = vmatpush2.msra.mxu0 0.0
    %846 = vmatprep.subr.mxu0 0.0
    %847 = vmatpush2.msra.mxu0 0.0
    %848 = vmatprep.subr.mxu0 0.0
    %849 = vmatpush2.msra.mxu0 0.0
    %850 = vmatprep.subr.mxu0 0.0
    %851 = vmatpush2.msra.mxu0 0.0
    %852 = vmatprep.mubr.f32.mxu0 0.0
    %853 = vmatmul.mubr.f32.gmra.mxu0 %v786
    %v854 = vpop.f32.mrf.mxu0
    %v855 = vadd.f32 %v782, %v854
    %v856 = vpop.f32.mrf.mxu0
    %857 = vdwg.mxu0
    %vm858 = vcmask 9216
    %v859 = vsel %vm858, %v855, -inf
    %860 = vmax.xlane.f32.xlu0 %v859
    %v861 = vpop.xlane.xlu0 %860
    %v862 = vsub.f32 %v855, %v861
    %v863 = vmul.f32 %v862, 1.442695
    %v864 = vpow.pop %v863
    %v865 = vsel %vm858, %v864, 0.0
    %866 = vadd.xlane.f32.xlu0 %v865
    %v867 = vpop.xlane.xlu0 %866
    %v868 = vrcp.pop %v867
    %v869 = vmul.f32 %v864, %v868
    %870 = vst.msk [vmem:[#allocation2] sm:$0x3] %vm858, %v869
    // Predicated region
    $region26: #{classifier_forward.11} parent=1 // pred_check
      _
    $region27: #{classifier_forward.11} parent=1 // pred_check_branch
      %872 = sbr.rel (0) target = $region29
    $region28: #{classifier_forward.11} parent=1 // pred_region
      %s874 = ssub.s32 32, 32
      %875 = vsyncadd [#allocation3], %s874
      %s877 = sshll.u32 [#allocation2], 4
      %s878 = int_to_ptr.vmem [resolvable:$true] %s877
      %880 = dma.vmem_to_hbm [thread:$0]  %s878, 32, %s6, [#allocation3]
    $region29: #{classifier_forward.11} parent=1 // pred_fallthru
      _
    // Predicated region
    $region30: #{classifier_forward.11} parent=1 // pred_check
      _
    $region31: #{classifier_forward.11} parent=1 // pred_check_branch
      %882 = sbr.rel (0) target = $region33
    $region32: #{classifier_forward.11} parent=1 // pred_region
      %883 = dma.done [#allocation3], 32
    $region33: #{classifier_forward.11} parent=1 // pred_fallthru
      _
    %884 = vsyncpa [#allocation3], 1

// kernel: classifier_forward.10
$region0: #{classifier_forward.10}
  #allocation0 [shape = 'u32[]', space=smem, size = 0x4, offset = 0x4, fixed_abs, tag = 'smem constant byte address 0x4 - core index']
  #allocation1 [shape = 'u32[144,128]{1,0:T(1,128)}', space=vmem, size = 0x12000, scoped, tag = 'internal scratch']
  %s0 = inlined_call_operand.vmem [shape: bf16[288,32], index: 0, kind: input, shape index: {}]
  %s1 = inlined_call_operand.vmem [shape: bf16[288,32], index: 1, kind: input, shape index: {}]
  %s2 = inlined_call_operand.vmem [shape: bf16[288,32], index: 2, kind: input, shape index: {}]
  %s3 = inlined_call_operand.vmem [shape: bf16[288,32], index: 3, kind: input, shape index: {}]
  %s4 = inlined_call_operand.vmem [shape: bf16[64,288], index: 4, kind: input, shape index: {}]
  %s5 = inlined_call_operand.vmem [shape: f32[64,1], index: 5, kind: input, shape index: {}]
  %s6 = inlined_call_operand.vmem [shape: bf16[64,32], index: 6, kind: output, shape index: {}]
  %s7 = sld [smem:[#allocation0]]
  $region34: #{classifier_forward.10} parent=0
    _
  %s9 = ssub.s32 1, %s7
  %s10 = scalar_select 0, %s9, %s7
  // Predicated region
  $region2: #{classifier_forward.10} parent=0 // pred_check
    _
  $region3: #{classifier_forward.10} parent=0 // pred_check_branch
    %12 = sbr.rel (0) target = $region5
  $region4: #{classifier_forward.10} parent=0 // pred_region
    _
  $region5: #{classifier_forward.10} parent=0 // pred_fallthru
    _
  // Predicated region
  $region6: #{classifier_forward.10} parent=0 // pred_check
    _
  $region7: #{classifier_forward.10} parent=0 // pred_check_branch
    %14 = sbr.rel (0) target = $region9
  $region8: #{classifier_forward.10} parent=0 // pred_region
    _
  $region9: #{classifier_forward.10} parent=0 // pred_fallthru
    _
  // Predicated region
  $region10: #{classifier_forward.10} parent=0 // pred_check
    _
  $region11: #{classifier_forward.10} parent=0 // pred_check_branch
    %16 = sbr.rel (0) target = $region13
  $region12: #{classifier_forward.10} parent=0 // pred_region
    _
  $region13: #{classifier_forward.10} parent=0 // pred_fallthru
    _
  // Predicated region
  $region14: #{classifier_forward.10} parent=0 // pred_check
    _
  $region15: #{classifier_forward.10} parent=0 // pred_check_branch
    %18 = sbr.rel (0) target = $region17
  $region16: #{classifier_forward.10} parent=0 // pred_region
    _
  $region17: #{classifier_forward.10} parent=0 // pred_fallthru
    _
  // Predicated region
  $region18: #{classifier_forward.10} parent=0 // pred_check
    _
  $region19: #{classifier_forward.10} parent=0 // pred_check_branch
    %20 = sbr.rel (0) target = $region21
  $region20: #{classifier_forward.10} parent=0 // pred_region
    _
  $region21: #{classifier_forward.10} parent=0 // pred_fallthru
    _
  // Predicated region
  $region22: #{classifier_forward.10} parent=0 // pred_check
    _
  $region23: #{classifier_forward.10} parent=0 // pred_check_branch
    %22 = sbr.rel (0) target = $region25
  $region24: #{classifier_forward.10} parent=0 // pred_region
    _
  $region25: #{classifier_forward.10} parent=0 // pred_fallthru
    _
  %v24 = vld [vmem:[%s4] sm:$0xff]
  %v25 = vld [vmem:[%s4 + $0x8] sm:$0xf]
  %v26 = vld [vmem:[%s4 + $0xc] sm:$0xff]
  %v27 = vld [vmem:[%s4 + $0x14] sm:$0xf]
  %v28 = vld [vmem:[%s4 + $0x18] sm:$0xff]
  %v29 = vld [vmem:[%s4 + $0x20] sm:$0xf]
  %v30 = vld [vmem:[%s4 + $0x24] sm:$0xff]
  %v31 = vld [vmem:[%s4 + $0x2c] sm:$0xf]
  %v32 = vld [vmem:[%s4 + $0x30] sm:$0xff]
  %v33 = vld [vmem:[%s4 + $0x38] sm:$0xf]
  %v34 = vld [vmem:[%s4 + $0x3c] sm:$0xff]
  %v35 = vld [vmem:[%s4 + $0x44] sm:$0xf]
  %v36 = vld [vmem:[%s4 + $0x48] sm:$0xff]
  %v37 = vld [vmem:[%s4 + $0x50] sm:$0xf]
  %v38 = vld [vmem:[%s4 + $0x54] sm:$0xff]
  %v39 = vld [vmem:[%s4 + $0x5c] sm:$0xf]
  %v40 = vld [vmem:[%s0] sm:$0xf]
  %v41 = vld [vmem:[%s0 + $0x4] sm:$0xf]
  %v42 = vld [vmem:[%s0 + $0x8] sm:$0xf]
  %v43 = vld [vmem:[%s0 + $0xc] sm:$0xf]
  %v44 = vld [vmem:[%s0 + $0x10] sm:$0xf]
  %v45 = vld [vmem:[%s0 + $0x14] sm:$0xf]
  %v46 = vld [vmem:[%s0 + $0x18] sm:$0xf]
  %v47 = vld [vmem:[%s0 + $0x1c] sm:$0xf]
  %v48 = vld [vmem:[%s0 + $0x20] sm:$0xf]
  %v49 = vld [vmem:[%s0 + $0x24] sm:$0xf]
  %v50 = vld [vmem:[%s0 + $0x28] sm:$0xf]
  %v51 = vld [vmem:[%s0 + $0x2c] sm:$0xf]
  %v52 = vld [vmem:[%s0 + $0x30] sm:$0xf]
  %v53 = vld [vmem:[%s0 + $0x34] sm:$0xf]
  %v54 = vld [vmem:[%s0 + $0x38] sm:$0xf]
  %v55 = vld [vmem:[%s0 + $0x3c] sm:$0xf]
  %v56 = vld [vmem:[%s0 + $0x40] sm:$0xf]
  %v57 = vld [vmem:[%s0 + $0x44] sm:$0xf]
  %v58 = vld [vmem:[%s0 + $0x48] sm:$0xf]
  %v59 = vld [vmem:[%s0 + $0x4c] sm:$0xf]
  %v60 = vld [vmem:[%s0 + $0x50] sm:$0xf]
  %v61 = vld [vmem:[%s0 + $0x54] sm:$0xf]
  %v62 = vld [vmem:[%s0 + $0x58] sm:$0xf]
  %v63 = vld [vmem:[%s0 + $0x5c] sm:$0xf]
  %v64 = vld [vmem:[%s0 + $0x60] sm:$0xf]
  %v65 = vld [vmem:[%s0 + $0x64] sm:$0xf]
  %v66 = vld [vmem:[%s0 + $0x68] sm:$0xf]
  %v67 = vld [vmem:[%s0 + $0x6c] sm:$0xf]
  %v68 = vld [vmem:[%s0 + $0x70] sm:$0xf]
  %v69 = vld [vmem:[%s0 + $0x74] sm:$0xf]
  %v70 = vld [vmem:[%s0 + $0x78] sm:$0xf]
  %v71 = vld [vmem:[%s0 + $0x7c] sm:$0xf]
  %v72 = vld [vmem:[%s0 + $0x80] sm:$0xf]
  %v73 = vld [vmem:[%s0 + $0x84] sm:$0xf]
  %v74 = vld [vmem:[%s0 + $0x88] sm:$0xf]
  %v75 = vld [vmem:[%s0 + $0x8c] sm:$0xf]
  %v92 = vunpack.c.l.b16 %v24
  %v93 = vunpack.c.h.b16 %v24
  %v94 = vunpack.c.l.b16 %v25
  %v95 = vunpack.c.l.b16 %v26
  %v96 = vunpack.c.h.b16 %v26
  %v97 = vunpack.c.l.b16 %v27
  %v98 = vunpack.c.l.b16 %v28
  %v99 = vunpack.c.h.b16 %v28
  %v100 = vunpack.c.l.b16 %v29
  %v101 = vunpack.c.l.b16 %v30
  %v102 = vunpack.c.h.b16 %v30
  %v103 = vunpack.c.l.b16 %v31
  %v104 = vunpack.c.l.b16 %v32
  %v105 = vunpack.c.h.b16 %v32
  %v106 = vunpack.c.l.b16 %v33
  %v107 = vunpack.c.l.b16 %v34
  %v108 = vunpack.c.h.b16 %v34
  %v109 = vunpack.c.l.b16 %v35
  %v110 = vunpack.c.l.b16 %v36
  %v111 = vunpack.c.h.b16 %v36
  %v112 = vunpack.c.l.b16 %v37
  %v113 = vunpack.c.l.b16 %v38
  %v114 = vunpack.c.h.b16 %v38
  %v115 = vunpack.c.l.b16 %v39
  %v116 = vpack.c.b16 %v95, %v92
  %v117 = vpack.c.b16 %v96, %v93
  %v118 = vpack.c.b16 %v97, %v94
  %v119 = vpack.c.b16 %v101, %v98
  %v120 = vpack.c.b16 %v102, %v99
  %v121 = vpack.c.b16 %v103, %v100
  %v122 = vpack.c.b16 %v107, %v104
  %v123 = vpack.c.b16 %v108, %v105
  %v124 = vpack.c.b16 %v109, %v106
  %v125 = vpack.c.b16 %v113, %v110
  %v126 = vpack.c.b16 %v114, %v111
  %v127 = vpack.c.b16 %v115, %v112
  %v172 = vunpack.c.l.b16 %v40
  %v173 = vunpack.c.l.b16 %v41
  %v174 = vunpack.c.l.b16 %v42
  %v175 = vunpack.c.l.b16 %v43
  %v176 = vunpack.c.l.b16 %v44
  %v177 = vunpack.c.l.b16 %v45
  %v178 = vunpack.c.l.b16 %v46
  %v179 = vunpack.c.l.b16 %v47
  %v180 = vunpack.c.l.b16 %v48
  %v181 = vunpack.c.l.b16 %v49
  %v182 = vunpack.c.l.b16 %v50
  %v183 = vunpack.c.l.b16 %v51
  %v184 = vunpack.c.l.b16 %v52
  %v185 = vunpack.c.l.b16 %v53
  %v186 = vunpack.c.l.b16 %v54
  %v187 = vunpack.c.l.b16 %v55
  %v188 = vunpack.c.l.b16 %v56
  %v189 = vunpack.c.l.b16 %v57
  %v190 = vunpack.c.l.b16 %v58
  %v191 = vunpack.c.l.b16 %v59
  %v192 = vunpack.c.l.b16 %v60
  %v193 = vunpack.c.l.b16 %v61
  %v194 = vunpack.c.l.b16 %v62
  %v195 = vunpack.c.l.b16 %v63
  %v196 = vunpack.c.l.b16 %v64
  %v197 = vunpack.c.l.b16 %v65
  %v198 = vunpack.c.l.b16 %v66
  %v199 = vunpack.c.l.b16 %v67
  %v200 = vunpack.c.l.b16 %v68
  %v201 = vunpack.c.l.b16 %v69
  %v202 = vunpack.c.l.b16 %v70
  %v203 = vunpack.c.l.b16 %v71
  %v204 = vunpack.c.l.b16 %v72
  %v205 = vunpack.c.l.b16 %v73
  %v206 = vunpack.c.l.b16 %v74
  %v207 = vunpack.c.l.b16 %v75
  %v208 = vpack.c.b16 %v173, %v172
  %v209 = vpack.c.b16 %v175, %v174
  %v210 = vpack.c.b16 %v177, %v176
  %v211 = vpack.c.b16 %v179, %v178
  %v212 = vpack.c.b16 %v181, %v180
  %v213 = vpack.c.b16 %v183, %v182
  %v214 = vpack.c.b16 %v185, %v184
  %v215 = vpack.c.b16 %v187, %v186
  %v216 = vpack.c.b16 %v189, %v188
  %v217 = vpack.c.b16 %v191, %v190
  %v218 = vpack.c.b16 %v193, %v192
  %v219 = vpack.c.b16 %v195, %v194
  %v220 = vpack.c.b16 %v197, %v196
  %v221 = vpack.c.b16 %v199, %v198
  %v222 = vpack.c.b16 %v201, %v200
  %v223 = vpack.c.b16 %v203, %v202
  %v224 = vpack.c.b16 %v205, %v204
  %v225 = vpack.c.b16 %v207, %v206
  %vm244 = vcmask 261120
  %v246 = vsel %vm244, %v118, 0
  %v249 = vsel %vm244, %v121, 0
  %v252 = vsel %vm244, %v124, 0
  %v255 = vsel %vm244, %v127, 0
  %257 = vmatprep.subr.bf16.mxu0 0
  %258 = vmatpush1.bf16.msra.mxu0 %v215
  %259 = vmatprep.subr.bf16.mxu0 0
  %260 = vmatpush1.bf16.msra.mxu0 %v214
  %261 = vmatprep.subr.bf16.mxu0 0
  %262 = vmatpush1.bf16.msra.mxu0 %v213
  %263 = vmatprep.subr.bf16.mxu0 0
  %264 = vmatpush1.bf16.msra.mxu0 %v212
  %265 = vmatprep.subr.bf16.mxu0 0
  %266 = vmatpush1.bf16.msra.mxu0 %v211
  %267 = vmatprep.subr.bf16.mxu0 0
  %268 = vmatpush1.bf16.msra.mxu0 %v210
  %269 = vmatprep.subr.bf16.mxu0 0
  %270 = vmatpush1.bf16.msra.mxu0 %v209
  %271 = vmatprep.subr.bf16.mxu0 0
  %272 = vmatpush1.bf16.msra.mxu0 %v208
  %273 = vmatprep.subr.bf16.mxu0 0
  %274 = vmatpush2.bf16.msra.mxu0 %v223
  %275 = vmatprep.subr.bf16.mxu0 0
  %276 = vmatpush2.bf16.msra.mxu0 %v222
  %277 = vmatprep.subr.bf16.mxu0 0
  %278 = vmatpush2.bf16.msra.mxu0 %v221
  %279 = vmatprep.subr.bf16.mxu0 0
  %280 = vmatpush2.bf16.msra.mxu0 %v220
  %281 = vmatprep.subr.bf16.mxu0 0
  %282 = vmatpush2.bf16.msra.mxu0 %v219
  %283 = vmatprep.subr.bf16.mxu0 0
  %284 = vmatpush2.bf16.msra.mxu0 %v218
  %285 = vmatprep.subr.bf16.mxu0 0
  %286 = vmatpush2.bf16.msra.mxu0 %v217
  %287 = vmatprep.subr.bf16.mxu0 0
  %288 = vmatpush2.bf16.msra.mxu0 %v216
  %289 = vmatprep.mubr.bf16.mxu0 %v117
  %290 = vmatmul.mubr.bf16.gmra.mxu0 %v116
  %v291 = vpop.f32.mrf.mxu0
  %v292 = vadd.f32 0.0, %v291
  %v293 = vpop.f32.mrf.mxu0
  %v294 = vpop.f32.mrf.mxu0
  %v295 = vadd.f32 0.0, %v294
  %v296 = vpop.f32.mrf.mxu0
  %297 = vmatprep.mubr.bf16.mxu0 %v120
  %298 = vmatmul.mubr.bf16.gmra.mxu0 %v119
  %v299 = vpop.f32.mrf.mxu0
  %v300 = vadd.f32 0.0, %v299
  %v301 = vpop.f32.mrf.mxu0
  %v302 = vpop.f32.mrf.mxu0
  %v303 = vadd.f32 0.0, %v302
  %v304 = vpop.f32.mrf.mxu0
  %305 = vmatprep.mubr.bf16.mxu0 %v123
  %306 = vmatmul.mubr.bf16.gmra.mxu0 %v122
  %v307 = vpop.f32.mrf.mxu0
  %v308 = vadd.f32 0.0, %v307
  %v309 = vpop.f32.mrf.mxu0
  %v310 = vpop.f32.mrf.mxu0
  %v311 = vadd.f32 0.0, %v310
  %v312 = vpop.f32.mrf.mxu0
  %313 = vmatprep.mubr.bf16.mxu0 %v126
  %314 = vmatmul.mubr.bf16.gmra.mxu0 %v125
  %v315 = vpop.f32.mrf.mxu0
  %v316 = vadd.f32 0.0, %v315
  %v317 = vpop.f32.mrf.mxu0
  %v318 = vpop.f32.mrf.mxu0
  %v319 = vadd.f32 0.0, %v318
  %v320 = vpop.f32.mrf.mxu0
  %321 = vdwg.mxu0
  %322 = vmatprep.subr.bf16.mxu0 0
  %323 = vmatpush1.bf16.msra.mxu0 0
  %324 = vmatprep.subr.bf16.mxu0 0
  %325 = vmatpush1.bf16.msra.mxu0 0
  %326 = vmatprep.subr.bf16.mxu0 0
  %327 = vmatpush1.bf16.msra.mxu0 0
  %328 = vmatprep.subr.bf16.mxu0 0
  %329 = vmatpush1.bf16.msra.mxu0 0
  %330 = vmatprep.subr.bf16.mxu0 0
  %331 = vmatpush1.bf16.msra.mxu0 0
  %332 = vmatprep.subr.bf16.mxu0 0
  %333 = vmatpush1.bf16.msra.mxu0 0
  %334 = vmatprep.subr.bf16.mxu0 0
  %335 = vmatpush1.bf16.msra.mxu0 %v225
  %336 = vmatprep.subr.bf16.mxu0 0
  %337 = vmatpush1.bf16.msra.mxu0 %v224
  %338 = vmatprep.subr.bf16.mxu0 0
  %339 = vmatpush2.bf16.msra.mxu0 0
  %340 = vmatprep.subr.bf16.mxu0 0
  %341 = vmatpush2.bf16.msra.mxu0 0
  %342 = vmatprep.subr.bf16.mxu0 0
  %343 = vmatpush2.bf16.msra.mxu0 0
  %344 = vmatprep.subr.bf16.mxu0 0
  %345 = vmatpush2.bf16.msra.mxu0 0
  %346 = vmatprep.subr.bf16.mxu0 0
  %347 = vmatpush2.bf16.msra.mxu0 0
  %348 = vmatprep.subr.bf16.mxu0 0
  %349 = vmatpush2.bf16.msra.mxu0 0
  %350 = vmatprep.subr.bf16.mxu0 0
  %351 = vmatpush2.bf16.msra.mxu0 0
  %352 = vmatprep.subr.bf16.mxu0 0
  %353 = vmatpush2.bf16.msra.mxu0 0
  %354 = vmatprep.mubr.bf16.mxu0 0
  %355 = vmatmul.mubr.bf16.gmra.mxu0 %v246
  %v356 = vpop.f32.mrf.mxu0
  %v357 = vadd.f32 %v292, %v356
  %v358 = vpop.f32.mrf.mxu0
  %v359 = vpop.f32.mrf.mxu0
  %v360 = vadd.f32 %v295, %v359
  %v361 = vpop.f32.mrf.mxu0
  %362 = vmatprep.mubr.bf16.mxu0 0
  %363 = vmatmul.mubr.bf16.gmra.mxu0 %v249
  %v364 = vpop.f32.mrf.mxu0
  %v365 = vadd.f32 %v300, %v364
  %v366 = vpop.f32.mrf.mxu0
  %v367 = vpop.f32.mrf.mxu0
  %v368 = vadd.f32 %v303, %v367
  %v369 = vpop.f32.mrf.mxu0
  %370 = vmatprep.mubr.bf16.mxu0 0
  %371 = vmatmul.mubr.bf16.gmra.mxu0 %v252
  %v372 = vpop.f32.mrf.mxu0
  %v373 = vadd.f32 %v308, %v372
  %v374 = vpop.f32.mrf.mxu0
  %v375 = vpop.f32.mrf.mxu0
  %v376 = vadd.f32 %v311, %v375
  %v377 = vpop.f32.mrf.mxu0
  %378 = vmatprep.mubr.bf16.mxu0 0
  %379 = vmatmul.mubr.bf16.gmra.mxu0 %v255
  %v380 = vpop.f32.mrf.mxu0
  %v381 = vadd.f32 %v316, %v380
  %v382 = vpop.f32.mrf.mxu0
  %v383 = vpop.f32.mrf.mxu0
  %v384 = vadd.f32 %v319, %v383
  %v385 = vpop.f32.mrf.mxu0
  %386 = vdwg.mxu0
  %v387 = vld [vmem:[%s1] sm:$0xf]
  %v388 = vld [vmem:[%s1 + $0x4] sm:$0xf]
  %v389 = vld [vmem:[%s1 + $0x8] sm:$0xf]
  %v390 = vld [vmem:[%s1 + $0xc] sm:$0xf]
  %v391 = vld [vmem:[%s1 + $0x10] sm:$0xf]
  %v392 = vld [vmem:[%s1 + $0x14] sm:$0xf]
  %v393 = vld [vmem:[%s1 + $0x18] sm:$0xf]
  %v394 = vld [vmem:[%s1 + $0x1c] sm:$0xf]
  %v395 = vld [vmem:[%s1 + $0x20] sm:$0xf]
  %v396 = vld [vmem:[%s1 + $0x24] sm:$0xf]
  %v397 = vld [vmem:[%s1 + $0x28] sm:$0xf]
  %v398 = vld [vmem:[%s1 + $0x2c] sm:$0xf]
  %v399 = vld [vmem:[%s1 + $0x30] sm:$0xf]
  %v400 = vld [vmem:[%s1 + $0x34] sm:$0xf]
  %v401 = vld [vmem:[%s1 + $0x38] sm:$0xf]
  %v402 = vld [vmem:[%s1 + $0x3c] sm:$0xf]
  %v403 = vld [vmem:[%s1 + $0x40] sm:$0xf]
  %v404 = vld [vmem:[%s1 + $0x44] sm:$0xf]
  %v405 = vld [vmem:[%s1 + $0x48] sm:$0xf]
  %v406 = vld [vmem:[%s1 + $0x4c] sm:$0xf]
  %v407 = vld [vmem:[%s1 + $0x50] sm:$0xf]
  %v408 = vld [vmem:[%s1 + $0x54] sm:$0xf]
  %v409 = vld [vmem:[%s1 + $0x58] sm:$0xf]
  %v410 = vld [vmem:[%s1 + $0x5c] sm:$0xf]
  %v411 = vld [vmem:[%s1 + $0x60] sm:$0xf]
  %v412 = vld [vmem:[%s1 + $0x64] sm:$0xf]
  %v413 = vld [vmem:[%s1 + $0x68] sm:$0xf]
  %v414 = vld [vmem:[%s1 + $0x6c] sm:$0xf]
  %v415 = vld [vmem:[%s1 + $0x70] sm:$0xf]
  %v416 = vld [vmem:[%s1 + $0x74] sm:$0xf]
  %v417 = vld [vmem:[%s1 + $0x78] sm:$0xf]
  %v418 = vld [vmem:[%s1 + $0x7c] sm:$0xf]
  %v419 = vld [vmem:[%s1 + $0x80] sm:$0xf]
  %v420 = vld [vmem:[%s1 + $0x84] sm:$0xf]
  %v421 = vld [vmem:[%s1 + $0x88] sm:$0xf]
  %v422 = vld [vmem:[%s1 + $0x8c] sm:$0xf]
  %v459 = vunpack.c.l.b16 %v387
  %v460 = vunpack.c.l.b16 %v388
  %v461 = vunpack.c.l.b16 %v389
  %v462 = vunpack.c.l.b16 %v390
  %v463 = vunpack.c.l.b16 %v391
  %v464 = vunpack.c.l.b16 %v392
  %v465 = vunpack.c.l.b16 %v393
  %v466 = vunpack.c.l.b16 %v394
  %v467 = vunpack.c.l.b16 %v395
  %v468 = vunpack.c.l.b16 %v396
  %v469 = vunpack.c.l.b16 %v397
  %v470 = vunpack.c.l.b16 %v398
  %v471 = vunpack.c.l.b16 %v399
  %v472 = vunpack.c.l.b16 %v400
  %v473 = vunpack.c.l.b16 %v401
  %v474 = vunpack.c.l.b16 %v402
  %v475 = vunpack.c.l.b16 %v403
  %v476 = vunpack.c.l.b16 %v404
  %v477 = vunpack.c.l.b16 %v405
  %v478 = vunpack.c.l.b16 %v406
  %v479 = vunpack.c.l.b16 %v407
  %v480 = vunpack.c.l.b16 %v408
  %v481 = vunpack.c.l.b16 %v409
  %v482 = vunpack.c.l.b16 %v410
  %v483 = vunpack.c.l.b16 %v411
  %v484 = vunpack.c.l.b16 %v412
  %v485 = vunpack.c.l.b16 %v413
  %v486 = vunpack.c.l.b16 %v414
  %v487 = vunpack.c.l.b16 %v415
  %v488 = vunpack.c.l.b16 %v416
  %v489 = vunpack.c.l.b16 %v417
  %v490 = vunpack.c.l.b16 %v418
  %v491 = vunpack.c.l.b16 %v419
  %v492 = vunpack.c.l.b16 %v420
  %v493 = vunpack.c.l.b16 %v421
  %v494 = vunpack.c.l.b16 %v422
  %v495 = vpack.c.b16 %v460, %v459
  %v496 = vpack.c.b16 %v462, %v461
  %v497 = vpack.c.b16 %v464, %v463
  %v498 = vpack.c.b16 %v466, %v465
  %v499 = vpack.c.b16 %v468, %v467
  %v500 = vpack.c.b16 %v470, %v469
  %v501 = vpack.c.b16 %v472, %v471
  %v502 = vpack.c.b16 %v474, %v473
  %v503 = vpack.c.b16 %v476, %v475
  %v504 = vpack.c.b16 %v478, %v477
  %v505 = vpack.c.b16 %v480, %v479
  %v506 = vpack.c.b16 %v482, %v481
  %v507 = vpack.c.b16 %v484, %v483
  %v508 = vpack.c.b16 %v486, %v485
  %v509 = vpack.c.b16 %v488, %v487
  %v510 = vpack.c.b16 %v490, %v489
  %v511 = vpack.c.b16 %v492, %v491
  %v512 = vpack.c.b16 %v494, %v493
  %531 = vmatprep.subr.bf16.mxu0 0
  %532 = vmatpush1.bf16.msra.mxu0 %v502
  %533 = vmatprep.subr.bf16.mxu0 0
  %534 = vmatpush1.bf16.msra.mxu0 %v501
  %535 = vmatprep.subr.bf16.mxu0 0
  %536 = vmatpush1.bf16.msra.mxu0 %v500
  %537 = vmatprep.subr.bf16.mxu0 0
  %538 = vmatpush1.bf16.msra.mxu0 %v499
  %539 = vmatprep.subr.bf16.mxu0 0
  %540 = vmatpush1.bf16.msra.mxu0 %v498
  %541 = vmatprep.subr.bf16.mxu0 0
  %542 = vmatpush1.bf16.msra.mxu0 %v497
  %543 = vmatprep.subr.bf16.mxu0 0
  %544 = vmatpush1.bf16.msra.mxu0 %v496
  %545 = vmatprep.subr.bf16.mxu0 0
  %546 = vmatpush1.bf16.msra.mxu0 %v495
  %547 = vmatprep.subr.bf16.mxu0 0
  %548 = vmatpush2.bf16.msra.mxu0 %v510
  %549 = vmatprep.subr.bf16.mxu0 0
  %550 = vmatpush2.bf16.msra.mxu0 %v509
  %551 = vmatprep.subr.bf16.mxu0 0
  %552 = vmatpush2.bf16.msra.mxu0 %v508
  %553 = vmatprep.subr.bf16.mxu0 0
  %554 = vmatpush2.bf16.msra.mxu0 %v507
  %555 = vmatprep.subr.bf16.mxu0 0
  %556 = vmatpush2.bf16.msra.mxu0 %v506
  %557 = vmatprep.subr.bf16.mxu0 0
  %558 = vmatpush2.bf16.msra.mxu0 %v505
  %559 = vmatprep.subr.bf16.mxu0 0
  %560 = vmatpush2.bf16.msra.mxu0 %v504
  %561 = vmatprep.subr.bf16.mxu0 0
  %562 = vmatpush2.bf16.msra.mxu0 %v503
  %563 = vmatprep.mubr.bf16.mxu0 %v117
  %564 = vmatmul.mubr.bf16.gmra.mxu0 %v116
  %v565 = vpop.f32.mrf.mxu0
  %v566 = vadd.f32 0.0, %v565
  %v567 = vpop.f32.mrf.mxu0
  %v568 = vpop.f32.mrf.mxu0
  %v569 = vadd.f32 0.0, %v568
  %v570 = vpop.f32.mrf.mxu0
  %571 = vmatprep.mubr.bf16.mxu0 %v120
  %572 = vmatmul.mubr.bf16.gmra.mxu0 %v119
  %v573 = vpop.f32.mrf.mxu0
  %v574 = vadd.f32 0.0, %v573
  %v575 = vpop.f32.mrf.mxu0
  %v576 = vpop.f32.mrf.mxu0
  %v577 = vadd.f32 0.0, %v576
  %v578 = vpop.f32.mrf.mxu0
  %579 = vmatprep.mubr.bf16.mxu0 %v123
  %580 = vmatmul.mubr.bf16.gmra.mxu0 %v122
  %v581 = vpop.f32.mrf.mxu0
  %v582 = vadd.f32 0.0, %v581
  %v583 = vpop.f32.mrf.mxu0
  %v584 = vpop.f32.mrf.mxu0
  %v585 = vadd.f32 0.0, %v584
  %v586 = vpop.f32.mrf.mxu0
  %587 = vmatprep.mubr.bf16.mxu0 %v126
  %588 = vmatmul.mubr.bf16.gmra.mxu0 %v125
  %v589 = vpop.f32.mrf.mxu0
  %v590 = vadd.f32 0.0, %v589
  %v591 = vpop.f32.mrf.mxu0
  %v592 = vpop.f32.mrf.mxu0
  %v593 = vadd.f32 0.0, %v592
  %v594 = vpop.f32.mrf.mxu0
  %595 = vdwg.mxu0
  %596 = vmatprep.subr.bf16.mxu0 0
  %597 = vmatpush1.bf16.msra.mxu0 0
  %598 = vmatprep.subr.bf16.mxu0 0
  %599 = vmatpush1.bf16.msra.mxu0 0
  %600 = vmatprep.subr.bf16.mxu0 0
  %601 = vmatpush1.bf16.msra.mxu0 0
  %602 = vmatprep.subr.bf16.mxu0 0
  %603 = vmatpush1.bf16.msra.mxu0 0
  %604 = vmatprep.subr.bf16.mxu0 0
  %605 = vmatpush1.bf16.msra.mxu0 0
  %606 = vmatprep.subr.bf16.mxu0 0
  %607 = vmatpush1.bf16.msra.mxu0 0
  %608 = vmatprep.subr.bf16.mxu0 0
  %609 = vmatpush1.bf16.msra.mxu0 %v512
  %610 = vmatprep.subr.bf16.mxu0 0
  %611 = vmatpush1.bf16.msra.mxu0 %v511
  %612 = vmatprep.subr.bf16.mxu0 0
  %613 = vmatpush2.bf16.msra.mxu0 0
  %614 = vmatprep.subr.bf16.mxu0 0
  %615 = vmatpush2.bf16.msra.mxu0 0
  %616 = vmatprep.subr.bf16.mxu0 0
  %617 = vmatpush2.bf16.msra.mxu0 0
  %618 = vmatprep.subr.bf16.mxu0 0
  %619 = vmatpush2.bf16.msra.mxu0 0
  %620 = vmatprep.subr.bf16.mxu0 0
  %621 = vmatpush2.bf16.msra.mxu0 0
  %622 = vmatprep.subr.bf16.mxu0 0
  %623 = vmatpush2.bf16.msra.mxu0 0
  %624 = vmatprep.subr.bf16.mxu0 0
  %625 = vmatpush2.bf16.msra.mxu0 0
  %626 = vmatprep.subr.bf16.mxu0 0
  %627 = vmatpush2.bf16.msra.mxu0 0
  %628 = vmatprep.mubr.bf16.mxu0 0
  %629 = vmatmul.mubr.bf16.gmra.mxu0 %v246
  %v630 = vpop.f32.mrf.mxu0
  %v631 = vadd.f32 %v566, %v630
  %v632 = vpop.f32.mrf.mxu0
  %v633 = vpop.f32.mrf.mxu0
  %v634 = vadd.f32 %v569, %v633
  %v635 = vpop.f32.mrf.mxu0
  %636 = vmatprep.mubr.bf16.mxu0 0
  %637 = vmatmul.mubr.bf16.gmra.mxu0 %v249
  %v638 = vpop.f32.mrf.mxu0
  %v639 = vadd.f32 %v574, %v638
  %v640 = vpop.f32.mrf.mxu0
  %v641 = vpop.f32.mrf.mxu0
  %v642 = vadd.f32 %v577, %v641
  %v643 = vpop.f32.mrf.mxu0
  %644 = vmatprep.mubr.bf16.mxu0 0
  %645 = vmatmul.mubr.bf16.gmra.mxu0 %v252
  %v646 = vpop.f32.mrf.mxu0
  %v647 = vadd.f32 %v582, %v646
  %v648 = vpop.f32.mrf.mxu0
  %v649 = vpop.f32.mrf.mxu0
  %v650 = vadd.f32 %v585, %v649
  %v651 = vpop.f32.mrf.mxu0
  %652 = vmatprep.mubr.bf16.mxu0 0
  %653 = vmatmul.mubr.bf16.gmra.mxu0 %v255
  %v654 = vpop.f32.mrf.mxu0
  %v655 = vadd.f32 %v590, %v654
  %v656 = vpop.f32.mrf.mxu0
  %v657 = vpop.f32.mrf.mxu0
  %v658 = vadd.f32 %v593, %v657
  %v659 = vpop.f32.mrf.mxu0
  %660 = vdwg.mxu0
  %v661 = vmax.f32 %v357, %v631
  %v662 = vmax.f32 %v360, %v634
  %v663 = vmax.f32 %v365, %v639
  %v664 = vmax.f32 %v368, %v642
  %v665 = vmax.f32 %v373, %v647
  %v666 = vmax.f32 %v376, %v650
  %v667 = vmax.f32 %v381, %v655
  %v668 = vmax.f32 %v384, %v658
  %v669 = vld [vmem:[%s2] sm:$0xf]
  %v670 = vld [vmem:[%s2 + $0x4] sm:$0xf]
  %v671 = vld [vmem:[%s2 + $0x8] sm:$0xf]
  %v672 = vld [vmem:[%s2 + $0xc] sm:$0xf]
  %v673 = vld [vmem:[%s2 + $0x10] sm:$0xf]
  %v674 = vld [vmem:[%s2 + $0x14] sm:$0xf]
  %v675 = vld [vmem:[%s2 + $0x18] sm:$0xf]
  %v676 = vld [vmem:[%s2 + $0x1c] sm:$0xf]
  %v677 = vld [vmem:[%s2 + $0x20] sm:$0xf]
  %v678 = vld [vmem:[%s2 + $0x24] sm:$0xf]
  %v679 = vld [vmem:[%s2 + $0x28] sm:$0xf]
  %v680 = vld [vmem:[%s2 + $0x2c] sm:$0xf]
  %v681 = vld [vmem:[%s2 + $0x30] sm:$0xf]
  %v682 = vld [vmem:[%s2 + $0x34] sm:$0xf]
  %v683 = vld [vmem:[%s2 + $0x38] sm:$0xf]
  %v684 = vld [vmem:[%s2 + $0x3c] sm:$0xf]
  %v685 = vld [vmem:[%s2 + $0x40] sm:$0xf]
  %v686 = vld [vmem:[%s2 + $0x44] sm:$0xf]
  %v687 = vld [vmem:[%s2 + $0x48] sm:$0xf]
  %v688 = vld [vmem:[%s2 + $0x4c] sm:$0xf]
  %v689 = vld [vmem:[%s2 + $0x50] sm:$0xf]
  %v690 = vld [vmem:[%s2 + $0x54] sm:$0xf]
  %v691 = vld [vmem:[%s2 + $0x58] sm:$0xf]
  %v692 = vld [vmem:[%s2 + $0x5c] sm:$0xf]
  %v693 = vld [vmem:[%s2 + $0x60] sm:$0xf]
  %v694 = vld [vmem:[%s2 + $0x64] sm:$0xf]
  %v695 = vld [vmem:[%s2 + $0x68] sm:$0xf]
  %v696 = vld [vmem:[%s2 + $0x6c] sm:$0xf]
  %v697 = vld [vmem:[%s2 + $0x70] sm:$0xf]
  %v698 = vld [vmem:[%s2 + $0x74] sm:$0xf]
  %v699 = vld [vmem:[%s2 + $0x78] sm:$0xf]
  %v700 = vld [vmem:[%s2 + $0x7c] sm:$0xf]
  %v701 = vld [vmem:[%s2 + $0x80] sm:$0xf]
  %v702 = vld [vmem:[%s2 + $0x84] sm:$0xf]
  %v703 = vld [vmem:[%s2 + $0x88] sm:$0xf]
  %v704 = vld [vmem:[%s2 + $0x8c] sm:$0xf]
  %v741 = vunpack.c.l.b16 %v669
  %v742 = vunpack.c.l.b16 %v670
  %v743 = vunpack.c.l.b16 %v671
  %v744 = vunpack.c.l.b16 %v672
  %v745 = vunpack.c.l.b16 %v673
  %v746 = vunpack.c.l.b16 %v674
  %v747 = vunpack.c.l.b16 %v675
  %v748 = vunpack.c.l.b16 %v676
  %v749 = vunpack.c.l.b16 %v677
  %v750 = vunpack.c.l.b16 %v678
  %v751 = vunpack.c.l.b16 %v679
  %v752 = vunpack.c.l.b16 %v680
  %v753 = vunpack.c.l.b16 %v681
  %v754 = vunpack.c.l.b16 %v682
  %v755 = vunpack.c.l.b16 %v683
  %v756 = vunpack.c.l.b16 %v684
  %v757 = vunpack.c.l.b16 %v685
  %v758 = vunpack.c.l.b16 %v686
  %v759 = vunpack.c.l.b16 %v687
  %v760 = vunpack.c.l.b16 %v688
  %v761 = vunpack.c.l.b16 %v689
  %v762 = vunpack.c.l.b16 %v690
  %v763 = vunpack.c.l.b16 %v691
  %v764 = vunpack.c.l.b16 %v692
  %v765 = vunpack.c.l.b16 %v693
  %v766 = vunpack.c.l.b16 %v694
  %v767 = vunpack.c.l.b16 %v695
  %v768 = vunpack.c.l.b16 %v696
  %v769 = vunpack.c.l.b16 %v697
  %v770 = vunpack.c.l.b16 %v698
  %v771 = vunpack.c.l.b16 %v699
  %v772 = vunpack.c.l.b16 %v700
  %v773 = vunpack.c.l.b16 %v701
  %v774 = vunpack.c.l.b16 %v702
  %v775 = vunpack.c.l.b16 %v703
  %v776 = vunpack.c.l.b16 %v704
  %v777 = vpack.c.b16 %v742, %v741
  %v778 = vpack.c.b16 %v744, %v743
  %v779 = vpack.c.b16 %v746, %v745
  %v780 = vpack.c.b16 %v748, %v747
  %v781 = vpack.c.b16 %v750, %v749
  %v782 = vpack.c.b16 %v752, %v751
  %v783 = vpack.c.b16 %v754, %v753
  %v784 = vpack.c.b16 %v756, %v755
  %v785 = vpack.c.b16 %v758, %v757
  %v786 = vpack.c.b16 %v760, %v759
  %v787 = vpack.c.b16 %v762, %v761
  %v788 = vpack.c.b16 %v764, %v763
  %v789 = vpack.c.b16 %v766, %v765
  %v790 = vpack.c.b16 %v768, %v767
  %v791 = vpack.c.b16 %v770, %v769
  %v792 = vpack.c.b16 %v772, %v771
  %v793 = vpack.c.b16 %v774, %v773
  %v794 = vpack.c.b16 %v776, %v775
  %813 = vmatprep.subr.bf16.mxu0 0
  %814 = vmatpush1.bf16.msra.mxu0 %v784
  %815 = vmatprep.subr.bf16.mxu0 0
  %816 = vmatpush1.bf16.msra.mxu0 %v783
  %817 = vmatprep.subr.bf16.mxu0 0
  %818 = vmatpush1.bf16.msra.mxu0 %v782
  %819 = vmatprep.subr.bf16.mxu0 0
  %820 = vmatpush1.bf16.msra.mxu0 %v781
  %821 = vmatprep.subr.bf16.mxu0 0
  %822 = vmatpush1.bf16.msra.mxu0 %v780
  %823 = vmatprep.subr.bf16.mxu0 0
  %824 = vmatpush1.bf16.msra.mxu0 %v779
  %825 = vmatprep.subr.bf16.mxu0 0
  %826 = vmatpush1.bf16.msra.mxu0 %v778
  %827 = vmatprep.subr.bf16.mxu0 0
  %828 = vmatpush1.bf16.msra.mxu0 %v777
  %829 = vmatprep.subr.bf16.mxu0 0
  %830 = vmatpush2.bf16.msra.mxu0 %v792
  %831 = vmatprep.subr.bf16.mxu0 0
  %832 = vmatpush2.bf16.msra.mxu0 %v791
  %833 = vmatprep.subr.bf16.mxu0 0
  %834 = vmatpush2.bf16.msra.mxu0 %v790
  %835 = vmatprep.subr.bf16.mxu0 0
  %836 = vmatpush2.bf16.msra.mxu0 %v789
  %837 = vmatprep.subr.bf16.mxu0 0
  %838 = vmatpush2.bf16.msra.mxu0 %v788
  %839 = vmatprep.subr.bf16.mxu0 0
  %840 = vmatpush2.bf16.msra.mxu0 %v787
  %841 = vmatprep.subr.bf16.mxu0 0
  %842 = vmatpush2.bf16.msra.mxu0 %v786
  %843 = vmatprep.subr.bf16.mxu0 0
  %844 = vmatpush2.bf16.msra.mxu0 %v785
  %845 = vmatprep.mubr.bf16.mxu0 %v117
  %846 = vmatmul.mubr.bf16.gmra.mxu0 %v116
  %v847 = vpop.f32.mrf.mxu0
  %v848 = vadd.f32 0.0, %v847
  %v849 = vpop.f32.mrf.mxu0
  %v850 = vpop.f32.mrf.mxu0
  %v851 = vadd.f32 0.0, %v850
  %v852 = vpop.f32.mrf.mxu0
  %853 = vmatprep.mubr.bf16.mxu0 %v120
  %854 = vmatmul.mubr.bf16.gmra.mxu0 %v119
  %v855 = vpop.f32.mrf.mxu0
  %v856 = vadd.f32 0.0, %v855
  %v857 = vpop.f32.mrf.mxu0
  %v858 = vpop.f32.mrf.mxu0
  %v859 = vadd.f32 0.0, %v858
  %v860 = vpop.f32.mrf.mxu0
  %861 = vmatprep.mubr.bf16.mxu0 %v123
  %862 = vmatmul.mubr.bf16.gmra.mxu0 %v122
  %v863 = vpop.f32.mrf.mxu0
  %v864 = vadd.f32 0.0, %v863
  %v865 = vpop.f32.mrf.mxu0
  %v866 = vpop.f32.mrf.mxu0
  %v867 = vadd.f32 0.0, %v866
  %v868 = vpop.f32.mrf.mxu0
  %869 = vmatprep.mubr.bf16.mxu0 %v126
  %870 = vmatmul.mubr.bf16.gmra.mxu0 %v125
  %v871 = vpop.f32.mrf.mxu0
  %v872 = vadd.f32 0.0, %v871
  %v873 = vpop.f32.mrf.mxu0
  %v874 = vpop.f32.mrf.mxu0
  %v875 = vadd.f32 0.0, %v874
  %v876 = vpop.f32.mrf.mxu0
  %877 = vdwg.mxu0
  %878 = vmatprep.subr.bf16.mxu0 0
  %879 = vmatpush1.bf16.msra.mxu0 0
  %880 = vmatprep.subr.bf16.mxu0 0
  %881 = vmatpush1.bf16.msra.mxu0 0
  %882 = vmatprep.subr.bf16.mxu0 0
  %883 = vmatpush1.bf16.msra.mxu0 0
  %884 = vmatprep.subr.bf16.mxu0 0
  %885 = vmatpush1.bf16.msra.mxu0 0
  %886 = vmatprep.subr.bf16.mxu0 0
  %887 = vmatpush1.bf16.msra.mxu0 0
  %888 = vmatprep.subr.bf16.mxu0 0
  %889 = vmatpush1.bf16.msra.mxu0 0
  %890 = vmatprep.subr.bf16.mxu0 0
  %891 = vmatpush1.bf16.msra.mxu0 %v794
  %892 = vmatprep.subr.bf16.mxu0 0
  %893 = vmatpush1.bf16.msra.mxu0 %v793
  %894 = vmatprep.subr.bf16.mxu0 0
  %895 = vmatpush2.bf16.msra.mxu0 0
  %896 = vmatprep.subr.bf16.mxu0 0
  %897 = vmatpush2.bf16.msra.mxu0 0
  %898 = vmatprep.subr.bf16.mxu0 0
  %899 = vmatpush2.bf16.msra.mxu0 0
  %900 = vmatprep.subr.bf16.mxu0 0
  %901 = vmatpush2.bf16.msra.mxu0 0
  %902 = vmatprep.subr.bf16.mxu0 0
  %903 = vmatpush2.bf16.msra.mxu0 0
  %904 = vmatprep.subr.bf16.mxu0 0
  %905 = vmatpush2.bf16.msra.mxu0 0
  %906 = vmatprep.subr.bf16.mxu0 0
  %907 = vmatpush2.bf16.msra.mxu0 0
  %908 = vmatprep.subr.bf16.mxu0 0
  %909 = vmatpush2.bf16.msra.mxu0 0
  %910 = vmatprep.mubr.bf16.mxu0 0
  %911 = vmatmul.mubr.bf16.gmra.mxu0 %v246
  %v912 = vpop.f32.mrf.mxu0
  %v913 = vadd.f32 %v848, %v912
  %v914 = vpop.f32.mrf.mxu0
  %v915 = vpop.f32.mrf.mxu0
  %v916 = vadd.f32 %v851, %v915
  %v917 = vpop.f32.mrf.mxu0
  %918 = vmatprep.mubr.bf16.mxu0 0
  %919 = vmatmul.mubr.bf16.gmra.mxu0 %v249
  %v920 = vpop.f32.mrf.mxu0
  %v921 = vadd.f32 %v856, %v920
  %v922 = vpop.f32.mrf.mxu0
  %v923 = vpop.f32.mrf.mxu0
  %v924 = vadd.f32 %v859, %v923
  %v925 = vpop.f32.mrf.mxu0
  %926 = vmatprep.mubr.bf16.mxu0 0
  %927 = vmatmul.mubr.bf16.gmra.mxu0 %v252
  %v928 = vpop.f32.mrf.mxu0
  %v929 = vadd.f32 %v864, %v928
  %v930 = vpop.f32.mrf.mxu0
  %v931 = vpop.f32.mrf.mxu0
  %v932 = vadd.f32 %v867, %v931
  %v933 = vpop.f32.mrf.mxu0
  %934 = vmatprep.mubr.bf16.mxu0 0
  %935 = vmatmul.mubr.bf16.gmra.mxu0 %v255
  %v936 = vpop.f32.mrf.mxu0
  %v937 = vadd.f32 %v872, %v936
  %v938 = vpop.f32.mrf.mxu0
  %v939 = vpop.f32.mrf.mxu0
  %v940 = vadd.f32 %v875, %v939
  %v941 = vpop.f32.mrf.mxu0
  %942 = vdwg.mxu0
  %v943 = vmax.f32 %v661, %v913
  %v944 = vmax.f32 %v662, %v916
  %v945 = vmax.f32 %v663, %v921
  %v946 = vmax.f32 %v664, %v924
  %v947 = vmax.f32 %v665, %v929
  %v948 = vmax.f32 %v666, %v932
  %v949 = vmax.f32 %v667, %v937
  %v950 = vmax.f32 %v668, %v940
  %v951 = vld [vmem:[%s3] sm:$0xf]
  %v952 = vld [vmem:[%s3 + $0x4] sm:$0xf]
  %v953 = vld [vmem:[%s3 + $0x8] sm:$0xf]
  %v954 = vld [vmem:[%s3 + $0xc] sm:$0xf]
  %v955 = vld [vmem:[%s3 + $0x10] sm:$0xf]
  %v956 = vld [vmem:[%s3 + $0x14] sm:$0xf]
  %v957 = vld [vmem:[%s3 + $0x18] sm:$0xf]
  %v958 = vld [vmem:[%s3 + $0x1c] sm:$0xf]
  %v959 = vld [vmem:[%s3 + $0x20] sm:$0xf]
  %v960 = vld [vmem:[%s3 + $0x24] sm:$0xf]
  %v961 = vld [vmem:[%s3 + $0x28] sm:$0xf]
  %v962 = vld [vmem:[%s3 + $0x2c] sm:$0xf]
  %v963 = vld [vmem:[%s3 + $0x30] sm:$0xf]
  %v964 = vld [vmem:[%s3 + $0x34] sm:$0xf]
  %v965 = vld [vmem:[%s3 + $0x38] sm:$0xf]
  %v966 = vld [vmem:[%s3 + $0x3c] sm:$0xf]
  %v967 = vld [vmem:[%s3 + $0x40] sm:$0xf]
  %v968 = vld [vmem:[%s3 + $0x44] sm:$0xf]
  %v969 = vld [vmem:[%s3 + $0x48] sm:$0xf]
  %v970 = vld [vmem:[%s3 + $0x4c] sm:$0xf]
  %v971 = vld [vmem:[%s3 + $0x50] sm:$0xf]
  %v972 = vld [vmem:[%s3 + $0x54] sm:$0xf]
  %v973 = vld [vmem:[%s3 + $0x58] sm:$0xf]
  %v974 = vld [vmem:[%s3 + $0x5c] sm:$0xf]
  %v975 = vld [vmem:[%s3 + $0x60] sm:$0xf]
  %v976 = vld [vmem:[%s3 + $0x64] sm:$0xf]
  %v977 = vld [vmem:[%s3 + $0x68] sm:$0xf]
  %v978 = vld [vmem:[%s3 + $0x6c] sm:$0xf]
  %v979 = vld [vmem:[%s3 + $0x70] sm:$0xf]
  %v980 = vld [vmem:[%s3 + $0x74] sm:$0xf]
  %v981 = vld [vmem:[%s3 + $0x78] sm:$0xf]
  %v982 = vld [vmem:[%s3 + $0x7c] sm:$0xf]
  %v983 = vld [vmem:[%s3 + $0x80] sm:$0xf]
  %v984 = vld [vmem:[%s3 + $0x84] sm:$0xf]
  %v985 = vld [vmem:[%s3 + $0x88] sm:$0xf]
  %v986 = vld [vmem:[%s3 + $0x8c] sm:$0xf]
  %v1023 = vunpack.c.l.b16 %v951
  %v1024 = vunpack.c.l.b16 %v952
  %v1025 = vunpack.c.l.b16 %v953
  %v1026 = vunpack.c.l.b16 %v954
  %v1027 = vunpack.c.l.b16 %v955
  %v1028 = vunpack.c.l.b16 %v956
  %v1029 = vunpack.c.l.b16 %v957
  %v1030 = vunpack.c.l.b16 %v958
  %v1031 = vunpack.c.l.b16 %v959
  %v1032 = vunpack.c.l.b16 %v960
  %v1033 = vunpack.c.l.b16 %v961
  %v1034 = vunpack.c.l.b16 %v962
  %v1035 = vunpack.c.l.b16 %v963
  %v1036 = vunpack.c.l.b16 %v964
  %v1037 = vunpack.c.l.b16 %v965
  %v1038 = vunpack.c.l.b16 %v966
  %v1039 = vunpack.c.l.b16 %v967
  %v1040 = vunpack.c.l.b16 %v968
  %v1041 = vunpack.c.l.b16 %v969
  %v1042 = vunpack.c.l.b16 %v970
  %v1043 = vunpack.c.l.b16 %v971
  %v1044 = vunpack.c.l.b16 %v972
  %v1045 = vunpack.c.l.b16 %v973
  %v1046 = vunpack.c.l.b16 %v974
  %v1047 = vunpack.c.l.b16 %v975
  %v1048 = vunpack.c.l.b16 %v976
  %v1049 = vunpack.c.l.b16 %v977
  %v1050 = vunpack.c.l.b16 %v978
  %v1051 = vunpack.c.l.b16 %v979
  %v1052 = vunpack.c.l.b16 %v980
  %v1053 = vunpack.c.l.b16 %v981
  %v1054 = vunpack.c.l.b16 %v982
  %v1055 = vunpack.c.l.b16 %v983
  %v1056 = vunpack.c.l.b16 %v984
  %v1057 = vunpack.c.l.b16 %v985
  %v1058 = vunpack.c.l.b16 %v986
  %v1059 = vpack.c.b16 %v1024, %v1023
  %v1060 = vpack.c.b16 %v1026, %v1025
  %v1061 = vpack.c.b16 %v1028, %v1027
  %v1062 = vpack.c.b16 %v1030, %v1029
  %v1063 = vpack.c.b16 %v1032, %v1031
  %v1064 = vpack.c.b16 %v1034, %v1033
  %v1065 = vpack.c.b16 %v1036, %v1035
  %v1066 = vpack.c.b16 %v1038, %v1037
  %v1067 = vpack.c.b16 %v1040, %v1039
  %v1068 = vpack.c.b16 %v1042, %v1041
  %v1069 = vpack.c.b16 %v1044, %v1043
  %v1070 = vpack.c.b16 %v1046, %v1045
  %v1071 = vpack.c.b16 %v1048, %v1047
  %v1072 = vpack.c.b16 %v1050, %v1049
  %v1073 = vpack.c.b16 %v1052, %v1051
  %v1074 = vpack.c.b16 %v1054, %v1053
  %v1075 = vpack.c.b16 %v1056, %v1055
  %v1076 = vpack.c.b16 %v1058, %v1057
  %1095 = vmatprep.subr.bf16.mxu0 0
  %1096 = vmatpush1.bf16.msra.mxu0 %v1066
  %1097 = vmatprep.subr.bf16.mxu0 0
  %1098 = vmatpush1.bf16.msra.mxu0 %v1065
  %1099 = vmatprep.subr.bf16.mxu0 0
  %1100 = vmatpush1.bf16.msra.mxu0 %v1064
  %1101 = vmatprep.subr.bf16.mxu0 0
  %1102 = vmatpush1.bf16.msra.mxu0 %v1063
  %1103 = vmatprep.subr.bf16.mxu0 0
  %1104 = vmatpush1.bf16.msra.mxu0 %v1062
  %1105 = vmatprep.subr.bf16.mxu0 0
  %1106 = vmatpush1.bf16.msra.mxu0 %v1061
  %1107 = vmatprep.subr.bf16.mxu0 0
  %1108 = vmatpush1.bf16.msra.mxu0 %v1060
  %1109 = vmatprep.subr.bf16.mxu0 0
  %1110 = vmatpush1.bf16.msra.mxu0 %v1059
  %1111 = vmatprep.subr.bf16.mxu0 0
  %1112 = vmatpush2.bf16.msra.mxu0 %v1074
  %1113 = vmatprep.subr.bf16.mxu0 0
  %1114 = vmatpush2.bf16.msra.mxu0 %v1073
  %1115 = vmatprep.subr.bf16.mxu0 0
  %1116 = vmatpush2.bf16.msra.mxu0 %v1072
  %1117 = vmatprep.subr.bf16.mxu0 0
  %1118 = vmatpush2.bf16.msra.mxu0 %v1071
  %1119 = vmatprep.subr.bf16.mxu0 0
  %1120 = vmatpush2.bf16.msra.mxu0 %v1070
  %1121 = vmatprep.subr.bf16.mxu0 0
  %1122 = vmatpush2.bf16.msra.mxu0 %v1069
  %1123 = vmatprep.subr.bf16.mxu0 0
  %1124 = vmatpush2.bf16.msra.mxu0 %v1068
  %1125 = vmatprep.subr.bf16.mxu0 0
  %1126 = vmatpush2.bf16.msra.mxu0 %v1067
  %1127 = vmatprep.mubr.bf16.mxu0 %v117
  %1128 = vmatmul.mubr.bf16.gmra.mxu0 %v116
  %v1129 = vpop.f32.mrf.mxu0
  %v1130 = vadd.f32 0.0, %v1129
  %v1131 = vpop.f32.mrf.mxu0
  %v1132 = vpop.f32.mrf.mxu0
  %v1133 = vadd.f32 0.0, %v1132
  %v1134 = vpop.f32.mrf.mxu0
  %1135 = vmatprep.mubr.bf16.mxu0 %v120
  %1136 = vmatmul.mubr.bf16.gmra.mxu0 %v119
  %v1137 = vpop.f32.mrf.mxu0
  %v1138 = vadd.f32 0.0, %v1137
  %v1139 = vpop.f32.mrf.mxu0
  %v1140 = vpop.f32.mrf.mxu0
  %v1141 = vadd.f32 0.0, %v1140
  %v1142 = vpop.f32.mrf.mxu0
  %1143 = vmatprep.mubr.bf16.mxu0 %v123
  %1144 = vmatmul.mubr.bf16.gmra.mxu0 %v122
  %v1145 = vpop.f32.mrf.mxu0
  %v1146 = vadd.f32 0.0, %v1145
  %v1147 = vpop.f32.mrf.mxu0
  %v1148 = vpop.f32.mrf.mxu0
  %v1149 = vadd.f32 0.0, %v1148
  %v1150 = vpop.f32.mrf.mxu0
  %1151 = vmatprep.mubr.bf16.mxu0 %v126
  %1152 = vmatmul.mubr.bf16.gmra.mxu0 %v125
  %v1153 = vpop.f32.mrf.mxu0
  %v1154 = vadd.f32 0.0, %v1153
  %v1155 = vpop.f32.mrf.mxu0
  %v1156 = vpop.f32.mrf.mxu0
  %v1157 = vadd.f32 0.0, %v1156
  %v1158 = vpop.f32.mrf.mxu0
  %1159 = vdwg.mxu0
  %1160 = vmatprep.subr.bf16.mxu0 0
  %1161 = vmatpush1.bf16.msra.mxu0 0
  %1162 = vmatprep.subr.bf16.mxu0 0
  %1163 = vmatpush1.bf16.msra.mxu0 0
  %1164 = vmatprep.subr.bf16.mxu0 0
  %1165 = vmatpush1.bf16.msra.mxu0 0
  %1166 = vmatprep.subr.bf16.mxu0 0
  %1167 = vmatpush1.bf16.msra.mxu0 0
  %1168 = vmatprep.subr.bf16.mxu0 0
  %1169 = vmatpush1.bf16.msra.mxu0 0
  %1170 = vmatprep.subr.bf16.mxu0 0
  %1171 = vmatpush1.bf16.msra.mxu0 0
  %1172 = vmatprep.subr.bf16.mxu0 0
  %1173 = vmatpush1.bf16.msra.mxu0 %v1076
  %1174 = vmatprep.subr.bf16.mxu0 0
  %1175 = vmatpush1.bf16.msra.mxu0 %v1075
  %1176 = vmatprep.subr.bf16.mxu0 0
  %1177 = vmatpush2.bf16.msra.mxu0 0
  %1178 = vmatprep.subr.bf16.mxu0 0
  %1179 = vmatpush2.bf16.msra.mxu0 0
  %1180 = vmatprep.subr.bf16.mxu0 0
  %1181 = vmatpush2.bf16.msra.mxu0 0
  %1182 = vmatprep.subr.bf16.mxu0 0
  %1183 = vmatpush2.bf16.msra.mxu0 0
  %1184 = vmatprep.subr.bf16.mxu0 0
  %1185 = vmatpush2.bf16.msra.mxu0 0
  %1186 = vmatprep.subr.bf16.mxu0 0
  %1187 = vmatpush2.bf16.msra.mxu0 0
  %1188 = vmatprep.subr.bf16.mxu0 0
  %1189 = vmatpush2.bf16.msra.mxu0 0
  %1190 = vmatprep.subr.bf16.mxu0 0
  %1191 = vmatpush2.bf16.msra.mxu0 0
  %1192 = vmatprep.mubr.bf16.mxu0 0
  %1193 = vmatmul.mubr.bf16.gmra.mxu0 %v246
  %v1194 = vpop.f32.mrf.mxu0
  %v1195 = vadd.f32 %v1130, %v1194
  %v1196 = vpop.f32.mrf.mxu0
  %v1197 = vpop.f32.mrf.mxu0
  %v1198 = vadd.f32 %v1133, %v1197
  %v1199 = vpop.f32.mrf.mxu0
  %1200 = vmatprep.mubr.bf16.mxu0 0
  %1201 = vmatmul.mubr.bf16.gmra.mxu0 %v249
  %v1202 = vpop.f32.mrf.mxu0
  %v1203 = vadd.f32 %v1138, %v1202
  %v1204 = vpop.f32.mrf.mxu0
  %v1205 = vpop.f32.mrf.mxu0
  %v1206 = vadd.f32 %v1141, %v1205
  %v1207 = vpop.f32.mrf.mxu0
  %1208 = vmatprep.mubr.bf16.mxu0 0
  %1209 = vmatmul.mubr.bf16.gmra.mxu0 %v252
  %v1210 = vpop.f32.mrf.mxu0
  %v1211 = vadd.f32 %v1146, %v1210
  %v1212 = vpop.f32.mrf.mxu0
  %v1213 = vpop.f32.mrf.mxu0
  %v1214 = vadd.f32 %v1149, %v1213
  %v1215 = vpop.f32.mrf.mxu0
  %1216 = vmatprep.mubr.bf16.mxu0 0
  %1217 = vmatmul.mubr.bf16.gmra.mxu0 %v255
  %v1218 = vpop.f32.mrf.mxu0
  %v1219 = vadd.f32 %v1154, %v1218
  %v1220 = vpop.f32.mrf.mxu0
  %v1221 = vpop.f32.mrf.mxu0
  %v1222 = vadd.f32 %v1157, %v1221
  %v1223 = vpop.f32.mrf.mxu0
  %1224 = vdwg.mxu0
  %v1225 = vmax.f32 %v943, %v1195
  %v1226 = vmax.f32 %v944, %v1198
  %v1227 = vmax.f32 %v945, %v1203
  %v1228 = vmax.f32 %v946, %v1206
  %v1229 = vmax.f32 %v947, %v1211
  %v1230 = vmax.f32 %v948, %v1214
  %v1231 = vmax.f32 %v949, %v1219
  %v1232 = vmax.f32 %v950, %v1222
  %v1233 = vld [vmem:[%s5] sm:$0xff]
  %v1234 = vld [vmem:[%s5 + $0x8] sm:$0xff]
  %v1235 = vld [vmem:[%s5 + $0x10] sm:$0xff]
  %v1236 = vld [vmem:[%s5 + $0x18] sm:$0xff]
  %v1237 = vld [vmem:[%s5 + $0x20] sm:$0xff]
  %v1238 = vld [vmem:[%s5 + $0x28] sm:$0xff]
  %v1239 = vld [vmem:[%s5 + $0x30] sm:$0xff]
  %v1240 = vld [vmem:[%s5 + $0x38] sm:$0xff]
  %1242 = vset.pattern.permute.xlu0 0
  %1243 = vperm.xlu0 %1242, %v1233
  %v1244 = vpop.permute.xlu0 %1243
  %1247 = vset.pattern.permute.xlu0 0
  %1248 = vperm.xlu0 %1247, %v1234
  %v1249 = vpop.permute.xlu0 %1248
  %1252 = vset.pattern.permute.xlu0 0
  %1253 = vperm.xlu0 %1252, %v1235
  %v1254 = vpop.permute.xlu0 %1253
  %1257 = vset.pattern.permute.xlu0 0
  %1258 = vperm.xlu0 %1257, %v1236
  %v1259 = vpop.permute.xlu0 %1258
  %1262 = vset.pattern.permute.xlu0 0
  %1263 = vperm.xlu0 %1262, %v1237
  %v1264 = vpop.permute.xlu0 %1263
  %1267 = vset.pattern.permute.xlu0 0
  %1268 = vperm.xlu0 %1267, %v1238
  %v1269 = vpop.permute.xlu0 %1268
  %1272 = vset.pattern.permute.xlu0 0
  %1273 = vperm.xlu0 %1272, %v1239
  %v1274 = vpop.permute.xlu0 %1273
  %1277 = vset.pattern.permute.xlu0 0
  %1278 = vperm.xlu0 %1277, %v1240
  %v1279 = vpop.permute.xlu0 %1278
  %v1281 = vadd.f32 %v1225, %v1244
  %v1282 = vadd.f32 %v1226, %v1249
  %v1283 = vadd.f32 %v1227, %v1254
  %v1284 = vadd.f32 %v1228, %v1259
  %v1285 = vadd.f32 %v1229, %v1264
  %v1286 = vadd.f32 %v1230, %v1269
  %v1287 = vadd.f32 %v1231, %v1274
  %v1288 = vadd.f32 %v1232, %v1279
  %vm1289 = vcmp.ge.f32.partialorder %v1281, 0.0
  %vm1290 = vcmp.ge.f32.partialorder %v1282, 0.0
  %vm1291 = vcmp.ge.f32.partialorder %v1283, 0.0
  %vm1292 = vcmp.ge.f32.partialorder %v1284, 0.0
  %vm1293 = vcmp.ge.f32.partialorder %v1285, 0.0
  %vm1294 = vcmp.ge.f32.partialorder %v1286, 0.0
  %vm1295 = vcmp.ge.f32.partialorder %v1287, 0.0
  %vm1296 = vcmp.ge.f32.partialorder %v1288, 0.0
  %v1297 = vmul.f32 %v1281, 0.01
  %v1298 = vmul.f32 %v1282, 0.01
  %v1299 = vmul.f32 %v1283, 0.01
  %v1300 = vmul.f32 %v1284, 0.01
  %v1301 = vmul.f32 %v1285, 0.01
  %v1302 = vmul.f32 %v1286, 0.01
  %v1303 = vmul.f32 %v1287, 0.01
  %v1304 = vmul.f32 %v1288, 0.01
  %v1305 = vsel %vm1289, %v1281, %v1297
  %v1306 = vsel %vm1290, %v1282, %v1298
  %v1307 = vsel %vm1291, %v1283, %v1299
  %v1308 = vsel %vm1292, %v1284, %v1300
  %v1309 = vsel %vm1293, %v1285, %v1301
  %v1310 = vsel %vm1294, %v1286, %v1302
  %v1311 = vsel %vm1295, %v1287, %v1303
  %v1312 = vsel %vm1296, %v1288, %v1304
  %v1313 = vpack.c.bf16 %v1306, %v1305
  %v1314 = vpack.c.bf16 %v1308, %v1307
  %v1315 = vpack.c.bf16 %v1310, %v1309
  %v1316 = vpack.c.bf16 %v1312, %v1311
  %v1321 = vunpack.c.l.b16 %v1313
  %v1322 = vunpack.c.h.b16 %v1313
  %v1323 = vunpack.c.l.b16 %v1314
  %v1324 = vunpack.c.h.b16 %v1314
  %v1325 = vunpack.c.l.b16 %v1315
  %v1326 = vunpack.c.h.b16 %v1315
  %v1327 = vunpack.c.l.b16 %v1316
  %v1328 = vunpack.c.h.b16 %v1316
  %v1329 = vpack.c.b16 %v1321, %v1321
  %v1330 = vpack.c.b16 %v1322, %v1322
  %v1331 = vpack.c.b16 %v1323, %v1323
  %v1332 = vpack.c.b16 %v1324, %v1324
  %v1333 = vpack.c.b16 %v1325, %v1325
  %v1334 = vpack.c.b16 %v1326, %v1326
  %v1335 = vpack.c.b16 %v1327, %v1327
  %v1336 = vpack.c.b16 %v1328, %v1328
  %vm1345 = vcmask 257024
  %1346 = vst.msk [vmem:[%s6] sm:$0xf] %vm1345, %v1329
  %1347 = vst.msk [vmem:[%s6 + $0x4] sm:$0xf] %vm1345, %v1330
  %1348 = vst.msk [vmem:[%s6 + $0x8] sm:$0xf] %vm1345, %v1331
  %1349 = vst.msk [vmem:[%s6 + $0xc] sm:$0xf] %vm1345, %v1332
  %1350 = vst.msk [vmem:[%s6 + $0x10] sm:$0xf] %vm1345, %v1333
  %1351 = vst.msk [vmem:[%s6 + $0x14] sm:$0xf] %vm1345, %v1334
  %1352 = vst.msk [vmem:[%s6 + $0x18] sm:$0xf] %vm1345, %v1335
  %1353 = vst.msk [vmem:[%s6 + $0x1c] sm:$0xf] %vm1345, %v1336
  // Predicated region
  $region26: #{classifier_forward.10} parent=0 // pred_check
    _
  $region27: #{classifier_forward.10} parent=0 // pred_check_branch
    %1355 = sbr.rel (0) target = $region29
  $region28: #{classifier_forward.10} parent=0 // pred_region
    _
  $region29: #{classifier_forward.10} parent=0 // pred_fallthru
    _
  // Predicated region
  $region30: #{classifier_forward.10} parent=0 // pred_check
    _
  $region31: #{classifier_forward.10} parent=0 // pred_check_branch
    %1357 = sbr.rel (0) target = $region33
  $region32: #{classifier_forward.10} parent=0 // pred_region
    _
  $region33: #{classifier_forward.10} parent=0 // pred_fallthru
    _

</llo_original>
